<compile_context>
chip_gen: v6e
topology: v6e:2x2x1
jax: 0.10.0
libtpu: 0.0.40
codegen_flags: <defaults>
</compile_context>

<pallas_src>
import functools

import jax
import jax.numpy as jnp
import numpy as np
from jax import lax
from jax.experimental import pallas as pl
from jax.experimental.pallas import tpu as pltpu


# ---------------------------------------------------------------------------
# Fused Pallas kernel: whole ST-LSTM cell for one batch element per grid step.
# ---------------------------------------------------------------------------
def _st_lstm_kernel(xhm_ref, c_ref, m_ref, w1_ref, w2_ref,
                    h_new_ref, c_new_ref, m_new_ref, mem_scr,
                    *, H, W, C, ksize, forget_bias):
    f32 = jnp.float32
    HW = H * W
    pad = ksize // 2

    # ---- stage 1: conv_x + conv_h + conv_m fused as ksize^2 shifted GEMMs --
    # xhm_ref block: [1, H+2p, W+2p, Cin+2C]; w1_ref: [k, k, Cin+2C, 7C].
    # Column layout of `pre`: [ i|f|g (c-path) | i'|f'|g' (m-path) | o_x+o_h ]
    pre = jnp.zeros((HW, 7 * C), f32)
    for kh in range(ksize):
        for kw in range(ksize):
            a = xhm_ref[0, kh:kh + H, kw:kw + W, :].reshape(HW, -1)
            pre = pre + jnp.dot(a, w1_ref[kh, kw],
                                preferred_element_type=f32)

    c_t = c_ref[0].reshape(HW, C)
    m_t = m_ref[0].reshape(HW, C)

    i_t = jax.nn.sigmoid(pre[:, 0:C])
    f_t = jax.nn.sigmoid(pre[:, C:2 * C] + forget_bias)
    g_t = jnp.tanh(pre[:, 2 * C:3 * C])
    c_new = f_t * c_t + i_t * g_t

    i_p = jax.nn.sigmoid(pre[:, 3 * C:4 * C])
    f_p = jax.nn.sigmoid(pre[:, 4 * C:5 * C] + forget_bias)
    g_p = jnp.tanh(pre[:, 5 * C:6 * C])
    m_new = f_p * m_t + i_p * g_p

    o_xh = pre[:, 6 * C:7 * C]           # o_x + o_h, already summed by the GEMM

    # ---- stage 2: conv_o(mem) + conv_last(mem) fused, mem stays in VMEM ----
    mem_scr[...] = jnp.zeros_like(mem_scr)               # zero halo border
    mem = jnp.concatenate([c_new, m_new], axis=-1)       # [HW, 2C]
    mem_scr[pad:pad + H, pad:pad + W, :] = mem.reshape(H, W, 2 * C)

    om = jnp.zeros((HW, 2 * C), f32)     # columns: [ conv_o | conv_last ]
    for kh in range(ksize):
        for kw in range(ksize):
            a = mem_scr[kh:kh + H, kw:kw + W, :].reshape(HW, 2 * C)
            om = om + jnp.dot(a, w2_ref[kh, kw],
                              preferred_element_type=f32)

    o_t = jax.nn.sigmoid(o_xh + om[:, 0:C])
    h_new = o_t * jnp.tanh(om[:, C:2 * C])

    h_new_ref[0] = h_new.reshape(H, W, C)
    c_new_ref[0] = c_new.reshape(H, W, C)
    m_new_ref[0] = m_new.reshape(H, W, C)


# ---------------------------------------------------------------------------
# Weight fusion (plain JAX, tiny, runs once per call under jit).
# ---------------------------------------------------------------------------
def _fused_weights(params, in_channel, C, ksize):
    """Build the two fused per-tap weight tensors.

    w1: [k, k, Cin+2C, 7C]   (rows = concat(x, h, m) channels)
        cols [0:3C)  -> i,f,g   (x + h contributions summed by the GEMM)
        cols [3C:6C) -> i',f',g' (x + m contributions)
        cols [6C:7C) -> o_x + o_h
    w2: [k, k, 2C, 2C]       (rows = concat(c_new, m_new) channels)
        cols [0:C)   -> conv_o (all taps)
        cols [C:2C)  -> conv_last (center tap only, 1x1 conv)
    """
    f32 = jnp.float32
    wx = jnp.transpose(params["w_x"].astype(f32), (2, 3, 1, 0))   # [k,k,Cin,7C]
    wh = jnp.transpose(params["w_h"].astype(f32), (2, 3, 1, 0))   # [k,k,C, 4C]
    wm = jnp.transpose(params["w_m"].astype(f32), (2, 3, 1, 0))   # [k,k,C, 3C]
    wo = jnp.transpose(params["w_o"].astype(f32), (2, 3, 1, 0))   # [k,k,2C,C]
    wl = jnp.transpose(params["w_last"].astype(f32)[:, :, 0, 0], (1, 0))  # [2C,C]

    z = lambda *s: jnp.zeros(s, f32)
    h_rows = jnp.concatenate(
        [wh[..., 0:3 * C], z(ksize, ksize, C, 3 * C), wh[..., 3 * C:4 * C]],
        axis=-1)
    m_rows = jnp.concatenate(
        [z(ksize, ksize, C, 3 * C), wm, z(ksize, ksize, C, C)], axis=-1)
    w1 = jnp.concatenate([wx, h_rows, m_rows], axis=2)   # [k,k,Cin+2C,7C]

    ctr = ksize // 2
    wl_taps = jnp.zeros((ksize, ksize, 2 * C, C), f32).at[ctr, ctr].set(wl)
    w2 = jnp.concatenate([wo, wl_taps], axis=-1)         # [k,k,2C,2C]
    return w1, w2


# ---------------------------------------------------------------------------
# NHWC core (preferred across timesteps) and NCHW wrapper matching PyTorch.
# ---------------------------------------------------------------------------
def st_lstm_cell_nhwc(params, x, h, c, m, num_hidden, forget_bias=1.0):
    x = x.astype(jnp.float32)
    h = h.astype(jnp.float32)
    c = c.astype(jnp.float32)
    m = m.astype(jnp.float32)

    B, H, W, Cin = x.shape
    C = num_hidden
    ksize = params["w_x"].shape[-1]
    pad = ksize // 2
    Kcat = Cin + 2 * C

    w1, w2 = _fused_weights(params, Cin, C, ksize)

    # Single halo-padded activation tensor: concat(x, h, m) over channels.
    xhm = jnp.concatenate([x, h, m], axis=-1)
    xhm = jnp.pad(xhm, ((0, 0), (pad, pad), (pad, pad), (0, 0)))

    kern = functools.partial(_st_lstm_kernel, H=H, W=W, C=C,
                             ksize=ksize, forget_bias=float(forget_bias))
    out_sds = jax.ShapeDtypeStruct((B, H, W, C), jnp.float32)
    state_spec = pl.BlockSpec((1, H, W, C), lambda b: (b, 0, 0, 0))

    h_new, c_new, m_new = pl.pallas_call(
        kern,
        out_shape=(out_sds, out_sds, out_sds),
        grid=(B,),
        in_specs=[
            pl.BlockSpec((1, H + 2 * pad, W + 2 * pad, Kcat),
                         lambda b: (b, 0, 0, 0)),
            state_spec,                                   # c_t
            state_spec,                                   # m_t
            # Weights: constant block index -> loaded once, stay VMEM-resident.
            pl.BlockSpec((ksize, ksize, Kcat, 7 * C), lambda b: (0, 0, 0, 0)),
            pl.BlockSpec((ksize, ksize, 2 * C, 2 * C), lambda b: (0, 0, 0, 0)),
        ],
        out_specs=(state_spec, state_spec, state_spec),
        scratch_shapes=[
            pltpu.VMEM((H + 2 * pad, W + 2 * pad, 2 * C), jnp.float32),
        ],
        compiler_params=pltpu.CompilerParams(
            dimension_semantics=("parallel",),
            vmem_limit_bytes=32 * 1024 * 1024),
    )(xhm, c, m, w1, w2)
    return h_new, c_new, m_new


def st_lstm_cell(params, x_t, h_t, c_t, m_t, num_hidden, forget_bias=1.0):
    """NCHW in / NCHW out, matching the PyTorch module's forward."""
    to_nhwc = lambda z: jnp.transpose(z, (0, 2, 3, 1)).astype(jnp.float32)
    h_new, c_new, m_new = st_lstm_cell_nhwc(
        params, to_nhwc(x_t), to_nhwc(h_t), to_nhwc(c_t), to_nhwc(m_t),
        num_hidden, forget_bias)
    to_nchw = lambda z: jnp.transpose(z, (0, 3, 1, 2))
    return to_nchw(h_new), to_nchw(c_new), to_nchw(m_new)


# ---------------------------------------------------------------------------
# Pure-JAX reference (mirrors the PyTorch forward exactly, f32-accurate).
# ---------------------------------------------------------------------------
def reference(params, x_t, h_t, c_t, m_t, num_hidden, forget_bias=1.0):
    C = num_hidden

    def conv(x, wt):
        pad = wt.shape[2] // 2
        return lax.conv_general_dilated(
            x, wt, window_strides=(1, 1),
            padding=((pad, pad), (pad, pad)),
            dimension_numbers=("NCHW", "OIHW", "NCHW"),
            precision=lax.Precision.HIGHEST)

    x_concat = conv(x_t, params["w_x"])
    h_concat = conv(h_t, params["w_h"])
    m_concat = conv(m_t, params["w_m"])
    sp = lambda z, n: [z[:, k * C:(k + 1) * C] for k in range(n)]
    i_x, f_x, g_x, i_xp, f_xp, g_xp, o_x = sp(x_concat, 7)
    i_h, f_h, g_h, o_h = sp(h_concat, 4)
    i_m, f_m, g_m = sp(m_concat, 3)
    i_t = jax.nn.sigmoid(i_x + i_h)
    f_t = jax.nn.sigmoid(f_x + f_h + forget_bias)
    g_t = jnp.tanh(g_x + g_h)
    c_new = f_t * c_t + i_t * g_t
    i_tp = jax.nn.sigmoid(i_xp + i_m)
    f_tp = jax.nn.sigmoid(f_xp + f_m + forget_bias)
    g_tp = jnp.tanh(g_xp + g_m)
    m_new = f_tp * m_t + i_tp * g_tp
    mem = jnp.concatenate([c_new, m_new], axis=1)
    o_t = jax.nn.sigmoid(o_x + o_h + conv(mem, params["w_o"]))
    h_new = o_t * jnp.tanh(conv(mem, params["w_last"]))
    return h_new, c_new, m_new


# ---------------------------------------------------------------------------
if __name__ == "__main__":
    B, Cin, H, W = 2, 4, 16, 16
    num_hidden, ksize = 32, 3

    key = jax.random.PRNGKey(0)
    keys = jax.random.split(key, 9)

    def mk_w(k, shape, fan_in):
        return (jax.random.normal(k, shape, jnp.float32)
                / jnp.sqrt(jnp.float32(fan_in)))

    params = {
        "w_x": mk_w(keys[0], (7 * num_hidden, Cin, ksize, ksize),
                    Cin * ksize * ksize),
        "w_h": mk_w(keys[1], (4 * num_hidden, num_hidden, ksize, ksize),
                    num_hidden * ksize * ksize),
        "w_m": mk_w(keys[2], (3 * num_hidden, num_hidden, ksize, ksize),
                    num_hidden * ksize * ksize),
        "w_o": mk_w(keys[3], (num_hidden, 2 * num_hidden, ksize, ksize),
                    2 * num_hidden * ksize * ksize),
        "w_last": mk_w(keys[4], (num_hidden, 2 * num_hidden, 1, 1),
                       2 * num_hidden),
    }

    x_t = jax.random.normal(keys[5], (B, Cin, H, W), jnp.float32)
    h_t = jax.random.normal(keys[6], (B, num_hidden, H, W), jnp.float32)
    c_t = jax.random.normal(keys[7], (B, num_hidden, H, W), jnp.float32)
    m_t = jax.random.normal(keys[8], (B, num_hidden, H, W), jnp.float32)

    fwd = jax.jit(functools.partial(st_lstm_cell, num_hidden=num_hidden))
    h_new, c_new, m_new = fwd(params, x_t, h_t, c_t, m_t)
    jax.block_until_ready((h_new, c_new, m_new))

    h_ref, c_ref, m_ref = reference(params, x_t, h_t, c_t, m_t, num_hidden)
    np.testing.assert_allclose(np.asarray(h_new), np.asarray(h_ref),
                               rtol=1e-4, atol=1e-4)
    np.testing.assert_allclose(np.asarray(c_new), np.asarray(c_ref),
                               rtol=1e-4, atol=1e-4)
    np.testing.assert_allclose(np.asarray(m_new), np.asarray(m_ref),
                               rtol=1e-4, atol=1e-4)

    print("KERNEL_OK")
</pallas_src>

<mosaic_0001>
module attributes {stable_mosaic.version = 11 : i64} {
  func.func @_st_lstm_kernel(%arg0: i32, %arg1: memref<1x18x18x68xf32, #tpu.memory_space<vmem>>, %arg2: memref<1x16x16x32xf32, #tpu.memory_space<vmem>>, %arg3: memref<1x16x16x32xf32, #tpu.memory_space<vmem>>, %arg4: memref<3x3x68x224xf32, #tpu.memory_space<vmem>>, %arg5: memref<3x3x64x64xf32, #tpu.memory_space<vmem>>, %arg6: memref<1x16x16x32xf32, #tpu.memory_space<vmem>>, %arg7: memref<1x16x16x32xf32, #tpu.memory_space<vmem>>, %arg8: memref<1x16x16x32xf32, #tpu.memory_space<vmem>>, %arg9: memref<18x18x64xf32, #tpu.memory_space<vmem>>) attributes {dimension_semantics = [#tpu.dimension_semantics<parallel>], iteration_bounds = array<i64: 2>, scalar_prefetch = 0 : i64, scratch_operands = 1 : i64, tpu.core_type = #tpu.core_type<tc>, window_params = [{transform_indices = @transform_0, window_bounds = array<i64: 1, 18, 18, 68>}, {transform_indices = @transform_1, window_bounds = array<i64: 1, 16, 16, 32>}, {transform_indices = @transform_2, window_bounds = array<i64: 1, 16, 16, 32>}, {pipeline_mode = #tpu.pipeline_mode<synchronous>, transform_indices = @transform_3, window_bounds = array<i64: 3, 3, 68, 224>}, {pipeline_mode = #tpu.pipeline_mode<synchronous>, transform_indices = @transform_4, window_bounds = array<i64: 3, 3, 64, 64>}, {transform_indices = @transform_5, window_bounds = array<i64: 1, 16, 16, 32>}, {transform_indices = @transform_6, window_bounds = array<i64: 1, 16, 16, 32>}, {transform_indices = @transform_7, window_bounds = array<i64: 1, 16, 16, 32>}]} {
    %cst = arith.constant 0.000000e+00 : f32
    %0 = vector.broadcast %cst : f32 to vector<256x224xf32>
    %c0 = arith.constant 0 : index
    %c0_0 = arith.constant 0 : index
    %c0_1 = arith.constant 0 : index
    %c0_2 = arith.constant 0 : index
    %1 = vector.load %arg1[%c0, %c0_0, %c0_1, %c0_2] : memref<1x18x18x68xf32, #tpu.memory_space<vmem>>, vector<1x16x16x68xf32>
    %2 = vector.shape_cast %1 : vector<1x16x16x68xf32> to vector<16x16x68xf32>
    %3 = vector.shape_cast %2 : vector<16x16x68xf32> to vector<256x68xf32>
    %c0_3 = arith.constant 0 : index
    %c0_4 = arith.constant 0 : index
    %c0_5 = arith.constant 0 : index
    %c0_6 = arith.constant 0 : index
    %4 = vector.load %arg4[%c0_3, %c0_4, %c0_5, %c0_6] : memref<3x3x68x224xf32, #tpu.memory_space<vmem>>, vector<1x1x68x224xf32>
    %5 = vector.shape_cast %4 : vector<1x1x68x224xf32> to vector<68x224xf32>
    %cst_7 = arith.constant dense<0.000000e+00> : vector<256x224xf32>
    %6 = tpu.matmul %3, %5, %cst_7 {dimension_numbers = #tpu.dot_dimension_numbers<[1], [0], [0], [1], [0, 0, 1, 1], [], []>} : vector<256x68xf32>, vector<68x224xf32>, vector<256x224xf32> -> vector<256x224xf32>
    %7 = arith.addf %0, %6 : vector<256x224xf32>
    %c0_8 = arith.constant 0 : index
    %c0_9 = arith.constant 0 : index
    %c1 = arith.constant 1 : index
    %c0_10 = arith.constant 0 : index
    %8 = vector.load %arg1[%c0_8, %c0_9, %c1, %c0_10] : memref<1x18x18x68xf32, #tpu.memory_space<vmem>>, vector<1x16x16x68xf32>
    %9 = vector.shape_cast %8 : vector<1x16x16x68xf32> to vector<16x16x68xf32>
    %10 = vector.shape_cast %9 : vector<16x16x68xf32> to vector<256x68xf32>
    %c0_11 = arith.constant 0 : index
    %c1_12 = arith.constant 1 : index
    %c0_13 = arith.constant 0 : index
    %c0_14 = arith.constant 0 : index
    %11 = vector.load %arg4[%c0_11, %c1_12, %c0_13, %c0_14] : memref<3x3x68x224xf32, #tpu.memory_space<vmem>>, vector<1x1x68x224xf32>
    %12 = vector.shape_cast %11 : vector<1x1x68x224xf32> to vector<68x224xf32>
    %cst_15 = arith.constant dense<0.000000e+00> : vector<256x224xf32>
    %13 = tpu.matmul %10, %12, %cst_15 {dimension_numbers = #tpu.dot_dimension_numbers<[1], [0], [0], [1], [0, 0, 1, 1], [], []>} : vector<256x68xf32>, vector<68x224xf32>, vector<256x224xf32> -> vector<256x224xf32>
    %14 = arith.addf %7, %13 : vector<256x224xf32>
    %c0_16 = arith.constant 0 : index
    %c0_17 = arith.constant 0 : index
    %c2 = arith.constant 2 : index
    %c0_18 = arith.constant 0 : index
    %15 = vector.load %arg1[%c0_16, %c0_17, %c2, %c0_18] : memref<1x18x18x68xf32, #tpu.memory_space<vmem>>, vector<1x16x16x68xf32>
    %16 = vector.shape_cast %15 : vector<1x16x16x68xf32> to vector<16x16x68xf32>
    %17 = vector.shape_cast %16 : vector<16x16x68xf32> to vector<256x68xf32>
    %c0_19 = arith.constant 0 : index
    %c2_20 = arith.constant 2 : index
    %c0_21 = arith.constant 0 : index
    %c0_22 = arith.constant 0 : index
    %18 = vector.load %arg4[%c0_19, %c2_20, %c0_21, %c0_22] : memref<3x3x68x224xf32, #tpu.memory_space<vmem>>, vector<1x1x68x224xf32>
    %19 = vector.shape_cast %18 : vector<1x1x68x224xf32> to vector<68x224xf32>
    %cst_23 = arith.constant dense<0.000000e+00> : vector<256x224xf32>
    %20 = tpu.matmul %17, %19, %cst_23 {dimension_numbers = #tpu.dot_dimension_numbers<[1], [0], [0], [1], [0, 0, 1, 1], [], []>} : vector<256x68xf32>, vector<68x224xf32>, vector<256x224xf32> -> vector<256x224xf32>
    %21 = arith.addf %14, %20 : vector<256x224xf32>
    %c0_24 = arith.constant 0 : index
    %c1_25 = arith.constant 1 : index
    %c0_26 = arith.constant 0 : index
    %c0_27 = arith.constant 0 : index
    %22 = vector.load %arg1[%c0_24, %c1_25, %c0_26, %c0_27] : memref<1x18x18x68xf32, #tpu.memory_space<vmem>>, vector<1x16x16x68xf32>
    %23 = vector.shape_cast %22 : vector<1x16x16x68xf32> to vector<16x16x68xf32>
    %24 = vector.shape_cast %23 : vector<16x16x68xf32> to vector<256x68xf32>
    %c1_28 = arith.constant 1 : index
    %c0_29 = arith.constant 0 : index
    %c0_30 = arith.constant 0 : index
    %c0_31 = arith.constant 0 : index
    %25 = vector.load %arg4[%c1_28, %c0_29, %c0_30, %c0_31] : memref<3x3x68x224xf32, #tpu.memory_space<vmem>>, vector<1x1x68x224xf32>
    %26 = vector.shape_cast %25 : vector<1x1x68x224xf32> to vector<68x224xf32>
    %cst_32 = arith.constant dense<0.000000e+00> : vector<256x224xf32>
    %27 = tpu.matmul %24, %26, %cst_32 {dimension_numbers = #tpu.dot_dimension_numbers<[1], [0], [0], [1], [0, 0, 1, 1], [], []>} : vector<256x68xf32>, vector<68x224xf32>, vector<256x224xf32> -> vector<256x224xf32>
    %28 = arith.addf %21, %27 : vector<256x224xf32>
    %c0_33 = arith.constant 0 : index
    %c1_34 = arith.constant 1 : index
    %c1_35 = arith.constant 1 : index
    %c0_36 = arith.constant 0 : index
    %29 = vector.load %arg1[%c0_33, %c1_34, %c1_35, %c0_36] : memref<1x18x18x68xf32, #tpu.memory_space<vmem>>, vector<1x16x16x68xf32>
    %30 = vector.shape_cast %29 : vector<1x16x16x68xf32> to vector<16x16x68xf32>
    %31 = vector.shape_cast %30 : vector<16x16x68xf32> to vector<256x68xf32>
    %c1_37 = arith.constant 1 : index
    %c1_38 = arith.constant 1 : index
    %c0_39 = arith.constant 0 : index
    %c0_40 = arith.constant 0 : index
    %32 = vector.load %arg4[%c1_37, %c1_38, %c0_39, %c0_40] : memref<3x3x68x224xf32, #tpu.memory_space<vmem>>, vector<1x1x68x224xf32>
    %33 = vector.shape_cast %32 : vector<1x1x68x224xf32> to vector<68x224xf32>
    %cst_41 = arith.constant dense<0.000000e+00> : vector<256x224xf32>
    %34 = tpu.matmul %31, %33, %cst_41 {dimension_numbers = #tpu.dot_dimension_numbers<[1], [0], [0], [1], [0, 0, 1, 1], [], []>} : vector<256x68xf32>, vector<68x224xf32>, vector<256x224xf32> -> vector<256x224xf32>
    %35 = arith.addf %28, %34 : vector<256x224xf32>
    %c0_42 = arith.constant 0 : index
    %c1_43 = arith.constant 1 : index
    %c2_44 = arith.constant 2 : index
    %c0_45 = arith.constant 0 : index
    %36 = vector.load %arg1[%c0_42, %c1_43, %c2_44, %c0_45] : memref<1x18x18x68xf32, #tpu.memory_space<vmem>>, vector<1x16x16x68xf32>
    %37 = vector.shape_cast %36 : vector<1x16x16x68xf32> to vector<16x16x68xf32>
    %38 = vector.shape_cast %37 : vector<16x16x68xf32> to vector<256x68xf32>
    %c1_46 = arith.constant 1 : index
    %c2_47 = arith.constant 2 : index
    %c0_48 = arith.constant 0 : index
    %c0_49 = arith.constant 0 : index
    %39 = vector.load %arg4[%c1_46, %c2_47, %c0_48, %c0_49] : memref<3x3x68x224xf32, #tpu.memory_space<vmem>>, vector<1x1x68x224xf32>
    %40 = vector.shape_cast %39 : vector<1x1x68x224xf32> to vector<68x224xf32>
    %cst_50 = arith.constant dense<0.000000e+00> : vector<256x224xf32>
    %41 = tpu.matmul %38, %40, %cst_50 {dimension_numbers = #tpu.dot_dimension_numbers<[1], [0], [0], [1], [0, 0, 1, 1], [], []>} : vector<256x68xf32>, vector<68x224xf32>, vector<256x224xf32> -> vector<256x224xf32>
    %42 = arith.addf %35, %41 : vector<256x224xf32>
    %c0_51 = arith.constant 0 : index
    %c2_52 = arith.constant 2 : index
    %c0_53 = arith.constant 0 : index
    %c0_54 = arith.constant 0 : index
    %43 = vector.load %arg1[%c0_51, %c2_52, %c0_53, %c0_54] : memref<1x18x18x68xf32, #tpu.memory_space<vmem>>, vector<1x16x16x68xf32>
    %44 = vector.shape_cast %43 : vector<1x16x16x68xf32> to vector<16x16x68xf32>
    %45 = vector.shape_cast %44 : vector<16x16x68xf32> to vector<256x68xf32>
    %c2_55 = arith.constant 2 : index
    %c0_56 = arith.constant 0 : index
    %c0_57 = arith.constant 0 : index
    %c0_58 = arith.constant 0 : index
    %46 = vector.load %arg4[%c2_55, %c0_56, %c0_57, %c0_58] : memref<3x3x68x224xf32, #tpu.memory_space<vmem>>, vector<1x1x68x224xf32>
    %47 = vector.shape_cast %46 : vector<1x1x68x224xf32> to vector<68x224xf32>
    %cst_59 = arith.constant dense<0.000000e+00> : vector<256x224xf32>
    %48 = tpu.matmul %45, %47, %cst_59 {dimension_numbers = #tpu.dot_dimension_numbers<[1], [0], [0], [1], [0, 0, 1, 1], [], []>} : vector<256x68xf32>, vector<68x224xf32>, vector<256x224xf32> -> vector<256x224xf32>
    %49 = arith.addf %42, %48 : vector<256x224xf32>
    %c0_60 = arith.constant 0 : index
    %c2_61 = arith.constant 2 : index
    %c1_62 = arith.constant 1 : index
    %c0_63 = arith.constant 0 : index
    %50 = vector.load %arg1[%c0_60, %c2_61, %c1_62, %c0_63] : memref<1x18x18x68xf32, #tpu.memory_space<vmem>>, vector<1x16x16x68xf32>
    %51 = vector.shape_cast %50 : vector<1x16x16x68xf32> to vector<16x16x68xf32>
    %52 = vector.shape_cast %51 : vector<16x16x68xf32> to vector<256x68xf32>
    %c2_64 = arith.constant 2 : index
    %c1_65 = arith.constant 1 : index
    %c0_66 = arith.constant 0 : index
    %c0_67 = arith.constant 0 : index
    %53 = vector.load %arg4[%c2_64, %c1_65, %c0_66, %c0_67] : memref<3x3x68x224xf32, #tpu.memory_space<vmem>>, vector<1x1x68x224xf32>
    %54 = vector.shape_cast %53 : vector<1x1x68x224xf32> to vector<68x224xf32>
    %cst_68 = arith.constant dense<0.000000e+00> : vector<256x224xf32>
    %55 = tpu.matmul %52, %54, %cst_68 {dimension_numbers = #tpu.dot_dimension_numbers<[1], [0], [0], [1], [0, 0, 1, 1], [], []>} : vector<256x68xf32>, vector<68x224xf32>, vector<256x224xf32> -> vector<256x224xf32>
    %56 = arith.addf %49, %55 : vector<256x224xf32>
    %c0_69 = arith.constant 0 : index
    %c2_70 = arith.constant 2 : index
    %c2_71 = arith.constant 2 : index
    %c0_72 = arith.constant 0 : index
    %57 = vector.load %arg1[%c0_69, %c2_70, %c2_71, %c0_72] : memref<1x18x18x68xf32, #tpu.memory_space<vmem>>, vector<1x16x16x68xf32>
    %58 = vector.shape_cast %57 : vector<1x16x16x68xf32> to vector<16x16x68xf32>
    %59 = vector.shape_cast %58 : vector<16x16x68xf32> to vector<256x68xf32>
    %c2_73 = arith.constant 2 : index
    %c2_74 = arith.constant 2 : index
    %c0_75 = arith.constant 0 : index
    %c0_76 = arith.constant 0 : index
    %60 = vector.load %arg4[%c2_73, %c2_74, %c0_75, %c0_76] : memref<3x3x68x224xf32, #tpu.memory_space<vmem>>, vector<1x1x68x224xf32>
    %61 = vector.shape_cast %60 : vector<1x1x68x224xf32> to vector<68x224xf32>
    %cst_77 = arith.constant dense<0.000000e+00> : vector<256x224xf32>
    %62 = tpu.matmul %59, %61, %cst_77 {dimension_numbers = #tpu.dot_dimension_numbers<[1], [0], [0], [1], [0, 0, 1, 1], [], []>} : vector<256x68xf32>, vector<68x224xf32>, vector<256x224xf32> -> vector<256x224xf32>
    %63 = arith.addf %56, %62 : vector<256x224xf32>
    %c0_78 = arith.constant 0 : index
    %c0_79 = arith.constant 0 : index
    %c0_80 = arith.constant 0 : index
    %c0_81 = arith.constant 0 : index
    %64 = vector.load %arg2[%c0_78, %c0_79, %c0_80, %c0_81] : memref<1x16x16x32xf32, #tpu.memory_space<vmem>>, vector<1x16x16x32xf32>
    %65 = vector.shape_cast %64 : vector<1x16x16x32xf32> to vector<16x16x32xf32>
    %66 = vector.shape_cast %65 : vector<16x16x32xf32> to vector<256x32xf32>
    %c0_82 = arith.constant 0 : index
    %c0_83 = arith.constant 0 : index
    %c0_84 = arith.constant 0 : index
    %c0_85 = arith.constant 0 : index
    %67 = vector.load %arg3[%c0_82, %c0_83, %c0_84, %c0_85] : memref<1x16x16x32xf32, #tpu.memory_space<vmem>>, vector<1x16x16x32xf32>
    %68 = vector.shape_cast %67 : vector<1x16x16x32xf32> to vector<16x16x32xf32>
    %69 = vector.shape_cast %68 : vector<16x16x32xf32> to vector<256x32xf32>
    %70 = vector.extract_strided_slice %63 {offsets = [0, 0], sizes = [256, 32], strides = [1, 1]} : vector<256x224xf32> to vector<256x32xf32>
    %71 = arith.negf %70 : vector<256x32xf32>
    %72 = math.exp %71 : vector<256x32xf32>
    %cst_86 = arith.constant 1.000000e+00 : f32
    %73 = vector.broadcast %cst_86 : f32 to vector<256x32xf32>
    %74 = arith.addf %73, %72 : vector<256x32xf32>
    %75 = arith.divf %73, %74 : vector<256x32xf32>
    %76 = vector.extract_strided_slice %63 {offsets = [0, 32], sizes = [256, 32], strides = [1, 1]} : vector<256x224xf32> to vector<256x32xf32>
    %cst_87 = arith.constant 1.000000e+00 : f32
    %77 = vector.broadcast %cst_87 : f32 to vector<256x32xf32>
    %78 = arith.addf %76, %77 : vector<256x32xf32>
    %79 = arith.negf %78 : vector<256x32xf32>
    %80 = math.exp %79 : vector<256x32xf32>
    %cst_88 = arith.constant 1.000000e+00 : f32
    %81 = vector.broadcast %cst_88 : f32 to vector<256x32xf32>
    %82 = arith.addf %81, %80 : vector<256x32xf32>
    %83 = arith.divf %81, %82 : vector<256x32xf32>
    %84 = vector.extract_strided_slice %63 {offsets = [0, 64], sizes = [256, 32], strides = [1, 1]} : vector<256x224xf32> to vector<256x32xf32>
    %85 = math.tanh %84 : vector<256x32xf32>
    %86 = arith.mulf %83, %66 : vector<256x32xf32>
    %87 = arith.mulf %75, %85 : vector<256x32xf32>
    %88 = arith.addf %86, %87 : vector<256x32xf32>
    %89 = vector.extract_strided_slice %63 {offsets = [0, 96], sizes = [256, 32], strides = [1, 1]} : vector<256x224xf32> to vector<256x32xf32>
    %90 = arith.negf %89 : vector<256x32xf32>
    %91 = math.exp %90 : vector<256x32xf32>
    %cst_89 = arith.constant 1.000000e+00 : f32
    %92 = vector.broadcast %cst_89 : f32 to vector<256x32xf32>
    %93 = arith.addf %92, %91 : vector<256x32xf32>
    %94 = arith.divf %92, %93 : vector<256x32xf32>
    %95 = vector.extract_strided_slice %63 {offsets = [0, 128], sizes = [256, 32], strides = [1, 1]} : vector<256x224xf32> to vector<256x32xf32>
    %cst_90 = arith.constant 1.000000e+00 : f32
    %96 = vector.broadcast %cst_90 : f32 to vector<256x32xf32>
    %97 = arith.addf %95, %96 : vector<256x32xf32>
    %98 = arith.negf %97 : vector<256x32xf32>
    %99 = math.exp %98 : vector<256x32xf32>
    %cst_91 = arith.constant 1.000000e+00 : f32
    %100 = vector.broadcast %cst_91 : f32 to vector<256x32xf32>
    %101 = arith.addf %100, %99 : vector<256x32xf32>
    %102 = arith.divf %100, %101 : vector<256x32xf32>
    %103 = vector.extract_strided_slice %63 {offsets = [0, 160], sizes = [256, 32], strides = [1, 1]} : vector<256x224xf32> to vector<256x32xf32>
    %104 = math.tanh %103 : vector<256x32xf32>
    %105 = arith.mulf %102, %69 : vector<256x32xf32>
    %106 = arith.mulf %94, %104 : vector<256x32xf32>
    %107 = arith.addf %105, %106 : vector<256x32xf32>
    %108 = vector.extract_strided_slice %63 {offsets = [0, 192], sizes = [256, 32], strides = [1, 1]} : vector<256x224xf32> to vector<256x32xf32>
    %cst_92 = arith.constant 0.000000e+00 : f32
    %109 = vector.broadcast %cst_92 : f32 to vector<18x18x64xf32>
    %c0_93 = arith.constant 0 : index
    %c0_94 = arith.constant 0 : index
    %c0_95 = arith.constant 0 : index
    %110 = vector.load %arg9[%c0_93, %c0_94, %c0_95] : memref<18x18x64xf32, #tpu.memory_space<vmem>>, vector<18x18x64xf32>
    tpu.vector_store %arg9[%c0_93, %c0_94, %c0_95], %109 {strides = array<i32>} : memref<18x18x64xf32, #tpu.memory_space<vmem>>, vector<18x18x64xf32>,
    %111 = tpu.concatenate %88, %107 in 1 : vector<256x32xf32>, vector<256x32xf32> -> vector<256x64xf32>
    %112 = vector.shape_cast %111 : vector<256x64xf32> to vector<16x16x64xf32>
    %c1_96 = arith.constant 1 : index
    %c1_97 = arith.constant 1 : index
    %c0_98 = arith.constant 0 : index
    %113 = vector.load %arg9[%c1_96, %c1_97, %c0_98] : memref<18x18x64xf32, #tpu.memory_space<vmem>>, vector<16x16x64xf32>
    tpu.vector_store %arg9[%c1_96, %c1_97, %c0_98], %112 {strides = array<i32>} : memref<18x18x64xf32, #tpu.memory_space<vmem>>, vector<16x16x64xf32>,
    %cst_99 = arith.constant 0.000000e+00 : f32
    %114 = vector.broadcast %cst_99 : f32 to vector<256x64xf32>
    %c0_100 = arith.constant 0 : index
    %c0_101 = arith.constant 0 : index
    %c0_102 = arith.constant 0 : index
    %115 = vector.load %arg9[%c0_100, %c0_101, %c0_102] : memref<18x18x64xf32, #tpu.memory_space<vmem>>, vector<16x16x64xf32>
    %116 = vector.shape_cast %115 : vector<16x16x64xf32> to vector<256x64xf32>
    %c0_103 = arith.constant 0 : index
    %c0_104 = arith.constant 0 : index
    %c0_105 = arith.constant 0 : index
    %c0_106 = arith.constant 0 : index
    %117 = vector.load %arg5[%c0_103, %c0_104, %c0_105, %c0_106] : memref<3x3x64x64xf32, #tpu.memory_space<vmem>>, vector<1x1x64x64xf32>
    %118 = vector.shape_cast %117 : vector<1x1x64x64xf32> to vector<64x64xf32>
    %cst_107 = arith.constant dense<0.000000e+00> : vector<256x64xf32>
    %119 = tpu.matmul %116, %118, %cst_107 {dimension_numbers = #tpu.dot_dimension_numbers<[1], [0], [0], [1], [0, 0, 1, 1], [], []>} : vector<256x64xf32>, vector<64x64xf32>, vector<256x64xf32> -> vector<256x64xf32>
    %120 = arith.addf %114, %119 : vector<256x64xf32>
    %c0_108 = arith.constant 0 : index
    %c1_109 = arith.constant 1 : index
    %c0_110 = arith.constant 0 : index
    %121 = vector.load %arg9[%c0_108, %c1_109, %c0_110] : memref<18x18x64xf32, #tpu.memory_space<vmem>>, vector<16x16x64xf32>
    %122 = vector.shape_cast %121 : vector<16x16x64xf32> to vector<256x64xf32>
    %c0_111 = arith.constant 0 : index
    %c1_112 = arith.constant 1 : index
    %c0_113 = arith.constant 0 : index
    %c0_114 = arith.constant 0 : index
    %123 = vector.load %arg5[%c0_111, %c1_112, %c0_113, %c0_114] : memref<3x3x64x64xf32, #tpu.memory_space<vmem>>, vector<1x1x64x64xf32>
    %124 = vector.shape_cast %123 : vector<1x1x64x64xf32> to vector<64x64xf32>
    %cst_115 = arith.constant dense<0.000000e+00> : vector<256x64xf32>
    %125 = tpu.matmul %122, %124, %cst_115 {dimension_numbers = #tpu.dot_dimension_numbers<[1], [0], [0], [1], [0, 0, 1, 1], [], []>} : vector<256x64xf32>, vector<64x64xf32>, vector<256x64xf32> -> vector<256x64xf32>
    %126 = arith.addf %120, %125 : vector<256x64xf32>
    %c0_116 = arith.constant 0 : index
    %c2_117 = arith.constant 2 : index
    %c0_118 = arith.constant 0 : index
    %127 = vector.load %arg9[%c0_116, %c2_117, %c0_118] : memref<18x18x64xf32, #tpu.memory_space<vmem>>, vector<16x16x64xf32>
    %128 = vector.shape_cast %127 : vector<16x16x64xf32> to vector<256x64xf32>
    %c0_119 = arith.constant 0 : index
    %c2_120 = arith.constant 2 : index
    %c0_121 = arith.constant 0 : index
    %c0_122 = arith.constant 0 : index
    %129 = vector.load %arg5[%c0_119, %c2_120, %c0_121, %c0_122] : memref<3x3x64x64xf32, #tpu.memory_space<vmem>>, vector<1x1x64x64xf32>
    %130 = vector.shape_cast %129 : vector<1x1x64x64xf32> to vector<64x64xf32>
    %cst_123 = arith.constant dense<0.000000e+00> : vector<256x64xf32>
    %131 = tpu.matmul %128, %130, %cst_123 {dimension_numbers = #tpu.dot_dimension_numbers<[1], [0], [0], [1], [0, 0, 1, 1], [], []>} : vector<256x64xf32>, vector<64x64xf32>, vector<256x64xf32> -> vector<256x64xf32>
    %132 = arith.addf %126, %131 : vector<256x64xf32>
    %c1_124 = arith.constant 1 : index
    %c0_125 = arith.constant 0 : index
    %c0_126 = arith.constant 0 : index
    %133 = vector.load %arg9[%c1_124, %c0_125, %c0_126] : memref<18x18x64xf32, #tpu.memory_space<vmem>>, vector<16x16x64xf32>
    %134 = vector.shape_cast %133 : vector<16x16x64xf32> to vector<256x64xf32>
    %c1_127 = arith.constant 1 : index
    %c0_128 = arith.constant 0 : index
    %c0_129 = arith.constant 0 : index
    %c0_130 = arith.constant 0 : index
    %135 = vector.load %arg5[%c1_127, %c0_128, %c0_129, %c0_130] : memref<3x3x64x64xf32, #tpu.memory_space<vmem>>, vector<1x1x64x64xf32>
    %136 = vector.shape_cast %135 : vector<1x1x64x64xf32> to vector<64x64xf32>
    %cst_131 = arith.constant dense<0.000000e+00> : vector<256x64xf32>
    %137 = tpu.matmul %134, %136, %cst_131 {dimension_numbers = #tpu.dot_dimension_numbers<[1], [0], [0], [1], [0, 0, 1, 1], [], []>} : vector<256x64xf32>, vector<64x64xf32>, vector<256x64xf32> -> vector<256x64xf32>
    %138 = arith.addf %132, %137 : vector<256x64xf32>
    %c1_132 = arith.constant 1 : index
    %c1_133 = arith.constant 1 : index
    %c0_134 = arith.constant 0 : index
    %139 = vector.load %arg9[%c1_132, %c1_133, %c0_134] : memref<18x18x64xf32, #tpu.memory_space<vmem>>, vector<16x16x64xf32>
    %140 = vector.shape_cast %139 : vector<16x16x64xf32> to vector<256x64xf32>
    %c1_135 = arith.constant 1 : index
    %c1_136 = arith.constant 1 : index
    %c0_137 = arith.constant 0 : index
    %c0_138 = arith.constant 0 : index
    %141 = vector.load %arg5[%c1_135, %c1_136, %c0_137, %c0_138] : memref<3x3x64x64xf32, #tpu.memory_space<vmem>>, vector<1x1x64x64xf32>
    %142 = vector.shape_cast %141 : vector<1x1x64x64xf32> to vector<64x64xf32>
    %cst_139 = arith.constant dense<0.000000e+00> : vector<256x64xf32>
    %143 = tpu.matmul %140, %142, %cst_139 {dimension_numbers = #tpu.dot_dimension_numbers<[1], [0], [0], [1], [0, 0, 1, 1], [], []>} : vector<256x64xf32>, vector<64x64xf32>, vector<256x64xf32> -> vector<256x64xf32>
    %144 = arith.addf %138, %143 : vector<256x64xf32>
    %c1_140 = arith.constant 1 : index
    %c2_141 = arith.constant 2 : index
    %c0_142 = arith.constant 0 : index
    %145 = vector.load %arg9[%c1_140, %c2_141, %c0_142] : memref<18x18x64xf32, #tpu.memory_space<vmem>>, vector<16x16x64xf32>
    %146 = vector.shape_cast %145 : vector<16x16x64xf32> to vector<256x64xf32>
    %c1_143 = arith.constant 1 : index
    %c2_144 = arith.constant 2 : index
    %c0_145 = arith.constant 0 : index
    %c0_146 = arith.constant 0 : index
    %147 = vector.load %arg5[%c1_143, %c2_144, %c0_145, %c0_146] : memref<3x3x64x64xf32, #tpu.memory_space<vmem>>, vector<1x1x64x64xf32>
    %148 = vector.shape_cast %147 : vector<1x1x64x64xf32> to vector<64x64xf32>
    %cst_147 = arith.constant dense<0.000000e+00> : vector<256x64xf32>
    %149 = tpu.matmul %146, %148, %cst_147 {dimension_numbers = #tpu.dot_dimension_numbers<[1], [0], [0], [1], [0, 0, 1, 1], [], []>} : vector<256x64xf32>, vector<64x64xf32>, vector<256x64xf32> -> vector<256x64xf32>
    %150 = arith.addf %144, %149 : vector<256x64xf32>
    %c2_148 = arith.constant 2 : index
    %c0_149 = arith.constant 0 : index
    %c0_150 = arith.constant 0 : index
    %151 = vector.load %arg9[%c2_148, %c0_149, %c0_150] : memref<18x18x64xf32, #tpu.memory_space<vmem>>, vector<16x16x64xf32>
    %152 = vector.shape_cast %151 : vector<16x16x64xf32> to vector<256x64xf32>
    %c2_151 = arith.constant 2 : index
    %c0_152 = arith.constant 0 : index
    %c0_153 = arith.constant 0 : index
    %c0_154 = arith.constant 0 : index
    %153 = vector.load %arg5[%c2_151, %c0_152, %c0_153, %c0_154] : memref<3x3x64x64xf32, #tpu.memory_space<vmem>>, vector<1x1x64x64xf32>
    %154 = vector.shape_cast %153 : vector<1x1x64x64xf32> to vector<64x64xf32>
    %cst_155 = arith.constant dense<0.000000e+00> : vector<256x64xf32>
    %155 = tpu.matmul %152, %154, %cst_155 {dimension_numbers = #tpu.dot_dimension_numbers<[1], [0], [0], [1], [0, 0, 1, 1], [], []>} : vector<256x64xf32>, vector<64x64xf32>, vector<256x64xf32> -> vector<256x64xf32>
    %156 = arith.addf %150, %155 : vector<256x64xf32>
    %c2_156 = arith.constant 2 : index
    %c1_157 = arith.constant 1 : index
    %c0_158 = arith.constant 0 : index
    %157 = vector.load %arg9[%c2_156, %c1_157, %c0_158] : memref<18x18x64xf32, #tpu.memory_space<vmem>>, vector<16x16x64xf32>
    %158 = vector.shape_cast %157 : vector<16x16x64xf32> to vector<256x64xf32>
    %c2_159 = arith.constant 2 : index
    %c1_160 = arith.constant 1 : index
    %c0_161 = arith.constant 0 : index
    %c0_162 = arith.constant 0 : index
    %159 = vector.load %arg5[%c2_159, %c1_160, %c0_161, %c0_162] : memref<3x3x64x64xf32, #tpu.memory_space<vmem>>, vector<1x1x64x64xf32>
    %160 = vector.shape_cast %159 : vector<1x1x64x64xf32> to vector<64x64xf32>
    %cst_163 = arith.constant dense<0.000000e+00> : vector<256x64xf32>
    %161 = tpu.matmul %158, %160, %cst_163 {dimension_numbers = #tpu.dot_dimension_numbers<[1], [0], [0], [1], [0, 0, 1, 1], [], []>} : vector<256x64xf32>, vector<64x64xf32>, vector<256x64xf32> -> vector<256x64xf32>
    %162 = arith.addf %156, %161 : vector<256x64xf32>
    %c2_164 = arith.constant 2 : index
    %c2_165 = arith.constant 2 : index
    %c0_166 = arith.constant 0 : index
    %163 = vector.load %arg9[%c2_164, %c2_165, %c0_166] : memref<18x18x64xf32, #tpu.memory_space<vmem>>, vector<16x16x64xf32>
    %164 = vector.shape_cast %163 : vector<16x16x64xf32> to vector<256x64xf32>
    %c2_167 = arith.constant 2 : index
    %c2_168 = arith.constant 2 : index
    %c0_169 = arith.constant 0 : index
    %c0_170 = arith.constant 0 : index
    %165 = vector.load %arg5[%c2_167, %c2_168, %c0_169, %c0_170] : memref<3x3x64x64xf32, #tpu.memory_space<vmem>>, vector<1x1x64x64xf32>
    %166 = vector.shape_cast %165 : vector<1x1x64x64xf32> to vector<64x64xf32>
    %cst_171 = arith.constant dense<0.000000e+00> : vector<256x64xf32>
    %167 = tpu.matmul %164, %166, %cst_171 {dimension_numbers = #tpu.dot_dimension_numbers<[1], [0], [0], [1], [0, 0, 1, 1], [], []>} : vector<256x64xf32>, vector<64x64xf32>, vector<256x64xf32> -> vector<256x64xf32>
    %168 = arith.addf %162, %167 : vector<256x64xf32>
    %169 = vector.extract_strided_slice %168 {offsets = [0, 0], sizes = [256, 32], strides = [1, 1]} : vector<256x64xf32> to vector<256x32xf32>
    %170 = arith.addf %108, %169 : vector<256x32xf32>
    %171 = arith.negf %170 : vector<256x32xf32>
    %172 = math.exp %171 : vector<256x32xf32>
    %cst_172 = arith.constant 1.000000e+00 : f32
    %173 = vector.broadcast %cst_172 : f32 to vector<256x32xf32>
    %174 = arith.addf %173, %172 : vector<256x32xf32>
    %175 = arith.divf %173, %174 : vector<256x32xf32>
    %176 = vector.extract_strided_slice %168 {offsets = [0, 32], sizes = [256, 32], strides = [1, 1]} : vector<256x64xf32> to vector<256x32xf32>
    %177 = math.tanh %176 : vector<256x32xf32>
    %178 = arith.mulf %175, %177 : vector<256x32xf32>
    %179 = vector.shape_cast %178 : vector<256x32xf32> to vector<16x16x32xf32>
    %c0_173 = arith.constant 0 : index
    %c0_174 = arith.constant 0 : index
    %c0_175 = arith.constant 0 : index
    %c0_176 = arith.constant 0 : index
    %180 = vector.load %arg6[%c0_173, %c0_174, %c0_175, %c0_176] : memref<1x16x16x32xf32, #tpu.memory_space<vmem>>, vector<1x16x16x32xf32>
    %181 = vector.shape_cast %180 : vector<1x16x16x32xf32> to vector<16x16x32xf32>
    %182 = vector.shape_cast %179 : vector<16x16x32xf32> to vector<1x16x16x32xf32>
    tpu.vector_store %arg6[%c0_173, %c0_174, %c0_175, %c0_176], %182 {strides = array<i32>} : memref<1x16x16x32xf32, #tpu.memory_space<vmem>>, vector<1x16x16x32xf32>,
    %183 = vector.shape_cast %88 : vector<256x32xf32> to vector<16x16x32xf32>
    %c0_177 = arith.constant 0 : index
    %c0_178 = arith.constant 0 : index
    %c0_179 = arith.constant 0 : index
    %c0_180 = arith.constant 0 : index
    %184 = vector.load %arg7[%c0_177, %c0_178, %c0_179, %c0_180] : memref<1x16x16x32xf32, #tpu.memory_space<vmem>>, vector<1x16x16x32xf32>
    %185 = vector.shape_cast %184 : vector<1x16x16x32xf32> to vector<16x16x32xf32>
    %186 = vector.shape_cast %183 : vector<16x16x32xf32> to vector<1x16x16x32xf32>
    tpu.vector_store %arg7[%c0_177, %c0_178, %c0_179, %c0_180], %186 {strides = array<i32>} : memref<1x16x16x32xf32, #tpu.memory_space<vmem>>, vector<1x16x16x32xf32>,
    %187 = vector.shape_cast %107 : vector<256x32xf32> to vector<16x16x32xf32>
    %c0_181 = arith.constant 0 : index
    %c0_182 = arith.constant 0 : index
    %c0_183 = arith.constant 0 : index
    %c0_184 = arith.constant 0 : index
    %188 = vector.load %arg8[%c0_181, %c0_182, %c0_183, %c0_184] : memref<1x16x16x32xf32, #tpu.memory_space<vmem>>, vector<1x16x16x32xf32>
    %189 = vector.shape_cast %188 : vector<1x16x16x32xf32> to vector<16x16x32xf32>
    %190 = vector.shape_cast %187 : vector<16x16x32xf32> to vector<1x16x16x32xf32>
    tpu.vector_store %arg8[%c0_181, %c0_182, %c0_183, %c0_184], %190 {strides = array<i32>} : memref<1x16x16x32xf32, #tpu.memory_space<vmem>>, vector<1x16x16x32xf32>,
    return
  }
  func.func @transform_0(%arg0: i32) -> (i32, i32, i32, i32) {
    %c0_i32 = arith.constant 0 : i32
    %c0_i32_0 = arith.constant 0 : i32
    %c0_i32_1 = arith.constant 0 : i32
    %c0_i32_2 = arith.constant 0 : i32
    return %arg0, %c0_i32, %c0_i32_0, %c0_i32_1 : i32, i32, i32, i32
  }
  func.func @transform_1(%arg0: i32) -> (i32, i32, i32, i32) {
    %c0_i32 = arith.constant 0 : i32
    %c0_i32_0 = arith.constant 0 : i32
    %c0_i32_1 = arith.constant 0 : i32
    %c0_i32_2 = arith.constant 0 : i32
    return %arg0, %c0_i32, %c0_i32_0, %c0_i32_1 : i32, i32, i32, i32
  }
  func.func @transform_2(%arg0: i32) -> (i32, i32, i32, i32) {
    %c0_i32 = arith.constant 0 : i32
    %c0_i32_0 = arith.constant 0 : i32
    %c0_i32_1 = arith.constant 0 : i32
    %c0_i32_2 = arith.constant 0 : i32
    return %arg0, %c0_i32, %c0_i32_0, %c0_i32_1 : i32, i32, i32, i32
  }
  func.func @transform_3(%arg0: i32) -> (i32, i32, i32, i32) {
    %c0_i32 = arith.constant 0 : i32
    %c0_i32_0 = arith.constant 0 : i32
    %c0_i32_1 = arith.constant 0 : i32
    %c0_i32_2 = arith.constant 0 : i32
    %c0_i32_3 = arith.constant 0 : i32
    return %c0_i32, %c0_i32_0, %c0_i32_1, %c0_i32_2 : i32, i32, i32, i32
  }
  func.func @transform_4(%arg0: i32) -> (i32, i32, i32, i32) {
    %c0_i32 = arith.constant 0 : i32
    %c0_i32_0 = arith.constant 0 : i32
    %c0_i32_1 = arith.constant 0 : i32
    %c0_i32_2 = arith.constant 0 : i32
    %c0_i32_3 = arith.constant 0 : i32
    return %c0_i32, %c0_i32_0, %c0_i32_1, %c0_i32_2 : i32, i32, i32, i32
  }
  func.func @transform_5(%arg0: i32) -> (i32, i32, i32, i32) {
    %c0_i32 = arith.constant 0 : i32
    %c0_i32_0 = arith.constant 0 : i32
    %c0_i32_1 = arith.constant 0 : i32
    %c0_i32_2 = arith.constant 0 : i32
    return %arg0, %c0_i32, %c0_i32_0, %c0_i32_1 : i32, i32, i32, i32
  }
  func.func @transform_6(%arg0: i32) -> (i32, i32, i32, i32) {
    %c0_i32 = arith.constant 0 : i32
    %c0_i32_0 = arith.constant 0 : i32
    %c0_i32_1 = arith.constant 0 : i32
    %c0_i32_2 = arith.constant 0 : i32
    return %arg0, %c0_i32, %c0_i32_0, %c0_i32_1 : i32, i32, i32, i32
  }
  func.func @transform_7(%arg0: i32) -> (i32, i32, i32, i32) {
    %c0_i32 = arith.constant 0 : i32
    %c0_i32_0 = arith.constant 0 : i32
    %c0_i32_1 = arith.constant 0 : i32
    %c0_i32_2 = arith.constant 0 : i32
    return %arg0, %c0_i32, %c0_i32_0, %c0_i32_1 : i32, i32, i32, i32
  }
}

</mosaic_0001>

<llo_original>
// kernel: st_lstm_cell.1
$region0: #{st_lstm_cell.1}
  #allocation0 [shape = 'u32[]', space=smem, size = 0x4, offset = 0x4, fixed_abs, tag = 'smem constant byte address 0x4 - core index']
  #allocation1 [shape = 'u32[144,128]{1,0:T(1,128)}', space=vmem, size = 0x12000, scoped, tag = 'internal scratch']
  #allocation2 [shape = 'f32[18,18,64]{2,1,0:T(8,128)}', space=vmem, size = 0x36000, scoped, tag = 'scratch operand']
  %s0 = inlined_call_operand.vmem [shape: f32[2,18,18,68], index: 0, kind: input, shape index: {}]
  %s1 = inlined_call_operand.vmem [shape: f32[2,16,16,32], index: 1, kind: input, shape index: {}]
  %s2 = inlined_call_operand.vmem [shape: f32[2,16,16,32], index: 2, kind: input, shape index: {}]
  %s3 = inlined_call_operand.vmem [shape: f32[3,3,68,224], index: 3, kind: input, shape index: {}]
  %s4 = inlined_call_operand.vmem [shape: f32[3,3,64,64], index: 4, kind: input, shape index: {}]
  %s5 = inlined_call_operand.hbm [shape: f32[2,16,16,32], index: 5, kind: output, shape index: {0}]
  %s6 = inlined_call_operand.hbm [shape: f32[2,16,16,32], index: 6, kind: output, shape index: {1}]
  %s7 = inlined_call_operand.hbm [shape: f32[2,16,16,32], index: 7, kind: output, shape index: {2}]
  %8 = xla_tuple %s5, %s6, %s7
  %s9 = sld [smem:[#allocation0]]
  $region69: #{st_lstm_cell.1} parent=0
    _
  %s11 = ssub.s32 1, %s9
  %s12 = scalar_select 0, %s11, %s9
  $region1: #{st_lstm_cell.1} parent=0
    #allocation3 [shape = 'u8[262144]{0}', space=vmem, size = 0x40000, scoped, tag = 'output window, operand 0']
    #allocation4 [shape = 's32[2]{0}', space=sflag, size = 0x8, scoped, tag = 'scoped memory for st_lstm_cell.1']
    #allocation5 [shape = 'u8[262144]{0}', space=vmem, size = 0x40000, scoped, tag = 'output window, operand 1']
    #allocation6 [shape = 's32[2]{0}', space=sflag, size = 0x8, scoped, tag = 'scoped memory for st_lstm_cell.1']
    #allocation7 [shape = 'u8[262144]{0}', space=vmem, size = 0x40000, scoped, tag = 'output window, operand 2']
    %13 = vsyncpa [#allocation4], 0
    %s14 = scalar_lea.sflag [#allocation4], 1
    %15 = vsyncpa %s14, 0
    %16 = vsyncpa [#allocation6], 0
    %s17 = scalar_lea.sflag [#allocation6], 1
    %18 = vsyncpa %s17, 0
    loop: start=0, step=1, limit=4
    $region2: #{st_lstm_cell.1} parent=1 // loop_pre_header
      _
    $region3: #{st_lstm_cell.1} parent=1 // loop_header
      %s20 = sphi 0, %s24
      %p21 = scmp.ge.s32.totalorder %s20, 4
      %s30 = sphi 0, %s32
      %s33 = sphi 0, %s30
      %s34 = sphi 0, %s33
      %s50 = sphi 0, %s34
      %s56 = sphi 0, %s58
      %s59 = sphi 0, %s56
      %s60 = sphi 0, %s59
      %s76 = sphi 0, %s60
      %s82 = sphi 0, %s84
      %s85 = sphi 0, %s82
      %s86 = sphi 0, %s85
      %s102 = sphi 0, %s86
      %s106 = sphi 0, %s106
      %s108 = sphi 0, %s106
      %s109 = sphi 0, %s108
      %s123 = sphi 0, %s109
      %s127 = sphi 0, %s127
      %s129 = sphi 0, %s127
      %s130 = sphi 0, %s129
      %s144 = sphi 0, %s130
      %s150 = sphi 0, %s152
      %s153 = sphi 0, %s150
      %s154 = sphi 0, %s153
      %s170 = sphi 0, %s154
      %s176 = sphi 0, %s178
      %s179 = sphi 0, %s176
      %s180 = sphi 0, %s179
      %s196 = sphi 0, %s180
      %s202 = sphi 0, %s204
      %s205 = sphi 0, %s202
      %s206 = sphi 0, %s205
      %s222 = sphi 0, %s206
    $region4: #{st_lstm_cell.1} parent=1 // loop_header_branch
      %23 = sbr.rel (%p21) target = $region8
    $region5: #{st_lstm_cell.1} parent=1 // loop_body
      %s25 = ssub.s32 %s20, 1
      %s26 = ssub.s32 %s20, 2
      %s27 = sadd.s32 %s20, 1
      %s28 = ssub.s32 %s20, %s27
      %p29 = scmp.eq.s32.totalorder %s28, 0
      %s31 = sadd.s32 %s30, 1
      %s32 = scalar_select %p29, %s30, %s31
      %p35 = pneg %p29
      %p36 = scmp.eq.s32.totalorder %s20, 1
      %p37 = por %p35, %p36
      %p38 = scmp.ne.s32.totalorder %s30, %s33
      %p39 = scmp.eq.s32.totalorder %s20, 0
      %p40 = por %p38, %p39
      %p41 = scmp.ne.s32.totalorder %s30, %s33
      %p42 = scmp.eq.s32.totalorder %s25, 1
      %p43 = por %p41, %p42
      %p44 = scmp.ne.s32.totalorder %s33, %s34
      %p45 = scmp.eq.s32.totalorder %s25, 0
      %p46 = por %p44, %p45
      %p47 = scmp.ne.s32.totalorder %s33, %s34
      %p48 = scmp.eq.s32.totalorder %s26, 1
      %p49 = por %p47, %p48
      %p51 = scmp.ne.s32.totalorder %s34, %s50
      %p52 = scmp.eq.s32.totalorder %s26, 0
      %p53 = por %p51, %p52
      %s54 = ssub.s32 %s20, %s27
      %p55 = scmp.eq.s32.totalorder %s54, 0
      %s57 = sadd.s32 %s56, 1
      %s58 = scalar_select %p55, %s56, %s57
      %p61 = pneg %p55
      %p62 = scmp.eq.s32.totalorder %s20, 1
      %p63 = por %p61, %p62
      %p64 = scmp.ne.s32.totalorder %s56, %s59
      %p65 = scmp.eq.s32.totalorder %s20, 0
      %p66 = por %p64, %p65
      %p67 = scmp.ne.s32.totalorder %s56, %s59
      %p68 = scmp.eq.s32.totalorder %s25, 1
      %p69 = por %p67, %p68
      %p70 = scmp.ne.s32.totalorder %s59, %s60
      %p71 = scmp.eq.s32.totalorder %s25, 0
      %p72 = por %p70, %p71
      %p73 = scmp.ne.s32.totalorder %s59, %s60
      %p74 = scmp.eq.s32.totalorder %s26, 1
      %p75 = por %p73, %p74
      %p77 = scmp.ne.s32.totalorder %s60, %s76
      %p78 = scmp.eq.s32.totalorder %s26, 0
      %p79 = por %p77, %p78
      %s80 = ssub.s32 %s20, %s27
      %p81 = scmp.eq.s32.totalorder %s80, 0
      %s83 = sadd.s32 %s82, 1
      %s84 = scalar_select %p81, %s82, %s83
      %p87 = pneg %p81
      %p88 = scmp.eq.s32.totalorder %s20, 1
      %p89 = por %p87, %p88
      %p90 = scmp.ne.s32.totalorder %s82, %s85
      %p91 = scmp.eq.s32.totalorder %s20, 0
      %p92 = por %p90, %p91
      %p93 = scmp.ne.s32.totalorder %s82, %s85
      %p94 = scmp.eq.s32.totalorder %s25, 1
      %p95 = por %p93, %p94
      %p96 = scmp.ne.s32.totalorder %s85, %s86
      %p97 = scmp.eq.s32.totalorder %s25, 0
      %p98 = por %p96, %p97
      %p99 = scmp.ne.s32.totalorder %s85, %s86
      %p100 = scmp.eq.s32.totalorder %s26, 1
      %p101 = por %p99, %p100
      %p103 = scmp.ne.s32.totalorder %s86, %s102
      %p104 = scmp.eq.s32.totalorder %s26, 0
      %p105 = por %p103, %p104
      %s107 = sadd.s32 %s106, 1
      %p110 = scmp.eq.s32.totalorder %s20, 1
      %p111 = scmp.ne.s32.totalorder %s106, %s108
      %p112 = scmp.eq.s32.totalorder %s20, 0
      %p113 = por %p111, %p112
      %p114 = scmp.ne.s32.totalorder %s106, %s108
      %p115 = scmp.eq.s32.totalorder %s25, 1
      %p116 = por %p114, %p115
      %p117 = scmp.ne.s32.totalorder %s108, %s109
      %p118 = scmp.eq.s32.totalorder %s25, 0
      %p119 = por %p117, %p118
      %p120 = scmp.ne.s32.totalorder %s108, %s109
      %p121 = scmp.eq.s32.totalorder %s26, 1
      %p122 = por %p120, %p121
      %p124 = scmp.ne.s32.totalorder %s109, %s123
      %p125 = scmp.eq.s32.totalorder %s26, 0
      %p126 = por %p124, %p125
      %s128 = sadd.s32 %s127, 1
      %p131 = scmp.eq.s32.totalorder %s20, 1
      %p132 = scmp.ne.s32.totalorder %s127, %s129
      %p133 = scmp.eq.s32.totalorder %s20, 0
      %p134 = por %p132, %p133
      %p135 = scmp.ne.s32.totalorder %s127, %s129
      %p136 = scmp.eq.s32.totalorder %s25, 1
      %p137 = por %p135, %p136
      %p138 = scmp.ne.s32.totalorder %s129, %s130
      %p139 = scmp.eq.s32.totalorder %s25, 0
      %p140 = por %p138, %p139
      %p141 = scmp.ne.s32.totalorder %s129, %s130
      %p142 = scmp.eq.s32.totalorder %s26, 1
      %p143 = por %p141, %p142
      %p145 = scmp.ne.s32.totalorder %s130, %s144
      %p146 = scmp.eq.s32.totalorder %s26, 0
      %p147 = por %p145, %p146
      %s148 = ssub.s32 %s20, %s27
      %p149 = scmp.eq.s32.totalorder %s148, 0
      %s151 = sadd.s32 %s150, 1
      %s152 = scalar_select %p149, %s150, %s151
      %p155 = pneg %p149
      %p156 = scmp.eq.s32.totalorder %s20, 1
      %p157 = por %p155, %p156
      %p158 = scmp.ne.s32.totalorder %s150, %s153
      %p159 = scmp.eq.s32.totalorder %s20, 0
      %p160 = por %p158, %p159
      %p161 = scmp.ne.s32.totalorder %s150, %s153
      %p162 = scmp.eq.s32.totalorder %s25, 1
      %p163 = por %p161, %p162
      %p164 = scmp.ne.s32.totalorder %s153, %s154
      %p165 = scmp.eq.s32.totalorder %s25, 0
      %p166 = por %p164, %p165
      %p167 = scmp.ne.s32.totalorder %s153, %s154
      %p168 = scmp.eq.s32.totalorder %s26, 1
      %p169 = por %p167, %p168
      %p171 = scmp.ne.s32.totalorder %s154, %s170
      %p172 = scmp.eq.s32.totalorder %s26, 0
      %p173 = por %p171, %p172
      %s174 = ssub.s32 %s20, %s27
      %p175 = scmp.eq.s32.totalorder %s174, 0
      %s177 = sadd.s32 %s176, 1
      %s178 = scalar_select %p175, %s176, %s177
      %p181 = pneg %p175
      %p182 = scmp.eq.s32.totalorder %s20, 1
      %p183 = por %p181, %p182
      %p184 = scmp.ne.s32.totalorder %s176, %s179
      %p185 = scmp.eq.s32.totalorder %s20, 0
      %p186 = por %p184, %p185
      %p187 = scmp.ne.s32.totalorder %s176, %s179
      %p188 = scmp.eq.s32.totalorder %s25, 1
      %p189 = por %p187, %p188
      %p190 = scmp.ne.s32.totalorder %s179, %s180
      %p191 = scmp.eq.s32.totalorder %s25, 0
      %p192 = por %p190, %p191
      %p193 = scmp.ne.s32.totalorder %s179, %s180
      %p194 = scmp.eq.s32.totalorder %s26, 1
      %p195 = por %p193, %p194
      %p197 = scmp.ne.s32.totalorder %s180, %s196
      %p198 = scmp.eq.s32.totalorder %s26, 0
      %p199 = por %p197, %p198
      %s200 = ssub.s32 %s20, %s27
      %p201 = scmp.eq.s32.totalorder %s200, 0
      %s203 = sadd.s32 %s202, 1
      %s204 = scalar_select %p201, %s202, %s203
      %p207 = pneg %p201
      %p208 = scmp.eq.s32.totalorder %s20, 1
      %p209 = por %p207, %p208
      %p210 = scmp.ne.s32.totalorder %s202, %s205
      %p211 = scmp.eq.s32.totalorder %s20, 0
      %p212 = por %p210, %p211
      %p213 = scmp.ne.s32.totalorder %s202, %s205
      %p214 = scmp.eq.s32.totalorder %s25, 1
      %p215 = por %p213, %p214
      %p216 = scmp.ne.s32.totalorder %s205, %s206
      %p217 = scmp.eq.s32.totalorder %s25, 0
      %p218 = por %p216, %p217
      %p219 = scmp.ne.s32.totalorder %s205, %s206
      %p220 = scmp.eq.s32.totalorder %s26, 1
      %p221 = por %p219, %p220
      %p223 = scmp.ne.s32.totalorder %s206, %s222
      %p224 = scmp.eq.s32.totalorder %s26, 0
      %p225 = por %p223, %p224
      %p226 = scmp.le.s32.totalorder 1, %s20
      %p227 = scmp.lt.s32.totalorder %s20, 3
      %p228 = pnand %p226, %p227
      %p229 = pneg %p228
      // Predicated region
      $region9: #{st_lstm_cell.1} parent=5 // pred_check
        _
      $region10: #{st_lstm_cell.1} parent=5 // pred_check_branch
        %231 = sbr.rel (%p228) target = $region12
      $region11: #{st_lstm_cell.1} parent=5 // pred_region
        %s232 = ssub.s32 %s20, 1
        // Predicated region
        $region13: #{st_lstm_cell.1} parent=11 // pred_check
          %p233 = pneg %p119
        $region14: #{st_lstm_cell.1} parent=11 // pred_check_branch
          %235 = sbr.rel (%p233) target = $region16
        $region15: #{st_lstm_cell.1} parent=11 // pred_region
          _
        $region16: #{st_lstm_cell.1} parent=11 // pred_fallthru
          _
        // Predicated region
        $region17: #{st_lstm_cell.1} parent=11 // pred_check
          %p236 = pneg %p140
        $region18: #{st_lstm_cell.1} parent=11 // pred_check_branch
          %238 = sbr.rel (%p236) target = $region20
        $region19: #{st_lstm_cell.1} parent=11 // pred_region
          _
        $region20: #{st_lstm_cell.1} parent=11 // pred_fallthru
          _
      $region12: #{st_lstm_cell.1} parent=5 // pred_fallthru
        _
      %p239 = scmp.lt.s32.totalorder %s20, 2
      // Predicated region
      $region21: #{st_lstm_cell.1} parent=5 // pred_check
        %p240 = pneg %p239
      $region22: #{st_lstm_cell.1} parent=5 // pred_check_branch
        %242 = sbr.rel (%p240) target = $region24
      $region23: #{st_lstm_cell.1} parent=5 // pred_region
        // Predicated region
        $region25: #{st_lstm_cell.1} parent=23 // pred_check
          %p243 = pneg %p40
        $region26: #{st_lstm_cell.1} parent=23 // pred_check_branch
          %245 = sbr.rel (%p243) target = $region28
        $region27: #{st_lstm_cell.1} parent=23 // pred_region
          %p246 = scmp.lt.s32.totalorder %s20, 1
          %s247 = scalar_select %p246, %s20, 1
          %s248 = smul.addr %s247, 54
          %s249 = smul.addr %s248, 8
          %s250 = scalar_lea.vmem %s0, %s249
        $region28: #{st_lstm_cell.1} parent=23 // pred_fallthru
          _
        // Predicated region
        $region29: #{st_lstm_cell.1} parent=23 // pred_check
          %p251 = pneg %p66
        $region30: #{st_lstm_cell.1} parent=23 // pred_check_branch
          %253 = sbr.rel (%p251) target = $region32
        $region31: #{st_lstm_cell.1} parent=23 // pred_region
          %p254 = scmp.lt.s32.totalorder %s20, 1
          %s255 = scalar_select %p254, %s20, 1
          %s256 = smul.addr %s255, 32
          %s257 = smul.addr %s256, 8
          %s258 = scalar_lea.vmem %s1, %s257
        $region32: #{st_lstm_cell.1} parent=23 // pred_fallthru
          _
        // Predicated region
        $region33: #{st_lstm_cell.1} parent=23 // pred_check
          %p259 = pneg %p92
        $region34: #{st_lstm_cell.1} parent=23 // pred_check_branch
          %261 = sbr.rel (%p259) target = $region36
        $region35: #{st_lstm_cell.1} parent=23 // pred_region
          %p262 = scmp.lt.s32.totalorder %s20, 1
          %s263 = scalar_select %p262, %s20, 1
          %s264 = smul.addr %s263, 32
          %s265 = smul.addr %s264, 8
          %s266 = scalar_lea.vmem %s2, %s265
        $region36: #{st_lstm_cell.1} parent=23 // pred_fallthru
          _
      $region24: #{st_lstm_cell.1} parent=5 // pred_fallthru
        _
      %p267 = scmp.le.s32.totalorder 1, %s20
      %p268 = scmp.lt.s32.totalorder %s20, 3
      %p269 = pnand %p267, %p268
      %p270 = pneg %p269
      // Predicated region
      $region37: #{st_lstm_cell.1} parent=5 // pred_check
        _
      $region38: #{st_lstm_cell.1} parent=5 // pred_check_branch
        %272 = sbr.rel (%p269) target = $region40
      $region39: #{st_lstm_cell.1} parent=5 // pred_region
        %s273 = ssub.s32 %s20, 1
        %p274 = scmp.lt.s32.totalorder %s25, 1
        %s275 = scalar_select %p274, %s25, 1
        %s276 = smul.addr %s275, 54
        %s277 = smul.addr %s276, 8
        %s278 = scalar_lea.vmem %s0, %s277
        %p279 = pneg %p46
        %p280 = pneg %p43
        %p281 = scmp.lt.s32.totalorder %s25, 1
        %s282 = scalar_select %p281, %s25, 1
        %s283 = smul.addr %s282, 32
        %s284 = smul.addr %s283, 8
        %s285 = scalar_lea.vmem %s1, %s284
        %p286 = pneg %p72
        %p287 = pneg %p69
        %p288 = scmp.lt.s32.totalorder %s25, 1
        %s289 = scalar_select %p288, %s25, 1
        %s290 = smul.addr %s289, 32
        %s291 = smul.addr %s290, 8
        %s292 = scalar_lea.vmem %s2, %s291
        %p293 = pneg %p98
        %p294 = pneg %p95
        %p295 = pneg %p119
        %p296 = pneg %p116
        %p297 = pneg %p140
        %p298 = pneg %p137
        %p299 = pneg %p166
        %p300 = pneg %p163
        %s301 = sand.u32 %s153, 1
        %s302 = scalar_lea.sflag [#allocation4], %s301
        %s303 = sand.u32 %s153, 1
        %s304 = smul.addr %s303, 256
        %s305 = scalar_lea.vmem [#allocation3], %s304
        %p306 = pneg %p192
        %p307 = pneg %p189
        %s308 = sand.u32 %s25, 1
        %s309 = scalar_lea.sflag [#allocation6], %s308
        %s310 = sand.u32 %s179, 1
        %s311 = smul.addr %s310, 256
        %s312 = scalar_lea.vmem [#allocation5], %s311
        %p313 = pneg %p218
        %p314 = pneg %p215
        %s315 = sand.u32 %s25, 1
        %s316 = scalar_lea.sflag [#allocation6], %s315
        %s317 = sand.u32 %s205, 1
        %s318 = smul.addr %s317, 256
        %s319 = scalar_lea.vmem [#allocation7], %s318
        %p320 = scmp.lt.s32.totalorder %s25, 1
        %s321 = scalar_select %p320, %s25, 1
        %s322 = smul.addr %s321, 54
        %s323 = smul.addr %s322, 8
        %s324 = scalar_lea.vmem %s0, %s323
        %p325 = scmp.lt.s32.totalorder %s25, 1
        %s326 = scalar_select %p325, %s25, 1
        %s327 = smul.addr %s326, 32
        %s328 = smul.addr %s327, 8
        %s329 = scalar_lea.vmem %s1, %s328
        %p330 = scmp.lt.s32.totalorder %s25, 1
        %s331 = scalar_select %p330, %s25, 1
        %s332 = smul.addr %s331, 32
        %s333 = smul.addr %s332, 8
        %s334 = scalar_lea.vmem %s2, %s333
        %v335 = vld [vmem:[%s324] sm:$0xff]
        %v336 = vld [vmem:[%s324 + $0x8] sm:$0xff]
        %v337 = vld [vmem:[%s324 + $0x18] sm:$0xff]
        %v338 = vld [vmem:[%s324 + $0x20] sm:$0xff]
        %v339 = vld [vmem:[%s324 + $0x30] sm:$0xff]
        %v340 = vld [vmem:[%s324 + $0x38] sm:$0xff]
        %v341 = vld [vmem:[%s324 + $0x48] sm:$0xff]
        %v342 = vld [vmem:[%s324 + $0x50] sm:$0xff]
        %v343 = vld [vmem:[%s324 + $0x60] sm:$0xff]
        %v344 = vld [vmem:[%s324 + $0x68] sm:$0xff]
        %v345 = vld [vmem:[%s324 + $0x78] sm:$0xff]
        %v346 = vld [vmem:[%s324 + $0x80] sm:$0xff]
        %v347 = vld [vmem:[%s324 + $0x90] sm:$0xff]
        %v348 = vld [vmem:[%s324 + $0x98] sm:$0xff]
        %v349 = vld [vmem:[%s324 + $0xa8] sm:$0xff]
        %v350 = vld [vmem:[%s324 + $0xb0] sm:$0xff]
        %v351 = vld [vmem:[%s324 + $0xc0] sm:$0xff]
        %v352 = vld [vmem:[%s324 + $0xc8] sm:$0xff]
        %v353 = vld [vmem:[%s324 + $0xd8] sm:$0xff]
        %v354 = vld [vmem:[%s324 + $0xe0] sm:$0xff]
        %v355 = vld [vmem:[%s324 + $0xf0] sm:$0xff]
        %v356 = vld [vmem:[%s324 + $0xf8] sm:$0xff]
        %v357 = vld [vmem:[%s324 + $0x108] sm:$0xff]
        %v358 = vld [vmem:[%s324 + $0x110] sm:$0xff]
        %v359 = vld [vmem:[%s324 + $0x120] sm:$0xff]
        %v360 = vld [vmem:[%s324 + $0x128] sm:$0xff]
        %v361 = vld [vmem:[%s324 + $0x138] sm:$0xff]
        %v362 = vld [vmem:[%s324 + $0x140] sm:$0xff]
        %v363 = vld [vmem:[%s324 + $0x150] sm:$0xff]
        %v364 = vld [vmem:[%s324 + $0x158] sm:$0xff]
        %v365 = vld [vmem:[%s324 + $0x168] sm:$0xff]
        %v366 = vld [vmem:[%s324 + $0x170] sm:$0xff]
        %v367 = vld [vmem:[%s3] sm:$0xff]
        %v368 = vld [vmem:[%s3 + $0x8] sm:$0xff]
        %v369 = vld [vmem:[%s3 + $0x10] sm:$0xff]
        %v370 = vld [vmem:[%s3 + $0x18] sm:$0xff]
        %v371 = vld [vmem:[%s3 + $0x20] sm:$0xff]
        %v372 = vld [vmem:[%s3 + $0x28] sm:$0xff]
        %v373 = vld [vmem:[%s3 + $0x30] sm:$0xff]
        %v374 = vld [vmem:[%s3 + $0x38] sm:$0xff]
        %v375 = vld [vmem:[%s3 + $0x40] sm:$0xff]
        %v376 = vld [vmem:[%s3 + $0x48] sm:$0xff]
        %v377 = vld [vmem:[%s3 + $0x50] sm:$0xff]
        %v378 = vld [vmem:[%s3 + $0x58] sm:$0xff]
        %v379 = vld [vmem:[%s3 + $0x60] sm:$0xff]
        %v380 = vld [vmem:[%s3 + $0x68] sm:$0xff]
        %v381 = vld [vmem:[%s3 + $0x70] sm:$0xff]
        %v382 = vld [vmem:[%s3 + $0x78] sm:$0xff]
        %v383 = vld [vmem:[%s3 + $0x80] sm:$0xf]
        %v384 = vld [vmem:[%s3 + $0x88] sm:$0xf]
        %v385 = vld [vmem:[%s324 + $0x1] sm:$0xff]
        %v386 = vld [vmem:[%s324 + $0x9] sm:$0xff]
        %v387 = vld [vmem:[%s324 + $0x19] sm:$0xff]
        %v388 = vld [vmem:[%s324 + $0x21] sm:$0xff]
        %v389 = vld [vmem:[%s324 + $0x31] sm:$0xff]
        %v390 = vld [vmem:[%s324 + $0x39] sm:$0xff]
        %v391 = vld [vmem:[%s324 + $0x49] sm:$0xff]
        %v392 = vld [vmem:[%s324 + $0x51] sm:$0xff]
        %v393 = vld [vmem:[%s324 + $0x61] sm:$0xff]
        %v394 = vld [vmem:[%s324 + $0x69] sm:$0xff]
        %v395 = vld [vmem:[%s324 + $0x79] sm:$0xff]
        %v396 = vld [vmem:[%s324 + $0x81] sm:$0xff]
        %v397 = vld [vmem:[%s324 + $0x91] sm:$0xff]
        %v398 = vld [vmem:[%s324 + $0x99] sm:$0xff]
        %v399 = vld [vmem:[%s324 + $0xa9] sm:$0xff]
        %v400 = vld [vmem:[%s324 + $0xb1] sm:$0xff]
        %v401 = vld [vmem:[%s324 + $0xc1] sm:$0xff]
        %v402 = vld [vmem:[%s324 + $0xc9] sm:$0xff]
        %v403 = vld [vmem:[%s324 + $0xd9] sm:$0xff]
        %v404 = vld [vmem:[%s324 + $0xe1] sm:$0xff]
        %v405 = vld [vmem:[%s324 + $0xf1] sm:$0xff]
        %v406 = vld [vmem:[%s324 + $0xf9] sm:$0xff]
        %v407 = vld [vmem:[%s324 + $0x109] sm:$0xff]
        %v408 = vld [vmem:[%s324 + $0x111] sm:$0xff]
        %v409 = vld [vmem:[%s324 + $0x121] sm:$0xff]
        %v410 = vld [vmem:[%s324 + $0x129] sm:$0xff]
        %v411 = vld [vmem:[%s324 + $0x139] sm:$0xff]
        %v412 = vld [vmem:[%s324 + $0x141] sm:$0xff]
        %v413 = vld [vmem:[%s324 + $0x151] sm:$0xff]
        %v414 = vld [vmem:[%s324 + $0x159] sm:$0xff]
        %v415 = vld [vmem:[%s324 + $0x169] sm:$0xff]
        %v416 = vld [vmem:[%s324 + $0x171] sm:$0xff]
        %s417 = scalar_lea.vmem %s3, 144
        %v418 = vld [vmem:[%s417] sm:$0xff]
        %v419 = vld [vmem:[%s417 + $0x8] sm:$0xff]
        %v420 = vld [vmem:[%s417 + $0x10] sm:$0xff]
        %v421 = vld [vmem:[%s417 + $0x18] sm:$0xff]
        %v422 = vld [vmem:[%s417 + $0x20] sm:$0xff]
        %v423 = vld [vmem:[%s417 + $0x28] sm:$0xff]
        %v424 = vld [vmem:[%s417 + $0x30] sm:$0xff]
        %v425 = vld [vmem:[%s417 + $0x38] sm:$0xff]
        %v426 = vld [vmem:[%s417 + $0x40] sm:$0xff]
        %v427 = vld [vmem:[%s417 + $0x48] sm:$0xff]
        %v428 = vld [vmem:[%s417 + $0x50] sm:$0xff]
        %v429 = vld [vmem:[%s417 + $0x58] sm:$0xff]
        %v430 = vld [vmem:[%s417 + $0x60] sm:$0xff]
        %v431 = vld [vmem:[%s417 + $0x68] sm:$0xff]
        %v432 = vld [vmem:[%s417 + $0x70] sm:$0xff]
        %v433 = vld [vmem:[%s417 + $0x78] sm:$0xff]
        %v434 = vld [vmem:[%s417 + $0x80] sm:$0xf]
        %v435 = vld [vmem:[%s417 + $0x88] sm:$0xf]
        %vm436 = vcmask 556032
        %v438 = vsel %vm436, %v385, 0
        %v441 = vsel %vm436, %v386, 0
        %v444 = vsel %vm436, %v387, 0
        %v447 = vsel %vm436, %v388, 0
        %v450 = vsel %vm436, %v389, 0
        %v453 = vsel %vm436, %v390, 0
        %v456 = vsel %vm436, %v391, 0
        %v459 = vsel %vm436, %v392, 0
        %v462 = vsel %vm436, %v393, 0
        %v465 = vsel %vm436, %v394, 0
        %v468 = vsel %vm436, %v395, 0
        %v471 = vsel %vm436, %v396, 0
        %v474 = vsel %vm436, %v397, 0
        %v477 = vsel %vm436, %v398, 0
        %v480 = vsel %vm436, %v399, 0
        %v483 = vsel %vm436, %v400, 0
        %v486 = vsel %vm436, %v401, 0
        %v489 = vsel %vm436, %v402, 0
        %v492 = vsel %vm436, %v403, 0
        %v495 = vsel %vm436, %v404, 0
        %v498 = vsel %vm436, %v405, 0
        %v501 = vsel %vm436, %v406, 0
        %v504 = vsel %vm436, %v407, 0
        %v507 = vsel %vm436, %v408, 0
        %v510 = vsel %vm436, %v409, 0
        %v513 = vsel %vm436, %v410, 0
        %v516 = vsel %vm436, %v411, 0
        %v519 = vsel %vm436, %v412, 0
        %v522 = vsel %vm436, %v413, 0
        %v525 = vsel %vm436, %v414, 0
        %v528 = vsel %vm436, %v415, 0
        %v531 = vsel %vm436, %v416, 0
        %vm533 = vcmask 1043456
        %v535 = vsel %vm533, %v434, 0
        %v538 = vsel %vm533, %v435, 0
        %540 = vmatprep.subr.mxu0 0.0
        %541 = vmatpush1.msra.mxu0 0.0
        %542 = vmatprep.subr.mxu0 0.0
        %543 = vmatpush1.msra.mxu0 0.0
        %544 = vmatprep.subr.mxu0 0.0
        %545 = vmatpush1.msra.mxu0 0.0
        %546 = vmatprep.subr.mxu0 0.0
        %547 = vmatpush1.msra.mxu0 0.0
        %548 = vmatprep.subr.mxu0 0.0
        %549 = vmatpush1.msra.mxu0 0.0
        %550 = vmatprep.subr.mxu0 0.0
        %551 = vmatpush1.msra.mxu0 0.0
        %552 = vmatprep.subr.mxu0 0.0
        %553 = vmatpush1.msra.mxu0 0.0
        %554 = vmatprep.subr.mxu0 %v538
        %555 = vmatpush1.msra.mxu0 %v535
        %556 = vmatprep.subr.mxu0 %v433
        %557 = vmatpush1.msra.mxu0 %v432
        %558 = vmatprep.subr.mxu0 %v431
        %559 = vmatpush1.msra.mxu0 %v430
        %560 = vmatprep.subr.mxu0 %v429
        %561 = vmatpush1.msra.mxu0 %v428
        %562 = vmatprep.subr.mxu0 %v427
        %563 = vmatpush1.msra.mxu0 %v426
        %564 = vmatprep.subr.mxu0 %v425
        %565 = vmatpush1.msra.mxu0 %v424
        %566 = vmatprep.subr.mxu0 %v423
        %567 = vmatpush1.msra.mxu0 %v422
        %568 = vmatprep.subr.mxu0 %v421
        %569 = vmatpush1.msra.mxu0 %v420
        %570 = vmatprep.subr.mxu0 %v419
        %571 = vmatpush1.msra.mxu0 %v418
        %572 = vmatprep.subr.mxu0 0.0
        %573 = vmatpush2.msra.mxu0 0.0
        %574 = vmatprep.subr.mxu0 0.0
        %575 = vmatpush2.msra.mxu0 0.0
        %576 = vmatprep.subr.mxu0 0.0
        %577 = vmatpush2.msra.mxu0 0.0
        %578 = vmatprep.subr.mxu0 0.0
        %579 = vmatpush2.msra.mxu0 0.0
        %580 = vmatprep.subr.mxu0 0.0
        %581 = vmatpush2.msra.mxu0 0.0
        %582 = vmatprep.subr.mxu0 0.0
        %583 = vmatpush2.msra.mxu0 0.0
        %584 = vmatprep.subr.mxu0 0.0
        %585 = vmatpush2.msra.mxu0 0.0
        %586 = vmatprep.subr.mxu0 0.0
        %587 = vmatpush2.msra.mxu0 0.0
        %588 = vmatprep.subr.mxu0 0.0
        %589 = vmatpush2.msra.mxu0 0.0
        %590 = vmatprep.subr.mxu0 0.0
        %591 = vmatpush2.msra.mxu0 0.0
        %592 = vmatprep.subr.mxu0 0.0
        %593 = vmatpush2.msra.mxu0 0.0
        %594 = vmatprep.subr.mxu0 0.0
        %595 = vmatpush2.msra.mxu0 0.0
        %596 = vmatprep.subr.mxu0 0.0
        %597 = vmatpush2.msra.mxu0 0.0
        %598 = vmatprep.subr.mxu0 0.0
        %599 = vmatpush2.msra.mxu0 0.0
        %600 = vmatprep.subr.mxu0 0.0
        %601 = vmatpush2.msra.mxu0 0.0
        %602 = vmatprep.subr.mxu0 0.0
        %603 = vmatpush2.msra.mxu0 0.0
        %604 = vmatprep.mubr.f32.mxu0 0.0
        %605 = vmatmul.mubr.f32.gmra.mxu0 %v438
        %v606 = vpop.f32.mrf.mxu0
        %v607 = vadd.f32 0.0, %v606
        %v608 = vpop.f32.mrf.mxu0
        %v609 = vadd.f32 0.0, %v608
        %610 = vmatprep.mubr.f32.mxu0 0.0
        %611 = vmatmul.mubr.f32.gmra.mxu0 %v441
        %v612 = vpop.f32.mrf.mxu0
        %v613 = vadd.f32 0.0, %v612
        %v614 = vpop.f32.mrf.mxu0
        %v615 = vadd.f32 0.0, %v614
        %616 = vmatprep.mubr.f32.mxu0 0.0
        %617 = vmatmul.mubr.f32.gmra.mxu0 %v444
        %v618 = vpop.f32.mrf.mxu0
        %v619 = vadd.f32 0.0, %v618
        %v620 = vpop.f32.mrf.mxu0
        %v621 = vadd.f32 0.0, %v620
        %622 = vmatprep.mubr.f32.mxu0 0.0
        %623 = vmatmul.mubr.f32.gmra.mxu0 %v447
        %v624 = vpop.f32.mrf.mxu0
        %v625 = vadd.f32 0.0, %v624
        %v626 = vpop.f32.mrf.mxu0
        %v627 = vadd.f32 0.0, %v626
        %628 = vmatprep.mubr.f32.mxu0 0.0
        %629 = vmatmul.mubr.f32.gmra.mxu0 %v450
        %v630 = vpop.f32.mrf.mxu0
        %v631 = vadd.f32 0.0, %v630
        %v632 = vpop.f32.mrf.mxu0
        %v633 = vadd.f32 0.0, %v632
        %634 = vmatprep.mubr.f32.mxu0 0.0
        %635 = vmatmul.mubr.f32.gmra.mxu0 %v453
        %v636 = vpop.f32.mrf.mxu0
        %v637 = vadd.f32 0.0, %v636
        %v638 = vpop.f32.mrf.mxu0
        %v639 = vadd.f32 0.0, %v638
        %640 = vmatprep.mubr.f32.mxu0 0.0
        %641 = vmatmul.mubr.f32.gmra.mxu0 %v456
        %v642 = vpop.f32.mrf.mxu0
        %v643 = vadd.f32 0.0, %v642
        %v644 = vpop.f32.mrf.mxu0
        %v645 = vadd.f32 0.0, %v644
        %646 = vmatprep.mubr.f32.mxu0 0.0
        %647 = vmatmul.mubr.f32.gmra.mxu0 %v459
        %v648 = vpop.f32.mrf.mxu0
        %v649 = vadd.f32 0.0, %v648
        %v650 = vpop.f32.mrf.mxu0
        %v651 = vadd.f32 0.0, %v650
        %652 = vmatprep.mubr.f32.mxu0 0.0
        %653 = vmatmul.mubr.f32.gmra.mxu0 %v462
        %v654 = vpop.f32.mrf.mxu0
        %v655 = vadd.f32 0.0, %v654
        %v656 = vpop.f32.mrf.mxu0
        %v657 = vadd.f32 0.0, %v656
        %658 = vmatprep.mubr.f32.mxu0 0.0
        %659 = vmatmul.mubr.f32.gmra.mxu0 %v465
        %v660 = vpop.f32.mrf.mxu0
        %v661 = vadd.f32 0.0, %v660
        %v662 = vpop.f32.mrf.mxu0
        %v663 = vadd.f32 0.0, %v662
        %664 = vmatprep.mubr.f32.mxu0 0.0
        %665 = vmatmul.mubr.f32.gmra.mxu0 %v468
        %v666 = vpop.f32.mrf.mxu0
        %v667 = vadd.f32 0.0, %v666
        %v668 = vpop.f32.mrf.mxu0
        %v669 = vadd.f32 0.0, %v668
        %670 = vmatprep.mubr.f32.mxu0 0.0
        %671 = vmatmul.mubr.f32.gmra.mxu0 %v471
        %v672 = vpop.f32.mrf.mxu0
        %v673 = vadd.f32 0.0, %v672
        %v674 = vpop.f32.mrf.mxu0
        %v675 = vadd.f32 0.0, %v674
        %676 = vmatprep.mubr.f32.mxu0 0.0
        %677 = vmatmul.mubr.f32.gmra.mxu0 %v474
        %v678 = vpop.f32.mrf.mxu0
        %v679 = vadd.f32 0.0, %v678
        %v680 = vpop.f32.mrf.mxu0
        %v681 = vadd.f32 0.0, %v680
        %682 = vmatprep.mubr.f32.mxu0 0.0
        %683 = vmatmul.mubr.f32.gmra.mxu0 %v477
        %v684 = vpop.f32.mrf.mxu0
        %v685 = vadd.f32 0.0, %v684
        %v686 = vpop.f32.mrf.mxu0
        %v687 = vadd.f32 0.0, %v686
        %688 = vmatprep.mubr.f32.mxu0 0.0
        %689 = vmatmul.mubr.f32.gmra.mxu0 %v480
        %v690 = vpop.f32.mrf.mxu0
        %v691 = vadd.f32 0.0, %v690
        %v692 = vpop.f32.mrf.mxu0
        %v693 = vadd.f32 0.0, %v692
        %694 = vmatprep.mubr.f32.mxu0 0.0
        %695 = vmatmul.mubr.f32.gmra.mxu0 %v483
        %v696 = vpop.f32.mrf.mxu0
        %v697 = vadd.f32 0.0, %v696
        %v698 = vpop.f32.mrf.mxu0
        %v699 = vadd.f32 0.0, %v698
        %700 = vmatprep.mubr.f32.mxu0 0.0
        %701 = vmatmul.mubr.f32.gmra.mxu0 %v486
        %v702 = vpop.f32.mrf.mxu0
        %v703 = vadd.f32 0.0, %v702
        %v704 = vpop.f32.mrf.mxu0
        %v705 = vadd.f32 0.0, %v704
        %706 = vmatprep.mubr.f32.mxu0 0.0
        %707 = vmatmul.mubr.f32.gmra.mxu0 %v489
        %v708 = vpop.f32.mrf.mxu0
        %v709 = vadd.f32 0.0, %v708
        %v710 = vpop.f32.mrf.mxu0
        %v711 = vadd.f32 0.0, %v710
        %712 = vmatprep.mubr.f32.mxu0 0.0
        %713 = vmatmul.mubr.f32.gmra.mxu0 %v492
        %v714 = vpop.f32.mrf.mxu0
        %v715 = vadd.f32 0.0, %v714
        %v716 = vpop.f32.mrf.mxu0
        %v717 = vadd.f32 0.0, %v716
        %718 = vmatprep.mubr.f32.mxu0 0.0
        %719 = vmatmul.mubr.f32.gmra.mxu0 %v495
        %v720 = vpop.f32.mrf.mxu0
        %v721 = vadd.f32 0.0, %v720
        %v722 = vpop.f32.mrf.mxu0
        %v723 = vadd.f32 0.0, %v722
        %724 = vmatprep.mubr.f32.mxu0 0.0
        %725 = vmatmul.mubr.f32.gmra.mxu0 %v498
        %v726 = vpop.f32.mrf.mxu0
        %v727 = vadd.f32 0.0, %v726
        %v728 = vpop.f32.mrf.mxu0
        %v729 = vadd.f32 0.0, %v728
        %730 = vmatprep.mubr.f32.mxu0 0.0
        %731 = vmatmul.mubr.f32.gmra.mxu0 %v501
        %v732 = vpop.f32.mrf.mxu0
        %v733 = vadd.f32 0.0, %v732
        %v734 = vpop.f32.mrf.mxu0
        %v735 = vadd.f32 0.0, %v734
        %736 = vmatprep.mubr.f32.mxu0 0.0
        %737 = vmatmul.mubr.f32.gmra.mxu0 %v504
        %v738 = vpop.f32.mrf.mxu0
        %v739 = vadd.f32 0.0, %v738
        %v740 = vpop.f32.mrf.mxu0
        %v741 = vadd.f32 0.0, %v740
        %742 = vmatprep.mubr.f32.mxu0 0.0
        %743 = vmatmul.mubr.f32.gmra.mxu0 %v507
        %v744 = vpop.f32.mrf.mxu0
        %v745 = vadd.f32 0.0, %v744
        %v746 = vpop.f32.mrf.mxu0
        %v747 = vadd.f32 0.0, %v746
        %748 = vmatprep.mubr.f32.mxu0 0.0
        %749 = vmatmul.mubr.f32.gmra.mxu0 %v510
        %v750 = vpop.f32.mrf.mxu0
        %v751 = vadd.f32 0.0, %v750
        %v752 = vpop.f32.mrf.mxu0
        %v753 = vadd.f32 0.0, %v752
        %754 = vmatprep.mubr.f32.mxu0 0.0
        %755 = vmatmul.mubr.f32.gmra.mxu0 %v513
        %v756 = vpop.f32.mrf.mxu0
        %v757 = vadd.f32 0.0, %v756
        %v758 = vpop.f32.mrf.mxu0
        %v759 = vadd.f32 0.0, %v758
        %760 = vmatprep.mubr.f32.mxu0 0.0
        %761 = vmatmul.mubr.f32.gmra.mxu0 %v516
        %v762 = vpop.f32.mrf.mxu0
        %v763 = vadd.f32 0.0, %v762
        %v764 = vpop.f32.mrf.mxu0
        %v765 = vadd.f32 0.0, %v764
        %766 = vmatprep.mubr.f32.mxu0 0.0
        %767 = vmatmul.mubr.f32.gmra.mxu0 %v519
        %v768 = vpop.f32.mrf.mxu0
        %v769 = vadd.f32 0.0, %v768
        %v770 = vpop.f32.mrf.mxu0
        %v771 = vadd.f32 0.0, %v770
        %772 = vmatprep.mubr.f32.mxu0 0.0
        %773 = vmatmul.mubr.f32.gmra.mxu0 %v522
        %v774 = vpop.f32.mrf.mxu0
        %v775 = vadd.f32 0.0, %v774
        %v776 = vpop.f32.mrf.mxu0
        %v777 = vadd.f32 0.0, %v776
        %778 = vmatprep.mubr.f32.mxu0 0.0
        %779 = vmatmul.mubr.f32.gmra.mxu0 %v525
        %v780 = vpop.f32.mrf.mxu0
        %v781 = vadd.f32 0.0, %v780
        %v782 = vpop.f32.mrf.mxu0
        %v783 = vadd.f32 0.0, %v782
        %784 = vmatprep.mubr.f32.mxu0 0.0
        %785 = vmatmul.mubr.f32.gmra.mxu0 %v528
        %v786 = vpop.f32.mrf.mxu0
        %v787 = vadd.f32 0.0, %v786
        %v788 = vpop.f32.mrf.mxu0
        %v789 = vadd.f32 0.0, %v788
        %790 = vmatprep.mubr.f32.mxu0 0.0
        %791 = vmatmul.mubr.f32.gmra.mxu0 %v531
        %v792 = vpop.f32.mrf.mxu0
        %v793 = vadd.f32 0.0, %v792
        %v794 = vpop.f32.mrf.mxu0
        %v795 = vadd.f32 0.0, %v794
        %796 = vdwg.mxu0
        %v798 = vsel %vm436, %v335, 0
        %v801 = vsel %vm436, %v336, 0
        %v804 = vsel %vm436, %v337, 0
        %v807 = vsel %vm436, %v338, 0
        %v810 = vsel %vm436, %v339, 0
        %v813 = vsel %vm436, %v340, 0
        %v816 = vsel %vm436, %v341, 0
        %v819 = vsel %vm436, %v342, 0
        %v822 = vsel %vm436, %v343, 0
        %v825 = vsel %vm436, %v344, 0
        %v828 = vsel %vm436, %v345, 0
        %v831 = vsel %vm436, %v346, 0
        %v834 = vsel %vm436, %v347, 0
        %v837 = vsel %vm436, %v348, 0
        %v840 = vsel %vm436, %v349, 0
        %v843 = vsel %vm436, %v350, 0
        %v846 = vsel %vm436, %v351, 0
        %v849 = vsel %vm436, %v352, 0
        %v852 = vsel %vm436, %v353, 0
        %v855 = vsel %vm436, %v354, 0
        %v858 = vsel %vm436, %v355, 0
        %v861 = vsel %vm436, %v356, 0
        %v864 = vsel %vm436, %v357, 0
        %v867 = vsel %vm436, %v358, 0
        %v870 = vsel %vm436, %v359, 0
        %v873 = vsel %vm436, %v360, 0
        %v876 = vsel %vm436, %v361, 0
        %v879 = vsel %vm436, %v362, 0
        %v882 = vsel %vm436, %v363, 0
        %v885 = vsel %vm436, %v364, 0
        %v888 = vsel %vm436, %v365, 0
        %v891 = vsel %vm436, %v366, 0
        %v894 = vsel %vm533, %v383, 0
        %v897 = vsel %vm533, %v384, 0
        %899 = vmatprep.subr.mxu0 0.0
        %900 = vmatpush1.msra.mxu0 0.0
        %901 = vmatprep.subr.mxu0 0.0
        %902 = vmatpush1.msra.mxu0 0.0
        %903 = vmatprep.subr.mxu0 0.0
        %904 = vmatpush1.msra.mxu0 0.0
        %905 = vmatprep.subr.mxu0 0.0
        %906 = vmatpush1.msra.mxu0 0.0
        %907 = vmatprep.subr.mxu0 0.0
        %908 = vmatpush1.msra.mxu0 0.0
        %909 = vmatprep.subr.mxu0 0.0
        %910 = vmatpush1.msra.mxu0 0.0
        %911 = vmatprep.subr.mxu0 0.0
        %912 = vmatpush1.msra.mxu0 0.0
        %913 = vmatprep.subr.mxu0 %v897
        %914 = vmatpush1.msra.mxu0 %v894
        %915 = vmatprep.subr.mxu0 %v382
        %916 = vmatpush1.msra.mxu0 %v381
        %917 = vmatprep.subr.mxu0 %v380
        %918 = vmatpush1.msra.mxu0 %v379
        %919 = vmatprep.subr.mxu0 %v378
        %920 = vmatpush1.msra.mxu0 %v377
        %921 = vmatprep.subr.mxu0 %v376
        %922 = vmatpush1.msra.mxu0 %v375
        %923 = vmatprep.subr.mxu0 %v374
        %924 = vmatpush1.msra.mxu0 %v373
        %925 = vmatprep.subr.mxu0 %v372
        %926 = vmatpush1.msra.mxu0 %v371
        %927 = vmatprep.subr.mxu0 %v370
        %928 = vmatpush1.msra.mxu0 %v369
        %929 = vmatprep.subr.mxu0 %v368
        %930 = vmatpush1.msra.mxu0 %v367
        %931 = vmatprep.subr.mxu0 0.0
        %932 = vmatpush2.msra.mxu0 0.0
        %933 = vmatprep.subr.mxu0 0.0
        %934 = vmatpush2.msra.mxu0 0.0
        %935 = vmatprep.subr.mxu0 0.0
        %936 = vmatpush2.msra.mxu0 0.0
        %937 = vmatprep.subr.mxu0 0.0
        %938 = vmatpush2.msra.mxu0 0.0
        %939 = vmatprep.subr.mxu0 0.0
        %940 = vmatpush2.msra.mxu0 0.0
        %941 = vmatprep.subr.mxu0 0.0
        %942 = vmatpush2.msra.mxu0 0.0
        %943 = vmatprep.subr.mxu0 0.0
        %944 = vmatpush2.msra.mxu0 0.0
        %945 = vmatprep.subr.mxu0 0.0
        %946 = vmatpush2.msra.mxu0 0.0
        %947 = vmatprep.subr.mxu0 0.0
        %948 = vmatpush2.msra.mxu0 0.0
        %949 = vmatprep.subr.mxu0 0.0
        %950 = vmatpush2.msra.mxu0 0.0
        %951 = vmatprep.subr.mxu0 0.0
        %952 = vmatpush2.msra.mxu0 0.0
        %953 = vmatprep.subr.mxu0 0.0
        %954 = vmatpush2.msra.mxu0 0.0
        %955 = vmatprep.subr.mxu0 0.0
        %956 = vmatpush2.msra.mxu0 0.0
        %957 = vmatprep.subr.mxu0 0.0
        %958 = vmatpush2.msra.mxu0 0.0
        %959 = vmatprep.subr.mxu0 0.0
        %960 = vmatpush2.msra.mxu0 0.0
        %961 = vmatprep.subr.mxu0 0.0
        %962 = vmatpush2.msra.mxu0 0.0
        %963 = vmatprep.mubr.f32.mxu0 0.0
        %964 = vmatmul.mubr.f32.gmra.mxu0 %v798
        %v965 = vpop.f32.mrf.mxu0
        %v966 = vadd.f32 %v607, %v965
        %v967 = vpop.f32.mrf.mxu0
        %v968 = vadd.f32 %v609, %v967
        %969 = vmatprep.mubr.f32.mxu0 0.0
        %970 = vmatmul.mubr.f32.gmra.mxu0 %v801
        %v971 = vpop.f32.mrf.mxu0
        %v972 = vadd.f32 %v613, %v971
        %v973 = vpop.f32.mrf.mxu0
        %v974 = vadd.f32 %v615, %v973
        %975 = vmatprep.mubr.f32.mxu0 0.0
        %976 = vmatmul.mubr.f32.gmra.mxu0 %v804
        %v977 = vpop.f32.mrf.mxu0
        %v978 = vadd.f32 %v619, %v977
        %v979 = vpop.f32.mrf.mxu0
        %v980 = vadd.f32 %v621, %v979
        %981 = vmatprep.mubr.f32.mxu0 0.0
        %982 = vmatmul.mubr.f32.gmra.mxu0 %v807
        %v983 = vpop.f32.mrf.mxu0
        %v984 = vadd.f32 %v625, %v983
        %v985 = vpop.f32.mrf.mxu0
        %v986 = vadd.f32 %v627, %v985
        %987 = vmatprep.mubr.f32.mxu0 0.0
        %988 = vmatmul.mubr.f32.gmra.mxu0 %v810
        %v989 = vpop.f32.mrf.mxu0
        %v990 = vadd.f32 %v631, %v989
        %v991 = vpop.f32.mrf.mxu0
        %v992 = vadd.f32 %v633, %v991
        %993 = vmatprep.mubr.f32.mxu0 0.0
        %994 = vmatmul.mubr.f32.gmra.mxu0 %v813
        %v995 = vpop.f32.mrf.mxu0
        %v996 = vadd.f32 %v637, %v995
        %v997 = vpop.f32.mrf.mxu0
        %v998 = vadd.f32 %v639, %v997
        %999 = vmatprep.mubr.f32.mxu0 0.0
        %1000 = vmatmul.mubr.f32.gmra.mxu0 %v816
        %v1001 = vpop.f32.mrf.mxu0
        %v1002 = vadd.f32 %v643, %v1001
        %v1003 = vpop.f32.mrf.mxu0
        %v1004 = vadd.f32 %v645, %v1003
        %1005 = vmatprep.mubr.f32.mxu0 0.0
        %1006 = vmatmul.mubr.f32.gmra.mxu0 %v819
        %v1007 = vpop.f32.mrf.mxu0
        %v1008 = vadd.f32 %v649, %v1007
        %v1009 = vpop.f32.mrf.mxu0
        %v1010 = vadd.f32 %v651, %v1009
        %1011 = vmatprep.mubr.f32.mxu0 0.0
        %1012 = vmatmul.mubr.f32.gmra.mxu0 %v822
        %v1013 = vpop.f32.mrf.mxu0
        %v1014 = vadd.f32 %v655, %v1013
        %v1015 = vpop.f32.mrf.mxu0
        %v1016 = vadd.f32 %v657, %v1015
        %1017 = vmatprep.mubr.f32.mxu0 0.0
        %1018 = vmatmul.mubr.f32.gmra.mxu0 %v825
        %v1019 = vpop.f32.mrf.mxu0
        %v1020 = vadd.f32 %v661, %v1019
        %v1021 = vpop.f32.mrf.mxu0
        %v1022 = vadd.f32 %v663, %v1021
        %1023 = vmatprep.mubr.f32.mxu0 0.0
        %1024 = vmatmul.mubr.f32.gmra.mxu0 %v828
        %v1025 = vpop.f32.mrf.mxu0
        %v1026 = vadd.f32 %v667, %v1025
        %v1027 = vpop.f32.mrf.mxu0
        %v1028 = vadd.f32 %v669, %v1027
        %1029 = vmatprep.mubr.f32.mxu0 0.0
        %1030 = vmatmul.mubr.f32.gmra.mxu0 %v831
        %v1031 = vpop.f32.mrf.mxu0
        %v1032 = vadd.f32 %v673, %v1031
        %v1033 = vpop.f32.mrf.mxu0
        %v1034 = vadd.f32 %v675, %v1033
        %1035 = vmatprep.mubr.f32.mxu0 0.0
        %1036 = vmatmul.mubr.f32.gmra.mxu0 %v834
        %v1037 = vpop.f32.mrf.mxu0
        %v1038 = vadd.f32 %v679, %v1037
        %v1039 = vpop.f32.mrf.mxu0
        %v1040 = vadd.f32 %v681, %v1039
        %1041 = vmatprep.mubr.f32.mxu0 0.0
        %1042 = vmatmul.mubr.f32.gmra.mxu0 %v837
        %v1043 = vpop.f32.mrf.mxu0
        %v1044 = vadd.f32 %v685, %v1043
        %v1045 = vpop.f32.mrf.mxu0
        %v1046 = vadd.f32 %v687, %v1045
        %1047 = vmatprep.mubr.f32.mxu0 0.0
        %1048 = vmatmul.mubr.f32.gmra.mxu0 %v840
        %v1049 = vpop.f32.mrf.mxu0
        %v1050 = vadd.f32 %v691, %v1049
        %v1051 = vpop.f32.mrf.mxu0
        %v1052 = vadd.f32 %v693, %v1051
        %1053 = vmatprep.mubr.f32.mxu0 0.0
        %1054 = vmatmul.mubr.f32.gmra.mxu0 %v843
        %v1055 = vpop.f32.mrf.mxu0
        %v1056 = vadd.f32 %v697, %v1055
        %v1057 = vpop.f32.mrf.mxu0
        %v1058 = vadd.f32 %v699, %v1057
        %1059 = vmatprep.mubr.f32.mxu0 0.0
        %1060 = vmatmul.mubr.f32.gmra.mxu0 %v846
        %v1061 = vpop.f32.mrf.mxu0
        %v1062 = vadd.f32 %v703, %v1061
        %v1063 = vpop.f32.mrf.mxu0
        %v1064 = vadd.f32 %v705, %v1063
        %1065 = vmatprep.mubr.f32.mxu0 0.0
        %1066 = vmatmul.mubr.f32.gmra.mxu0 %v849
        %v1067 = vpop.f32.mrf.mxu0
        %v1068 = vadd.f32 %v709, %v1067
        %v1069 = vpop.f32.mrf.mxu0
        %v1070 = vadd.f32 %v711, %v1069
        %1071 = vmatprep.mubr.f32.mxu0 0.0
        %1072 = vmatmul.mubr.f32.gmra.mxu0 %v852
        %v1073 = vpop.f32.mrf.mxu0
        %v1074 = vadd.f32 %v715, %v1073
        %v1075 = vpop.f32.mrf.mxu0
        %v1076 = vadd.f32 %v717, %v1075
        %1077 = vmatprep.mubr.f32.mxu0 0.0
        %1078 = vmatmul.mubr.f32.gmra.mxu0 %v855
        %v1079 = vpop.f32.mrf.mxu0
        %v1080 = vadd.f32 %v721, %v1079
        %v1081 = vpop.f32.mrf.mxu0
        %v1082 = vadd.f32 %v723, %v1081
        %1083 = vmatprep.mubr.f32.mxu0 0.0
        %1084 = vmatmul.mubr.f32.gmra.mxu0 %v858
        %v1085 = vpop.f32.mrf.mxu0
        %v1086 = vadd.f32 %v727, %v1085
        %v1087 = vpop.f32.mrf.mxu0
        %v1088 = vadd.f32 %v729, %v1087
        %1089 = vmatprep.mubr.f32.mxu0 0.0
        %1090 = vmatmul.mubr.f32.gmra.mxu0 %v861
        %v1091 = vpop.f32.mrf.mxu0
        %v1092 = vadd.f32 %v733, %v1091
        %v1093 = vpop.f32.mrf.mxu0
        %v1094 = vadd.f32 %v735, %v1093
        %1095 = vmatprep.mubr.f32.mxu0 0.0
        %1096 = vmatmul.mubr.f32.gmra.mxu0 %v864
        %v1097 = vpop.f32.mrf.mxu0
        %v1098 = vadd.f32 %v739, %v1097
        %v1099 = vpop.f32.mrf.mxu0
        %v1100 = vadd.f32 %v741, %v1099
        %1101 = vmatprep.mubr.f32.mxu0 0.0
        %1102 = vmatmul.mubr.f32.gmra.mxu0 %v867
        %v1103 = vpop.f32.mrf.mxu0
        %v1104 = vadd.f32 %v745, %v1103
        %v1105 = vpop.f32.mrf.mxu0
        %v1106 = vadd.f32 %v747, %v1105
        %1107 = vmatprep.mubr.f32.mxu0 0.0
        %1108 = vmatmul.mubr.f32.gmra.mxu0 %v870
        %v1109 = vpop.f32.mrf.mxu0
        %v1110 = vadd.f32 %v751, %v1109
        %v1111 = vpop.f32.mrf.mxu0
        %v1112 = vadd.f32 %v753, %v1111
        %1113 = vmatprep.mubr.f32.mxu0 0.0
        %1114 = vmatmul.mubr.f32.gmra.mxu0 %v873
        %v1115 = vpop.f32.mrf.mxu0
        %v1116 = vadd.f32 %v757, %v1115
        %v1117 = vpop.f32.mrf.mxu0
        %v1118 = vadd.f32 %v759, %v1117
        %1119 = vmatprep.mubr.f32.mxu0 0.0
        %1120 = vmatmul.mubr.f32.gmra.mxu0 %v876
        %v1121 = vpop.f32.mrf.mxu0
        %v1122 = vadd.f32 %v763, %v1121
        %v1123 = vpop.f32.mrf.mxu0
        %v1124 = vadd.f32 %v765, %v1123
        %1125 = vmatprep.mubr.f32.mxu0 0.0
        %1126 = vmatmul.mubr.f32.gmra.mxu0 %v879
        %v1127 = vpop.f32.mrf.mxu0
        %v1128 = vadd.f32 %v769, %v1127
        %v1129 = vpop.f32.mrf.mxu0
        %v1130 = vadd.f32 %v771, %v1129
        %1131 = vmatprep.mubr.f32.mxu0 0.0
        %1132 = vmatmul.mubr.f32.gmra.mxu0 %v882
        %v1133 = vpop.f32.mrf.mxu0
        %v1134 = vadd.f32 %v775, %v1133
        %v1135 = vpop.f32.mrf.mxu0
        %v1136 = vadd.f32 %v777, %v1135
        %1137 = vmatprep.mubr.f32.mxu0 0.0
        %1138 = vmatmul.mubr.f32.gmra.mxu0 %v885
        %v1139 = vpop.f32.mrf.mxu0
        %v1140 = vadd.f32 %v781, %v1139
        %v1141 = vpop.f32.mrf.mxu0
        %v1142 = vadd.f32 %v783, %v1141
        %1143 = vmatprep.mubr.f32.mxu0 0.0
        %1144 = vmatmul.mubr.f32.gmra.mxu0 %v888
        %v1145 = vpop.f32.mrf.mxu0
        %v1146 = vadd.f32 %v787, %v1145
        %v1147 = vpop.f32.mrf.mxu0
        %v1148 = vadd.f32 %v789, %v1147
        %1149 = vmatprep.mubr.f32.mxu0 0.0
        %1150 = vmatmul.mubr.f32.gmra.mxu0 %v891
        %v1151 = vpop.f32.mrf.mxu0
        %v1152 = vadd.f32 %v793, %v1151
        %v1153 = vpop.f32.mrf.mxu0
        %v1154 = vadd.f32 %v795, %v1153
        %1155 = vdwg.mxu0
        %v1156 = vld [vmem:[%s324 + $0x2] sm:$0xff]
        %v1157 = vld [vmem:[%s324 + $0xa] sm:$0xff]
        %v1158 = vld [vmem:[%s324 + $0x1a] sm:$0xff]
        %v1159 = vld [vmem:[%s324 + $0x22] sm:$0xff]
        %v1160 = vld [vmem:[%s324 + $0x32] sm:$0xff]
        %v1161 = vld [vmem:[%s324 + $0x3a] sm:$0xff]
        %v1162 = vld [vmem:[%s324 + $0x4a] sm:$0xff]
        %v1163 = vld [vmem:[%s324 + $0x52] sm:$0xff]
        %v1164 = vld [vmem:[%s324 + $0x62] sm:$0xff]
        %v1165 = vld [vmem:[%s324 + $0x6a] sm:$0xff]
        %v1166 = vld [vmem:[%s324 + $0x7a] sm:$0xff]
        %v1167 = vld [vmem:[%s324 + $0x82] sm:$0xff]
        %v1168 = vld [vmem:[%s324 + $0x92] sm:$0xff]
        %v1169 = vld [vmem:[%s324 + $0x9a] sm:$0xff]
        %v1170 = vld [vmem:[%s324 + $0xaa] sm:$0xff]
        %v1171 = vld [vmem:[%s324 + $0xb2] sm:$0xff]
        %v1172 = vld [vmem:[%s324 + $0xc2] sm:$0xff]
        %v1173 = vld [vmem:[%s324 + $0xca] sm:$0xff]
        %v1174 = vld [vmem:[%s324 + $0xda] sm:$0xff]
        %v1175 = vld [vmem:[%s324 + $0xe2] sm:$0xff]
        %v1176 = vld [vmem:[%s324 + $0xf2] sm:$0xff]
        %v1177 = vld [vmem:[%s324 + $0xfa] sm:$0xff]
        %v1178 = vld [vmem:[%s324 + $0x10a] sm:$0xff]
        %v1179 = vld [vmem:[%s324 + $0x112] sm:$0xff]
        %v1180 = vld [vmem:[%s324 + $0x122] sm:$0xff]
        %v1181 = vld [vmem:[%s324 + $0x12a] sm:$0xff]
        %v1182 = vld [vmem:[%s324 + $0x13a] sm:$0xff]
        %v1183 = vld [vmem:[%s324 + $0x142] sm:$0xff]
        %v1184 = vld [vmem:[%s324 + $0x152] sm:$0xff]
        %v1185 = vld [vmem:[%s324 + $0x15a] sm:$0xff]
        %v1186 = vld [vmem:[%s324 + $0x16a] sm:$0xff]
        %v1187 = vld [vmem:[%s324 + $0x172] sm:$0xff]
        %s1188 = scalar_lea.vmem %s3, 288
        %v1189 = vld [vmem:[%s1188] sm:$0xff]
        %v1190 = vld [vmem:[%s1188 + $0x8] sm:$0xff]
        %v1191 = vld [vmem:[%s1188 + $0x10] sm:$0xff]
        %v1192 = vld [vmem:[%s1188 + $0x18] sm:$0xff]
        %v1193 = vld [vmem:[%s1188 + $0x20] sm:$0xff]
        %v1194 = vld [vmem:[%s1188 + $0x28] sm:$0xff]
        %v1195 = vld [vmem:[%s1188 + $0x30] sm:$0xff]
        %v1196 = vld [vmem:[%s1188 + $0x38] sm:$0xff]
        %v1197 = vld [vmem:[%s1188 + $0x40] sm:$0xff]
        %v1198 = vld [vmem:[%s1188 + $0x48] sm:$0xff]
        %v1199 = vld [vmem:[%s1188 + $0x50] sm:$0xff]
        %v1200 = vld [vmem:[%s1188 + $0x58] sm:$0xff]
        %v1201 = vld [vmem:[%s1188 + $0x60] sm:$0xff]
        %v1202 = vld [vmem:[%s1188 + $0x68] sm:$0xff]
        %v1203 = vld [vmem:[%s1188 + $0x70] sm:$0xff]
        %v1204 = vld [vmem:[%s1188 + $0x78] sm:$0xff]
        %v1205 = vld [vmem:[%s1188 + $0x80] sm:$0xf]
        %v1206 = vld [vmem:[%s1188 + $0x88] sm:$0xf]
        %v1208 = vsel %vm436, %v1156, 0
        %v1211 = vsel %vm436, %v1157, 0
        %v1214 = vsel %vm436, %v1158, 0
        %v1217 = vsel %vm436, %v1159, 0
        %v1220 = vsel %vm436, %v1160, 0
        %v1223 = vsel %vm436, %v1161, 0
        %v1226 = vsel %vm436, %v1162, 0
        %v1229 = vsel %vm436, %v1163, 0
        %v1232 = vsel %vm436, %v1164, 0
        %v1235 = vsel %vm436, %v1165, 0
        %v1238 = vsel %vm436, %v1166, 0
        %v1241 = vsel %vm436, %v1167, 0
        %v1244 = vsel %vm436, %v1168, 0
        %v1247 = vsel %vm436, %v1169, 0
        %v1250 = vsel %vm436, %v1170, 0
        %v1253 = vsel %vm436, %v1171, 0
        %v1256 = vsel %vm436, %v1172, 0
        %v1259 = vsel %vm436, %v1173, 0
        %v1262 = vsel %vm436, %v1174, 0
        %v1265 = vsel %vm436, %v1175, 0
        %v1268 = vsel %vm436, %v1176, 0
        %v1271 = vsel %vm436, %v1177, 0
        %v1274 = vsel %vm436, %v1178, 0
        %v1277 = vsel %vm436, %v1179, 0
        %v1280 = vsel %vm436, %v1180, 0
        %v1283 = vsel %vm436, %v1181, 0
        %v1286 = vsel %vm436, %v1182, 0
        %v1289 = vsel %vm436, %v1183, 0
        %v1292 = vsel %vm436, %v1184, 0
        %v1295 = vsel %vm436, %v1185, 0
        %v1298 = vsel %vm436, %v1186, 0
        %v1301 = vsel %vm436, %v1187, 0
        %v1304 = vsel %vm533, %v1205, 0
        %v1307 = vsel %vm533, %v1206, 0
        %1309 = vmatprep.subr.mxu0 0.0
        %1310 = vmatpush1.msra.mxu0 0.0
        %1311 = vmatprep.subr.mxu0 0.0
        %1312 = vmatpush1.msra.mxu0 0.0
        %1313 = vmatprep.subr.mxu0 0.0
        %1314 = vmatpush1.msra.mxu0 0.0
        %1315 = vmatprep.subr.mxu0 0.0
        %1316 = vmatpush1.msra.mxu0 0.0
        %1317 = vmatprep.subr.mxu0 0.0
        %1318 = vmatpush1.msra.mxu0 0.0
        %1319 = vmatprep.subr.mxu0 0.0
        %1320 = vmatpush1.msra.mxu0 0.0
        %1321 = vmatprep.subr.mxu0 0.0
        %1322 = vmatpush1.msra.mxu0 0.0
        %1323 = vmatprep.subr.mxu0 %v1307
        %1324 = vmatpush1.msra.mxu0 %v1304
        %1325 = vmatprep.subr.mxu0 %v1204
        %1326 = vmatpush1.msra.mxu0 %v1203
        %1327 = vmatprep.subr.mxu0 %v1202
        %1328 = vmatpush1.msra.mxu0 %v1201
        %1329 = vmatprep.subr.mxu0 %v1200
        %1330 = vmatpush1.msra.mxu0 %v1199
        %1331 = vmatprep.subr.mxu0 %v1198
        %1332 = vmatpush1.msra.mxu0 %v1197
        %1333 = vmatprep.subr.mxu0 %v1196
        %1334 = vmatpush1.msra.mxu0 %v1195
        %1335 = vmatprep.subr.mxu0 %v1194
        %1336 = vmatpush1.msra.mxu0 %v1193
        %1337 = vmatprep.subr.mxu0 %v1192
        %1338 = vmatpush1.msra.mxu0 %v1191
        %1339 = vmatprep.subr.mxu0 %v1190
        %1340 = vmatpush1.msra.mxu0 %v1189
        %1341 = vmatprep.subr.mxu0 0.0
        %1342 = vmatpush2.msra.mxu0 0.0
        %1343 = vmatprep.subr.mxu0 0.0
        %1344 = vmatpush2.msra.mxu0 0.0
        %1345 = vmatprep.subr.mxu0 0.0
        %1346 = vmatpush2.msra.mxu0 0.0
        %1347 = vmatprep.subr.mxu0 0.0
        %1348 = vmatpush2.msra.mxu0 0.0
        %1349 = vmatprep.subr.mxu0 0.0
        %1350 = vmatpush2.msra.mxu0 0.0
        %1351 = vmatprep.subr.mxu0 0.0
        %1352 = vmatpush2.msra.mxu0 0.0
        %1353 = vmatprep.subr.mxu0 0.0
        %1354 = vmatpush2.msra.mxu0 0.0
        %1355 = vmatprep.subr.mxu0 0.0
        %1356 = vmatpush2.msra.mxu0 0.0
        %1357 = vmatprep.subr.mxu0 0.0
        %1358 = vmatpush2.msra.mxu0 0.0
        %1359 = vmatprep.subr.mxu0 0.0
        %1360 = vmatpush2.msra.mxu0 0.0
        %1361 = vmatprep.subr.mxu0 0.0
        %1362 = vmatpush2.msra.mxu0 0.0
        %1363 = vmatprep.subr.mxu0 0.0
        %1364 = vmatpush2.msra.mxu0 0.0
        %1365 = vmatprep.subr.mxu0 0.0
        %1366 = vmatpush2.msra.mxu0 0.0
        %1367 = vmatprep.subr.mxu0 0.0
        %1368 = vmatpush2.msra.mxu0 0.0
        %1369 = vmatprep.subr.mxu0 0.0
        %1370 = vmatpush2.msra.mxu0 0.0
        %1371 = vmatprep.subr.mxu0 0.0
        %1372 = vmatpush2.msra.mxu0 0.0
        %1373 = vmatprep.mubr.f32.mxu0 0.0
        %1374 = vmatmul.mubr.f32.gmra.mxu0 %v1208
        %v1375 = vpop.f32.mrf.mxu0
        %v1376 = vadd.f32 0.0, %v1375
        %v1377 = vpop.f32.mrf.mxu0
        %v1378 = vadd.f32 0.0, %v1377
        %1379 = vmatprep.mubr.f32.mxu0 0.0
        %1380 = vmatmul.mubr.f32.gmra.mxu0 %v1211
        %v1381 = vpop.f32.mrf.mxu0
        %v1382 = vadd.f32 0.0, %v1381
        %v1383 = vpop.f32.mrf.mxu0
        %v1384 = vadd.f32 0.0, %v1383
        %1385 = vmatprep.mubr.f32.mxu0 0.0
        %1386 = vmatmul.mubr.f32.gmra.mxu0 %v1214
        %v1387 = vpop.f32.mrf.mxu0
        %v1388 = vadd.f32 0.0, %v1387
        %v1389 = vpop.f32.mrf.mxu0
        %v1390 = vadd.f32 0.0, %v1389
        %1391 = vmatprep.mubr.f32.mxu0 0.0
        %1392 = vmatmul.mubr.f32.gmra.mxu0 %v1217
        %v1393 = vpop.f32.mrf.mxu0
        %v1394 = vadd.f32 0.0, %v1393
        %v1395 = vpop.f32.mrf.mxu0
        %v1396 = vadd.f32 0.0, %v1395
        %1397 = vmatprep.mubr.f32.mxu0 0.0
        %1398 = vmatmul.mubr.f32.gmra.mxu0 %v1220
        %v1399 = vpop.f32.mrf.mxu0
        %v1400 = vadd.f32 0.0, %v1399
        %v1401 = vpop.f32.mrf.mxu0
        %v1402 = vadd.f32 0.0, %v1401
        %1403 = vmatprep.mubr.f32.mxu0 0.0
        %1404 = vmatmul.mubr.f32.gmra.mxu0 %v1223
        %v1405 = vpop.f32.mrf.mxu0
        %v1406 = vadd.f32 0.0, %v1405
        %v1407 = vpop.f32.mrf.mxu0
        %v1408 = vadd.f32 0.0, %v1407
        %1409 = vmatprep.mubr.f32.mxu0 0.0
        %1410 = vmatmul.mubr.f32.gmra.mxu0 %v1226
        %v1411 = vpop.f32.mrf.mxu0
        %v1412 = vadd.f32 0.0, %v1411
        %v1413 = vpop.f32.mrf.mxu0
        %v1414 = vadd.f32 0.0, %v1413
        %1415 = vmatprep.mubr.f32.mxu0 0.0
        %1416 = vmatmul.mubr.f32.gmra.mxu0 %v1229
        %v1417 = vpop.f32.mrf.mxu0
        %v1418 = vadd.f32 0.0, %v1417
        %v1419 = vpop.f32.mrf.mxu0
        %v1420 = vadd.f32 0.0, %v1419
        %1421 = vmatprep.mubr.f32.mxu0 0.0
        %1422 = vmatmul.mubr.f32.gmra.mxu0 %v1232
        %v1423 = vpop.f32.mrf.mxu0
        %v1424 = vadd.f32 0.0, %v1423
        %v1425 = vpop.f32.mrf.mxu0
        %v1426 = vadd.f32 0.0, %v1425
        %1427 = vmatprep.mubr.f32.mxu0 0.0
        %1428 = vmatmul.mubr.f32.gmra.mxu0 %v1235
        %v1429 = vpop.f32.mrf.mxu0
        %v1430 = vadd.f32 0.0, %v1429
        %v1431 = vpop.f32.mrf.mxu0
        %v1432 = vadd.f32 0.0, %v1431
        %1433 = vmatprep.mubr.f32.mxu0 0.0
        %1434 = vmatmul.mubr.f32.gmra.mxu0 %v1238
        %v1435 = vpop.f32.mrf.mxu0
        %v1436 = vadd.f32 0.0, %v1435
        %v1437 = vpop.f32.mrf.mxu0
        %v1438 = vadd.f32 0.0, %v1437
        %1439 = vmatprep.mubr.f32.mxu0 0.0
        %1440 = vmatmul.mubr.f32.gmra.mxu0 %v1241
        %v1441 = vpop.f32.mrf.mxu0
        %v1442 = vadd.f32 0.0, %v1441
        %v1443 = vpop.f32.mrf.mxu0
        %v1444 = vadd.f32 0.0, %v1443
        %1445 = vmatprep.mubr.f32.mxu0 0.0
        %1446 = vmatmul.mubr.f32.gmra.mxu0 %v1244
        %v1447 = vpop.f32.mrf.mxu0
        %v1448 = vadd.f32 0.0, %v1447
        %v1449 = vpop.f32.mrf.mxu0
        %v1450 = vadd.f32 0.0, %v1449
        %1451 = vmatprep.mubr.f32.mxu0 0.0
        %1452 = vmatmul.mubr.f32.gmra.mxu0 %v1247
        %v1453 = vpop.f32.mrf.mxu0
        %v1454 = vadd.f32 0.0, %v1453
        %v1455 = vpop.f32.mrf.mxu0
        %v1456 = vadd.f32 0.0, %v1455
        %1457 = vmatprep.mubr.f32.mxu0 0.0
        %1458 = vmatmul.mubr.f32.gmra.mxu0 %v1250
        %v1459 = vpop.f32.mrf.mxu0
        %v1460 = vadd.f32 0.0, %v1459
        %v1461 = vpop.f32.mrf.mxu0
        %v1462 = vadd.f32 0.0, %v1461
        %1463 = vmatprep.mubr.f32.mxu0 0.0
        %1464 = vmatmul.mubr.f32.gmra.mxu0 %v1253
        %v1465 = vpop.f32.mrf.mxu0
        %v1466 = vadd.f32 0.0, %v1465
        %v1467 = vpop.f32.mrf.mxu0
        %v1468 = vadd.f32 0.0, %v1467
        %1469 = vmatprep.mubr.f32.mxu0 0.0
        %1470 = vmatmul.mubr.f32.gmra.mxu0 %v1256
        %v1471 = vpop.f32.mrf.mxu0
        %v1472 = vadd.f32 0.0, %v1471
        %v1473 = vpop.f32.mrf.mxu0
        %v1474 = vadd.f32 0.0, %v1473
        %1475 = vmatprep.mubr.f32.mxu0 0.0
        %1476 = vmatmul.mubr.f32.gmra.mxu0 %v1259
        %v1477 = vpop.f32.mrf.mxu0
        %v1478 = vadd.f32 0.0, %v1477
        %v1479 = vpop.f32.mrf.mxu0
        %v1480 = vadd.f32 0.0, %v1479
        %1481 = vmatprep.mubr.f32.mxu0 0.0
        %1482 = vmatmul.mubr.f32.gmra.mxu0 %v1262
        %v1483 = vpop.f32.mrf.mxu0
        %v1484 = vadd.f32 0.0, %v1483
        %v1485 = vpop.f32.mrf.mxu0
        %v1486 = vadd.f32 0.0, %v1485
        %1487 = vmatprep.mubr.f32.mxu0 0.0
        %1488 = vmatmul.mubr.f32.gmra.mxu0 %v1265
        %v1489 = vpop.f32.mrf.mxu0
        %v1490 = vadd.f32 0.0, %v1489
        %v1491 = vpop.f32.mrf.mxu0
        %v1492 = vadd.f32 0.0, %v1491
        %1493 = vmatprep.mubr.f32.mxu0 0.0
        %1494 = vmatmul.mubr.f32.gmra.mxu0 %v1268
        %v1495 = vpop.f32.mrf.mxu0
        %v1496 = vadd.f32 0.0, %v1495
        %v1497 = vpop.f32.mrf.mxu0
        %v1498 = vadd.f32 0.0, %v1497
        %1499 = vmatprep.mubr.f32.mxu0 0.0
        %1500 = vmatmul.mubr.f32.gmra.mxu0 %v1271
        %v1501 = vpop.f32.mrf.mxu0
        %v1502 = vadd.f32 0.0, %v1501
        %v1503 = vpop.f32.mrf.mxu0
        %v1504 = vadd.f32 0.0, %v1503
        %1505 = vmatprep.mubr.f32.mxu0 0.0
        %1506 = vmatmul.mubr.f32.gmra.mxu0 %v1274
        %v1507 = vpop.f32.mrf.mxu0
        %v1508 = vadd.f32 0.0, %v1507
        %v1509 = vpop.f32.mrf.mxu0
        %v1510 = vadd.f32 0.0, %v1509
        %1511 = vmatprep.mubr.f32.mxu0 0.0
        %1512 = vmatmul.mubr.f32.gmra.mxu0 %v1277
        %v1513 = vpop.f32.mrf.mxu0
        %v1514 = vadd.f32 0.0, %v1513
        %v1515 = vpop.f32.mrf.mxu0
        %v1516 = vadd.f32 0.0, %v1515
        %1517 = vmatprep.mubr.f32.mxu0 0.0
        %1518 = vmatmul.mubr.f32.gmra.mxu0 %v1280
        %v1519 = vpop.f32.mrf.mxu0
        %v1520 = vadd.f32 0.0, %v1519
        %v1521 = vpop.f32.mrf.mxu0
        %v1522 = vadd.f32 0.0, %v1521
        %1523 = vmatprep.mubr.f32.mxu0 0.0
        %1524 = vmatmul.mubr.f32.gmra.mxu0 %v1283
        %v1525 = vpop.f32.mrf.mxu0
        %v1526 = vadd.f32 0.0, %v1525
        %v1527 = vpop.f32.mrf.mxu0
        %v1528 = vadd.f32 0.0, %v1527
        %1529 = vmatprep.mubr.f32.mxu0 0.0
        %1530 = vmatmul.mubr.f32.gmra.mxu0 %v1286
        %v1531 = vpop.f32.mrf.mxu0
        %v1532 = vadd.f32 0.0, %v1531
        %v1533 = vpop.f32.mrf.mxu0
        %v1534 = vadd.f32 0.0, %v1533
        %1535 = vmatprep.mubr.f32.mxu0 0.0
        %1536 = vmatmul.mubr.f32.gmra.mxu0 %v1289
        %v1537 = vpop.f32.mrf.mxu0
        %v1538 = vadd.f32 0.0, %v1537
        %v1539 = vpop.f32.mrf.mxu0
        %v1540 = vadd.f32 0.0, %v1539
        %1541 = vmatprep.mubr.f32.mxu0 0.0
        %1542 = vmatmul.mubr.f32.gmra.mxu0 %v1292
        %v1543 = vpop.f32.mrf.mxu0
        %v1544 = vadd.f32 0.0, %v1543
        %v1545 = vpop.f32.mrf.mxu0
        %v1546 = vadd.f32 0.0, %v1545
        %1547 = vmatprep.mubr.f32.mxu0 0.0
        %1548 = vmatmul.mubr.f32.gmra.mxu0 %v1295
        %v1549 = vpop.f32.mrf.mxu0
        %v1550 = vadd.f32 0.0, %v1549
        %v1551 = vpop.f32.mrf.mxu0
        %v1552 = vadd.f32 0.0, %v1551
        %1553 = vmatprep.mubr.f32.mxu0 0.0
        %1554 = vmatmul.mubr.f32.gmra.mxu0 %v1298
        %v1555 = vpop.f32.mrf.mxu0
        %v1556 = vadd.f32 0.0, %v1555
        %v1557 = vpop.f32.mrf.mxu0
        %v1558 = vadd.f32 0.0, %v1557
        %1559 = vmatprep.mubr.f32.mxu0 0.0
        %1560 = vmatmul.mubr.f32.gmra.mxu0 %v1301
        %v1561 = vpop.f32.mrf.mxu0
        %v1562 = vadd.f32 0.0, %v1561
        %v1563 = vpop.f32.mrf.mxu0
        %v1564 = vadd.f32 0.0, %v1563
        %1565 = vdwg.mxu0
        %v1566 = vadd.f32 %v966, %v1376
        %v1567 = vadd.f32 %v968, %v1378
        %v1568 = vadd.f32 %v972, %v1382
        %v1569 = vadd.f32 %v974, %v1384
        %v1570 = vadd.f32 %v978, %v1388
        %v1571 = vadd.f32 %v980, %v1390
        %v1572 = vadd.f32 %v984, %v1394
        %v1573 = vadd.f32 %v986, %v1396
        %v1574 = vadd.f32 %v990, %v1400
        %v1575 = vadd.f32 %v992, %v1402
        %v1576 = vadd.f32 %v996, %v1406
        %v1577 = vadd.f32 %v998, %v1408
        %v1578 = vadd.f32 %v1002, %v1412
        %v1579 = vadd.f32 %v1004, %v1414
        %v1580 = vadd.f32 %v1008, %v1418
        %v1581 = vadd.f32 %v1010, %v1420
        %v1582 = vadd.f32 %v1014, %v1424
        %v1583 = vadd.f32 %v1016, %v1426
        %v1584 = vadd.f32 %v1020, %v1430
        %v1585 = vadd.f32 %v1022, %v1432
        %v1586 = vadd.f32 %v1026, %v1436
        %v1587 = vadd.f32 %v1028, %v1438
        %v1588 = vadd.f32 %v1032, %v1442
        %v1589 = vadd.f32 %v1034, %v1444
        %v1590 = vadd.f32 %v1038, %v1448
        %v1591 = vadd.f32 %v1040, %v1450
        %v1592 = vadd.f32 %v1044, %v1454
        %v1593 = vadd.f32 %v1046, %v1456
        %v1594 = vadd.f32 %v1050, %v1460
        %v1595 = vadd.f32 %v1052, %v1462
        %v1596 = vadd.f32 %v1056, %v1466
        %v1597 = vadd.f32 %v1058, %v1468
        %v1598 = vadd.f32 %v1062, %v1472
        %v1599 = vadd.f32 %v1064, %v1474
        %v1600 = vadd.f32 %v1068, %v1478
        %v1601 = vadd.f32 %v1070, %v1480
        %v1602 = vadd.f32 %v1074, %v1484
        %v1603 = vadd.f32 %v1076, %v1486
        %v1604 = vadd.f32 %v1080, %v1490
        %v1605 = vadd.f32 %v1082, %v1492
        %v1606 = vadd.f32 %v1086, %v1496
        %v1607 = vadd.f32 %v1088, %v1498
        %v1608 = vadd.f32 %v1092, %v1502
        %v1609 = vadd.f32 %v1094, %v1504
        %v1610 = vadd.f32 %v1098, %v1508
        %v1611 = vadd.f32 %v1100, %v1510
        %v1612 = vadd.f32 %v1104, %v1514
        %v1613 = vadd.f32 %v1106, %v1516
        %v1614 = vadd.f32 %v1110, %v1520
        %v1615 = vadd.f32 %v1112, %v1522
        %v1616 = vadd.f32 %v1116, %v1526
        %v1617 = vadd.f32 %v1118, %v1528
        %v1618 = vadd.f32 %v1122, %v1532
        %v1619 = vadd.f32 %v1124, %v1534
        %v1620 = vadd.f32 %v1128, %v1538
        %v1621 = vadd.f32 %v1130, %v1540
        %v1622 = vadd.f32 %v1134, %v1544
        %v1623 = vadd.f32 %v1136, %v1546
        %v1624 = vadd.f32 %v1140, %v1550
        %v1625 = vadd.f32 %v1142, %v1552
        %v1626 = vadd.f32 %v1146, %v1556
        %v1627 = vadd.f32 %v1148, %v1558
        %v1628 = vadd.f32 %v1152, %v1562
        %v1629 = vadd.f32 %v1154, %v1564
        %s1630 = scalar_lea.vmem %s324, 24
        %v1631 = vld [vmem:[%s1630] sm:$0xff]
        %v1632 = vld [vmem:[%s1630 + $0x8] sm:$0xff]
        %v1633 = vld [vmem:[%s1630 + $0x18] sm:$0xff]
        %v1634 = vld [vmem:[%s1630 + $0x20] sm:$0xff]
        %v1635 = vld [vmem:[%s1630 + $0x30] sm:$0xff]
        %v1636 = vld [vmem:[%s1630 + $0x38] sm:$0xff]
        %v1637 = vld [vmem:[%s1630 + $0x48] sm:$0xff]
        %v1638 = vld [vmem:[%s1630 + $0x50] sm:$0xff]
        %v1639 = vld [vmem:[%s1630 + $0x60] sm:$0xff]
        %v1640 = vld [vmem:[%s1630 + $0x68] sm:$0xff]
        %v1641 = vld [vmem:[%s1630 + $0x78] sm:$0xff]
        %v1642 = vld [vmem:[%s1630 + $0x80] sm:$0xff]
        %v1643 = vld [vmem:[%s1630 + $0x90] sm:$0xff]
        %v1644 = vld [vmem:[%s1630 + $0x98] sm:$0xff]
        %v1645 = vld [vmem:[%s1630 + $0xa8] sm:$0xff]
        %v1646 = vld [vmem:[%s1630 + $0xb0] sm:$0xff]
        %v1647 = vld [vmem:[%s1630 + $0xc0] sm:$0xff]
        %v1648 = vld [vmem:[%s1630 + $0xc8] sm:$0xff]
        %v1649 = vld [vmem:[%s1630 + $0xd8] sm:$0xff]
        %v1650 = vld [vmem:[%s1630 + $0xe0] sm:$0xff]
        %v1651 = vld [vmem:[%s1630 + $0xf0] sm:$0xff]
        %v1652 = vld [vmem:[%s1630 + $0xf8] sm:$0xff]
        %v1653 = vld [vmem:[%s1630 + $0x108] sm:$0xff]
        %v1654 = vld [vmem:[%s1630 + $0x110] sm:$0xff]
        %v1655 = vld [vmem:[%s1630 + $0x120] sm:$0xff]
        %v1656 = vld [vmem:[%s1630 + $0x128] sm:$0xff]
        %v1657 = vld [vmem:[%s1630 + $0x138] sm:$0xff]
        %v1658 = vld [vmem:[%s1630 + $0x140] sm:$0xff]
        %v1659 = vld [vmem:[%s1630 + $0x150] sm:$0xff]
        %v1660 = vld [vmem:[%s1630 + $0x158] sm:$0xff]
        %v1661 = vld [vmem:[%s1630 + $0x168] sm:$0xff]
        %v1662 = vld [vmem:[%s1630 + $0x170] sm:$0xff]
        %s1663 = scalar_lea.vmem %s3, 432
        %v1664 = vld [vmem:[%s1663] sm:$0xff]
        %v1665 = vld [vmem:[%s1663 + $0x8] sm:$0xff]
        %v1666 = vld [vmem:[%s1663 + $0x10] sm:$0xff]
        %v1667 = vld [vmem:[%s1663 + $0x18] sm:$0xff]
        %v1668 = vld [vmem:[%s1663 + $0x20] sm:$0xff]
        %v1669 = vld [vmem:[%s1663 + $0x28] sm:$0xff]
        %v1670 = vld [vmem:[%s1663 + $0x30] sm:$0xff]
        %v1671 = vld [vmem:[%s1663 + $0x38] sm:$0xff]
        %v1672 = vld [vmem:[%s1663 + $0x40] sm:$0xff]
        %v1673 = vld [vmem:[%s1663 + $0x48] sm:$0xff]
        %v1674 = vld [vmem:[%s1663 + $0x50] sm:$0xff]
        %v1675 = vld [vmem:[%s1663 + $0x58] sm:$0xff]
        %v1676 = vld [vmem:[%s1663 + $0x60] sm:$0xff]
        %v1677 = vld [vmem:[%s1663 + $0x68] sm:$0xff]
        %v1678 = vld [vmem:[%s1663 + $0x70] sm:$0xff]
        %v1679 = vld [vmem:[%s1663 + $0x78] sm:$0xff]
        %v1680 = vld [vmem:[%s1663 + $0x80] sm:$0xf]
        %v1681 = vld [vmem:[%s1663 + $0x88] sm:$0xf]
        %v1683 = vsel %vm436, %v1631, 0
        %v1686 = vsel %vm436, %v1632, 0
        %v1689 = vsel %vm436, %v1633, 0
        %v1692 = vsel %vm436, %v1634, 0
        %v1695 = vsel %vm436, %v1635, 0
        %v1698 = vsel %vm436, %v1636, 0
        %v1701 = vsel %vm436, %v1637, 0
        %v1704 = vsel %vm436, %v1638, 0
        %v1707 = vsel %vm436, %v1639, 0
        %v1710 = vsel %vm436, %v1640, 0
        %v1713 = vsel %vm436, %v1641, 0
        %v1716 = vsel %vm436, %v1642, 0
        %v1719 = vsel %vm436, %v1643, 0
        %v1722 = vsel %vm436, %v1644, 0
        %v1725 = vsel %vm436, %v1645, 0
        %v1728 = vsel %vm436, %v1646, 0
        %v1731 = vsel %vm436, %v1647, 0
        %v1734 = vsel %vm436, %v1648, 0
        %v1737 = vsel %vm436, %v1649, 0
        %v1740 = vsel %vm436, %v1650, 0
        %v1743 = vsel %vm436, %v1651, 0
        %v1746 = vsel %vm436, %v1652, 0
        %v1749 = vsel %vm436, %v1653, 0
        %v1752 = vsel %vm436, %v1654, 0
        %v1755 = vsel %vm436, %v1655, 0
        %v1758 = vsel %vm436, %v1656, 0
        %v1761 = vsel %vm436, %v1657, 0
        %v1764 = vsel %vm436, %v1658, 0
        %v1767 = vsel %vm436, %v1659, 0
        %v1770 = vsel %vm436, %v1660, 0
        %v1773 = vsel %vm436, %v1661, 0
        %v1776 = vsel %vm436, %v1662, 0
        %v1779 = vsel %vm533, %v1680, 0
        %v1782 = vsel %vm533, %v1681, 0
        %1784 = vmatprep.subr.mxu0 0.0
        %1785 = vmatpush1.msra.mxu0 0.0
        %1786 = vmatprep.subr.mxu0 0.0
        %1787 = vmatpush1.msra.mxu0 0.0
        %1788 = vmatprep.subr.mxu0 0.0
        %1789 = vmatpush1.msra.mxu0 0.0
        %1790 = vmatprep.subr.mxu0 0.0
        %1791 = vmatpush1.msra.mxu0 0.0
        %1792 = vmatprep.subr.mxu0 0.0
        %1793 = vmatpush1.msra.mxu0 0.0
        %1794 = vmatprep.subr.mxu0 0.0
        %1795 = vmatpush1.msra.mxu0 0.0
        %1796 = vmatprep.subr.mxu0 0.0
        %1797 = vmatpush1.msra.mxu0 0.0
        %1798 = vmatprep.subr.mxu0 %v1782
        %1799 = vmatpush1.msra.mxu0 %v1779
        %1800 = vmatprep.subr.mxu0 %v1679
        %1801 = vmatpush1.msra.mxu0 %v1678
        %1802 = vmatprep.subr.mxu0 %v1677
        %1803 = vmatpush1.msra.mxu0 %v1676
        %1804 = vmatprep.subr.mxu0 %v1675
        %1805 = vmatpush1.msra.mxu0 %v1674
        %1806 = vmatprep.subr.mxu0 %v1673
        %1807 = vmatpush1.msra.mxu0 %v1672
        %1808 = vmatprep.subr.mxu0 %v1671
        %1809 = vmatpush1.msra.mxu0 %v1670
        %1810 = vmatprep.subr.mxu0 %v1669
        %1811 = vmatpush1.msra.mxu0 %v1668
        %1812 = vmatprep.subr.mxu0 %v1667
        %1813 = vmatpush1.msra.mxu0 %v1666
        %1814 = vmatprep.subr.mxu0 %v1665
        %1815 = vmatpush1.msra.mxu0 %v1664
        %1816 = vmatprep.subr.mxu0 0.0
        %1817 = vmatpush2.msra.mxu0 0.0
        %1818 = vmatprep.subr.mxu0 0.0
        %1819 = vmatpush2.msra.mxu0 0.0
        %1820 = vmatprep.subr.mxu0 0.0
        %1821 = vmatpush2.msra.mxu0 0.0
        %1822 = vmatprep.subr.mxu0 0.0
        %1823 = vmatpush2.msra.mxu0 0.0
        %1824 = vmatprep.subr.mxu0 0.0
        %1825 = vmatpush2.msra.mxu0 0.0
        %1826 = vmatprep.subr.mxu0 0.0
        %1827 = vmatpush2.msra.mxu0 0.0
        %1828 = vmatprep.subr.mxu0 0.0
        %1829 = vmatpush2.msra.mxu0 0.0
        %1830 = vmatprep.subr.mxu0 0.0
        %1831 = vmatpush2.msra.mxu0 0.0
        %1832 = vmatprep.subr.mxu0 0.0
        %1833 = vmatpush2.msra.mxu0 0.0
        %1834 = vmatprep.subr.mxu0 0.0
        %1835 = vmatpush2.msra.mxu0 0.0
        %1836 = vmatprep.subr.mxu0 0.0
        %1837 = vmatpush2.msra.mxu0 0.0
        %1838 = vmatprep.subr.mxu0 0.0
        %1839 = vmatpush2.msra.mxu0 0.0
        %1840 = vmatprep.subr.mxu0 0.0
        %1841 = vmatpush2.msra.mxu0 0.0
        %1842 = vmatprep.subr.mxu0 0.0
        %1843 = vmatpush2.msra.mxu0 0.0
        %1844 = vmatprep.subr.mxu0 0.0
        %1845 = vmatpush2.msra.mxu0 0.0
        %1846 = vmatprep.subr.mxu0 0.0
        %1847 = vmatpush2.msra.mxu0 0.0
        %1848 = vmatprep.mubr.f32.mxu0 0.0
        %1849 = vmatmul.mubr.f32.gmra.mxu0 %v1683
        %v1850 = vpop.f32.mrf.mxu0
        %v1851 = vadd.f32 0.0, %v1850
        %v1852 = vpop.f32.mrf.mxu0
        %v1853 = vadd.f32 0.0, %v1852
        %1854 = vmatprep.mubr.f32.mxu0 0.0
        %1855 = vmatmul.mubr.f32.gmra.mxu0 %v1686
        %v1856 = vpop.f32.mrf.mxu0
        %v1857 = vadd.f32 0.0, %v1856
        %v1858 = vpop.f32.mrf.mxu0
        %v1859 = vadd.f32 0.0, %v1858
        %1860 = vmatprep.mubr.f32.mxu0 0.0
        %1861 = vmatmul.mubr.f32.gmra.mxu0 %v1689
        %v1862 = vpop.f32.mrf.mxu0
        %v1863 = vadd.f32 0.0, %v1862
        %v1864 = vpop.f32.mrf.mxu0
        %v1865 = vadd.f32 0.0, %v1864
        %1866 = vmatprep.mubr.f32.mxu0 0.0
        %1867 = vmatmul.mubr.f32.gmra.mxu0 %v1692
        %v1868 = vpop.f32.mrf.mxu0
        %v1869 = vadd.f32 0.0, %v1868
        %v1870 = vpop.f32.mrf.mxu0
        %v1871 = vadd.f32 0.0, %v1870
        %1872 = vmatprep.mubr.f32.mxu0 0.0
        %1873 = vmatmul.mubr.f32.gmra.mxu0 %v1695
        %v1874 = vpop.f32.mrf.mxu0
        %v1875 = vadd.f32 0.0, %v1874
        %v1876 = vpop.f32.mrf.mxu0
        %v1877 = vadd.f32 0.0, %v1876
        %1878 = vmatprep.mubr.f32.mxu0 0.0
        %1879 = vmatmul.mubr.f32.gmra.mxu0 %v1698
        %v1880 = vpop.f32.mrf.mxu0
        %v1881 = vadd.f32 0.0, %v1880
        %v1882 = vpop.f32.mrf.mxu0
        %v1883 = vadd.f32 0.0, %v1882
        %1884 = vmatprep.mubr.f32.mxu0 0.0
        %1885 = vmatmul.mubr.f32.gmra.mxu0 %v1701
        %v1886 = vpop.f32.mrf.mxu0
        %v1887 = vadd.f32 0.0, %v1886
        %v1888 = vpop.f32.mrf.mxu0
        %v1889 = vadd.f32 0.0, %v1888
        %1890 = vmatprep.mubr.f32.mxu0 0.0
        %1891 = vmatmul.mubr.f32.gmra.mxu0 %v1704
        %v1892 = vpop.f32.mrf.mxu0
        %v1893 = vadd.f32 0.0, %v1892
        %v1894 = vpop.f32.mrf.mxu0
        %v1895 = vadd.f32 0.0, %v1894
        %1896 = vmatprep.mubr.f32.mxu0 0.0
        %1897 = vmatmul.mubr.f32.gmra.mxu0 %v1707
        %v1898 = vpop.f32.mrf.mxu0
        %v1899 = vadd.f32 0.0, %v1898
        %v1900 = vpop.f32.mrf.mxu0
        %v1901 = vadd.f32 0.0, %v1900
        %1902 = vmatprep.mubr.f32.mxu0 0.0
        %1903 = vmatmul.mubr.f32.gmra.mxu0 %v1710
        %v1904 = vpop.f32.mrf.mxu0
        %v1905 = vadd.f32 0.0, %v1904
        %v1906 = vpop.f32.mrf.mxu0
        %v1907 = vadd.f32 0.0, %v1906
        %1908 = vmatprep.mubr.f32.mxu0 0.0
        %1909 = vmatmul.mubr.f32.gmra.mxu0 %v1713
        %v1910 = vpop.f32.mrf.mxu0
        %v1911 = vadd.f32 0.0, %v1910
        %v1912 = vpop.f32.mrf.mxu0
        %v1913 = vadd.f32 0.0, %v1912
        %1914 = vmatprep.mubr.f32.mxu0 0.0
        %1915 = vmatmul.mubr.f32.gmra.mxu0 %v1716
        %v1916 = vpop.f32.mrf.mxu0
        %v1917 = vadd.f32 0.0, %v1916
        %v1918 = vpop.f32.mrf.mxu0
        %v1919 = vadd.f32 0.0, %v1918
        %1920 = vmatprep.mubr.f32.mxu0 0.0
        %1921 = vmatmul.mubr.f32.gmra.mxu0 %v1719
        %v1922 = vpop.f32.mrf.mxu0
        %v1923 = vadd.f32 0.0, %v1922
        %v1924 = vpop.f32.mrf.mxu0
        %v1925 = vadd.f32 0.0, %v1924
        %1926 = vmatprep.mubr.f32.mxu0 0.0
        %1927 = vmatmul.mubr.f32.gmra.mxu0 %v1722
        %v1928 = vpop.f32.mrf.mxu0
        %v1929 = vadd.f32 0.0, %v1928
        %v1930 = vpop.f32.mrf.mxu0
        %v1931 = vadd.f32 0.0, %v1930
        %1932 = vmatprep.mubr.f32.mxu0 0.0
        %1933 = vmatmul.mubr.f32.gmra.mxu0 %v1725
        %v1934 = vpop.f32.mrf.mxu0
        %v1935 = vadd.f32 0.0, %v1934
        %v1936 = vpop.f32.mrf.mxu0
        %v1937 = vadd.f32 0.0, %v1936
        %1938 = vmatprep.mubr.f32.mxu0 0.0
        %1939 = vmatmul.mubr.f32.gmra.mxu0 %v1728
        %v1940 = vpop.f32.mrf.mxu0
        %v1941 = vadd.f32 0.0, %v1940
        %v1942 = vpop.f32.mrf.mxu0
        %v1943 = vadd.f32 0.0, %v1942
        %1944 = vmatprep.mubr.f32.mxu0 0.0
        %1945 = vmatmul.mubr.f32.gmra.mxu0 %v1731
        %v1946 = vpop.f32.mrf.mxu0
        %v1947 = vadd.f32 0.0, %v1946
        %v1948 = vpop.f32.mrf.mxu0
        %v1949 = vadd.f32 0.0, %v1948
        %1950 = vmatprep.mubr.f32.mxu0 0.0
        %1951 = vmatmul.mubr.f32.gmra.mxu0 %v1734
        %v1952 = vpop.f32.mrf.mxu0
        %v1953 = vadd.f32 0.0, %v1952
        %v1954 = vpop.f32.mrf.mxu0
        %v1955 = vadd.f32 0.0, %v1954
        %1956 = vmatprep.mubr.f32.mxu0 0.0
        %1957 = vmatmul.mubr.f32.gmra.mxu0 %v1737
        %v1958 = vpop.f32.mrf.mxu0
        %v1959 = vadd.f32 0.0, %v1958
        %v1960 = vpop.f32.mrf.mxu0
        %v1961 = vadd.f32 0.0, %v1960
        %1962 = vmatprep.mubr.f32.mxu0 0.0
        %1963 = vmatmul.mubr.f32.gmra.mxu0 %v1740
        %v1964 = vpop.f32.mrf.mxu0
        %v1965 = vadd.f32 0.0, %v1964
        %v1966 = vpop.f32.mrf.mxu0
        %v1967 = vadd.f32 0.0, %v1966
        %1968 = vmatprep.mubr.f32.mxu0 0.0
        %1969 = vmatmul.mubr.f32.gmra.mxu0 %v1743
        %v1970 = vpop.f32.mrf.mxu0
        %v1971 = vadd.f32 0.0, %v1970
        %v1972 = vpop.f32.mrf.mxu0
        %v1973 = vadd.f32 0.0, %v1972
        %1974 = vmatprep.mubr.f32.mxu0 0.0
        %1975 = vmatmul.mubr.f32.gmra.mxu0 %v1746
        %v1976 = vpop.f32.mrf.mxu0
        %v1977 = vadd.f32 0.0, %v1976
        %v1978 = vpop.f32.mrf.mxu0
        %v1979 = vadd.f32 0.0, %v1978
        %1980 = vmatprep.mubr.f32.mxu0 0.0
        %1981 = vmatmul.mubr.f32.gmra.mxu0 %v1749
        %v1982 = vpop.f32.mrf.mxu0
        %v1983 = vadd.f32 0.0, %v1982
        %v1984 = vpop.f32.mrf.mxu0
        %v1985 = vadd.f32 0.0, %v1984
        %1986 = vmatprep.mubr.f32.mxu0 0.0
        %1987 = vmatmul.mubr.f32.gmra.mxu0 %v1752
        %v1988 = vpop.f32.mrf.mxu0
        %v1989 = vadd.f32 0.0, %v1988
        %v1990 = vpop.f32.mrf.mxu0
        %v1991 = vadd.f32 0.0, %v1990
        %1992 = vmatprep.mubr.f32.mxu0 0.0
        %1993 = vmatmul.mubr.f32.gmra.mxu0 %v1755
        %v1994 = vpop.f32.mrf.mxu0
        %v1995 = vadd.f32 0.0, %v1994
        %v1996 = vpop.f32.mrf.mxu0
        %v1997 = vadd.f32 0.0, %v1996
        %1998 = vmatprep.mubr.f32.mxu0 0.0
        %1999 = vmatmul.mubr.f32.gmra.mxu0 %v1758
        %v2000 = vpop.f32.mrf.mxu0
        %v2001 = vadd.f32 0.0, %v2000
        %v2002 = vpop.f32.mrf.mxu0
        %v2003 = vadd.f32 0.0, %v2002
        %2004 = vmatprep.mubr.f32.mxu0 0.0
        %2005 = vmatmul.mubr.f32.gmra.mxu0 %v1761
        %v2006 = vpop.f32.mrf.mxu0
        %v2007 = vadd.f32 0.0, %v2006
        %v2008 = vpop.f32.mrf.mxu0
        %v2009 = vadd.f32 0.0, %v2008
        %2010 = vmatprep.mubr.f32.mxu0 0.0
        %2011 = vmatmul.mubr.f32.gmra.mxu0 %v1764
        %v2012 = vpop.f32.mrf.mxu0
        %v2013 = vadd.f32 0.0, %v2012
        %v2014 = vpop.f32.mrf.mxu0
        %v2015 = vadd.f32 0.0, %v2014
        %2016 = vmatprep.mubr.f32.mxu0 0.0
        %2017 = vmatmul.mubr.f32.gmra.mxu0 %v1767
        %v2018 = vpop.f32.mrf.mxu0
        %v2019 = vadd.f32 0.0, %v2018
        %v2020 = vpop.f32.mrf.mxu0
        %v2021 = vadd.f32 0.0, %v2020
        %2022 = vmatprep.mubr.f32.mxu0 0.0
        %2023 = vmatmul.mubr.f32.gmra.mxu0 %v1770
        %v2024 = vpop.f32.mrf.mxu0
        %v2025 = vadd.f32 0.0, %v2024
        %v2026 = vpop.f32.mrf.mxu0
        %v2027 = vadd.f32 0.0, %v2026
        %2028 = vmatprep.mubr.f32.mxu0 0.0
        %2029 = vmatmul.mubr.f32.gmra.mxu0 %v1773
        %v2030 = vpop.f32.mrf.mxu0
        %v2031 = vadd.f32 0.0, %v2030
        %v2032 = vpop.f32.mrf.mxu0
        %v2033 = vadd.f32 0.0, %v2032
        %2034 = vmatprep.mubr.f32.mxu0 0.0
        %2035 = vmatmul.mubr.f32.gmra.mxu0 %v1776
        %v2036 = vpop.f32.mrf.mxu0
        %v2037 = vadd.f32 0.0, %v2036
        %v2038 = vpop.f32.mrf.mxu0
        %v2039 = vadd.f32 0.0, %v2038
        %2040 = vdwg.mxu0
        %v2041 = vadd.f32 %v1566, %v1851
        %v2042 = vadd.f32 %v1567, %v1853
        %v2043 = vadd.f32 %v1568, %v1857
        %v2044 = vadd.f32 %v1569, %v1859
        %v2045 = vadd.f32 %v1570, %v1863
        %v2046 = vadd.f32 %v1571, %v1865
        %v2047 = vadd.f32 %v1572, %v1869
        %v2048 = vadd.f32 %v1573, %v1871
        %v2049 = vadd.f32 %v1574, %v1875
        %v2050 = vadd.f32 %v1575, %v1877
        %v2051 = vadd.f32 %v1576, %v1881
        %v2052 = vadd.f32 %v1577, %v1883
        %v2053 = vadd.f32 %v1578, %v1887
        %v2054 = vadd.f32 %v1579, %v1889
        %v2055 = vadd.f32 %v1580, %v1893
        %v2056 = vadd.f32 %v1581, %v1895
        %v2057 = vadd.f32 %v1582, %v1899
        %v2058 = vadd.f32 %v1583, %v1901
        %v2059 = vadd.f32 %v1584, %v1905
        %v2060 = vadd.f32 %v1585, %v1907
        %v2061 = vadd.f32 %v1586, %v1911
        %v2062 = vadd.f32 %v1587, %v1913
        %v2063 = vadd.f32 %v1588, %v1917
        %v2064 = vadd.f32 %v1589, %v1919
        %v2065 = vadd.f32 %v1590, %v1923
        %v2066 = vadd.f32 %v1591, %v1925
        %v2067 = vadd.f32 %v1592, %v1929
        %v2068 = vadd.f32 %v1593, %v1931
        %v2069 = vadd.f32 %v1594, %v1935
        %v2070 = vadd.f32 %v1595, %v1937
        %v2071 = vadd.f32 %v1596, %v1941
        %v2072 = vadd.f32 %v1597, %v1943
        %v2073 = vadd.f32 %v1598, %v1947
        %v2074 = vadd.f32 %v1599, %v1949
        %v2075 = vadd.f32 %v1600, %v1953
        %v2076 = vadd.f32 %v1601, %v1955
        %v2077 = vadd.f32 %v1602, %v1959
        %v2078 = vadd.f32 %v1603, %v1961
        %v2079 = vadd.f32 %v1604, %v1965
        %v2080 = vadd.f32 %v1605, %v1967
        %v2081 = vadd.f32 %v1606, %v1971
        %v2082 = vadd.f32 %v1607, %v1973
        %v2083 = vadd.f32 %v1608, %v1977
        %v2084 = vadd.f32 %v1609, %v1979
        %v2085 = vadd.f32 %v1610, %v1983
        %v2086 = vadd.f32 %v1611, %v1985
        %v2087 = vadd.f32 %v1612, %v1989
        %v2088 = vadd.f32 %v1613, %v1991
        %v2089 = vadd.f32 %v1614, %v1995
        %v2090 = vadd.f32 %v1615, %v1997
        %v2091 = vadd.f32 %v1616, %v2001
        %v2092 = vadd.f32 %v1617, %v2003
        %v2093 = vadd.f32 %v1618, %v2007
        %v2094 = vadd.f32 %v1619, %v2009
        %v2095 = vadd.f32 %v1620, %v2013
        %v2096 = vadd.f32 %v1621, %v2015
        %v2097 = vadd.f32 %v1622, %v2019
        %v2098 = vadd.f32 %v1623, %v2021
        %v2099 = vadd.f32 %v1624, %v2025
        %v2100 = vadd.f32 %v1625, %v2027
        %v2101 = vadd.f32 %v1626, %v2031
        %v2102 = vadd.f32 %v1627, %v2033
        %v2103 = vadd.f32 %v1628, %v2037
        %v2104 = vadd.f32 %v1629, %v2039
        %v2105 = vld [vmem:[%s1630 + $0x1] sm:$0xff]
        %v2106 = vld [vmem:[%s1630 + $0x9] sm:$0xff]
        %v2107 = vld [vmem:[%s1630 + $0x19] sm:$0xff]
        %v2108 = vld [vmem:[%s1630 + $0x21] sm:$0xff]
        %v2109 = vld [vmem:[%s1630 + $0x31] sm:$0xff]
        %v2110 = vld [vmem:[%s1630 + $0x39] sm:$0xff]
        %v2111 = vld [vmem:[%s1630 + $0x49] sm:$0xff]
        %v2112 = vld [vmem:[%s1630 + $0x51] sm:$0xff]
        %v2113 = vld [vmem:[%s1630 + $0x61] sm:$0xff]
        %v2114 = vld [vmem:[%s1630 + $0x69] sm:$0xff]
        %v2115 = vld [vmem:[%s1630 + $0x79] sm:$0xff]
        %v2116 = vld [vmem:[%s1630 + $0x81] sm:$0xff]
        %v2117 = vld [vmem:[%s1630 + $0x91] sm:$0xff]
        %v2118 = vld [vmem:[%s1630 + $0x99] sm:$0xff]
        %v2119 = vld [vmem:[%s1630 + $0xa9] sm:$0xff]
        %v2120 = vld [vmem:[%s1630 + $0xb1] sm:$0xff]
        %v2121 = vld [vmem:[%s1630 + $0xc1] sm:$0xff]
        %v2122 = vld [vmem:[%s1630 + $0xc9] sm:$0xff]
        %v2123 = vld [vmem:[%s1630 + $0xd9] sm:$0xff]
        %v2124 = vld [vmem:[%s1630 + $0xe1] sm:$0xff]
        %v2125 = vld [vmem:[%s1630 + $0xf1] sm:$0xff]
        %v2126 = vld [vmem:[%s1630 + $0xf9] sm:$0xff]
        %v2127 = vld [vmem:[%s1630 + $0x109] sm:$0xff]
        %v2128 = vld [vmem:[%s1630 + $0x111] sm:$0xff]
        %v2129 = vld [vmem:[%s1630 + $0x121] sm:$0xff]
        %v2130 = vld [vmem:[%s1630 + $0x129] sm:$0xff]
        %v2131 = vld [vmem:[%s1630 + $0x139] sm:$0xff]
        %v2132 = vld [vmem:[%s1630 + $0x141] sm:$0xff]
        %v2133 = vld [vmem:[%s1630 + $0x151] sm:$0xff]
        %v2134 = vld [vmem:[%s1630 + $0x159] sm:$0xff]
        %v2135 = vld [vmem:[%s1630 + $0x169] sm:$0xff]
        %v2136 = vld [vmem:[%s1630 + $0x171] sm:$0xff]
        %s2137 = scalar_lea.vmem %s3, 576
        %v2138 = vld [vmem:[%s2137] sm:$0xff]
        %v2139 = vld [vmem:[%s2137 + $0x8] sm:$0xff]
        %v2140 = vld [vmem:[%s2137 + $0x10] sm:$0xff]
        %v2141 = vld [vmem:[%s2137 + $0x18] sm:$0xff]
        %v2142 = vld [vmem:[%s2137 + $0x20] sm:$0xff]
        %v2143 = vld [vmem:[%s2137 + $0x28] sm:$0xff]
        %v2144 = vld [vmem:[%s2137 + $0x30] sm:$0xff]
        %v2145 = vld [vmem:[%s2137 + $0x38] sm:$0xff]
        %v2146 = vld [vmem:[%s2137 + $0x40] sm:$0xff]
        %v2147 = vld [vmem:[%s2137 + $0x48] sm:$0xff]
        %v2148 = vld [vmem:[%s2137 + $0x50] sm:$0xff]
        %v2149 = vld [vmem:[%s2137 + $0x58] sm:$0xff]
        %v2150 = vld [vmem:[%s2137 + $0x60] sm:$0xff]
        %v2151 = vld [vmem:[%s2137 + $0x68] sm:$0xff]
        %v2152 = vld [vmem:[%s2137 + $0x70] sm:$0xff]
        %v2153 = vld [vmem:[%s2137 + $0x78] sm:$0xff]
        %v2154 = vld [vmem:[%s2137 + $0x80] sm:$0xf]
        %v2155 = vld [vmem:[%s2137 + $0x88] sm:$0xf]
        %v2157 = vsel %vm436, %v2105, 0
        %v2160 = vsel %vm436, %v2106, 0
        %v2163 = vsel %vm436, %v2107, 0
        %v2166 = vsel %vm436, %v2108, 0
        %v2169 = vsel %vm436, %v2109, 0
        %v2172 = vsel %vm436, %v2110, 0
        %v2175 = vsel %vm436, %v2111, 0
        %v2178 = vsel %vm436, %v2112, 0
        %v2181 = vsel %vm436, %v2113, 0
        %v2184 = vsel %vm436, %v2114, 0
        %v2187 = vsel %vm436, %v2115, 0
        %v2190 = vsel %vm436, %v2116, 0
        %v2193 = vsel %vm436, %v2117, 0
        %v2196 = vsel %vm436, %v2118, 0
        %v2199 = vsel %vm436, %v2119, 0
        %v2202 = vsel %vm436, %v2120, 0
        %v2205 = vsel %vm436, %v2121, 0
        %v2208 = vsel %vm436, %v2122, 0
        %v2211 = vsel %vm436, %v2123, 0
        %v2214 = vsel %vm436, %v2124, 0
        %v2217 = vsel %vm436, %v2125, 0
        %v2220 = vsel %vm436, %v2126, 0
        %v2223 = vsel %vm436, %v2127, 0
        %v2226 = vsel %vm436, %v2128, 0
        %v2229 = vsel %vm436, %v2129, 0
        %v2232 = vsel %vm436, %v2130, 0
        %v2235 = vsel %vm436, %v2131, 0
        %v2238 = vsel %vm436, %v2132, 0
        %v2241 = vsel %vm436, %v2133, 0
        %v2244 = vsel %vm436, %v2134, 0
        %v2247 = vsel %vm436, %v2135, 0
        %v2250 = vsel %vm436, %v2136, 0
        %v2253 = vsel %vm533, %v2154, 0
        %v2256 = vsel %vm533, %v2155, 0
        %2258 = vmatprep.subr.mxu0 0.0
        %2259 = vmatpush1.msra.mxu0 0.0
        %2260 = vmatprep.subr.mxu0 0.0
        %2261 = vmatpush1.msra.mxu0 0.0
        %2262 = vmatprep.subr.mxu0 0.0
        %2263 = vmatpush1.msra.mxu0 0.0
        %2264 = vmatprep.subr.mxu0 0.0
        %2265 = vmatpush1.msra.mxu0 0.0
        %2266 = vmatprep.subr.mxu0 0.0
        %2267 = vmatpush1.msra.mxu0 0.0
        %2268 = vmatprep.subr.mxu0 0.0
        %2269 = vmatpush1.msra.mxu0 0.0
        %2270 = vmatprep.subr.mxu0 0.0
        %2271 = vmatpush1.msra.mxu0 0.0
        %2272 = vmatprep.subr.mxu0 %v2256
        %2273 = vmatpush1.msra.mxu0 %v2253
        %2274 = vmatprep.subr.mxu0 %v2153
        %2275 = vmatpush1.msra.mxu0 %v2152
        %2276 = vmatprep.subr.mxu0 %v2151
        %2277 = vmatpush1.msra.mxu0 %v2150
        %2278 = vmatprep.subr.mxu0 %v2149
        %2279 = vmatpush1.msra.mxu0 %v2148
        %2280 = vmatprep.subr.mxu0 %v2147
        %2281 = vmatpush1.msra.mxu0 %v2146
        %2282 = vmatprep.subr.mxu0 %v2145
        %2283 = vmatpush1.msra.mxu0 %v2144
        %2284 = vmatprep.subr.mxu0 %v2143
        %2285 = vmatpush1.msra.mxu0 %v2142
        %2286 = vmatprep.subr.mxu0 %v2141
        %2287 = vmatpush1.msra.mxu0 %v2140
        %2288 = vmatprep.subr.mxu0 %v2139
        %2289 = vmatpush1.msra.mxu0 %v2138
        %2290 = vmatprep.subr.mxu0 0.0
        %2291 = vmatpush2.msra.mxu0 0.0
        %2292 = vmatprep.subr.mxu0 0.0
        %2293 = vmatpush2.msra.mxu0 0.0
        %2294 = vmatprep.subr.mxu0 0.0
        %2295 = vmatpush2.msra.mxu0 0.0
        %2296 = vmatprep.subr.mxu0 0.0
        %2297 = vmatpush2.msra.mxu0 0.0
        %2298 = vmatprep.subr.mxu0 0.0
        %2299 = vmatpush2.msra.mxu0 0.0
        %2300 = vmatprep.subr.mxu0 0.0
        %2301 = vmatpush2.msra.mxu0 0.0
        %2302 = vmatprep.subr.mxu0 0.0
        %2303 = vmatpush2.msra.mxu0 0.0
        %2304 = vmatprep.subr.mxu0 0.0
        %2305 = vmatpush2.msra.mxu0 0.0
        %2306 = vmatprep.subr.mxu0 0.0
        %2307 = vmatpush2.msra.mxu0 0.0
        %2308 = vmatprep.subr.mxu0 0.0
        %2309 = vmatpush2.msra.mxu0 0.0
        %2310 = vmatprep.subr.mxu0 0.0
        %2311 = vmatpush2.msra.mxu0 0.0
        %2312 = vmatprep.subr.mxu0 0.0
        %2313 = vmatpush2.msra.mxu0 0.0
        %2314 = vmatprep.subr.mxu0 0.0
        %2315 = vmatpush2.msra.mxu0 0.0
        %2316 = vmatprep.subr.mxu0 0.0
        %2317 = vmatpush2.msra.mxu0 0.0
        %2318 = vmatprep.subr.mxu0 0.0
        %2319 = vmatpush2.msra.mxu0 0.0
        %2320 = vmatprep.subr.mxu0 0.0
        %2321 = vmatpush2.msra.mxu0 0.0
        %2322 = vmatprep.mubr.f32.mxu0 0.0
        %2323 = vmatmul.mubr.f32.gmra.mxu0 %v2157
        %v2324 = vpop.f32.mrf.mxu0
        %v2325 = vadd.f32 0.0, %v2324
        %v2326 = vpop.f32.mrf.mxu0
        %v2327 = vadd.f32 0.0, %v2326
        %2328 = vmatprep.mubr.f32.mxu0 0.0
        %2329 = vmatmul.mubr.f32.gmra.mxu0 %v2160
        %v2330 = vpop.f32.mrf.mxu0
        %v2331 = vadd.f32 0.0, %v2330
        %v2332 = vpop.f32.mrf.mxu0
        %v2333 = vadd.f32 0.0, %v2332
        %2334 = vmatprep.mubr.f32.mxu0 0.0
        %2335 = vmatmul.mubr.f32.gmra.mxu0 %v2163
        %v2336 = vpop.f32.mrf.mxu0
        %v2337 = vadd.f32 0.0, %v2336
        %v2338 = vpop.f32.mrf.mxu0
        %v2339 = vadd.f32 0.0, %v2338
        %2340 = vmatprep.mubr.f32.mxu0 0.0
        %2341 = vmatmul.mubr.f32.gmra.mxu0 %v2166
        %v2342 = vpop.f32.mrf.mxu0
        %v2343 = vadd.f32 0.0, %v2342
        %v2344 = vpop.f32.mrf.mxu0
        %v2345 = vadd.f32 0.0, %v2344
        %2346 = vmatprep.mubr.f32.mxu0 0.0
        %2347 = vmatmul.mubr.f32.gmra.mxu0 %v2169
        %v2348 = vpop.f32.mrf.mxu0
        %v2349 = vadd.f32 0.0, %v2348
        %v2350 = vpop.f32.mrf.mxu0
        %v2351 = vadd.f32 0.0, %v2350
        %2352 = vmatprep.mubr.f32.mxu0 0.0
        %2353 = vmatmul.mubr.f32.gmra.mxu0 %v2172
        %v2354 = vpop.f32.mrf.mxu0
        %v2355 = vadd.f32 0.0, %v2354
        %v2356 = vpop.f32.mrf.mxu0
        %v2357 = vadd.f32 0.0, %v2356
        %2358 = vmatprep.mubr.f32.mxu0 0.0
        %2359 = vmatmul.mubr.f32.gmra.mxu0 %v2175
        %v2360 = vpop.f32.mrf.mxu0
        %v2361 = vadd.f32 0.0, %v2360
        %v2362 = vpop.f32.mrf.mxu0
        %v2363 = vadd.f32 0.0, %v2362
        %2364 = vmatprep.mubr.f32.mxu0 0.0
        %2365 = vmatmul.mubr.f32.gmra.mxu0 %v2178
        %v2366 = vpop.f32.mrf.mxu0
        %v2367 = vadd.f32 0.0, %v2366
        %v2368 = vpop.f32.mrf.mxu0
        %v2369 = vadd.f32 0.0, %v2368
        %2370 = vmatprep.mubr.f32.mxu0 0.0
        %2371 = vmatmul.mubr.f32.gmra.mxu0 %v2181
        %v2372 = vpop.f32.mrf.mxu0
        %v2373 = vadd.f32 0.0, %v2372
        %v2374 = vpop.f32.mrf.mxu0
        %v2375 = vadd.f32 0.0, %v2374
        %2376 = vmatprep.mubr.f32.mxu0 0.0
        %2377 = vmatmul.mubr.f32.gmra.mxu0 %v2184
        %v2378 = vpop.f32.mrf.mxu0
        %v2379 = vadd.f32 0.0, %v2378
        %v2380 = vpop.f32.mrf.mxu0
        %v2381 = vadd.f32 0.0, %v2380
        %2382 = vmatprep.mubr.f32.mxu0 0.0
        %2383 = vmatmul.mubr.f32.gmra.mxu0 %v2187
        %v2384 = vpop.f32.mrf.mxu0
        %v2385 = vadd.f32 0.0, %v2384
        %v2386 = vpop.f32.mrf.mxu0
        %v2387 = vadd.f32 0.0, %v2386
        %2388 = vmatprep.mubr.f32.mxu0 0.0
        %2389 = vmatmul.mubr.f32.gmra.mxu0 %v2190
        %v2390 = vpop.f32.mrf.mxu0
        %v2391 = vadd.f32 0.0, %v2390
        %v2392 = vpop.f32.mrf.mxu0
        %v2393 = vadd.f32 0.0, %v2392
        %2394 = vmatprep.mubr.f32.mxu0 0.0
        %2395 = vmatmul.mubr.f32.gmra.mxu0 %v2193
        %v2396 = vpop.f32.mrf.mxu0
        %v2397 = vadd.f32 0.0, %v2396
        %v2398 = vpop.f32.mrf.mxu0
        %v2399 = vadd.f32 0.0, %v2398
        %2400 = vmatprep.mubr.f32.mxu0 0.0
        %2401 = vmatmul.mubr.f32.gmra.mxu0 %v2196
        %v2402 = vpop.f32.mrf.mxu0
        %v2403 = vadd.f32 0.0, %v2402
        %v2404 = vpop.f32.mrf.mxu0
        %v2405 = vadd.f32 0.0, %v2404
        %2406 = vmatprep.mubr.f32.mxu0 0.0
        %2407 = vmatmul.mubr.f32.gmra.mxu0 %v2199
        %v2408 = vpop.f32.mrf.mxu0
        %v2409 = vadd.f32 0.0, %v2408
        %v2410 = vpop.f32.mrf.mxu0
        %v2411 = vadd.f32 0.0, %v2410
        %2412 = vmatprep.mubr.f32.mxu0 0.0
        %2413 = vmatmul.mubr.f32.gmra.mxu0 %v2202
        %v2414 = vpop.f32.mrf.mxu0
        %v2415 = vadd.f32 0.0, %v2414
        %v2416 = vpop.f32.mrf.mxu0
        %v2417 = vadd.f32 0.0, %v2416
        %2418 = vmatprep.mubr.f32.mxu0 0.0
        %2419 = vmatmul.mubr.f32.gmra.mxu0 %v2205
        %v2420 = vpop.f32.mrf.mxu0
        %v2421 = vadd.f32 0.0, %v2420
        %v2422 = vpop.f32.mrf.mxu0
        %v2423 = vadd.f32 0.0, %v2422
        %2424 = vmatprep.mubr.f32.mxu0 0.0
        %2425 = vmatmul.mubr.f32.gmra.mxu0 %v2208
        %v2426 = vpop.f32.mrf.mxu0
        %v2427 = vadd.f32 0.0, %v2426
        %v2428 = vpop.f32.mrf.mxu0
        %v2429 = vadd.f32 0.0, %v2428
        %2430 = vmatprep.mubr.f32.mxu0 0.0
        %2431 = vmatmul.mubr.f32.gmra.mxu0 %v2211
        %v2432 = vpop.f32.mrf.mxu0
        %v2433 = vadd.f32 0.0, %v2432
        %v2434 = vpop.f32.mrf.mxu0
        %v2435 = vadd.f32 0.0, %v2434
        %2436 = vmatprep.mubr.f32.mxu0 0.0
        %2437 = vmatmul.mubr.f32.gmra.mxu0 %v2214
        %v2438 = vpop.f32.mrf.mxu0
        %v2439 = vadd.f32 0.0, %v2438
        %v2440 = vpop.f32.mrf.mxu0
        %v2441 = vadd.f32 0.0, %v2440
        %2442 = vmatprep.mubr.f32.mxu0 0.0
        %2443 = vmatmul.mubr.f32.gmra.mxu0 %v2217
        %v2444 = vpop.f32.mrf.mxu0
        %v2445 = vadd.f32 0.0, %v2444
        %v2446 = vpop.f32.mrf.mxu0
        %v2447 = vadd.f32 0.0, %v2446
        %2448 = vmatprep.mubr.f32.mxu0 0.0
        %2449 = vmatmul.mubr.f32.gmra.mxu0 %v2220
        %v2450 = vpop.f32.mrf.mxu0
        %v2451 = vadd.f32 0.0, %v2450
        %v2452 = vpop.f32.mrf.mxu0
        %v2453 = vadd.f32 0.0, %v2452
        %2454 = vmatprep.mubr.f32.mxu0 0.0
        %2455 = vmatmul.mubr.f32.gmra.mxu0 %v2223
        %v2456 = vpop.f32.mrf.mxu0
        %v2457 = vadd.f32 0.0, %v2456
        %v2458 = vpop.f32.mrf.mxu0
        %v2459 = vadd.f32 0.0, %v2458
        %2460 = vmatprep.mubr.f32.mxu0 0.0
        %2461 = vmatmul.mubr.f32.gmra.mxu0 %v2226
        %v2462 = vpop.f32.mrf.mxu0
        %v2463 = vadd.f32 0.0, %v2462
        %v2464 = vpop.f32.mrf.mxu0
        %v2465 = vadd.f32 0.0, %v2464
        %2466 = vmatprep.mubr.f32.mxu0 0.0
        %2467 = vmatmul.mubr.f32.gmra.mxu0 %v2229
        %v2468 = vpop.f32.mrf.mxu0
        %v2469 = vadd.f32 0.0, %v2468
        %v2470 = vpop.f32.mrf.mxu0
        %v2471 = vadd.f32 0.0, %v2470
        %2472 = vmatprep.mubr.f32.mxu0 0.0
        %2473 = vmatmul.mubr.f32.gmra.mxu0 %v2232
        %v2474 = vpop.f32.mrf.mxu0
        %v2475 = vadd.f32 0.0, %v2474
        %v2476 = vpop.f32.mrf.mxu0
        %v2477 = vadd.f32 0.0, %v2476
        %2478 = vmatprep.mubr.f32.mxu0 0.0
        %2479 = vmatmul.mubr.f32.gmra.mxu0 %v2235
        %v2480 = vpop.f32.mrf.mxu0
        %v2481 = vadd.f32 0.0, %v2480
        %v2482 = vpop.f32.mrf.mxu0
        %v2483 = vadd.f32 0.0, %v2482
        %2484 = vmatprep.mubr.f32.mxu0 0.0
        %2485 = vmatmul.mubr.f32.gmra.mxu0 %v2238
        %v2486 = vpop.f32.mrf.mxu0
        %v2487 = vadd.f32 0.0, %v2486
        %v2488 = vpop.f32.mrf.mxu0
        %v2489 = vadd.f32 0.0, %v2488
        %2490 = vmatprep.mubr.f32.mxu0 0.0
        %2491 = vmatmul.mubr.f32.gmra.mxu0 %v2241
        %v2492 = vpop.f32.mrf.mxu0
        %v2493 = vadd.f32 0.0, %v2492
        %v2494 = vpop.f32.mrf.mxu0
        %v2495 = vadd.f32 0.0, %v2494
        %2496 = vmatprep.mubr.f32.mxu0 0.0
        %2497 = vmatmul.mubr.f32.gmra.mxu0 %v2244
        %v2498 = vpop.f32.mrf.mxu0
        %v2499 = vadd.f32 0.0, %v2498
        %v2500 = vpop.f32.mrf.mxu0
        %v2501 = vadd.f32 0.0, %v2500
        %2502 = vmatprep.mubr.f32.mxu0 0.0
        %2503 = vmatmul.mubr.f32.gmra.mxu0 %v2247
        %v2504 = vpop.f32.mrf.mxu0
        %v2505 = vadd.f32 0.0, %v2504
        %v2506 = vpop.f32.mrf.mxu0
        %v2507 = vadd.f32 0.0, %v2506
        %2508 = vmatprep.mubr.f32.mxu0 0.0
        %2509 = vmatmul.mubr.f32.gmra.mxu0 %v2250
        %v2510 = vpop.f32.mrf.mxu0
        %v2511 = vadd.f32 0.0, %v2510
        %v2512 = vpop.f32.mrf.mxu0
        %v2513 = vadd.f32 0.0, %v2512
        %2514 = vdwg.mxu0
        %v2515 = vadd.f32 %v2041, %v2325
        %v2516 = vadd.f32 %v2042, %v2327
        %v2517 = vadd.f32 %v2043, %v2331
        %v2518 = vadd.f32 %v2044, %v2333
        %v2519 = vadd.f32 %v2045, %v2337
        %v2520 = vadd.f32 %v2046, %v2339
        %v2521 = vadd.f32 %v2047, %v2343
        %v2522 = vadd.f32 %v2048, %v2345
        %v2523 = vadd.f32 %v2049, %v2349
        %v2524 = vadd.f32 %v2050, %v2351
        %v2525 = vadd.f32 %v2051, %v2355
        %v2526 = vadd.f32 %v2052, %v2357
        %v2527 = vadd.f32 %v2053, %v2361
        %v2528 = vadd.f32 %v2054, %v2363
        %v2529 = vadd.f32 %v2055, %v2367
        %v2530 = vadd.f32 %v2056, %v2369
        %v2531 = vadd.f32 %v2057, %v2373
        %v2532 = vadd.f32 %v2058, %v2375
        %v2533 = vadd.f32 %v2059, %v2379
        %v2534 = vadd.f32 %v2060, %v2381
        %v2535 = vadd.f32 %v2061, %v2385
        %v2536 = vadd.f32 %v2062, %v2387
        %v2537 = vadd.f32 %v2063, %v2391
        %v2538 = vadd.f32 %v2064, %v2393
        %v2539 = vadd.f32 %v2065, %v2397
        %v2540 = vadd.f32 %v2066, %v2399
        %v2541 = vadd.f32 %v2067, %v2403
        %v2542 = vadd.f32 %v2068, %v2405
        %v2543 = vadd.f32 %v2069, %v2409
        %v2544 = vadd.f32 %v2070, %v2411
        %v2545 = vadd.f32 %v2071, %v2415
        %v2546 = vadd.f32 %v2072, %v2417
        %v2547 = vadd.f32 %v2073, %v2421
        %v2548 = vadd.f32 %v2074, %v2423
        %v2549 = vadd.f32 %v2075, %v2427
        %v2550 = vadd.f32 %v2076, %v2429
        %v2551 = vadd.f32 %v2077, %v2433
        %v2552 = vadd.f32 %v2078, %v2435
        %v2553 = vadd.f32 %v2079, %v2439
        %v2554 = vadd.f32 %v2080, %v2441
        %v2555 = vadd.f32 %v2081, %v2445
        %v2556 = vadd.f32 %v2082, %v2447
        %v2557 = vadd.f32 %v2083, %v2451
        %v2558 = vadd.f32 %v2084, %v2453
        %v2559 = vadd.f32 %v2085, %v2457
        %v2560 = vadd.f32 %v2086, %v2459
        %v2561 = vadd.f32 %v2087, %v2463
        %v2562 = vadd.f32 %v2088, %v2465
        %v2563 = vadd.f32 %v2089, %v2469
        %v2564 = vadd.f32 %v2090, %v2471
        %v2565 = vadd.f32 %v2091, %v2475
        %v2566 = vadd.f32 %v2092, %v2477
        %v2567 = vadd.f32 %v2093, %v2481
        %v2568 = vadd.f32 %v2094, %v2483
        %v2569 = vadd.f32 %v2095, %v2487
        %v2570 = vadd.f32 %v2096, %v2489
        %v2571 = vadd.f32 %v2097, %v2493
        %v2572 = vadd.f32 %v2098, %v2495
        %v2573 = vadd.f32 %v2099, %v2499
        %v2574 = vadd.f32 %v2100, %v2501
        %v2575 = vadd.f32 %v2101, %v2505
        %v2576 = vadd.f32 %v2102, %v2507
        %v2577 = vadd.f32 %v2103, %v2511
        %v2578 = vadd.f32 %v2104, %v2513
        %v2579 = vld [vmem:[%s1630 + $0x2] sm:$0xff]
        %v2580 = vld [vmem:[%s1630 + $0xa] sm:$0xff]
        %v2581 = vld [vmem:[%s1630 + $0x1a] sm:$0xff]
        %v2582 = vld [vmem:[%s1630 + $0x22] sm:$0xff]
        %v2583 = vld [vmem:[%s1630 + $0x32] sm:$0xff]
        %v2584 = vld [vmem:[%s1630 + $0x3a] sm:$0xff]
        %v2585 = vld [vmem:[%s1630 + $0x4a] sm:$0xff]
        %v2586 = vld [vmem:[%s1630 + $0x52] sm:$0xff]
        %v2587 = vld [vmem:[%s1630 + $0x62] sm:$0xff]
        %v2588 = vld [vmem:[%s1630 + $0x6a] sm:$0xff]
        %v2589 = vld [vmem:[%s1630 + $0x7a] sm:$0xff]
        %v2590 = vld [vmem:[%s1630 + $0x82] sm:$0xff]
        %v2591 = vld [vmem:[%s1630 + $0x92] sm:$0xff]
        %v2592 = vld [vmem:[%s1630 + $0x9a] sm:$0xff]
        %v2593 = vld [vmem:[%s1630 + $0xaa] sm:$0xff]
        %v2594 = vld [vmem:[%s1630 + $0xb2] sm:$0xff]
        %v2595 = vld [vmem:[%s1630 + $0xc2] sm:$0xff]
        %v2596 = vld [vmem:[%s1630 + $0xca] sm:$0xff]
        %v2597 = vld [vmem:[%s1630 + $0xda] sm:$0xff]
        %v2598 = vld [vmem:[%s1630 + $0xe2] sm:$0xff]
        %v2599 = vld [vmem:[%s1630 + $0xf2] sm:$0xff]
        %v2600 = vld [vmem:[%s1630 + $0xfa] sm:$0xff]
        %v2601 = vld [vmem:[%s1630 + $0x10a] sm:$0xff]
        %v2602 = vld [vmem:[%s1630 + $0x112] sm:$0xff]
        %v2603 = vld [vmem:[%s1630 + $0x122] sm:$0xff]
        %v2604 = vld [vmem:[%s1630 + $0x12a] sm:$0xff]
        %v2605 = vld [vmem:[%s1630 + $0x13a] sm:$0xff]
        %v2606 = vld [vmem:[%s1630 + $0x142] sm:$0xff]
        %v2607 = vld [vmem:[%s1630 + $0x152] sm:$0xff]
        %v2608 = vld [vmem:[%s1630 + $0x15a] sm:$0xff]
        %v2609 = vld [vmem:[%s1630 + $0x16a] sm:$0xff]
        %v2610 = vld [vmem:[%s1630 + $0x172] sm:$0xff]
        %s2611 = scalar_lea.vmem %s3, 720
        %v2612 = vld [vmem:[%s2611] sm:$0xff]
        %v2613 = vld [vmem:[%s2611 + $0x8] sm:$0xff]
        %v2614 = vld [vmem:[%s2611 + $0x10] sm:$0xff]
        %v2615 = vld [vmem:[%s2611 + $0x18] sm:$0xff]
        %v2616 = vld [vmem:[%s2611 + $0x20] sm:$0xff]
        %v2617 = vld [vmem:[%s2611 + $0x28] sm:$0xff]
        %v2618 = vld [vmem:[%s2611 + $0x30] sm:$0xff]
        %v2619 = vld [vmem:[%s2611 + $0x38] sm:$0xff]
        %v2620 = vld [vmem:[%s2611 + $0x40] sm:$0xff]
        %v2621 = vld [vmem:[%s2611 + $0x48] sm:$0xff]
        %v2622 = vld [vmem:[%s2611 + $0x50] sm:$0xff]
        %v2623 = vld [vmem:[%s2611 + $0x58] sm:$0xff]
        %v2624 = vld [vmem:[%s2611 + $0x60] sm:$0xff]
        %v2625 = vld [vmem:[%s2611 + $0x68] sm:$0xff]
        %v2626 = vld [vmem:[%s2611 + $0x70] sm:$0xff]
        %v2627 = vld [vmem:[%s2611 + $0x78] sm:$0xff]
        %v2628 = vld [vmem:[%s2611 + $0x80] sm:$0xf]
        %v2629 = vld [vmem:[%s2611 + $0x88] sm:$0xf]
        %v2631 = vsel %vm436, %v2579, 0
        %v2634 = vsel %vm436, %v2580, 0
        %v2637 = vsel %vm436, %v2581, 0
        %v2640 = vsel %vm436, %v2582, 0
        %v2643 = vsel %vm436, %v2583, 0
        %v2646 = vsel %vm436, %v2584, 0
        %v2649 = vsel %vm436, %v2585, 0
        %v2652 = vsel %vm436, %v2586, 0
        %v2655 = vsel %vm436, %v2587, 0
        %v2658 = vsel %vm436, %v2588, 0
        %v2661 = vsel %vm436, %v2589, 0
        %v2664 = vsel %vm436, %v2590, 0
        %v2667 = vsel %vm436, %v2591, 0
        %v2670 = vsel %vm436, %v2592, 0
        %v2673 = vsel %vm436, %v2593, 0
        %v2676 = vsel %vm436, %v2594, 0
        %v2679 = vsel %vm436, %v2595, 0
        %v2682 = vsel %vm436, %v2596, 0
        %v2685 = vsel %vm436, %v2597, 0
        %v2688 = vsel %vm436, %v2598, 0
        %v2691 = vsel %vm436, %v2599, 0
        %v2694 = vsel %vm436, %v2600, 0
        %v2697 = vsel %vm436, %v2601, 0
        %v2700 = vsel %vm436, %v2602, 0
        %v2703 = vsel %vm436, %v2603, 0
        %v2706 = vsel %vm436, %v2604, 0
        %v2709 = vsel %vm436, %v2605, 0
        %v2712 = vsel %vm436, %v2606, 0
        %v2715 = vsel %vm436, %v2607, 0
        %v2718 = vsel %vm436, %v2608, 0
        %v2721 = vsel %vm436, %v2609, 0
        %v2724 = vsel %vm436, %v2610, 0
        %v2727 = vsel %vm533, %v2628, 0
        %v2730 = vsel %vm533, %v2629, 0
        %2732 = vmatprep.subr.mxu0 0.0
        %2733 = vmatpush1.msra.mxu0 0.0
        %2734 = vmatprep.subr.mxu0 0.0
        %2735 = vmatpush1.msra.mxu0 0.0
        %2736 = vmatprep.subr.mxu0 0.0
        %2737 = vmatpush1.msra.mxu0 0.0
        %2738 = vmatprep.subr.mxu0 0.0
        %2739 = vmatpush1.msra.mxu0 0.0
        %2740 = vmatprep.subr.mxu0 0.0
        %2741 = vmatpush1.msra.mxu0 0.0
        %2742 = vmatprep.subr.mxu0 0.0
        %2743 = vmatpush1.msra.mxu0 0.0
        %2744 = vmatprep.subr.mxu0 0.0
        %2745 = vmatpush1.msra.mxu0 0.0
        %2746 = vmatprep.subr.mxu0 %v2730
        %2747 = vmatpush1.msra.mxu0 %v2727
        %2748 = vmatprep.subr.mxu0 %v2627
        %2749 = vmatpush1.msra.mxu0 %v2626
        %2750 = vmatprep.subr.mxu0 %v2625
        %2751 = vmatpush1.msra.mxu0 %v2624
        %2752 = vmatprep.subr.mxu0 %v2623
        %2753 = vmatpush1.msra.mxu0 %v2622
        %2754 = vmatprep.subr.mxu0 %v2621
        %2755 = vmatpush1.msra.mxu0 %v2620
        %2756 = vmatprep.subr.mxu0 %v2619
        %2757 = vmatpush1.msra.mxu0 %v2618
        %2758 = vmatprep.subr.mxu0 %v2617
        %2759 = vmatpush1.msra.mxu0 %v2616
        %2760 = vmatprep.subr.mxu0 %v2615
        %2761 = vmatpush1.msra.mxu0 %v2614
        %2762 = vmatprep.subr.mxu0 %v2613
        %2763 = vmatpush1.msra.mxu0 %v2612
        %2764 = vmatprep.subr.mxu0 0.0
        %2765 = vmatpush2.msra.mxu0 0.0
        %2766 = vmatprep.subr.mxu0 0.0
        %2767 = vmatpush2.msra.mxu0 0.0
        %2768 = vmatprep.subr.mxu0 0.0
        %2769 = vmatpush2.msra.mxu0 0.0
        %2770 = vmatprep.subr.mxu0 0.0
        %2771 = vmatpush2.msra.mxu0 0.0
        %2772 = vmatprep.subr.mxu0 0.0
        %2773 = vmatpush2.msra.mxu0 0.0
        %2774 = vmatprep.subr.mxu0 0.0
        %2775 = vmatpush2.msra.mxu0 0.0
        %2776 = vmatprep.subr.mxu0 0.0
        %2777 = vmatpush2.msra.mxu0 0.0
        %2778 = vmatprep.subr.mxu0 0.0
        %2779 = vmatpush2.msra.mxu0 0.0
        %2780 = vmatprep.subr.mxu0 0.0
        %2781 = vmatpush2.msra.mxu0 0.0
        %2782 = vmatprep.subr.mxu0 0.0
        %2783 = vmatpush2.msra.mxu0 0.0
        %2784 = vmatprep.subr.mxu0 0.0
        %2785 = vmatpush2.msra.mxu0 0.0
        %2786 = vmatprep.subr.mxu0 0.0
        %2787 = vmatpush2.msra.mxu0 0.0
        %2788 = vmatprep.subr.mxu0 0.0
        %2789 = vmatpush2.msra.mxu0 0.0
        %2790 = vmatprep.subr.mxu0 0.0
        %2791 = vmatpush2.msra.mxu0 0.0
        %2792 = vmatprep.subr.mxu0 0.0
        %2793 = vmatpush2.msra.mxu0 0.0
        %2794 = vmatprep.subr.mxu0 0.0
        %2795 = vmatpush2.msra.mxu0 0.0
        %2796 = vmatprep.mubr.f32.mxu0 0.0
        %2797 = vmatmul.mubr.f32.gmra.mxu0 %v2631
        %v2798 = vpop.f32.mrf.mxu0
        %v2799 = vadd.f32 0.0, %v2798
        %v2800 = vpop.f32.mrf.mxu0
        %v2801 = vadd.f32 0.0, %v2800
        %2802 = vmatprep.mubr.f32.mxu0 0.0
        %2803 = vmatmul.mubr.f32.gmra.mxu0 %v2634
        %v2804 = vpop.f32.mrf.mxu0
        %v2805 = vadd.f32 0.0, %v2804
        %v2806 = vpop.f32.mrf.mxu0
        %v2807 = vadd.f32 0.0, %v2806
        %2808 = vmatprep.mubr.f32.mxu0 0.0
        %2809 = vmatmul.mubr.f32.gmra.mxu0 %v2637
        %v2810 = vpop.f32.mrf.mxu0
        %v2811 = vadd.f32 0.0, %v2810
        %v2812 = vpop.f32.mrf.mxu0
        %v2813 = vadd.f32 0.0, %v2812
        %2814 = vmatprep.mubr.f32.mxu0 0.0
        %2815 = vmatmul.mubr.f32.gmra.mxu0 %v2640
        %v2816 = vpop.f32.mrf.mxu0
        %v2817 = vadd.f32 0.0, %v2816
        %v2818 = vpop.f32.mrf.mxu0
        %v2819 = vadd.f32 0.0, %v2818
        %2820 = vmatprep.mubr.f32.mxu0 0.0
        %2821 = vmatmul.mubr.f32.gmra.mxu0 %v2643
        %v2822 = vpop.f32.mrf.mxu0
        %v2823 = vadd.f32 0.0, %v2822
        %v2824 = vpop.f32.mrf.mxu0
        %v2825 = vadd.f32 0.0, %v2824
        %2826 = vmatprep.mubr.f32.mxu0 0.0
        %2827 = vmatmul.mubr.f32.gmra.mxu0 %v2646
        %v2828 = vpop.f32.mrf.mxu0
        %v2829 = vadd.f32 0.0, %v2828
        %v2830 = vpop.f32.mrf.mxu0
        %v2831 = vadd.f32 0.0, %v2830
        %2832 = vmatprep.mubr.f32.mxu0 0.0
        %2833 = vmatmul.mubr.f32.gmra.mxu0 %v2649
        %v2834 = vpop.f32.mrf.mxu0
        %v2835 = vadd.f32 0.0, %v2834
        %v2836 = vpop.f32.mrf.mxu0
        %v2837 = vadd.f32 0.0, %v2836
        %2838 = vmatprep.mubr.f32.mxu0 0.0
        %2839 = vmatmul.mubr.f32.gmra.mxu0 %v2652
        %v2840 = vpop.f32.mrf.mxu0
        %v2841 = vadd.f32 0.0, %v2840
        %v2842 = vpop.f32.mrf.mxu0
        %v2843 = vadd.f32 0.0, %v2842
        %2844 = vmatprep.mubr.f32.mxu0 0.0
        %2845 = vmatmul.mubr.f32.gmra.mxu0 %v2655
        %v2846 = vpop.f32.mrf.mxu0
        %v2847 = vadd.f32 0.0, %v2846
        %v2848 = vpop.f32.mrf.mxu0
        %v2849 = vadd.f32 0.0, %v2848
        %2850 = vmatprep.mubr.f32.mxu0 0.0
        %2851 = vmatmul.mubr.f32.gmra.mxu0 %v2658
        %v2852 = vpop.f32.mrf.mxu0
        %v2853 = vadd.f32 0.0, %v2852
        %v2854 = vpop.f32.mrf.mxu0
        %v2855 = vadd.f32 0.0, %v2854
        %2856 = vmatprep.mubr.f32.mxu0 0.0
        %2857 = vmatmul.mubr.f32.gmra.mxu0 %v2661
        %v2858 = vpop.f32.mrf.mxu0
        %v2859 = vadd.f32 0.0, %v2858
        %v2860 = vpop.f32.mrf.mxu0
        %v2861 = vadd.f32 0.0, %v2860
        %2862 = vmatprep.mubr.f32.mxu0 0.0
        %2863 = vmatmul.mubr.f32.gmra.mxu0 %v2664
        %v2864 = vpop.f32.mrf.mxu0
        %v2865 = vadd.f32 0.0, %v2864
        %v2866 = vpop.f32.mrf.mxu0
        %v2867 = vadd.f32 0.0, %v2866
        %2868 = vmatprep.mubr.f32.mxu0 0.0
        %2869 = vmatmul.mubr.f32.gmra.mxu0 %v2667
        %v2870 = vpop.f32.mrf.mxu0
        %v2871 = vadd.f32 0.0, %v2870
        %v2872 = vpop.f32.mrf.mxu0
        %v2873 = vadd.f32 0.0, %v2872
        %2874 = vmatprep.mubr.f32.mxu0 0.0
        %2875 = vmatmul.mubr.f32.gmra.mxu0 %v2670
        %v2876 = vpop.f32.mrf.mxu0
        %v2877 = vadd.f32 0.0, %v2876
        %v2878 = vpop.f32.mrf.mxu0
        %v2879 = vadd.f32 0.0, %v2878
        %2880 = vmatprep.mubr.f32.mxu0 0.0
        %2881 = vmatmul.mubr.f32.gmra.mxu0 %v2673
        %v2882 = vpop.f32.mrf.mxu0
        %v2883 = vadd.f32 0.0, %v2882
        %v2884 = vpop.f32.mrf.mxu0
        %v2885 = vadd.f32 0.0, %v2884
        %2886 = vmatprep.mubr.f32.mxu0 0.0
        %2887 = vmatmul.mubr.f32.gmra.mxu0 %v2676
        %v2888 = vpop.f32.mrf.mxu0
        %v2889 = vadd.f32 0.0, %v2888
        %v2890 = vpop.f32.mrf.mxu0
        %v2891 = vadd.f32 0.0, %v2890
        %2892 = vmatprep.mubr.f32.mxu0 0.0
        %2893 = vmatmul.mubr.f32.gmra.mxu0 %v2679
        %v2894 = vpop.f32.mrf.mxu0
        %v2895 = vadd.f32 0.0, %v2894
        %v2896 = vpop.f32.mrf.mxu0
        %v2897 = vadd.f32 0.0, %v2896
        %2898 = vmatprep.mubr.f32.mxu0 0.0
        %2899 = vmatmul.mubr.f32.gmra.mxu0 %v2682
        %v2900 = vpop.f32.mrf.mxu0
        %v2901 = vadd.f32 0.0, %v2900
        %v2902 = vpop.f32.mrf.mxu0
        %v2903 = vadd.f32 0.0, %v2902
        %2904 = vmatprep.mubr.f32.mxu0 0.0
        %2905 = vmatmul.mubr.f32.gmra.mxu0 %v2685
        %v2906 = vpop.f32.mrf.mxu0
        %v2907 = vadd.f32 0.0, %v2906
        %v2908 = vpop.f32.mrf.mxu0
        %v2909 = vadd.f32 0.0, %v2908
        %2910 = vmatprep.mubr.f32.mxu0 0.0
        %2911 = vmatmul.mubr.f32.gmra.mxu0 %v2688
        %v2912 = vpop.f32.mrf.mxu0
        %v2913 = vadd.f32 0.0, %v2912
        %v2914 = vpop.f32.mrf.mxu0
        %v2915 = vadd.f32 0.0, %v2914
        %2916 = vmatprep.mubr.f32.mxu0 0.0
        %2917 = vmatmul.mubr.f32.gmra.mxu0 %v2691
        %v2918 = vpop.f32.mrf.mxu0
        %v2919 = vadd.f32 0.0, %v2918
        %v2920 = vpop.f32.mrf.mxu0
        %v2921 = vadd.f32 0.0, %v2920
        %2922 = vmatprep.mubr.f32.mxu0 0.0
        %2923 = vmatmul.mubr.f32.gmra.mxu0 %v2694
        %v2924 = vpop.f32.mrf.mxu0
        %v2925 = vadd.f32 0.0, %v2924
        %v2926 = vpop.f32.mrf.mxu0
        %v2927 = vadd.f32 0.0, %v2926
        %2928 = vmatprep.mubr.f32.mxu0 0.0
        %2929 = vmatmul.mubr.f32.gmra.mxu0 %v2697
        %v2930 = vpop.f32.mrf.mxu0
        %v2931 = vadd.f32 0.0, %v2930
        %v2932 = vpop.f32.mrf.mxu0
        %v2933 = vadd.f32 0.0, %v2932
        %2934 = vmatprep.mubr.f32.mxu0 0.0
        %2935 = vmatmul.mubr.f32.gmra.mxu0 %v2700
        %v2936 = vpop.f32.mrf.mxu0
        %v2937 = vadd.f32 0.0, %v2936
        %v2938 = vpop.f32.mrf.mxu0
        %v2939 = vadd.f32 0.0, %v2938
        %2940 = vmatprep.mubr.f32.mxu0 0.0
        %2941 = vmatmul.mubr.f32.gmra.mxu0 %v2703
        %v2942 = vpop.f32.mrf.mxu0
        %v2943 = vadd.f32 0.0, %v2942
        %v2944 = vpop.f32.mrf.mxu0
        %v2945 = vadd.f32 0.0, %v2944
        %2946 = vmatprep.mubr.f32.mxu0 0.0
        %2947 = vmatmul.mubr.f32.gmra.mxu0 %v2706
        %v2948 = vpop.f32.mrf.mxu0
        %v2949 = vadd.f32 0.0, %v2948
        %v2950 = vpop.f32.mrf.mxu0
        %v2951 = vadd.f32 0.0, %v2950
        %2952 = vmatprep.mubr.f32.mxu0 0.0
        %2953 = vmatmul.mubr.f32.gmra.mxu0 %v2709
        %v2954 = vpop.f32.mrf.mxu0
        %v2955 = vadd.f32 0.0, %v2954
        %v2956 = vpop.f32.mrf.mxu0
        %v2957 = vadd.f32 0.0, %v2956
        %2958 = vmatprep.mubr.f32.mxu0 0.0
        %2959 = vmatmul.mubr.f32.gmra.mxu0 %v2712
        %v2960 = vpop.f32.mrf.mxu0
        %v2961 = vadd.f32 0.0, %v2960
        %v2962 = vpop.f32.mrf.mxu0
        %v2963 = vadd.f32 0.0, %v2962
        %2964 = vmatprep.mubr.f32.mxu0 0.0
        %2965 = vmatmul.mubr.f32.gmra.mxu0 %v2715
        %v2966 = vpop.f32.mrf.mxu0
        %v2967 = vadd.f32 0.0, %v2966
        %v2968 = vpop.f32.mrf.mxu0
        %v2969 = vadd.f32 0.0, %v2968
        %2970 = vmatprep.mubr.f32.mxu0 0.0
        %2971 = vmatmul.mubr.f32.gmra.mxu0 %v2718
        %v2972 = vpop.f32.mrf.mxu0
        %v2973 = vadd.f32 0.0, %v2972
        %v2974 = vpop.f32.mrf.mxu0
        %v2975 = vadd.f32 0.0, %v2974
        %2976 = vmatprep.mubr.f32.mxu0 0.0
        %2977 = vmatmul.mubr.f32.gmra.mxu0 %v2721
        %v2978 = vpop.f32.mrf.mxu0
        %v2979 = vadd.f32 0.0, %v2978
        %v2980 = vpop.f32.mrf.mxu0
        %v2981 = vadd.f32 0.0, %v2980
        %2982 = vmatprep.mubr.f32.mxu0 0.0
        %2983 = vmatmul.mubr.f32.gmra.mxu0 %v2724
        %v2984 = vpop.f32.mrf.mxu0
        %v2985 = vadd.f32 0.0, %v2984
        %v2986 = vpop.f32.mrf.mxu0
        %v2987 = vadd.f32 0.0, %v2986
        %2988 = vdwg.mxu0
        %v2989 = vadd.f32 %v2515, %v2799
        %v2990 = vadd.f32 %v2516, %v2801
        %v2991 = vadd.f32 %v2517, %v2805
        %v2992 = vadd.f32 %v2518, %v2807
        %v2993 = vadd.f32 %v2519, %v2811
        %v2994 = vadd.f32 %v2520, %v2813
        %v2995 = vadd.f32 %v2521, %v2817
        %v2996 = vadd.f32 %v2522, %v2819
        %v2997 = vadd.f32 %v2523, %v2823
        %v2998 = vadd.f32 %v2524, %v2825
        %v2999 = vadd.f32 %v2525, %v2829
        %v3000 = vadd.f32 %v2526, %v2831
        %v3001 = vadd.f32 %v2527, %v2835
        %v3002 = vadd.f32 %v2528, %v2837
        %v3003 = vadd.f32 %v2529, %v2841
        %v3004 = vadd.f32 %v2530, %v2843
        %v3005 = vadd.f32 %v2531, %v2847
        %v3006 = vadd.f32 %v2532, %v2849
        %v3007 = vadd.f32 %v2533, %v2853
        %v3008 = vadd.f32 %v2534, %v2855
        %v3009 = vadd.f32 %v2535, %v2859
        %v3010 = vadd.f32 %v2536, %v2861
        %v3011 = vadd.f32 %v2537, %v2865
        %v3012 = vadd.f32 %v2538, %v2867
        %v3013 = vadd.f32 %v2539, %v2871
        %v3014 = vadd.f32 %v2540, %v2873
        %v3015 = vadd.f32 %v2541, %v2877
        %v3016 = vadd.f32 %v2542, %v2879
        %v3017 = vadd.f32 %v2543, %v2883
        %v3018 = vadd.f32 %v2544, %v2885
        %v3019 = vadd.f32 %v2545, %v2889
        %v3020 = vadd.f32 %v2546, %v2891
        %v3021 = vadd.f32 %v2547, %v2895
        %v3022 = vadd.f32 %v2548, %v2897
        %v3023 = vadd.f32 %v2549, %v2901
        %v3024 = vadd.f32 %v2550, %v2903
        %v3025 = vadd.f32 %v2551, %v2907
        %v3026 = vadd.f32 %v2552, %v2909
        %v3027 = vadd.f32 %v2553, %v2913
        %v3028 = vadd.f32 %v2554, %v2915
        %v3029 = vadd.f32 %v2555, %v2919
        %v3030 = vadd.f32 %v2556, %v2921
        %v3031 = vadd.f32 %v2557, %v2925
        %v3032 = vadd.f32 %v2558, %v2927
        %v3033 = vadd.f32 %v2559, %v2931
        %v3034 = vadd.f32 %v2560, %v2933
        %v3035 = vadd.f32 %v2561, %v2937
        %v3036 = vadd.f32 %v2562, %v2939
        %v3037 = vadd.f32 %v2563, %v2943
        %v3038 = vadd.f32 %v2564, %v2945
        %v3039 = vadd.f32 %v2565, %v2949
        %v3040 = vadd.f32 %v2566, %v2951
        %v3041 = vadd.f32 %v2567, %v2955
        %v3042 = vadd.f32 %v2568, %v2957
        %v3043 = vadd.f32 %v2569, %v2961
        %v3044 = vadd.f32 %v2570, %v2963
        %v3045 = vadd.f32 %v2571, %v2967
        %v3046 = vadd.f32 %v2572, %v2969
        %v3047 = vadd.f32 %v2573, %v2973
        %v3048 = vadd.f32 %v2574, %v2975
        %v3049 = vadd.f32 %v2575, %v2979
        %v3050 = vadd.f32 %v2576, %v2981
        %v3051 = vadd.f32 %v2577, %v2985
        %v3052 = vadd.f32 %v2578, %v2987
        %s3053 = scalar_lea.vmem %s324, 48
        %v3054 = vld [vmem:[%s3053] sm:$0xff]
        %v3055 = vld [vmem:[%s3053 + $0x8] sm:$0xff]
        %v3056 = vld [vmem:[%s3053 + $0x18] sm:$0xff]
        %v3057 = vld [vmem:[%s3053 + $0x20] sm:$0xff]
        %v3058 = vld [vmem:[%s3053 + $0x30] sm:$0xff]
        %v3059 = vld [vmem:[%s3053 + $0x38] sm:$0xff]
        %v3060 = vld [vmem:[%s3053 + $0x48] sm:$0xff]
        %v3061 = vld [vmem:[%s3053 + $0x50] sm:$0xff]
        %v3062 = vld [vmem:[%s3053 + $0x60] sm:$0xff]
        %v3063 = vld [vmem:[%s3053 + $0x68] sm:$0xff]
        %v3064 = vld [vmem:[%s3053 + $0x78] sm:$0xff]
        %v3065 = vld [vmem:[%s3053 + $0x80] sm:$0xff]
        %v3066 = vld [vmem:[%s3053 + $0x90] sm:$0xff]
        %v3067 = vld [vmem:[%s3053 + $0x98] sm:$0xff]
        %v3068 = vld [vmem:[%s3053 + $0xa8] sm:$0xff]
        %v3069 = vld [vmem:[%s3053 + $0xb0] sm:$0xff]
        %v3070 = vld [vmem:[%s3053 + $0xc0] sm:$0xff]
        %v3071 = vld [vmem:[%s3053 + $0xc8] sm:$0xff]
        %v3072 = vld [vmem:[%s3053 + $0xd8] sm:$0xff]
        %v3073 = vld [vmem:[%s3053 + $0xe0] sm:$0xff]
        %v3074 = vld [vmem:[%s3053 + $0xf0] sm:$0xff]
        %v3075 = vld [vmem:[%s3053 + $0xf8] sm:$0xff]
        %v3076 = vld [vmem:[%s3053 + $0x108] sm:$0xff]
        %v3077 = vld [vmem:[%s3053 + $0x110] sm:$0xff]
        %v3078 = vld [vmem:[%s3053 + $0x120] sm:$0xff]
        %v3079 = vld [vmem:[%s3053 + $0x128] sm:$0xff]
        %v3080 = vld [vmem:[%s3053 + $0x138] sm:$0xff]
        %v3081 = vld [vmem:[%s3053 + $0x140] sm:$0xff]
        %v3082 = vld [vmem:[%s3053 + $0x150] sm:$0xff]
        %v3083 = vld [vmem:[%s3053 + $0x158] sm:$0xff]
        %v3084 = vld [vmem:[%s3053 + $0x168] sm:$0xff]
        %v3085 = vld [vmem:[%s3053 + $0x170] sm:$0xff]
        %s3086 = scalar_lea.vmem %s3, 864
        %v3087 = vld [vmem:[%s3086] sm:$0xff]
        %v3088 = vld [vmem:[%s3086 + $0x8] sm:$0xff]
        %v3089 = vld [vmem:[%s3086 + $0x10] sm:$0xff]
        %v3090 = vld [vmem:[%s3086 + $0x18] sm:$0xff]
        %v3091 = vld [vmem:[%s3086 + $0x20] sm:$0xff]
        %v3092 = vld [vmem:[%s3086 + $0x28] sm:$0xff]
        %v3093 = vld [vmem:[%s3086 + $0x30] sm:$0xff]
        %v3094 = vld [vmem:[%s3086 + $0x38] sm:$0xff]
        %v3095 = vld [vmem:[%s3086 + $0x40] sm:$0xff]
        %v3096 = vld [vmem:[%s3086 + $0x48] sm:$0xff]
        %v3097 = vld [vmem:[%s3086 + $0x50] sm:$0xff]
        %v3098 = vld [vmem:[%s3086 + $0x58] sm:$0xff]
        %v3099 = vld [vmem:[%s3086 + $0x60] sm:$0xff]
        %v3100 = vld [vmem:[%s3086 + $0x68] sm:$0xff]
        %v3101 = vld [vmem:[%s3086 + $0x70] sm:$0xff]
        %v3102 = vld [vmem:[%s3086 + $0x78] sm:$0xff]
        %v3103 = vld [vmem:[%s3086 + $0x80] sm:$0xf]
        %v3104 = vld [vmem:[%s3086 + $0x88] sm:$0xf]
        %v3106 = vsel %vm436, %v3054, 0
        %v3109 = vsel %vm436, %v3055, 0
        %v3112 = vsel %vm436, %v3056, 0
        %v3115 = vsel %vm436, %v3057, 0
        %v3118 = vsel %vm436, %v3058, 0
        %v3121 = vsel %vm436, %v3059, 0
        %v3124 = vsel %vm436, %v3060, 0
        %v3127 = vsel %vm436, %v3061, 0
        %v3130 = vsel %vm436, %v3062, 0
        %v3133 = vsel %vm436, %v3063, 0
        %v3136 = vsel %vm436, %v3064, 0
        %v3139 = vsel %vm436, %v3065, 0
        %v3142 = vsel %vm436, %v3066, 0
        %v3145 = vsel %vm436, %v3067, 0
        %v3148 = vsel %vm436, %v3068, 0
        %v3151 = vsel %vm436, %v3069, 0
        %v3154 = vsel %vm436, %v3070, 0
        %v3157 = vsel %vm436, %v3071, 0
        %v3160 = vsel %vm436, %v3072, 0
        %v3163 = vsel %vm436, %v3073, 0
        %v3166 = vsel %vm436, %v3074, 0
        %v3169 = vsel %vm436, %v3075, 0
        %v3172 = vsel %vm436, %v3076, 0
        %v3175 = vsel %vm436, %v3077, 0
        %v3178 = vsel %vm436, %v3078, 0
        %v3181 = vsel %vm436, %v3079, 0
        %v3184 = vsel %vm436, %v3080, 0
        %v3187 = vsel %vm436, %v3081, 0
        %v3190 = vsel %vm436, %v3082, 0
        %v3193 = vsel %vm436, %v3083, 0
        %v3196 = vsel %vm436, %v3084, 0
        %v3199 = vsel %vm436, %v3085, 0
        %v3202 = vsel %vm533, %v3103, 0
        %v3205 = vsel %vm533, %v3104, 0
        %3207 = vmatprep.subr.mxu0 0.0
        %3208 = vmatpush1.msra.mxu0 0.0
        %3209 = vmatprep.subr.mxu0 0.0
        %3210 = vmatpush1.msra.mxu0 0.0
        %3211 = vmatprep.subr.mxu0 0.0
        %3212 = vmatpush1.msra.mxu0 0.0
        %3213 = vmatprep.subr.mxu0 0.0
        %3214 = vmatpush1.msra.mxu0 0.0
        %3215 = vmatprep.subr.mxu0 0.0
        %3216 = vmatpush1.msra.mxu0 0.0
        %3217 = vmatprep.subr.mxu0 0.0
        %3218 = vmatpush1.msra.mxu0 0.0
        %3219 = vmatprep.subr.mxu0 0.0
        %3220 = vmatpush1.msra.mxu0 0.0
        %3221 = vmatprep.subr.mxu0 %v3205
        %3222 = vmatpush1.msra.mxu0 %v3202
        %3223 = vmatprep.subr.mxu0 %v3102
        %3224 = vmatpush1.msra.mxu0 %v3101
        %3225 = vmatprep.subr.mxu0 %v3100
        %3226 = vmatpush1.msra.mxu0 %v3099
        %3227 = vmatprep.subr.mxu0 %v3098
        %3228 = vmatpush1.msra.mxu0 %v3097
        %3229 = vmatprep.subr.mxu0 %v3096
        %3230 = vmatpush1.msra.mxu0 %v3095
        %3231 = vmatprep.subr.mxu0 %v3094
        %3232 = vmatpush1.msra.mxu0 %v3093
        %3233 = vmatprep.subr.mxu0 %v3092
        %3234 = vmatpush1.msra.mxu0 %v3091
        %3235 = vmatprep.subr.mxu0 %v3090
        %3236 = vmatpush1.msra.mxu0 %v3089
        %3237 = vmatprep.subr.mxu0 %v3088
        %3238 = vmatpush1.msra.mxu0 %v3087
        %3239 = vmatprep.subr.mxu0 0.0
        %3240 = vmatpush2.msra.mxu0 0.0
        %3241 = vmatprep.subr.mxu0 0.0
        %3242 = vmatpush2.msra.mxu0 0.0
        %3243 = vmatprep.subr.mxu0 0.0
        %3244 = vmatpush2.msra.mxu0 0.0
        %3245 = vmatprep.subr.mxu0 0.0
        %3246 = vmatpush2.msra.mxu0 0.0
        %3247 = vmatprep.subr.mxu0 0.0
        %3248 = vmatpush2.msra.mxu0 0.0
        %3249 = vmatprep.subr.mxu0 0.0
        %3250 = vmatpush2.msra.mxu0 0.0
        %3251 = vmatprep.subr.mxu0 0.0
        %3252 = vmatpush2.msra.mxu0 0.0
        %3253 = vmatprep.subr.mxu0 0.0
        %3254 = vmatpush2.msra.mxu0 0.0
        %3255 = vmatprep.subr.mxu0 0.0
        %3256 = vmatpush2.msra.mxu0 0.0
        %3257 = vmatprep.subr.mxu0 0.0
        %3258 = vmatpush2.msra.mxu0 0.0
        %3259 = vmatprep.subr.mxu0 0.0
        %3260 = vmatpush2.msra.mxu0 0.0
        %3261 = vmatprep.subr.mxu0 0.0
        %3262 = vmatpush2.msra.mxu0 0.0
        %3263 = vmatprep.subr.mxu0 0.0
        %3264 = vmatpush2.msra.mxu0 0.0
        %3265 = vmatprep.subr.mxu0 0.0
        %3266 = vmatpush2.msra.mxu0 0.0
        %3267 = vmatprep.subr.mxu0 0.0
        %3268 = vmatpush2.msra.mxu0 0.0
        %3269 = vmatprep.subr.mxu0 0.0
        %3270 = vmatpush2.msra.mxu0 0.0
        %3271 = vmatprep.mubr.f32.mxu0 0.0
        %3272 = vmatmul.mubr.f32.gmra.mxu0 %v3106
        %v3273 = vpop.f32.mrf.mxu0
        %v3274 = vadd.f32 0.0, %v3273
        %v3275 = vpop.f32.mrf.mxu0
        %v3276 = vadd.f32 0.0, %v3275
        %3277 = vmatprep.mubr.f32.mxu0 0.0
        %3278 = vmatmul.mubr.f32.gmra.mxu0 %v3109
        %v3279 = vpop.f32.mrf.mxu0
        %v3280 = vadd.f32 0.0, %v3279
        %v3281 = vpop.f32.mrf.mxu0
        %v3282 = vadd.f32 0.0, %v3281
        %3283 = vmatprep.mubr.f32.mxu0 0.0
        %3284 = vmatmul.mubr.f32.gmra.mxu0 %v3112
        %v3285 = vpop.f32.mrf.mxu0
        %v3286 = vadd.f32 0.0, %v3285
        %v3287 = vpop.f32.mrf.mxu0
        %v3288 = vadd.f32 0.0, %v3287
        %3289 = vmatprep.mubr.f32.mxu0 0.0
        %3290 = vmatmul.mubr.f32.gmra.mxu0 %v3115
        %v3291 = vpop.f32.mrf.mxu0
        %v3292 = vadd.f32 0.0, %v3291
        %v3293 = vpop.f32.mrf.mxu0
        %v3294 = vadd.f32 0.0, %v3293
        %3295 = vmatprep.mubr.f32.mxu0 0.0
        %3296 = vmatmul.mubr.f32.gmra.mxu0 %v3118
        %v3297 = vpop.f32.mrf.mxu0
        %v3298 = vadd.f32 0.0, %v3297
        %v3299 = vpop.f32.mrf.mxu0
        %v3300 = vadd.f32 0.0, %v3299
        %3301 = vmatprep.mubr.f32.mxu0 0.0
        %3302 = vmatmul.mubr.f32.gmra.mxu0 %v3121
        %v3303 = vpop.f32.mrf.mxu0
        %v3304 = vadd.f32 0.0, %v3303
        %v3305 = vpop.f32.mrf.mxu0
        %v3306 = vadd.f32 0.0, %v3305
        %3307 = vmatprep.mubr.f32.mxu0 0.0
        %3308 = vmatmul.mubr.f32.gmra.mxu0 %v3124
        %v3309 = vpop.f32.mrf.mxu0
        %v3310 = vadd.f32 0.0, %v3309
        %v3311 = vpop.f32.mrf.mxu0
        %v3312 = vadd.f32 0.0, %v3311
        %3313 = vmatprep.mubr.f32.mxu0 0.0
        %3314 = vmatmul.mubr.f32.gmra.mxu0 %v3127
        %v3315 = vpop.f32.mrf.mxu0
        %v3316 = vadd.f32 0.0, %v3315
        %v3317 = vpop.f32.mrf.mxu0
        %v3318 = vadd.f32 0.0, %v3317
        %3319 = vmatprep.mubr.f32.mxu0 0.0
        %3320 = vmatmul.mubr.f32.gmra.mxu0 %v3130
        %v3321 = vpop.f32.mrf.mxu0
        %v3322 = vadd.f32 0.0, %v3321
        %v3323 = vpop.f32.mrf.mxu0
        %v3324 = vadd.f32 0.0, %v3323
        %3325 = vmatprep.mubr.f32.mxu0 0.0
        %3326 = vmatmul.mubr.f32.gmra.mxu0 %v3133
        %v3327 = vpop.f32.mrf.mxu0
        %v3328 = vadd.f32 0.0, %v3327
        %v3329 = vpop.f32.mrf.mxu0
        %v3330 = vadd.f32 0.0, %v3329
        %3331 = vmatprep.mubr.f32.mxu0 0.0
        %3332 = vmatmul.mubr.f32.gmra.mxu0 %v3136
        %v3333 = vpop.f32.mrf.mxu0
        %v3334 = vadd.f32 0.0, %v3333
        %v3335 = vpop.f32.mrf.mxu0
        %v3336 = vadd.f32 0.0, %v3335
        %3337 = vmatprep.mubr.f32.mxu0 0.0
        %3338 = vmatmul.mubr.f32.gmra.mxu0 %v3139
        %v3339 = vpop.f32.mrf.mxu0
        %v3340 = vadd.f32 0.0, %v3339
        %v3341 = vpop.f32.mrf.mxu0
        %v3342 = vadd.f32 0.0, %v3341
        %3343 = vmatprep.mubr.f32.mxu0 0.0
        %3344 = vmatmul.mubr.f32.gmra.mxu0 %v3142
        %v3345 = vpop.f32.mrf.mxu0
        %v3346 = vadd.f32 0.0, %v3345
        %v3347 = vpop.f32.mrf.mxu0
        %v3348 = vadd.f32 0.0, %v3347
        %3349 = vmatprep.mubr.f32.mxu0 0.0
        %3350 = vmatmul.mubr.f32.gmra.mxu0 %v3145
        %v3351 = vpop.f32.mrf.mxu0
        %v3352 = vadd.f32 0.0, %v3351
        %v3353 = vpop.f32.mrf.mxu0
        %v3354 = vadd.f32 0.0, %v3353
        %3355 = vmatprep.mubr.f32.mxu0 0.0
        %3356 = vmatmul.mubr.f32.gmra.mxu0 %v3148
        %v3357 = vpop.f32.mrf.mxu0
        %v3358 = vadd.f32 0.0, %v3357
        %v3359 = vpop.f32.mrf.mxu0
        %v3360 = vadd.f32 0.0, %v3359
        %3361 = vmatprep.mubr.f32.mxu0 0.0
        %3362 = vmatmul.mubr.f32.gmra.mxu0 %v3151
        %v3363 = vpop.f32.mrf.mxu0
        %v3364 = vadd.f32 0.0, %v3363
        %v3365 = vpop.f32.mrf.mxu0
        %v3366 = vadd.f32 0.0, %v3365
        %3367 = vmatprep.mubr.f32.mxu0 0.0
        %3368 = vmatmul.mubr.f32.gmra.mxu0 %v3154
        %v3369 = vpop.f32.mrf.mxu0
        %v3370 = vadd.f32 0.0, %v3369
        %v3371 = vpop.f32.mrf.mxu0
        %v3372 = vadd.f32 0.0, %v3371
        %3373 = vmatprep.mubr.f32.mxu0 0.0
        %3374 = vmatmul.mubr.f32.gmra.mxu0 %v3157
        %v3375 = vpop.f32.mrf.mxu0
        %v3376 = vadd.f32 0.0, %v3375
        %v3377 = vpop.f32.mrf.mxu0
        %v3378 = vadd.f32 0.0, %v3377
        %3379 = vmatprep.mubr.f32.mxu0 0.0
        %3380 = vmatmul.mubr.f32.gmra.mxu0 %v3160
        %v3381 = vpop.f32.mrf.mxu0
        %v3382 = vadd.f32 0.0, %v3381
        %v3383 = vpop.f32.mrf.mxu0
        %v3384 = vadd.f32 0.0, %v3383
        %3385 = vmatprep.mubr.f32.mxu0 0.0
        %3386 = vmatmul.mubr.f32.gmra.mxu0 %v3163
        %v3387 = vpop.f32.mrf.mxu0
        %v3388 = vadd.f32 0.0, %v3387
        %v3389 = vpop.f32.mrf.mxu0
        %v3390 = vadd.f32 0.0, %v3389
        %3391 = vmatprep.mubr.f32.mxu0 0.0
        %3392 = vmatmul.mubr.f32.gmra.mxu0 %v3166
        %v3393 = vpop.f32.mrf.mxu0
        %v3394 = vadd.f32 0.0, %v3393
        %v3395 = vpop.f32.mrf.mxu0
        %v3396 = vadd.f32 0.0, %v3395
        %3397 = vmatprep.mubr.f32.mxu0 0.0
        %3398 = vmatmul.mubr.f32.gmra.mxu0 %v3169
        %v3399 = vpop.f32.mrf.mxu0
        %v3400 = vadd.f32 0.0, %v3399
        %v3401 = vpop.f32.mrf.mxu0
        %v3402 = vadd.f32 0.0, %v3401
        %3403 = vmatprep.mubr.f32.mxu0 0.0
        %3404 = vmatmul.mubr.f32.gmra.mxu0 %v3172
        %v3405 = vpop.f32.mrf.mxu0
        %v3406 = vadd.f32 0.0, %v3405
        %v3407 = vpop.f32.mrf.mxu0
        %v3408 = vadd.f32 0.0, %v3407
        %3409 = vmatprep.mubr.f32.mxu0 0.0
        %3410 = vmatmul.mubr.f32.gmra.mxu0 %v3175
        %v3411 = vpop.f32.mrf.mxu0
        %v3412 = vadd.f32 0.0, %v3411
        %v3413 = vpop.f32.mrf.mxu0
        %v3414 = vadd.f32 0.0, %v3413
        %3415 = vmatprep.mubr.f32.mxu0 0.0
        %3416 = vmatmul.mubr.f32.gmra.mxu0 %v3178
        %v3417 = vpop.f32.mrf.mxu0
        %v3418 = vadd.f32 0.0, %v3417
        %v3419 = vpop.f32.mrf.mxu0
        %v3420 = vadd.f32 0.0, %v3419
        %3421 = vmatprep.mubr.f32.mxu0 0.0
        %3422 = vmatmul.mubr.f32.gmra.mxu0 %v3181
        %v3423 = vpop.f32.mrf.mxu0
        %v3424 = vadd.f32 0.0, %v3423
        %v3425 = vpop.f32.mrf.mxu0
        %v3426 = vadd.f32 0.0, %v3425
        %3427 = vmatprep.mubr.f32.mxu0 0.0
        %3428 = vmatmul.mubr.f32.gmra.mxu0 %v3184
        %v3429 = vpop.f32.mrf.mxu0
        %v3430 = vadd.f32 0.0, %v3429
        %v3431 = vpop.f32.mrf.mxu0
        %v3432 = vadd.f32 0.0, %v3431
        %3433 = vmatprep.mubr.f32.mxu0 0.0
        %3434 = vmatmul.mubr.f32.gmra.mxu0 %v3187
        %v3435 = vpop.f32.mrf.mxu0
        %v3436 = vadd.f32 0.0, %v3435
        %v3437 = vpop.f32.mrf.mxu0
        %v3438 = vadd.f32 0.0, %v3437
        %3439 = vmatprep.mubr.f32.mxu0 0.0
        %3440 = vmatmul.mubr.f32.gmra.mxu0 %v3190
        %v3441 = vpop.f32.mrf.mxu0
        %v3442 = vadd.f32 0.0, %v3441
        %v3443 = vpop.f32.mrf.mxu0
        %v3444 = vadd.f32 0.0, %v3443
        %3445 = vmatprep.mubr.f32.mxu0 0.0
        %3446 = vmatmul.mubr.f32.gmra.mxu0 %v3193
        %v3447 = vpop.f32.mrf.mxu0
        %v3448 = vadd.f32 0.0, %v3447
        %v3449 = vpop.f32.mrf.mxu0
        %v3450 = vadd.f32 0.0, %v3449
        %3451 = vmatprep.mubr.f32.mxu0 0.0
        %3452 = vmatmul.mubr.f32.gmra.mxu0 %v3196
        %v3453 = vpop.f32.mrf.mxu0
        %v3454 = vadd.f32 0.0, %v3453
        %v3455 = vpop.f32.mrf.mxu0
        %v3456 = vadd.f32 0.0, %v3455
        %3457 = vmatprep.mubr.f32.mxu0 0.0
        %3458 = vmatmul.mubr.f32.gmra.mxu0 %v3199
        %v3459 = vpop.f32.mrf.mxu0
        %v3460 = vadd.f32 0.0, %v3459
        %v3461 = vpop.f32.mrf.mxu0
        %v3462 = vadd.f32 0.0, %v3461
        %3463 = vdwg.mxu0
        %v3464 = vadd.f32 %v2989, %v3274
        %v3465 = vadd.f32 %v2990, %v3276
        %v3466 = vadd.f32 %v2991, %v3280
        %v3467 = vadd.f32 %v2992, %v3282
        %v3468 = vadd.f32 %v2993, %v3286
        %v3469 = vadd.f32 %v2994, %v3288
        %v3470 = vadd.f32 %v2995, %v3292
        %v3471 = vadd.f32 %v2996, %v3294
        %v3472 = vadd.f32 %v2997, %v3298
        %v3473 = vadd.f32 %v2998, %v3300
        %v3474 = vadd.f32 %v2999, %v3304
        %v3475 = vadd.f32 %v3000, %v3306
        %v3476 = vadd.f32 %v3001, %v3310
        %v3477 = vadd.f32 %v3002, %v3312
        %v3478 = vadd.f32 %v3003, %v3316
        %v3479 = vadd.f32 %v3004, %v3318
        %v3480 = vadd.f32 %v3005, %v3322
        %v3481 = vadd.f32 %v3006, %v3324
        %v3482 = vadd.f32 %v3007, %v3328
        %v3483 = vadd.f32 %v3008, %v3330
        %v3484 = vadd.f32 %v3009, %v3334
        %v3485 = vadd.f32 %v3010, %v3336
        %v3486 = vadd.f32 %v3011, %v3340
        %v3487 = vadd.f32 %v3012, %v3342
        %v3488 = vadd.f32 %v3013, %v3346
        %v3489 = vadd.f32 %v3014, %v3348
        %v3490 = vadd.f32 %v3015, %v3352
        %v3491 = vadd.f32 %v3016, %v3354
        %v3492 = vadd.f32 %v3017, %v3358
        %v3493 = vadd.f32 %v3018, %v3360
        %v3494 = vadd.f32 %v3019, %v3364
        %v3495 = vadd.f32 %v3020, %v3366
        %v3496 = vadd.f32 %v3021, %v3370
        %v3497 = vadd.f32 %v3022, %v3372
        %v3498 = vadd.f32 %v3023, %v3376
        %v3499 = vadd.f32 %v3024, %v3378
        %v3500 = vadd.f32 %v3025, %v3382
        %v3501 = vadd.f32 %v3026, %v3384
        %v3502 = vadd.f32 %v3027, %v3388
        %v3503 = vadd.f32 %v3028, %v3390
        %v3504 = vadd.f32 %v3029, %v3394
        %v3505 = vadd.f32 %v3030, %v3396
        %v3506 = vadd.f32 %v3031, %v3400
        %v3507 = vadd.f32 %v3032, %v3402
        %v3508 = vadd.f32 %v3033, %v3406
        %v3509 = vadd.f32 %v3034, %v3408
        %v3510 = vadd.f32 %v3035, %v3412
        %v3511 = vadd.f32 %v3036, %v3414
        %v3512 = vadd.f32 %v3037, %v3418
        %v3513 = vadd.f32 %v3038, %v3420
        %v3514 = vadd.f32 %v3039, %v3424
        %v3515 = vadd.f32 %v3040, %v3426
        %v3516 = vadd.f32 %v3041, %v3430
        %v3517 = vadd.f32 %v3042, %v3432
        %v3518 = vadd.f32 %v3043, %v3436
        %v3519 = vadd.f32 %v3044, %v3438
        %v3520 = vadd.f32 %v3045, %v3442
        %v3521 = vadd.f32 %v3046, %v3444
        %v3522 = vadd.f32 %v3047, %v3448
        %v3523 = vadd.f32 %v3048, %v3450
        %v3524 = vadd.f32 %v3049, %v3454
        %v3525 = vadd.f32 %v3050, %v3456
        %v3526 = vadd.f32 %v3051, %v3460
        %v3527 = vadd.f32 %v3052, %v3462
        %v3528 = vld [vmem:[%s3053 + $0x1] sm:$0xff]
        %v3529 = vld [vmem:[%s3053 + $0x9] sm:$0xff]
        %v3530 = vld [vmem:[%s3053 + $0x19] sm:$0xff]
        %v3531 = vld [vmem:[%s3053 + $0x21] sm:$0xff]
        %v3532 = vld [vmem:[%s3053 + $0x31] sm:$0xff]
        %v3533 = vld [vmem:[%s3053 + $0x39] sm:$0xff]
        %v3534 = vld [vmem:[%s3053 + $0x49] sm:$0xff]
        %v3535 = vld [vmem:[%s3053 + $0x51] sm:$0xff]
        %v3536 = vld [vmem:[%s3053 + $0x61] sm:$0xff]
        %v3537 = vld [vmem:[%s3053 + $0x69] sm:$0xff]
        %v3538 = vld [vmem:[%s3053 + $0x79] sm:$0xff]
        %v3539 = vld [vmem:[%s3053 + $0x81] sm:$0xff]
        %v3540 = vld [vmem:[%s3053 + $0x91] sm:$0xff]
        %v3541 = vld [vmem:[%s3053 + $0x99] sm:$0xff]
        %v3542 = vld [vmem:[%s3053 + $0xa9] sm:$0xff]
        %v3543 = vld [vmem:[%s3053 + $0xb1] sm:$0xff]
        %v3544 = vld [vmem:[%s3053 + $0xc1] sm:$0xff]
        %v3545 = vld [vmem:[%s3053 + $0xc9] sm:$0xff]
        %v3546 = vld [vmem:[%s3053 + $0xd9] sm:$0xff]
        %v3547 = vld [vmem:[%s3053 + $0xe1] sm:$0xff]
        %v3548 = vld [vmem:[%s3053 + $0xf1] sm:$0xff]
        %v3549 = vld [vmem:[%s3053 + $0xf9] sm:$0xff]
        %v3550 = vld [vmem:[%s3053 + $0x109] sm:$0xff]
        %v3551 = vld [vmem:[%s3053 + $0x111] sm:$0xff]
        %v3552 = vld [vmem:[%s3053 + $0x121] sm:$0xff]
        %v3553 = vld [vmem:[%s3053 + $0x129] sm:$0xff]
        %v3554 = vld [vmem:[%s3053 + $0x139] sm:$0xff]
        %v3555 = vld [vmem:[%s3053 + $0x141] sm:$0xff]
        %v3556 = vld [vmem:[%s3053 + $0x151] sm:$0xff]
        %v3557 = vld [vmem:[%s3053 + $0x159] sm:$0xff]
        %v3558 = vld [vmem:[%s3053 + $0x169] sm:$0xff]
        %v3559 = vld [vmem:[%s3053 + $0x171] sm:$0xff]
        %s3560 = scalar_lea.vmem %s3, 1008
        %v3561 = vld [vmem:[%s3560] sm:$0xff]
        %v3562 = vld [vmem:[%s3560 + $0x8] sm:$0xff]
        %v3563 = vld [vmem:[%s3560 + $0x10] sm:$0xff]
        %v3564 = vld [vmem:[%s3560 + $0x18] sm:$0xff]
        %v3565 = vld [vmem:[%s3560 + $0x20] sm:$0xff]
        %v3566 = vld [vmem:[%s3560 + $0x28] sm:$0xff]
        %v3567 = vld [vmem:[%s3560 + $0x30] sm:$0xff]
        %v3568 = vld [vmem:[%s3560 + $0x38] sm:$0xff]
        %v3569 = vld [vmem:[%s3560 + $0x40] sm:$0xff]
        %v3570 = vld [vmem:[%s3560 + $0x48] sm:$0xff]
        %v3571 = vld [vmem:[%s3560 + $0x50] sm:$0xff]
        %v3572 = vld [vmem:[%s3560 + $0x58] sm:$0xff]
        %v3573 = vld [vmem:[%s3560 + $0x60] sm:$0xff]
        %v3574 = vld [vmem:[%s3560 + $0x68] sm:$0xff]
        %v3575 = vld [vmem:[%s3560 + $0x70] sm:$0xff]
        %v3576 = vld [vmem:[%s3560 + $0x78] sm:$0xff]
        %v3577 = vld [vmem:[%s3560 + $0x80] sm:$0xf]
        %v3578 = vld [vmem:[%s3560 + $0x88] sm:$0xf]
        %v3580 = vsel %vm436, %v3528, 0
        %v3583 = vsel %vm436, %v3529, 0
        %v3586 = vsel %vm436, %v3530, 0
        %v3589 = vsel %vm436, %v3531, 0
        %v3592 = vsel %vm436, %v3532, 0
        %v3595 = vsel %vm436, %v3533, 0
        %v3598 = vsel %vm436, %v3534, 0
        %v3601 = vsel %vm436, %v3535, 0
        %v3604 = vsel %vm436, %v3536, 0
        %v3607 = vsel %vm436, %v3537, 0
        %v3610 = vsel %vm436, %v3538, 0
        %v3613 = vsel %vm436, %v3539, 0
        %v3616 = vsel %vm436, %v3540, 0
        %v3619 = vsel %vm436, %v3541, 0
        %v3622 = vsel %vm436, %v3542, 0
        %v3625 = vsel %vm436, %v3543, 0
        %v3628 = vsel %vm436, %v3544, 0
        %v3631 = vsel %vm436, %v3545, 0
        %v3634 = vsel %vm436, %v3546, 0
        %v3637 = vsel %vm436, %v3547, 0
        %v3640 = vsel %vm436, %v3548, 0
        %v3643 = vsel %vm436, %v3549, 0
        %v3646 = vsel %vm436, %v3550, 0
        %v3649 = vsel %vm436, %v3551, 0
        %v3652 = vsel %vm436, %v3552, 0
        %v3655 = vsel %vm436, %v3553, 0
        %v3658 = vsel %vm436, %v3554, 0
        %v3661 = vsel %vm436, %v3555, 0
        %v3664 = vsel %vm436, %v3556, 0
        %v3667 = vsel %vm436, %v3557, 0
        %v3670 = vsel %vm436, %v3558, 0
        %v3673 = vsel %vm436, %v3559, 0
        %v3676 = vsel %vm533, %v3577, 0
        %v3679 = vsel %vm533, %v3578, 0
        %3681 = vmatprep.subr.mxu0 0.0
        %3682 = vmatpush1.msra.mxu0 0.0
        %3683 = vmatprep.subr.mxu0 0.0
        %3684 = vmatpush1.msra.mxu0 0.0
        %3685 = vmatprep.subr.mxu0 0.0
        %3686 = vmatpush1.msra.mxu0 0.0
        %3687 = vmatprep.subr.mxu0 0.0
        %3688 = vmatpush1.msra.mxu0 0.0
        %3689 = vmatprep.subr.mxu0 0.0
        %3690 = vmatpush1.msra.mxu0 0.0
        %3691 = vmatprep.subr.mxu0 0.0
        %3692 = vmatpush1.msra.mxu0 0.0
        %3693 = vmatprep.subr.mxu0 0.0
        %3694 = vmatpush1.msra.mxu0 0.0
        %3695 = vmatprep.subr.mxu0 %v3679
        %3696 = vmatpush1.msra.mxu0 %v3676
        %3697 = vmatprep.subr.mxu0 %v3576
        %3698 = vmatpush1.msra.mxu0 %v3575
        %3699 = vmatprep.subr.mxu0 %v3574
        %3700 = vmatpush1.msra.mxu0 %v3573
        %3701 = vmatprep.subr.mxu0 %v3572
        %3702 = vmatpush1.msra.mxu0 %v3571
        %3703 = vmatprep.subr.mxu0 %v3570
        %3704 = vmatpush1.msra.mxu0 %v3569
        %3705 = vmatprep.subr.mxu0 %v3568
        %3706 = vmatpush1.msra.mxu0 %v3567
        %3707 = vmatprep.subr.mxu0 %v3566
        %3708 = vmatpush1.msra.mxu0 %v3565
        %3709 = vmatprep.subr.mxu0 %v3564
        %3710 = vmatpush1.msra.mxu0 %v3563
        %3711 = vmatprep.subr.mxu0 %v3562
        %3712 = vmatpush1.msra.mxu0 %v3561
        %3713 = vmatprep.subr.mxu0 0.0
        %3714 = vmatpush2.msra.mxu0 0.0
        %3715 = vmatprep.subr.mxu0 0.0
        %3716 = vmatpush2.msra.mxu0 0.0
        %3717 = vmatprep.subr.mxu0 0.0
        %3718 = vmatpush2.msra.mxu0 0.0
        %3719 = vmatprep.subr.mxu0 0.0
        %3720 = vmatpush2.msra.mxu0 0.0
        %3721 = vmatprep.subr.mxu0 0.0
        %3722 = vmatpush2.msra.mxu0 0.0
        %3723 = vmatprep.subr.mxu0 0.0
        %3724 = vmatpush2.msra.mxu0 0.0
        %3725 = vmatprep.subr.mxu0 0.0
        %3726 = vmatpush2.msra.mxu0 0.0
        %3727 = vmatprep.subr.mxu0 0.0
        %3728 = vmatpush2.msra.mxu0 0.0
        %3729 = vmatprep.subr.mxu0 0.0
        %3730 = vmatpush2.msra.mxu0 0.0
        %3731 = vmatprep.subr.mxu0 0.0
        %3732 = vmatpush2.msra.mxu0 0.0
        %3733 = vmatprep.subr.mxu0 0.0
        %3734 = vmatpush2.msra.mxu0 0.0
        %3735 = vmatprep.subr.mxu0 0.0
        %3736 = vmatpush2.msra.mxu0 0.0
        %3737 = vmatprep.subr.mxu0 0.0
        %3738 = vmatpush2.msra.mxu0 0.0
        %3739 = vmatprep.subr.mxu0 0.0
        %3740 = vmatpush2.msra.mxu0 0.0
        %3741 = vmatprep.subr.mxu0 0.0
        %3742 = vmatpush2.msra.mxu0 0.0
        %3743 = vmatprep.subr.mxu0 0.0
        %3744 = vmatpush2.msra.mxu0 0.0
        %3745 = vmatprep.mubr.f32.mxu0 0.0
        %3746 = vmatmul.mubr.f32.gmra.mxu0 %v3580
        %v3747 = vpop.f32.mrf.mxu0
        %v3748 = vadd.f32 0.0, %v3747
        %v3749 = vpop.f32.mrf.mxu0
        %v3750 = vadd.f32 0.0, %v3749
        %3751 = vmatprep.mubr.f32.mxu0 0.0
        %3752 = vmatmul.mubr.f32.gmra.mxu0 %v3583
        %v3753 = vpop.f32.mrf.mxu0
        %v3754 = vadd.f32 0.0, %v3753
        %v3755 = vpop.f32.mrf.mxu0
        %v3756 = vadd.f32 0.0, %v3755
        %3757 = vmatprep.mubr.f32.mxu0 0.0
        %3758 = vmatmul.mubr.f32.gmra.mxu0 %v3586
        %v3759 = vpop.f32.mrf.mxu0
        %v3760 = vadd.f32 0.0, %v3759
        %v3761 = vpop.f32.mrf.mxu0
        %v3762 = vadd.f32 0.0, %v3761
        %3763 = vmatprep.mubr.f32.mxu0 0.0
        %3764 = vmatmul.mubr.f32.gmra.mxu0 %v3589
        %v3765 = vpop.f32.mrf.mxu0
        %v3766 = vadd.f32 0.0, %v3765
        %v3767 = vpop.f32.mrf.mxu0
        %v3768 = vadd.f32 0.0, %v3767
        %3769 = vmatprep.mubr.f32.mxu0 0.0
        %3770 = vmatmul.mubr.f32.gmra.mxu0 %v3592
        %v3771 = vpop.f32.mrf.mxu0
        %v3772 = vadd.f32 0.0, %v3771
        %v3773 = vpop.f32.mrf.mxu0
        %v3774 = vadd.f32 0.0, %v3773
        %3775 = vmatprep.mubr.f32.mxu0 0.0
        %3776 = vmatmul.mubr.f32.gmra.mxu0 %v3595
        %v3777 = vpop.f32.mrf.mxu0
        %v3778 = vadd.f32 0.0, %v3777
        %v3779 = vpop.f32.mrf.mxu0
        %v3780 = vadd.f32 0.0, %v3779
        %3781 = vmatprep.mubr.f32.mxu0 0.0
        %3782 = vmatmul.mubr.f32.gmra.mxu0 %v3598
        %v3783 = vpop.f32.mrf.mxu0
        %v3784 = vadd.f32 0.0, %v3783
        %v3785 = vpop.f32.mrf.mxu0
        %v3786 = vadd.f32 0.0, %v3785
        %3787 = vmatprep.mubr.f32.mxu0 0.0
        %3788 = vmatmul.mubr.f32.gmra.mxu0 %v3601
        %v3789 = vpop.f32.mrf.mxu0
        %v3790 = vadd.f32 0.0, %v3789
        %v3791 = vpop.f32.mrf.mxu0
        %v3792 = vadd.f32 0.0, %v3791
        %3793 = vmatprep.mubr.f32.mxu0 0.0
        %3794 = vmatmul.mubr.f32.gmra.mxu0 %v3604
        %v3795 = vpop.f32.mrf.mxu0
        %v3796 = vadd.f32 0.0, %v3795
        %v3797 = vpop.f32.mrf.mxu0
        %v3798 = vadd.f32 0.0, %v3797
        %3799 = vmatprep.mubr.f32.mxu0 0.0
        %3800 = vmatmul.mubr.f32.gmra.mxu0 %v3607
        %v3801 = vpop.f32.mrf.mxu0
        %v3802 = vadd.f32 0.0, %v3801
        %v3803 = vpop.f32.mrf.mxu0
        %v3804 = vadd.f32 0.0, %v3803
        %3805 = vmatprep.mubr.f32.mxu0 0.0
        %3806 = vmatmul.mubr.f32.gmra.mxu0 %v3610
        %v3807 = vpop.f32.mrf.mxu0
        %v3808 = vadd.f32 0.0, %v3807
        %v3809 = vpop.f32.mrf.mxu0
        %v3810 = vadd.f32 0.0, %v3809
        %3811 = vmatprep.mubr.f32.mxu0 0.0
        %3812 = vmatmul.mubr.f32.gmra.mxu0 %v3613
        %v3813 = vpop.f32.mrf.mxu0
        %v3814 = vadd.f32 0.0, %v3813
        %v3815 = vpop.f32.mrf.mxu0
        %v3816 = vadd.f32 0.0, %v3815
        %3817 = vmatprep.mubr.f32.mxu0 0.0
        %3818 = vmatmul.mubr.f32.gmra.mxu0 %v3616
        %v3819 = vpop.f32.mrf.mxu0
        %v3820 = vadd.f32 0.0, %v3819
        %v3821 = vpop.f32.mrf.mxu0
        %v3822 = vadd.f32 0.0, %v3821
        %3823 = vmatprep.mubr.f32.mxu0 0.0
        %3824 = vmatmul.mubr.f32.gmra.mxu0 %v3619
        %v3825 = vpop.f32.mrf.mxu0
        %v3826 = vadd.f32 0.0, %v3825
        %v3827 = vpop.f32.mrf.mxu0
        %v3828 = vadd.f32 0.0, %v3827
        %3829 = vmatprep.mubr.f32.mxu0 0.0
        %3830 = vmatmul.mubr.f32.gmra.mxu0 %v3622
        %v3831 = vpop.f32.mrf.mxu0
        %v3832 = vadd.f32 0.0, %v3831
        %v3833 = vpop.f32.mrf.mxu0
        %v3834 = vadd.f32 0.0, %v3833
        %3835 = vmatprep.mubr.f32.mxu0 0.0
        %3836 = vmatmul.mubr.f32.gmra.mxu0 %v3625
        %v3837 = vpop.f32.mrf.mxu0
        %v3838 = vadd.f32 0.0, %v3837
        %v3839 = vpop.f32.mrf.mxu0
        %v3840 = vadd.f32 0.0, %v3839
        %3841 = vmatprep.mubr.f32.mxu0 0.0
        %3842 = vmatmul.mubr.f32.gmra.mxu0 %v3628
        %v3843 = vpop.f32.mrf.mxu0
        %v3844 = vadd.f32 0.0, %v3843
        %v3845 = vpop.f32.mrf.mxu0
        %v3846 = vadd.f32 0.0, %v3845
        %3847 = vmatprep.mubr.f32.mxu0 0.0
        %3848 = vmatmul.mubr.f32.gmra.mxu0 %v3631
        %v3849 = vpop.f32.mrf.mxu0
        %v3850 = vadd.f32 0.0, %v3849
        %v3851 = vpop.f32.mrf.mxu0
        %v3852 = vadd.f32 0.0, %v3851
        %3853 = vmatprep.mubr.f32.mxu0 0.0
        %3854 = vmatmul.mubr.f32.gmra.mxu0 %v3634
        %v3855 = vpop.f32.mrf.mxu0
        %v3856 = vadd.f32 0.0, %v3855
        %v3857 = vpop.f32.mrf.mxu0
        %v3858 = vadd.f32 0.0, %v3857
        %3859 = vmatprep.mubr.f32.mxu0 0.0
        %3860 = vmatmul.mubr.f32.gmra.mxu0 %v3637
        %v3861 = vpop.f32.mrf.mxu0
        %v3862 = vadd.f32 0.0, %v3861
        %v3863 = vpop.f32.mrf.mxu0
        %v3864 = vadd.f32 0.0, %v3863
        %3865 = vmatprep.mubr.f32.mxu0 0.0
        %3866 = vmatmul.mubr.f32.gmra.mxu0 %v3640
        %v3867 = vpop.f32.mrf.mxu0
        %v3868 = vadd.f32 0.0, %v3867
        %v3869 = vpop.f32.mrf.mxu0
        %v3870 = vadd.f32 0.0, %v3869
        %3871 = vmatprep.mubr.f32.mxu0 0.0
        %3872 = vmatmul.mubr.f32.gmra.mxu0 %v3643
        %v3873 = vpop.f32.mrf.mxu0
        %v3874 = vadd.f32 0.0, %v3873
        %v3875 = vpop.f32.mrf.mxu0
        %v3876 = vadd.f32 0.0, %v3875
        %3877 = vmatprep.mubr.f32.mxu0 0.0
        %3878 = vmatmul.mubr.f32.gmra.mxu0 %v3646
        %v3879 = vpop.f32.mrf.mxu0
        %v3880 = vadd.f32 0.0, %v3879
        %v3881 = vpop.f32.mrf.mxu0
        %v3882 = vadd.f32 0.0, %v3881
        %3883 = vmatprep.mubr.f32.mxu0 0.0
        %3884 = vmatmul.mubr.f32.gmra.mxu0 %v3649
        %v3885 = vpop.f32.mrf.mxu0
        %v3886 = vadd.f32 0.0, %v3885
        %v3887 = vpop.f32.mrf.mxu0
        %v3888 = vadd.f32 0.0, %v3887
        %3889 = vmatprep.mubr.f32.mxu0 0.0
        %3890 = vmatmul.mubr.f32.gmra.mxu0 %v3652
        %v3891 = vpop.f32.mrf.mxu0
        %v3892 = vadd.f32 0.0, %v3891
        %v3893 = vpop.f32.mrf.mxu0
        %v3894 = vadd.f32 0.0, %v3893
        %3895 = vmatprep.mubr.f32.mxu0 0.0
        %3896 = vmatmul.mubr.f32.gmra.mxu0 %v3655
        %v3897 = vpop.f32.mrf.mxu0
        %v3898 = vadd.f32 0.0, %v3897
        %v3899 = vpop.f32.mrf.mxu0
        %v3900 = vadd.f32 0.0, %v3899
        %3901 = vmatprep.mubr.f32.mxu0 0.0
        %3902 = vmatmul.mubr.f32.gmra.mxu0 %v3658
        %v3903 = vpop.f32.mrf.mxu0
        %v3904 = vadd.f32 0.0, %v3903
        %v3905 = vpop.f32.mrf.mxu0
        %v3906 = vadd.f32 0.0, %v3905
        %3907 = vmatprep.mubr.f32.mxu0 0.0
        %3908 = vmatmul.mubr.f32.gmra.mxu0 %v3661
        %v3909 = vpop.f32.mrf.mxu0
        %v3910 = vadd.f32 0.0, %v3909
        %v3911 = vpop.f32.mrf.mxu0
        %v3912 = vadd.f32 0.0, %v3911
        %3913 = vmatprep.mubr.f32.mxu0 0.0
        %3914 = vmatmul.mubr.f32.gmra.mxu0 %v3664
        %v3915 = vpop.f32.mrf.mxu0
        %v3916 = vadd.f32 0.0, %v3915
        %v3917 = vpop.f32.mrf.mxu0
        %v3918 = vadd.f32 0.0, %v3917
        %3919 = vmatprep.mubr.f32.mxu0 0.0
        %3920 = vmatmul.mubr.f32.gmra.mxu0 %v3667
        %v3921 = vpop.f32.mrf.mxu0
        %v3922 = vadd.f32 0.0, %v3921
        %v3923 = vpop.f32.mrf.mxu0
        %v3924 = vadd.f32 0.0, %v3923
        %3925 = vmatprep.mubr.f32.mxu0 0.0
        %3926 = vmatmul.mubr.f32.gmra.mxu0 %v3670
        %v3927 = vpop.f32.mrf.mxu0
        %v3928 = vadd.f32 0.0, %v3927
        %v3929 = vpop.f32.mrf.mxu0
        %v3930 = vadd.f32 0.0, %v3929
        %3931 = vmatprep.mubr.f32.mxu0 0.0
        %3932 = vmatmul.mubr.f32.gmra.mxu0 %v3673
        %v3933 = vpop.f32.mrf.mxu0
        %v3934 = vadd.f32 0.0, %v3933
        %v3935 = vpop.f32.mrf.mxu0
        %v3936 = vadd.f32 0.0, %v3935
        %3937 = vdwg.mxu0
        %v3938 = vadd.f32 %v3464, %v3748
        %v3939 = vadd.f32 %v3465, %v3750
        %v3940 = vadd.f32 %v3466, %v3754
        %v3941 = vadd.f32 %v3467, %v3756
        %v3942 = vadd.f32 %v3468, %v3760
        %v3943 = vadd.f32 %v3469, %v3762
        %v3944 = vadd.f32 %v3470, %v3766
        %v3945 = vadd.f32 %v3471, %v3768
        %v3946 = vadd.f32 %v3472, %v3772
        %v3947 = vadd.f32 %v3473, %v3774
        %v3948 = vadd.f32 %v3474, %v3778
        %v3949 = vadd.f32 %v3475, %v3780
        %v3950 = vadd.f32 %v3476, %v3784
        %v3951 = vadd.f32 %v3477, %v3786
        %v3952 = vadd.f32 %v3478, %v3790
        %v3953 = vadd.f32 %v3479, %v3792
        %v3954 = vadd.f32 %v3480, %v3796
        %v3955 = vadd.f32 %v3481, %v3798
        %v3956 = vadd.f32 %v3482, %v3802
        %v3957 = vadd.f32 %v3483, %v3804
        %v3958 = vadd.f32 %v3484, %v3808
        %v3959 = vadd.f32 %v3485, %v3810
        %v3960 = vadd.f32 %v3486, %v3814
        %v3961 = vadd.f32 %v3487, %v3816
        %v3962 = vadd.f32 %v3488, %v3820
        %v3963 = vadd.f32 %v3489, %v3822
        %v3964 = vadd.f32 %v3490, %v3826
        %v3965 = vadd.f32 %v3491, %v3828
        %v3966 = vadd.f32 %v3492, %v3832
        %v3967 = vadd.f32 %v3493, %v3834
        %v3968 = vadd.f32 %v3494, %v3838
        %v3969 = vadd.f32 %v3495, %v3840
        %v3970 = vadd.f32 %v3496, %v3844
        %v3971 = vadd.f32 %v3497, %v3846
        %v3972 = vadd.f32 %v3498, %v3850
        %v3973 = vadd.f32 %v3499, %v3852
        %v3974 = vadd.f32 %v3500, %v3856
        %v3975 = vadd.f32 %v3501, %v3858
        %v3976 = vadd.f32 %v3502, %v3862
        %v3977 = vadd.f32 %v3503, %v3864
        %v3978 = vadd.f32 %v3504, %v3868
        %v3979 = vadd.f32 %v3505, %v3870
        %v3980 = vadd.f32 %v3506, %v3874
        %v3981 = vadd.f32 %v3507, %v3876
        %v3982 = vadd.f32 %v3508, %v3880
        %v3983 = vadd.f32 %v3509, %v3882
        %v3984 = vadd.f32 %v3510, %v3886
        %v3985 = vadd.f32 %v3511, %v3888
        %v3986 = vadd.f32 %v3512, %v3892
        %v3987 = vadd.f32 %v3513, %v3894
        %v3988 = vadd.f32 %v3514, %v3898
        %v3989 = vadd.f32 %v3515, %v3900
        %v3990 = vadd.f32 %v3516, %v3904
        %v3991 = vadd.f32 %v3517, %v3906
        %v3992 = vadd.f32 %v3518, %v3910
        %v3993 = vadd.f32 %v3519, %v3912
        %v3994 = vadd.f32 %v3520, %v3916
        %v3995 = vadd.f32 %v3521, %v3918
        %v3996 = vadd.f32 %v3522, %v3922
        %v3997 = vadd.f32 %v3523, %v3924
        %v3998 = vadd.f32 %v3524, %v3928
        %v3999 = vadd.f32 %v3525, %v3930
        %v4000 = vadd.f32 %v3526, %v3934
        %v4001 = vadd.f32 %v3527, %v3936
        %v4002 = vld [vmem:[%s3053 + $0x2] sm:$0xff]
        %v4003 = vld [vmem:[%s3053 + $0xa] sm:$0xff]
        %v4004 = vld [vmem:[%s3053 + $0x1a] sm:$0xff]
        %v4005 = vld [vmem:[%s3053 + $0x22] sm:$0xff]
        %v4006 = vld [vmem:[%s3053 + $0x32] sm:$0xff]
        %v4007 = vld [vmem:[%s3053 + $0x3a] sm:$0xff]
        %v4008 = vld [vmem:[%s3053 + $0x4a] sm:$0xff]
        %v4009 = vld [vmem:[%s3053 + $0x52] sm:$0xff]
        %v4010 = vld [vmem:[%s3053 + $0x62] sm:$0xff]
        %v4011 = vld [vmem:[%s3053 + $0x6a] sm:$0xff]
        %v4012 = vld [vmem:[%s3053 + $0x7a] sm:$0xff]
        %v4013 = vld [vmem:[%s3053 + $0x82] sm:$0xff]
        %v4014 = vld [vmem:[%s3053 + $0x92] sm:$0xff]
        %v4015 = vld [vmem:[%s3053 + $0x9a] sm:$0xff]
        %v4016 = vld [vmem:[%s3053 + $0xaa] sm:$0xff]
        %v4017 = vld [vmem:[%s3053 + $0xb2] sm:$0xff]
        %v4018 = vld [vmem:[%s3053 + $0xc2] sm:$0xff]
        %v4019 = vld [vmem:[%s3053 + $0xca] sm:$0xff]
        %v4020 = vld [vmem:[%s3053 + $0xda] sm:$0xff]
        %v4021 = vld [vmem:[%s3053 + $0xe2] sm:$0xff]
        %v4022 = vld [vmem:[%s3053 + $0xf2] sm:$0xff]
        %v4023 = vld [vmem:[%s3053 + $0xfa] sm:$0xff]
        %v4024 = vld [vmem:[%s3053 + $0x10a] sm:$0xff]
        %v4025 = vld [vmem:[%s3053 + $0x112] sm:$0xff]
        %v4026 = vld [vmem:[%s3053 + $0x122] sm:$0xff]
        %v4027 = vld [vmem:[%s3053 + $0x12a] sm:$0xff]
        %v4028 = vld [vmem:[%s3053 + $0x13a] sm:$0xff]
        %v4029 = vld [vmem:[%s3053 + $0x142] sm:$0xff]
        %v4030 = vld [vmem:[%s3053 + $0x152] sm:$0xff]
        %v4031 = vld [vmem:[%s3053 + $0x15a] sm:$0xff]
        %v4032 = vld [vmem:[%s3053 + $0x16a] sm:$0xff]
        %v4033 = vld [vmem:[%s3053 + $0x172] sm:$0xff]
        %s4034 = scalar_lea.vmem %s3, 1152
        %v4035 = vld [vmem:[%s4034] sm:$0xff]
        %v4036 = vld [vmem:[%s4034 + $0x8] sm:$0xff]
        %v4037 = vld [vmem:[%s4034 + $0x10] sm:$0xff]
        %v4038 = vld [vmem:[%s4034 + $0x18] sm:$0xff]
        %v4039 = vld [vmem:[%s4034 + $0x20] sm:$0xff]
        %v4040 = vld [vmem:[%s4034 + $0x28] sm:$0xff]
        %v4041 = vld [vmem:[%s4034 + $0x30] sm:$0xff]
        %v4042 = vld [vmem:[%s4034 + $0x38] sm:$0xff]
        %v4043 = vld [vmem:[%s4034 + $0x40] sm:$0xff]
        %v4044 = vld [vmem:[%s4034 + $0x48] sm:$0xff]
        %v4045 = vld [vmem:[%s4034 + $0x50] sm:$0xff]
        %v4046 = vld [vmem:[%s4034 + $0x58] sm:$0xff]
        %v4047 = vld [vmem:[%s4034 + $0x60] sm:$0xff]
        %v4048 = vld [vmem:[%s4034 + $0x68] sm:$0xff]
        %v4049 = vld [vmem:[%s4034 + $0x70] sm:$0xff]
        %v4050 = vld [vmem:[%s4034 + $0x78] sm:$0xff]
        %v4051 = vld [vmem:[%s4034 + $0x80] sm:$0xf]
        %v4052 = vld [vmem:[%s4034 + $0x88] sm:$0xf]
        %v4054 = vsel %vm436, %v4002, 0
        %v4057 = vsel %vm436, %v4003, 0
        %v4060 = vsel %vm436, %v4004, 0
        %v4063 = vsel %vm436, %v4005, 0
        %v4066 = vsel %vm436, %v4006, 0
        %v4069 = vsel %vm436, %v4007, 0
        %v4072 = vsel %vm436, %v4008, 0
        %v4075 = vsel %vm436, %v4009, 0
        %v4078 = vsel %vm436, %v4010, 0
        %v4081 = vsel %vm436, %v4011, 0
        %v4084 = vsel %vm436, %v4012, 0
        %v4087 = vsel %vm436, %v4013, 0
        %v4090 = vsel %vm436, %v4014, 0
        %v4093 = vsel %vm436, %v4015, 0
        %v4096 = vsel %vm436, %v4016, 0
        %v4099 = vsel %vm436, %v4017, 0
        %v4102 = vsel %vm436, %v4018, 0
        %v4105 = vsel %vm436, %v4019, 0
        %v4108 = vsel %vm436, %v4020, 0
        %v4111 = vsel %vm436, %v4021, 0
        %v4114 = vsel %vm436, %v4022, 0
        %v4117 = vsel %vm436, %v4023, 0
        %v4120 = vsel %vm436, %v4024, 0
        %v4123 = vsel %vm436, %v4025, 0
        %v4126 = vsel %vm436, %v4026, 0
        %v4129 = vsel %vm436, %v4027, 0
        %v4132 = vsel %vm436, %v4028, 0
        %v4135 = vsel %vm436, %v4029, 0
        %v4138 = vsel %vm436, %v4030, 0
        %v4141 = vsel %vm436, %v4031, 0
        %v4144 = vsel %vm436, %v4032, 0
        %v4147 = vsel %vm436, %v4033, 0
        %v4150 = vsel %vm533, %v4051, 0
        %v4153 = vsel %vm533, %v4052, 0
        %4155 = vmatprep.subr.mxu0 0.0
        %4156 = vmatpush1.msra.mxu0 0.0
        %4157 = vmatprep.subr.mxu0 0.0
        %4158 = vmatpush1.msra.mxu0 0.0
        %4159 = vmatprep.subr.mxu0 0.0
        %4160 = vmatpush1.msra.mxu0 0.0
        %4161 = vmatprep.subr.mxu0 0.0
        %4162 = vmatpush1.msra.mxu0 0.0
        %4163 = vmatprep.subr.mxu0 0.0
        %4164 = vmatpush1.msra.mxu0 0.0
        %4165 = vmatprep.subr.mxu0 0.0
        %4166 = vmatpush1.msra.mxu0 0.0
        %4167 = vmatprep.subr.mxu0 0.0
        %4168 = vmatpush1.msra.mxu0 0.0
        %4169 = vmatprep.subr.mxu0 %v4153
        %4170 = vmatpush1.msra.mxu0 %v4150
        %4171 = vmatprep.subr.mxu0 %v4050
        %4172 = vmatpush1.msra.mxu0 %v4049
        %4173 = vmatprep.subr.mxu0 %v4048
        %4174 = vmatpush1.msra.mxu0 %v4047
        %4175 = vmatprep.subr.mxu0 %v4046
        %4176 = vmatpush1.msra.mxu0 %v4045
        %4177 = vmatprep.subr.mxu0 %v4044
        %4178 = vmatpush1.msra.mxu0 %v4043
        %4179 = vmatprep.subr.mxu0 %v4042
        %4180 = vmatpush1.msra.mxu0 %v4041
        %4181 = vmatprep.subr.mxu0 %v4040
        %4182 = vmatpush1.msra.mxu0 %v4039
        %4183 = vmatprep.subr.mxu0 %v4038
        %4184 = vmatpush1.msra.mxu0 %v4037
        %4185 = vmatprep.subr.mxu0 %v4036
        %4186 = vmatpush1.msra.mxu0 %v4035
        %4187 = vmatprep.subr.mxu0 0.0
        %4188 = vmatpush2.msra.mxu0 0.0
        %4189 = vmatprep.subr.mxu0 0.0
        %4190 = vmatpush2.msra.mxu0 0.0
        %4191 = vmatprep.subr.mxu0 0.0
        %4192 = vmatpush2.msra.mxu0 0.0
        %4193 = vmatprep.subr.mxu0 0.0
        %4194 = vmatpush2.msra.mxu0 0.0
        %4195 = vmatprep.subr.mxu0 0.0
        %4196 = vmatpush2.msra.mxu0 0.0
        %4197 = vmatprep.subr.mxu0 0.0
        %4198 = vmatpush2.msra.mxu0 0.0
        %4199 = vmatprep.subr.mxu0 0.0
        %4200 = vmatpush2.msra.mxu0 0.0
        %4201 = vmatprep.subr.mxu0 0.0
        %4202 = vmatpush2.msra.mxu0 0.0
        %4203 = vmatprep.subr.mxu0 0.0
        %4204 = vmatpush2.msra.mxu0 0.0
        %4205 = vmatprep.subr.mxu0 0.0
        %4206 = vmatpush2.msra.mxu0 0.0
        %4207 = vmatprep.subr.mxu0 0.0
        %4208 = vmatpush2.msra.mxu0 0.0
        %4209 = vmatprep.subr.mxu0 0.0
        %4210 = vmatpush2.msra.mxu0 0.0
        %4211 = vmatprep.subr.mxu0 0.0
        %4212 = vmatpush2.msra.mxu0 0.0
        %4213 = vmatprep.subr.mxu0 0.0
        %4214 = vmatpush2.msra.mxu0 0.0
        %4215 = vmatprep.subr.mxu0 0.0
        %4216 = vmatpush2.msra.mxu0 0.0
        %4217 = vmatprep.subr.mxu0 0.0
        %4218 = vmatpush2.msra.mxu0 0.0
        %4219 = vmatprep.mubr.f32.mxu0 0.0
        %4220 = vmatmul.mubr.f32.gmra.mxu0 %v4054
        %v4221 = vpop.f32.mrf.mxu0
        %v4222 = vadd.f32 0.0, %v4221
        %v4223 = vpop.f32.mrf.mxu0
        %v4224 = vadd.f32 0.0, %v4223
        %4225 = vmatprep.mubr.f32.mxu0 0.0
        %4226 = vmatmul.mubr.f32.gmra.mxu0 %v4057
        %v4227 = vpop.f32.mrf.mxu0
        %v4228 = vadd.f32 0.0, %v4227
        %v4229 = vpop.f32.mrf.mxu0
        %v4230 = vadd.f32 0.0, %v4229
        %4231 = vmatprep.mubr.f32.mxu0 0.0
        %4232 = vmatmul.mubr.f32.gmra.mxu0 %v4060
        %v4233 = vpop.f32.mrf.mxu0
        %v4234 = vadd.f32 0.0, %v4233
        %v4235 = vpop.f32.mrf.mxu0
        %v4236 = vadd.f32 0.0, %v4235
        %4237 = vmatprep.mubr.f32.mxu0 0.0
        %4238 = vmatmul.mubr.f32.gmra.mxu0 %v4063
        %v4239 = vpop.f32.mrf.mxu0
        %v4240 = vadd.f32 0.0, %v4239
        %v4241 = vpop.f32.mrf.mxu0
        %v4242 = vadd.f32 0.0, %v4241
        %4243 = vmatprep.mubr.f32.mxu0 0.0
        %4244 = vmatmul.mubr.f32.gmra.mxu0 %v4066
        %v4245 = vpop.f32.mrf.mxu0
        %v4246 = vadd.f32 0.0, %v4245
        %v4247 = vpop.f32.mrf.mxu0
        %v4248 = vadd.f32 0.0, %v4247
        %4249 = vmatprep.mubr.f32.mxu0 0.0
        %4250 = vmatmul.mubr.f32.gmra.mxu0 %v4069
        %v4251 = vpop.f32.mrf.mxu0
        %v4252 = vadd.f32 0.0, %v4251
        %v4253 = vpop.f32.mrf.mxu0
        %v4254 = vadd.f32 0.0, %v4253
        %4255 = vmatprep.mubr.f32.mxu0 0.0
        %4256 = vmatmul.mubr.f32.gmra.mxu0 %v4072
        %v4257 = vpop.f32.mrf.mxu0
        %v4258 = vadd.f32 0.0, %v4257
        %v4259 = vpop.f32.mrf.mxu0
        %v4260 = vadd.f32 0.0, %v4259
        %4261 = vmatprep.mubr.f32.mxu0 0.0
        %4262 = vmatmul.mubr.f32.gmra.mxu0 %v4075
        %v4263 = vpop.f32.mrf.mxu0
        %v4264 = vadd.f32 0.0, %v4263
        %v4265 = vpop.f32.mrf.mxu0
        %v4266 = vadd.f32 0.0, %v4265
        %4267 = vmatprep.mubr.f32.mxu0 0.0
        %4268 = vmatmul.mubr.f32.gmra.mxu0 %v4078
        %v4269 = vpop.f32.mrf.mxu0
        %v4270 = vadd.f32 0.0, %v4269
        %v4271 = vpop.f32.mrf.mxu0
        %v4272 = vadd.f32 0.0, %v4271
        %4273 = vmatprep.mubr.f32.mxu0 0.0
        %4274 = vmatmul.mubr.f32.gmra.mxu0 %v4081
        %v4275 = vpop.f32.mrf.mxu0
        %v4276 = vadd.f32 0.0, %v4275
        %v4277 = vpop.f32.mrf.mxu0
        %v4278 = vadd.f32 0.0, %v4277
        %4279 = vmatprep.mubr.f32.mxu0 0.0
        %4280 = vmatmul.mubr.f32.gmra.mxu0 %v4084
        %v4281 = vpop.f32.mrf.mxu0
        %v4282 = vadd.f32 0.0, %v4281
        %v4283 = vpop.f32.mrf.mxu0
        %v4284 = vadd.f32 0.0, %v4283
        %4285 = vmatprep.mubr.f32.mxu0 0.0
        %4286 = vmatmul.mubr.f32.gmra.mxu0 %v4087
        %v4287 = vpop.f32.mrf.mxu0
        %v4288 = vadd.f32 0.0, %v4287
        %v4289 = vpop.f32.mrf.mxu0
        %v4290 = vadd.f32 0.0, %v4289
        %4291 = vmatprep.mubr.f32.mxu0 0.0
        %4292 = vmatmul.mubr.f32.gmra.mxu0 %v4090
        %v4293 = vpop.f32.mrf.mxu0
        %v4294 = vadd.f32 0.0, %v4293
        %v4295 = vpop.f32.mrf.mxu0
        %v4296 = vadd.f32 0.0, %v4295
        %4297 = vmatprep.mubr.f32.mxu0 0.0
        %4298 = vmatmul.mubr.f32.gmra.mxu0 %v4093
        %v4299 = vpop.f32.mrf.mxu0
        %v4300 = vadd.f32 0.0, %v4299
        %v4301 = vpop.f32.mrf.mxu0
        %v4302 = vadd.f32 0.0, %v4301
        %4303 = vmatprep.mubr.f32.mxu0 0.0
        %4304 = vmatmul.mubr.f32.gmra.mxu0 %v4096
        %v4305 = vpop.f32.mrf.mxu0
        %v4306 = vadd.f32 0.0, %v4305
        %v4307 = vpop.f32.mrf.mxu0
        %v4308 = vadd.f32 0.0, %v4307
        %4309 = vmatprep.mubr.f32.mxu0 0.0
        %4310 = vmatmul.mubr.f32.gmra.mxu0 %v4099
        %v4311 = vpop.f32.mrf.mxu0
        %v4312 = vadd.f32 0.0, %v4311
        %v4313 = vpop.f32.mrf.mxu0
        %v4314 = vadd.f32 0.0, %v4313
        %4315 = vmatprep.mubr.f32.mxu0 0.0
        %4316 = vmatmul.mubr.f32.gmra.mxu0 %v4102
        %v4317 = vpop.f32.mrf.mxu0
        %v4318 = vadd.f32 0.0, %v4317
        %v4319 = vpop.f32.mrf.mxu0
        %v4320 = vadd.f32 0.0, %v4319
        %4321 = vmatprep.mubr.f32.mxu0 0.0
        %4322 = vmatmul.mubr.f32.gmra.mxu0 %v4105
        %v4323 = vpop.f32.mrf.mxu0
        %v4324 = vadd.f32 0.0, %v4323
        %v4325 = vpop.f32.mrf.mxu0
        %v4326 = vadd.f32 0.0, %v4325
        %4327 = vmatprep.mubr.f32.mxu0 0.0
        %4328 = vmatmul.mubr.f32.gmra.mxu0 %v4108
        %v4329 = vpop.f32.mrf.mxu0
        %v4330 = vadd.f32 0.0, %v4329
        %v4331 = vpop.f32.mrf.mxu0
        %v4332 = vadd.f32 0.0, %v4331
        %4333 = vmatprep.mubr.f32.mxu0 0.0
        %4334 = vmatmul.mubr.f32.gmra.mxu0 %v4111
        %v4335 = vpop.f32.mrf.mxu0
        %v4336 = vadd.f32 0.0, %v4335
        %v4337 = vpop.f32.mrf.mxu0
        %v4338 = vadd.f32 0.0, %v4337
        %4339 = vmatprep.mubr.f32.mxu0 0.0
        %4340 = vmatmul.mubr.f32.gmra.mxu0 %v4114
        %v4341 = vpop.f32.mrf.mxu0
        %v4342 = vadd.f32 0.0, %v4341
        %v4343 = vpop.f32.mrf.mxu0
        %v4344 = vadd.f32 0.0, %v4343
        %4345 = vmatprep.mubr.f32.mxu0 0.0
        %4346 = vmatmul.mubr.f32.gmra.mxu0 %v4117
        %v4347 = vpop.f32.mrf.mxu0
        %v4348 = vadd.f32 0.0, %v4347
        %v4349 = vpop.f32.mrf.mxu0
        %v4350 = vadd.f32 0.0, %v4349
        %4351 = vmatprep.mubr.f32.mxu0 0.0
        %4352 = vmatmul.mubr.f32.gmra.mxu0 %v4120
        %v4353 = vpop.f32.mrf.mxu0
        %v4354 = vadd.f32 0.0, %v4353
        %v4355 = vpop.f32.mrf.mxu0
        %v4356 = vadd.f32 0.0, %v4355
        %4357 = vmatprep.mubr.f32.mxu0 0.0
        %4358 = vmatmul.mubr.f32.gmra.mxu0 %v4123
        %v4359 = vpop.f32.mrf.mxu0
        %v4360 = vadd.f32 0.0, %v4359
        %v4361 = vpop.f32.mrf.mxu0
        %v4362 = vadd.f32 0.0, %v4361
        %4363 = vmatprep.mubr.f32.mxu0 0.0
        %4364 = vmatmul.mubr.f32.gmra.mxu0 %v4126
        %v4365 = vpop.f32.mrf.mxu0
        %v4366 = vadd.f32 0.0, %v4365
        %v4367 = vpop.f32.mrf.mxu0
        %v4368 = vadd.f32 0.0, %v4367
        %4369 = vmatprep.mubr.f32.mxu0 0.0
        %4370 = vmatmul.mubr.f32.gmra.mxu0 %v4129
        %v4371 = vpop.f32.mrf.mxu0
        %v4372 = vadd.f32 0.0, %v4371
        %v4373 = vpop.f32.mrf.mxu0
        %v4374 = vadd.f32 0.0, %v4373
        %4375 = vmatprep.mubr.f32.mxu0 0.0
        %4376 = vmatmul.mubr.f32.gmra.mxu0 %v4132
        %v4377 = vpop.f32.mrf.mxu0
        %v4378 = vadd.f32 0.0, %v4377
        %v4379 = vpop.f32.mrf.mxu0
        %v4380 = vadd.f32 0.0, %v4379
        %4381 = vmatprep.mubr.f32.mxu0 0.0
        %4382 = vmatmul.mubr.f32.gmra.mxu0 %v4135
        %v4383 = vpop.f32.mrf.mxu0
        %v4384 = vadd.f32 0.0, %v4383
        %v4385 = vpop.f32.mrf.mxu0
        %v4386 = vadd.f32 0.0, %v4385
        %4387 = vmatprep.mubr.f32.mxu0 0.0
        %4388 = vmatmul.mubr.f32.gmra.mxu0 %v4138
        %v4389 = vpop.f32.mrf.mxu0
        %v4390 = vadd.f32 0.0, %v4389
        %v4391 = vpop.f32.mrf.mxu0
        %v4392 = vadd.f32 0.0, %v4391
        %4393 = vmatprep.mubr.f32.mxu0 0.0
        %4394 = vmatmul.mubr.f32.gmra.mxu0 %v4141
        %v4395 = vpop.f32.mrf.mxu0
        %v4396 = vadd.f32 0.0, %v4395
        %v4397 = vpop.f32.mrf.mxu0
        %v4398 = vadd.f32 0.0, %v4397
        %4399 = vmatprep.mubr.f32.mxu0 0.0
        %4400 = vmatmul.mubr.f32.gmra.mxu0 %v4144
        %v4401 = vpop.f32.mrf.mxu0
        %v4402 = vadd.f32 0.0, %v4401
        %v4403 = vpop.f32.mrf.mxu0
        %v4404 = vadd.f32 0.0, %v4403
        %4405 = vmatprep.mubr.f32.mxu0 0.0
        %4406 = vmatmul.mubr.f32.gmra.mxu0 %v4147
        %v4407 = vpop.f32.mrf.mxu0
        %v4408 = vadd.f32 0.0, %v4407
        %v4409 = vpop.f32.mrf.mxu0
        %v4410 = vadd.f32 0.0, %v4409
        %4411 = vdwg.mxu0
        %v4412 = vadd.f32 %v3938, %v4222
        %v4413 = vadd.f32 %v3939, %v4224
        %v4414 = vadd.f32 %v3940, %v4228
        %v4415 = vadd.f32 %v3941, %v4230
        %v4416 = vadd.f32 %v3942, %v4234
        %v4417 = vadd.f32 %v3943, %v4236
        %v4418 = vadd.f32 %v3944, %v4240
        %v4419 = vadd.f32 %v3945, %v4242
        %v4420 = vadd.f32 %v3946, %v4246
        %v4421 = vadd.f32 %v3947, %v4248
        %v4422 = vadd.f32 %v3948, %v4252
        %v4423 = vadd.f32 %v3949, %v4254
        %v4424 = vadd.f32 %v3950, %v4258
        %v4425 = vadd.f32 %v3951, %v4260
        %v4426 = vadd.f32 %v3952, %v4264
        %v4427 = vadd.f32 %v3953, %v4266
        %v4428 = vadd.f32 %v3954, %v4270
        %v4429 = vadd.f32 %v3955, %v4272
        %v4430 = vadd.f32 %v3956, %v4276
        %v4431 = vadd.f32 %v3957, %v4278
        %v4432 = vadd.f32 %v3958, %v4282
        %v4433 = vadd.f32 %v3959, %v4284
        %v4434 = vadd.f32 %v3960, %v4288
        %v4435 = vadd.f32 %v3961, %v4290
        %v4436 = vadd.f32 %v3962, %v4294
        %v4437 = vadd.f32 %v3963, %v4296
        %v4438 = vadd.f32 %v3964, %v4300
        %v4439 = vadd.f32 %v3965, %v4302
        %v4440 = vadd.f32 %v3966, %v4306
        %v4441 = vadd.f32 %v3967, %v4308
        %v4442 = vadd.f32 %v3968, %v4312
        %v4443 = vadd.f32 %v3969, %v4314
        %v4444 = vadd.f32 %v3970, %v4318
        %v4445 = vadd.f32 %v3971, %v4320
        %v4446 = vadd.f32 %v3972, %v4324
        %v4447 = vadd.f32 %v3973, %v4326
        %v4448 = vadd.f32 %v3974, %v4330
        %v4449 = vadd.f32 %v3975, %v4332
        %v4450 = vadd.f32 %v3976, %v4336
        %v4451 = vadd.f32 %v3977, %v4338
        %v4452 = vadd.f32 %v3978, %v4342
        %v4453 = vadd.f32 %v3979, %v4344
        %v4454 = vadd.f32 %v3980, %v4348
        %v4455 = vadd.f32 %v3981, %v4350
        %v4456 = vadd.f32 %v3982, %v4354
        %v4457 = vadd.f32 %v3983, %v4356
        %v4458 = vadd.f32 %v3984, %v4360
        %v4459 = vadd.f32 %v3985, %v4362
        %v4460 = vadd.f32 %v3986, %v4366
        %v4461 = vadd.f32 %v3987, %v4368
        %v4462 = vadd.f32 %v3988, %v4372
        %v4463 = vadd.f32 %v3989, %v4374
        %v4464 = vadd.f32 %v3990, %v4378
        %v4465 = vadd.f32 %v3991, %v4380
        %v4466 = vadd.f32 %v3992, %v4384
        %v4467 = vadd.f32 %v3993, %v4386
        %v4468 = vadd.f32 %v3994, %v4390
        %v4469 = vadd.f32 %v3995, %v4392
        %v4470 = vadd.f32 %v3996, %v4396
        %v4471 = vadd.f32 %v3997, %v4398
        %v4472 = vadd.f32 %v3998, %v4402
        %v4473 = vadd.f32 %v3999, %v4404
        %v4474 = vadd.f32 %v4000, %v4408
        %v4475 = vadd.f32 %v4001, %v4410
        %v4476 = vld [vmem:[%s329] sm:$0xff]
        %v4477 = vld [vmem:[%s329 + $0x8] sm:$0xff]
        %v4478 = vld [vmem:[%s329 + $0x10] sm:$0xff]
        %v4479 = vld [vmem:[%s329 + $0x18] sm:$0xff]
        %v4480 = vld [vmem:[%s329 + $0x20] sm:$0xff]
        %v4481 = vld [vmem:[%s329 + $0x28] sm:$0xff]
        %v4482 = vld [vmem:[%s329 + $0x30] sm:$0xff]
        %v4483 = vld [vmem:[%s329 + $0x38] sm:$0xff]
        %v4484 = vld [vmem:[%s329 + $0x40] sm:$0xff]
        %v4485 = vld [vmem:[%s329 + $0x48] sm:$0xff]
        %v4486 = vld [vmem:[%s329 + $0x50] sm:$0xff]
        %v4487 = vld [vmem:[%s329 + $0x58] sm:$0xff]
        %v4488 = vld [vmem:[%s329 + $0x60] sm:$0xff]
        %v4489 = vld [vmem:[%s329 + $0x68] sm:$0xff]
        %v4490 = vld [vmem:[%s329 + $0x70] sm:$0xff]
        %v4491 = vld [vmem:[%s329 + $0x78] sm:$0xff]
        %v4492 = vld [vmem:[%s329 + $0x80] sm:$0xff]
        %v4493 = vld [vmem:[%s329 + $0x88] sm:$0xff]
        %v4494 = vld [vmem:[%s329 + $0x90] sm:$0xff]
        %v4495 = vld [vmem:[%s329 + $0x98] sm:$0xff]
        %v4496 = vld [vmem:[%s329 + $0xa0] sm:$0xff]
        %v4497 = vld [vmem:[%s329 + $0xa8] sm:$0xff]
        %v4498 = vld [vmem:[%s329 + $0xb0] sm:$0xff]
        %v4499 = vld [vmem:[%s329 + $0xb8] sm:$0xff]
        %v4500 = vld [vmem:[%s329 + $0xc0] sm:$0xff]
        %v4501 = vld [vmem:[%s329 + $0xc8] sm:$0xff]
        %v4502 = vld [vmem:[%s329 + $0xd0] sm:$0xff]
        %v4503 = vld [vmem:[%s329 + $0xd8] sm:$0xff]
        %v4504 = vld [vmem:[%s329 + $0xe0] sm:$0xff]
        %v4505 = vld [vmem:[%s329 + $0xe8] sm:$0xff]
        %v4506 = vld [vmem:[%s329 + $0xf0] sm:$0xff]
        %v4507 = vld [vmem:[%s329 + $0xf8] sm:$0xff]
        %v4508 = vld [vmem:[%s334] sm:$0xff]
        %v4509 = vld [vmem:[%s334 + $0x8] sm:$0xff]
        %v4510 = vld [vmem:[%s334 + $0x10] sm:$0xff]
        %v4511 = vld [vmem:[%s334 + $0x18] sm:$0xff]
        %v4512 = vld [vmem:[%s334 + $0x20] sm:$0xff]
        %v4513 = vld [vmem:[%s334 + $0x28] sm:$0xff]
        %v4514 = vld [vmem:[%s334 + $0x30] sm:$0xff]
        %v4515 = vld [vmem:[%s334 + $0x38] sm:$0xff]
        %v4516 = vld [vmem:[%s334 + $0x40] sm:$0xff]
        %v4517 = vld [vmem:[%s334 + $0x48] sm:$0xff]
        %v4518 = vld [vmem:[%s334 + $0x50] sm:$0xff]
        %v4519 = vld [vmem:[%s334 + $0x58] sm:$0xff]
        %v4520 = vld [vmem:[%s334 + $0x60] sm:$0xff]
        %v4521 = vld [vmem:[%s334 + $0x68] sm:$0xff]
        %v4522 = vld [vmem:[%s334 + $0x70] sm:$0xff]
        %v4523 = vld [vmem:[%s334 + $0x78] sm:$0xff]
        %v4524 = vld [vmem:[%s334 + $0x80] sm:$0xff]
        %v4525 = vld [vmem:[%s334 + $0x88] sm:$0xff]
        %v4526 = vld [vmem:[%s334 + $0x90] sm:$0xff]
        %v4527 = vld [vmem:[%s334 + $0x98] sm:$0xff]
        %v4528 = vld [vmem:[%s334 + $0xa0] sm:$0xff]
        %v4529 = vld [vmem:[%s334 + $0xa8] sm:$0xff]
        %v4530 = vld [vmem:[%s334 + $0xb0] sm:$0xff]
        %v4531 = vld [vmem:[%s334 + $0xb8] sm:$0xff]
        %v4532 = vld [vmem:[%s334 + $0xc0] sm:$0xff]
        %v4533 = vld [vmem:[%s334 + $0xc8] sm:$0xff]
        %v4534 = vld [vmem:[%s334 + $0xd0] sm:$0xff]
        %v4535 = vld [vmem:[%s334 + $0xd8] sm:$0xff]
        %v4536 = vld [vmem:[%s334 + $0xe0] sm:$0xff]
        %v4537 = vld [vmem:[%s334 + $0xe8] sm:$0xff]
        %v4538 = vld [vmem:[%s334 + $0xf0] sm:$0xff]
        %v4539 = vld [vmem:[%s334 + $0xf8] sm:$0xff]
        %v4540 = vxor.u32 %v4412, 2147483648
        %v4541 = vxor.u32 %v4414, 2147483648
        %v4542 = vxor.u32 %v4416, 2147483648
        %v4543 = vxor.u32 %v4418, 2147483648
        %v4544 = vxor.u32 %v4420, 2147483648
        %v4545 = vxor.u32 %v4422, 2147483648
        %v4546 = vxor.u32 %v4424, 2147483648
        %v4547 = vxor.u32 %v4426, 2147483648
        %v4548 = vxor.u32 %v4428, 2147483648
        %v4549 = vxor.u32 %v4430, 2147483648
        %v4550 = vxor.u32 %v4432, 2147483648
        %v4551 = vxor.u32 %v4434, 2147483648
        %v4552 = vxor.u32 %v4436, 2147483648
        %v4553 = vxor.u32 %v4438, 2147483648
        %v4554 = vxor.u32 %v4440, 2147483648
        %v4555 = vxor.u32 %v4442, 2147483648
        %v4556 = vxor.u32 %v4444, 2147483648
        %v4557 = vxor.u32 %v4446, 2147483648
        %v4558 = vxor.u32 %v4448, 2147483648
        %v4559 = vxor.u32 %v4450, 2147483648
        %v4560 = vxor.u32 %v4452, 2147483648
        %v4561 = vxor.u32 %v4454, 2147483648
        %v4562 = vxor.u32 %v4456, 2147483648
        %v4563 = vxor.u32 %v4458, 2147483648
        %v4564 = vxor.u32 %v4460, 2147483648
        %v4565 = vxor.u32 %v4462, 2147483648
        %v4566 = vxor.u32 %v4464, 2147483648
        %v4567 = vxor.u32 %v4466, 2147483648
        %v4568 = vxor.u32 %v4468, 2147483648
        %v4569 = vxor.u32 %v4470, 2147483648
        %v4570 = vxor.u32 %v4472, 2147483648
        %v4571 = vxor.u32 %v4474, 2147483648
        %v4572 = vmul.f32 %v4540, 1.442695
        %v4573 = vpow.pop %v4572
        %v4574 = vmul.f32 %v4541, 1.442695
        %v4575 = vpow.pop %v4574
        %v4576 = vmul.f32 %v4542, 1.442695
        %v4577 = vpow.pop %v4576
        %v4578 = vmul.f32 %v4543, 1.442695
        %v4579 = vpow.pop %v4578
        %v4580 = vmul.f32 %v4544, 1.442695
        %v4581 = vpow.pop %v4580
        %v4582 = vmul.f32 %v4545, 1.442695
        %v4583 = vpow.pop %v4582
        %v4584 = vmul.f32 %v4546, 1.442695
        %v4585 = vpow.pop %v4584
        %v4586 = vmul.f32 %v4547, 1.442695
        %v4587 = vpow.pop %v4586
        %v4588 = vmul.f32 %v4548, 1.442695
        %v4589 = vpow.pop %v4588
        %v4590 = vmul.f32 %v4549, 1.442695
        %v4591 = vpow.pop %v4590
        %v4592 = vmul.f32 %v4550, 1.442695
        %v4593 = vpow.pop %v4592
        %v4594 = vmul.f32 %v4551, 1.442695
        %v4595 = vpow.pop %v4594
        %v4596 = vmul.f32 %v4552, 1.442695
        %v4597 = vpow.pop %v4596
        %v4598 = vmul.f32 %v4553, 1.442695
        %v4599 = vpow.pop %v4598
        %v4600 = vmul.f32 %v4554, 1.442695
        %v4601 = vpow.pop %v4600
        %v4602 = vmul.f32 %v4555, 1.442695
        %v4603 = vpow.pop %v4602
        %v4604 = vmul.f32 %v4556, 1.442695
        %v4605 = vpow.pop %v4604
        %v4606 = vmul.f32 %v4557, 1.442695
        %v4607 = vpow.pop %v4606
        %v4608 = vmul.f32 %v4558, 1.442695
        %v4609 = vpow.pop %v4608
        %v4610 = vmul.f32 %v4559, 1.442695
        %v4611 = vpow.pop %v4610
        %v4612 = vmul.f32 %v4560, 1.442695
        %v4613 = vpow.pop %v4612
        %v4614 = vmul.f32 %v4561, 1.442695
        %v4615 = vpow.pop %v4614
        %v4616 = vmul.f32 %v4562, 1.442695
        %v4617 = vpow.pop %v4616
        %v4618 = vmul.f32 %v4563, 1.442695
        %v4619 = vpow.pop %v4618
        %v4620 = vmul.f32 %v4564, 1.442695
        %v4621 = vpow.pop %v4620
        %v4622 = vmul.f32 %v4565, 1.442695
        %v4623 = vpow.pop %v4622
        %v4624 = vmul.f32 %v4566, 1.442695
        %v4625 = vpow.pop %v4624
        %v4626 = vmul.f32 %v4567, 1.442695
        %v4627 = vpow.pop %v4626
        %v4628 = vmul.f32 %v4568, 1.442695
        %v4629 = vpow.pop %v4628
        %v4630 = vmul.f32 %v4569, 1.442695
        %v4631 = vpow.pop %v4630
        %v4632 = vmul.f32 %v4570, 1.442695
        %v4633 = vpow.pop %v4632
        %v4634 = vmul.f32 %v4571, 1.442695
        %v4635 = vpow.pop %v4634
        %v4636 = vadd.f32 %v4573, 1.0
        %v4637 = vadd.f32 %v4575, 1.0
        %v4638 = vadd.f32 %v4577, 1.0
        %v4639 = vadd.f32 %v4579, 1.0
        %v4640 = vadd.f32 %v4581, 1.0
        %v4641 = vadd.f32 %v4583, 1.0
        %v4642 = vadd.f32 %v4585, 1.0
        %v4643 = vadd.f32 %v4587, 1.0
        %v4644 = vadd.f32 %v4589, 1.0
        %v4645 = vadd.f32 %v4591, 1.0
        %v4646 = vadd.f32 %v4593, 1.0
        %v4647 = vadd.f32 %v4595, 1.0
        %v4648 = vadd.f32 %v4597, 1.0
        %v4649 = vadd.f32 %v4599, 1.0
        %v4650 = vadd.f32 %v4601, 1.0
        %v4651 = vadd.f32 %v4603, 1.0
        %v4652 = vadd.f32 %v4605, 1.0
        %v4653 = vadd.f32 %v4607, 1.0
        %v4654 = vadd.f32 %v4609, 1.0
        %v4655 = vadd.f32 %v4611, 1.0
        %v4656 = vadd.f32 %v4613, 1.0
        %v4657 = vadd.f32 %v4615, 1.0
        %v4658 = vadd.f32 %v4617, 1.0
        %v4659 = vadd.f32 %v4619, 1.0
        %v4660 = vadd.f32 %v4621, 1.0
        %v4661 = vadd.f32 %v4623, 1.0
        %v4662 = vadd.f32 %v4625, 1.0
        %v4663 = vadd.f32 %v4627, 1.0
        %v4664 = vadd.f32 %v4629, 1.0
        %v4665 = vadd.f32 %v4631, 1.0
        %v4666 = vadd.f32 %v4633, 1.0
        %v4667 = vadd.f32 %v4635, 1.0
        %v4668 = vrcp.pop %v4636
        %v4669 = vmul.f32 1.0, %v4668
        %v4670 = vrcp.pop %v4637
        %v4671 = vmul.f32 1.0, %v4670
        %v4672 = vrcp.pop %v4638
        %v4673 = vmul.f32 1.0, %v4672
        %v4674 = vrcp.pop %v4639
        %v4675 = vmul.f32 1.0, %v4674
        %v4676 = vrcp.pop %v4640
        %v4677 = vmul.f32 1.0, %v4676
        %v4678 = vrcp.pop %v4641
        %v4679 = vmul.f32 1.0, %v4678
        %v4680 = vrcp.pop %v4642
        %v4681 = vmul.f32 1.0, %v4680
        %v4682 = vrcp.pop %v4643
        %v4683 = vmul.f32 1.0, %v4682
        %v4684 = vrcp.pop %v4644
        %v4685 = vmul.f32 1.0, %v4684
        %v4686 = vrcp.pop %v4645
        %v4687 = vmul.f32 1.0, %v4686
        %v4688 = vrcp.pop %v4646
        %v4689 = vmul.f32 1.0, %v4688
        %v4690 = vrcp.pop %v4647
        %v4691 = vmul.f32 1.0, %v4690
        %v4692 = vrcp.pop %v4648
        %v4693 = vmul.f32 1.0, %v4692
        %v4694 = vrcp.pop %v4649
        %v4695 = vmul.f32 1.0, %v4694
        %v4696 = vrcp.pop %v4650
        %v4697 = vmul.f32 1.0, %v4696
        %v4698 = vrcp.pop %v4651
        %v4699 = vmul.f32 1.0, %v4698
        %v4700 = vrcp.pop %v4652
        %v4701 = vmul.f32 1.0, %v4700
        %v4702 = vrcp.pop %v4653
        %v4703 = vmul.f32 1.0, %v4702
        %v4704 = vrcp.pop %v4654
        %v4705 = vmul.f32 1.0, %v4704
        %v4706 = vrcp.pop %v4655
        %v4707 = vmul.f32 1.0, %v4706
        %v4708 = vrcp.pop %v4656
        %v4709 = vmul.f32 1.0, %v4708
        %v4710 = vrcp.pop %v4657
        %v4711 = vmul.f32 1.0, %v4710
        %v4712 = vrcp.pop %v4658
        %v4713 = vmul.f32 1.0, %v4712
        %v4714 = vrcp.pop %v4659
        %v4715 = vmul.f32 1.0, %v4714
        %v4716 = vrcp.pop %v4660
        %v4717 = vmul.f32 1.0, %v4716
        %v4718 = vrcp.pop %v4661
        %v4719 = vmul.f32 1.0, %v4718
        %v4720 = vrcp.pop %v4662
        %v4721 = vmul.f32 1.0, %v4720
        %v4722 = vrcp.pop %v4663
        %v4723 = vmul.f32 1.0, %v4722
        %v4724 = vrcp.pop %v4664
        %v4725 = vmul.f32 1.0, %v4724
        %v4726 = vrcp.pop %v4665
        %v4727 = vmul.f32 1.0, %v4726
        %v4728 = vrcp.pop %v4666
        %v4729 = vmul.f32 1.0, %v4728
        %v4730 = vrcp.pop %v4667
        %v4731 = vmul.f32 1.0, %v4730
        %v4732 = vadd.f32 %v4412, 1.0
        %v4733 = vadd.f32 %v4414, 1.0
        %v4734 = vadd.f32 %v4416, 1.0
        %v4735 = vadd.f32 %v4418, 1.0
        %v4736 = vadd.f32 %v4420, 1.0
        %v4737 = vadd.f32 %v4422, 1.0
        %v4738 = vadd.f32 %v4424, 1.0
        %v4739 = vadd.f32 %v4426, 1.0
        %v4740 = vadd.f32 %v4428, 1.0
        %v4741 = vadd.f32 %v4430, 1.0
        %v4742 = vadd.f32 %v4432, 1.0
        %v4743 = vadd.f32 %v4434, 1.0
        %v4744 = vadd.f32 %v4436, 1.0
        %v4745 = vadd.f32 %v4438, 1.0
        %v4746 = vadd.f32 %v4440, 1.0
        %v4747 = vadd.f32 %v4442, 1.0
        %v4748 = vadd.f32 %v4444, 1.0
        %v4749 = vadd.f32 %v4446, 1.0
        %v4750 = vadd.f32 %v4448, 1.0
        %v4751 = vadd.f32 %v4450, 1.0
        %v4752 = vadd.f32 %v4452, 1.0
        %v4753 = vadd.f32 %v4454, 1.0
        %v4754 = vadd.f32 %v4456, 1.0
        %v4755 = vadd.f32 %v4458, 1.0
        %v4756 = vadd.f32 %v4460, 1.0
        %v4757 = vadd.f32 %v4462, 1.0
        %v4758 = vadd.f32 %v4464, 1.0
        %v4759 = vadd.f32 %v4466, 1.0
        %v4760 = vadd.f32 %v4468, 1.0
        %v4761 = vadd.f32 %v4470, 1.0
        %v4762 = vadd.f32 %v4472, 1.0
        %v4763 = vadd.f32 %v4474, 1.0
        %v4764 = vxor.u32 %v4732, 2147483648
        %v4765 = vxor.u32 %v4733, 2147483648
        %v4766 = vxor.u32 %v4734, 2147483648
        %v4767 = vxor.u32 %v4735, 2147483648
        %v4768 = vxor.u32 %v4736, 2147483648
        %v4769 = vxor.u32 %v4737, 2147483648
        %v4770 = vxor.u32 %v4738, 2147483648
        %v4771 = vxor.u32 %v4739, 2147483648
        %v4772 = vxor.u32 %v4740, 2147483648
        %v4773 = vxor.u32 %v4741, 2147483648
        %v4774 = vxor.u32 %v4742, 2147483648
        %v4775 = vxor.u32 %v4743, 2147483648
        %v4776 = vxor.u32 %v4744, 2147483648
        %v4777 = vxor.u32 %v4745, 2147483648
        %v4778 = vxor.u32 %v4746, 2147483648
        %v4779 = vxor.u32 %v4747, 2147483648
        %v4780 = vxor.u32 %v4748, 2147483648
        %v4781 = vxor.u32 %v4749, 2147483648
        %v4782 = vxor.u32 %v4750, 2147483648
        %v4783 = vxor.u32 %v4751, 2147483648
        %v4784 = vxor.u32 %v4752, 2147483648
        %v4785 = vxor.u32 %v4753, 2147483648
        %v4786 = vxor.u32 %v4754, 2147483648
        %v4787 = vxor.u32 %v4755, 2147483648
        %v4788 = vxor.u32 %v4756, 2147483648
        %v4789 = vxor.u32 %v4757, 2147483648
        %v4790 = vxor.u32 %v4758, 2147483648
        %v4791 = vxor.u32 %v4759, 2147483648
        %v4792 = vxor.u32 %v4760, 2147483648
        %v4793 = vxor.u32 %v4761, 2147483648
        %v4794 = vxor.u32 %v4762, 2147483648
        %v4795 = vxor.u32 %v4763, 2147483648
        %v4796 = vmul.f32 %v4764, 1.442695
        %v4797 = vpow.pop %v4796
        %v4798 = vmul.f32 %v4765, 1.442695
        %v4799 = vpow.pop %v4798
        %v4800 = vmul.f32 %v4766, 1.442695
        %v4801 = vpow.pop %v4800
        %v4802 = vmul.f32 %v4767, 1.442695
        %v4803 = vpow.pop %v4802
        %v4804 = vmul.f32 %v4768, 1.442695
        %v4805 = vpow.pop %v4804
        %v4806 = vmul.f32 %v4769, 1.442695
        %v4807 = vpow.pop %v4806
        %v4808 = vmul.f32 %v4770, 1.442695
        %v4809 = vpow.pop %v4808
        %v4810 = vmul.f32 %v4771, 1.442695
        %v4811 = vpow.pop %v4810
        %v4812 = vmul.f32 %v4772, 1.442695
        %v4813 = vpow.pop %v4812
        %v4814 = vmul.f32 %v4773, 1.442695
        %v4815 = vpow.pop %v4814
        %v4816 = vmul.f32 %v4774, 1.442695
        %v4817 = vpow.pop %v4816
        %v4818 = vmul.f32 %v4775, 1.442695
        %v4819 = vpow.pop %v4818
        %v4820 = vmul.f32 %v4776, 1.442695
        %v4821 = vpow.pop %v4820
        %v4822 = vmul.f32 %v4777, 1.442695
        %v4823 = vpow.pop %v4822
        %v4824 = vmul.f32 %v4778, 1.442695
        %v4825 = vpow.pop %v4824
        %v4826 = vmul.f32 %v4779, 1.442695
        %v4827 = vpow.pop %v4826
        %v4828 = vmul.f32 %v4780, 1.442695
        %v4829 = vpow.pop %v4828
        %v4830 = vmul.f32 %v4781, 1.442695
        %v4831 = vpow.pop %v4830
        %v4832 = vmul.f32 %v4782, 1.442695
        %v4833 = vpow.pop %v4832
        %v4834 = vmul.f32 %v4783, 1.442695
        %v4835 = vpow.pop %v4834
        %v4836 = vmul.f32 %v4784, 1.442695
        %v4837 = vpow.pop %v4836
        %v4838 = vmul.f32 %v4785, 1.442695
        %v4839 = vpow.pop %v4838
        %v4840 = vmul.f32 %v4786, 1.442695
        %v4841 = vpow.pop %v4840
        %v4842 = vmul.f32 %v4787, 1.442695
        %v4843 = vpow.pop %v4842
        %v4844 = vmul.f32 %v4788, 1.442695
        %v4845 = vpow.pop %v4844
        %v4846 = vmul.f32 %v4789, 1.442695
        %v4847 = vpow.pop %v4846
        %v4848 = vmul.f32 %v4790, 1.442695
        %v4849 = vpow.pop %v4848
        %v4850 = vmul.f32 %v4791, 1.442695
        %v4851 = vpow.pop %v4850
        %v4852 = vmul.f32 %v4792, 1.442695
        %v4853 = vpow.pop %v4852
        %v4854 = vmul.f32 %v4793, 1.442695
        %v4855 = vpow.pop %v4854
        %v4856 = vmul.f32 %v4794, 1.442695
        %v4857 = vpow.pop %v4856
        %v4858 = vmul.f32 %v4795, 1.442695
        %v4859 = vpow.pop %v4858
        %v4860 = vadd.f32 %v4797, 1.0
        %v4861 = vadd.f32 %v4799, 1.0
        %v4862 = vadd.f32 %v4801, 1.0
        %v4863 = vadd.f32 %v4803, 1.0
        %v4864 = vadd.f32 %v4805, 1.0
        %v4865 = vadd.f32 %v4807, 1.0
        %v4866 = vadd.f32 %v4809, 1.0
        %v4867 = vadd.f32 %v4811, 1.0
        %v4868 = vadd.f32 %v4813, 1.0
        %v4869 = vadd.f32 %v4815, 1.0
        %v4870 = vadd.f32 %v4817, 1.0
        %v4871 = vadd.f32 %v4819, 1.0
        %v4872 = vadd.f32 %v4821, 1.0
        %v4873 = vadd.f32 %v4823, 1.0
        %v4874 = vadd.f32 %v4825, 1.0
        %v4875 = vadd.f32 %v4827, 1.0
        %v4876 = vadd.f32 %v4829, 1.0
        %v4877 = vadd.f32 %v4831, 1.0
        %v4878 = vadd.f32 %v4833, 1.0
        %v4879 = vadd.f32 %v4835, 1.0
        %v4880 = vadd.f32 %v4837, 1.0
        %v4881 = vadd.f32 %v4839, 1.0
        %v4882 = vadd.f32 %v4841, 1.0
        %v4883 = vadd.f32 %v4843, 1.0
        %v4884 = vadd.f32 %v4845, 1.0
        %v4885 = vadd.f32 %v4847, 1.0
        %v4886 = vadd.f32 %v4849, 1.0
        %v4887 = vadd.f32 %v4851, 1.0
        %v4888 = vadd.f32 %v4853, 1.0
        %v4889 = vadd.f32 %v4855, 1.0
        %v4890 = vadd.f32 %v4857, 1.0
        %v4891 = vadd.f32 %v4859, 1.0
        %v4892 = vrcp.pop %v4860
        %v4893 = vmul.f32 1.0, %v4892
        %v4894 = vrcp.pop %v4861
        %v4895 = vmul.f32 1.0, %v4894
        %v4896 = vrcp.pop %v4862
        %v4897 = vmul.f32 1.0, %v4896
        %v4898 = vrcp.pop %v4863
        %v4899 = vmul.f32 1.0, %v4898
        %v4900 = vrcp.pop %v4864
        %v4901 = vmul.f32 1.0, %v4900
        %v4902 = vrcp.pop %v4865
        %v4903 = vmul.f32 1.0, %v4902
        %v4904 = vrcp.pop %v4866
        %v4905 = vmul.f32 1.0, %v4904
        %v4906 = vrcp.pop %v4867
        %v4907 = vmul.f32 1.0, %v4906
        %v4908 = vrcp.pop %v4868
        %v4909 = vmul.f32 1.0, %v4908
        %v4910 = vrcp.pop %v4869
        %v4911 = vmul.f32 1.0, %v4910
        %v4912 = vrcp.pop %v4870
        %v4913 = vmul.f32 1.0, %v4912
        %v4914 = vrcp.pop %v4871
        %v4915 = vmul.f32 1.0, %v4914
        %v4916 = vrcp.pop %v4872
        %v4917 = vmul.f32 1.0, %v4916
        %v4918 = vrcp.pop %v4873
        %v4919 = vmul.f32 1.0, %v4918
        %v4920 = vrcp.pop %v4874
        %v4921 = vmul.f32 1.0, %v4920
        %v4922 = vrcp.pop %v4875
        %v4923 = vmul.f32 1.0, %v4922
        %v4924 = vrcp.pop %v4876
        %v4925 = vmul.f32 1.0, %v4924
        %v4926 = vrcp.pop %v4877
        %v4927 = vmul.f32 1.0, %v4926
        %v4928 = vrcp.pop %v4878
        %v4929 = vmul.f32 1.0, %v4928
        %v4930 = vrcp.pop %v4879
        %v4931 = vmul.f32 1.0, %v4930
        %v4932 = vrcp.pop %v4880
        %v4933 = vmul.f32 1.0, %v4932
        %v4934 = vrcp.pop %v4881
        %v4935 = vmul.f32 1.0, %v4934
        %v4936 = vrcp.pop %v4882
        %v4937 = vmul.f32 1.0, %v4936
        %v4938 = vrcp.pop %v4883
        %v4939 = vmul.f32 1.0, %v4938
        %v4940 = vrcp.pop %v4884
        %v4941 = vmul.f32 1.0, %v4940
        %v4942 = vrcp.pop %v4885
        %v4943 = vmul.f32 1.0, %v4942
        %v4944 = vrcp.pop %v4886
        %v4945 = vmul.f32 1.0, %v4944
        %v4946 = vrcp.pop %v4887
        %v4947 = vmul.f32 1.0, %v4946
        %v4948 = vrcp.pop %v4888
        %v4949 = vmul.f32 1.0, %v4948
        %v4950 = vrcp.pop %v4889
        %v4951 = vmul.f32 1.0, %v4950
        %v4952 = vrcp.pop %v4890
        %v4953 = vmul.f32 1.0, %v4952
        %v4954 = vrcp.pop %v4891
        %v4955 = vmul.f32 1.0, %v4954
        %v4956 = vtanh.pop %v4412
        %v4957 = vtanh.pop %v4414
        %v4958 = vtanh.pop %v4416
        %v4959 = vtanh.pop %v4418
        %v4960 = vtanh.pop %v4420
        %v4961 = vtanh.pop %v4422
        %v4962 = vtanh.pop %v4424
        %v4963 = vtanh.pop %v4426
        %v4964 = vtanh.pop %v4428
        %v4965 = vtanh.pop %v4430
        %v4966 = vtanh.pop %v4432
        %v4967 = vtanh.pop %v4434
        %v4968 = vtanh.pop %v4436
        %v4969 = vtanh.pop %v4438
        %v4970 = vtanh.pop %v4440
        %v4971 = vtanh.pop %v4442
        %v4972 = vtanh.pop %v4444
        %v4973 = vtanh.pop %v4446
        %v4974 = vtanh.pop %v4448
        %v4975 = vtanh.pop %v4450
        %v4976 = vtanh.pop %v4452
        %v4977 = vtanh.pop %v4454
        %v4978 = vtanh.pop %v4456
        %v4979 = vtanh.pop %v4458
        %v4980 = vtanh.pop %v4460
        %v4981 = vtanh.pop %v4462
        %v4982 = vtanh.pop %v4464
        %v4983 = vtanh.pop %v4466
        %v4984 = vtanh.pop %v4468
        %v4985 = vtanh.pop %v4470
        %v4986 = vtanh.pop %v4472
        %v4987 = vtanh.pop %v4474
        %5020 = vrot.lane.b32.xlu0 %v4476, 32
        %v5021 = vpop.permute.xlu0 %5020
        %5022 = vrot.lane.b32.xlu0 %v4477, 32
        %v5023 = vpop.permute.xlu0 %5022
        %5024 = vrot.lane.b32.xlu0 %v4478, 32
        %v5025 = vpop.permute.xlu0 %5024
        %5026 = vrot.lane.b32.xlu0 %v4479, 32
        %v5027 = vpop.permute.xlu0 %5026
        %5028 = vrot.lane.b32.xlu0 %v4480, 32
        %v5029 = vpop.permute.xlu0 %5028
        %5030 = vrot.lane.b32.xlu0 %v4481, 32
        %v5031 = vpop.permute.xlu0 %5030
        %5032 = vrot.lane.b32.xlu0 %v4482, 32
        %v5033 = vpop.permute.xlu0 %5032
        %5034 = vrot.lane.b32.xlu0 %v4483, 32
        %v5035 = vpop.permute.xlu0 %5034
        %5036 = vrot.lane.b32.xlu0 %v4484, 32
        %v5037 = vpop.permute.xlu0 %5036
        %5038 = vrot.lane.b32.xlu0 %v4485, 32
        %v5039 = vpop.permute.xlu0 %5038
        %5040 = vrot.lane.b32.xlu0 %v4486, 32
        %v5041 = vpop.permute.xlu0 %5040
        %5042 = vrot.lane.b32.xlu0 %v4487, 32
        %v5043 = vpop.permute.xlu0 %5042
        %5044 = vrot.lane.b32.xlu0 %v4488, 32
        %v5045 = vpop.permute.xlu0 %5044
        %5046 = vrot.lane.b32.xlu0 %v4489, 32
        %v5047 = vpop.permute.xlu0 %5046
        %5048 = vrot.lane.b32.xlu0 %v4490, 32
        %v5049 = vpop.permute.xlu0 %5048
        %5050 = vrot.lane.b32.xlu0 %v4491, 32
        %v5051 = vpop.permute.xlu0 %5050
        %5052 = vrot.lane.b32.xlu0 %v4492, 32
        %v5053 = vpop.permute.xlu0 %5052
        %5054 = vrot.lane.b32.xlu0 %v4493, 32
        %v5055 = vpop.permute.xlu0 %5054
        %5056 = vrot.lane.b32.xlu0 %v4494, 32
        %v5057 = vpop.permute.xlu0 %5056
        %5058 = vrot.lane.b32.xlu0 %v4495, 32
        %v5059 = vpop.permute.xlu0 %5058
        %5060 = vrot.lane.b32.xlu0 %v4496, 32
        %v5061 = vpop.permute.xlu0 %5060
        %5062 = vrot.lane.b32.xlu0 %v4497, 32
        %v5063 = vpop.permute.xlu0 %5062
        %5064 = vrot.lane.b32.xlu0 %v4498, 32
        %v5065 = vpop.permute.xlu0 %5064
        %5066 = vrot.lane.b32.xlu0 %v4499, 32
        %v5067 = vpop.permute.xlu0 %5066
        %5068 = vrot.lane.b32.xlu0 %v4500, 32
        %v5069 = vpop.permute.xlu0 %5068
        %5070 = vrot.lane.b32.xlu0 %v4501, 32
        %v5071 = vpop.permute.xlu0 %5070
        %5072 = vrot.lane.b32.xlu0 %v4502, 32
        %v5073 = vpop.permute.xlu0 %5072
        %5074 = vrot.lane.b32.xlu0 %v4503, 32
        %v5075 = vpop.permute.xlu0 %5074
        %5076 = vrot.lane.b32.xlu0 %v4504, 32
        %v5077 = vpop.permute.xlu0 %5076
        %5078 = vrot.lane.b32.xlu0 %v4505, 32
        %v5079 = vpop.permute.xlu0 %5078
        %5080 = vrot.lane.b32.xlu0 %v4506, 32
        %v5081 = vpop.permute.xlu0 %5080
        %5082 = vrot.lane.b32.xlu0 %v4507, 32
        %v5083 = vpop.permute.xlu0 %5082
        %v5116 = vmul.f32 %v4893, %v5021
        %v5117 = vmul.f32 %v4895, %v5023
        %v5118 = vmul.f32 %v4897, %v5025
        %v5119 = vmul.f32 %v4899, %v5027
        %v5120 = vmul.f32 %v4901, %v5029
        %v5121 = vmul.f32 %v4903, %v5031
        %v5122 = vmul.f32 %v4905, %v5033
        %v5123 = vmul.f32 %v4907, %v5035
        %v5124 = vmul.f32 %v4909, %v5037
        %v5125 = vmul.f32 %v4911, %v5039
        %v5126 = vmul.f32 %v4913, %v5041
        %v5127 = vmul.f32 %v4915, %v5043
        %v5128 = vmul.f32 %v4917, %v5045
        %v5129 = vmul.f32 %v4919, %v5047
        %v5130 = vmul.f32 %v4921, %v5049
        %v5131 = vmul.f32 %v4923, %v5051
        %v5132 = vmul.f32 %v4925, %v5053
        %v5133 = vmul.f32 %v4927, %v5055
        %v5134 = vmul.f32 %v4929, %v5057
        %v5135 = vmul.f32 %v4931, %v5059
        %v5136 = vmul.f32 %v4933, %v5061
        %v5137 = vmul.f32 %v4935, %v5063
        %v5138 = vmul.f32 %v4937, %v5065
        %v5139 = vmul.f32 %v4939, %v5067
        %v5140 = vmul.f32 %v4941, %v5069
        %v5141 = vmul.f32 %v4943, %v5071
        %v5142 = vmul.f32 %v4945, %v5073
        %v5143 = vmul.f32 %v4947, %v5075
        %v5144 = vmul.f32 %v4949, %v5077
        %v5145 = vmul.f32 %v4951, %v5079
        %v5146 = vmul.f32 %v4953, %v5081
        %v5147 = vmul.f32 %v4955, %v5083
        %5180 = vrot.lane.b32.xlu0 %v4956, 64
        %v5181 = vpop.permute.xlu0 %5180
        %5182 = vrot.lane.b32.xlu0 %v4957, 64
        %v5183 = vpop.permute.xlu0 %5182
        %5184 = vrot.lane.b32.xlu0 %v4958, 64
        %v5185 = vpop.permute.xlu0 %5184
        %5186 = vrot.lane.b32.xlu0 %v4959, 64
        %v5187 = vpop.permute.xlu0 %5186
        %5188 = vrot.lane.b32.xlu0 %v4960, 64
        %v5189 = vpop.permute.xlu0 %5188
        %5190 = vrot.lane.b32.xlu0 %v4961, 64
        %v5191 = vpop.permute.xlu0 %5190
        %5192 = vrot.lane.b32.xlu0 %v4962, 64
        %v5193 = vpop.permute.xlu0 %5192
        %5194 = vrot.lane.b32.xlu0 %v4963, 64
        %v5195 = vpop.permute.xlu0 %5194
        %5196 = vrot.lane.b32.xlu0 %v4964, 64
        %v5197 = vpop.permute.xlu0 %5196
        %5198 = vrot.lane.b32.xlu0 %v4965, 64
        %v5199 = vpop.permute.xlu0 %5198
        %5200 = vrot.lane.b32.xlu0 %v4966, 64
        %v5201 = vpop.permute.xlu0 %5200
        %5202 = vrot.lane.b32.xlu0 %v4967, 64
        %v5203 = vpop.permute.xlu0 %5202
        %5204 = vrot.lane.b32.xlu0 %v4968, 64
        %v5205 = vpop.permute.xlu0 %5204
        %5206 = vrot.lane.b32.xlu0 %v4969, 64
        %v5207 = vpop.permute.xlu0 %5206
        %5208 = vrot.lane.b32.xlu0 %v4970, 64
        %v5209 = vpop.permute.xlu0 %5208
        %5210 = vrot.lane.b32.xlu0 %v4971, 64
        %v5211 = vpop.permute.xlu0 %5210
        %5212 = vrot.lane.b32.xlu0 %v4972, 64
        %v5213 = vpop.permute.xlu0 %5212
        %5214 = vrot.lane.b32.xlu0 %v4973, 64
        %v5215 = vpop.permute.xlu0 %5214
        %5216 = vrot.lane.b32.xlu0 %v4974, 64
        %v5217 = vpop.permute.xlu0 %5216
        %5218 = vrot.lane.b32.xlu0 %v4975, 64
        %v5219 = vpop.permute.xlu0 %5218
        %5220 = vrot.lane.b32.xlu0 %v4976, 64
        %v5221 = vpop.permute.xlu0 %5220
        %5222 = vrot.lane.b32.xlu0 %v4977, 64
        %v5223 = vpop.permute.xlu0 %5222
        %5224 = vrot.lane.b32.xlu0 %v4978, 64
        %v5225 = vpop.permute.xlu0 %5224
        %5226 = vrot.lane.b32.xlu0 %v4979, 64
        %v5227 = vpop.permute.xlu0 %5226
        %5228 = vrot.lane.b32.xlu0 %v4980, 64
        %v5229 = vpop.permute.xlu0 %5228
        %5230 = vrot.lane.b32.xlu0 %v4981, 64
        %v5231 = vpop.permute.xlu0 %5230
        %5232 = vrot.lane.b32.xlu0 %v4982, 64
        %v5233 = vpop.permute.xlu0 %5232
        %5234 = vrot.lane.b32.xlu0 %v4983, 64
        %v5235 = vpop.permute.xlu0 %5234
        %5236 = vrot.lane.b32.xlu0 %v4984, 64
        %v5237 = vpop.permute.xlu0 %5236
        %5238 = vrot.lane.b32.xlu0 %v4985, 64
        %v5239 = vpop.permute.xlu0 %5238
        %5240 = vrot.lane.b32.xlu0 %v4986, 64
        %v5241 = vpop.permute.xlu0 %5240
        %5242 = vrot.lane.b32.xlu0 %v4987, 64
        %v5243 = vpop.permute.xlu0 %5242
        %v5276 = vmul.f32 %v4669, %v5181
        %v5277 = vmul.f32 %v4671, %v5183
        %v5278 = vmul.f32 %v4673, %v5185
        %v5279 = vmul.f32 %v4675, %v5187
        %v5280 = vmul.f32 %v4677, %v5189
        %v5281 = vmul.f32 %v4679, %v5191
        %v5282 = vmul.f32 %v4681, %v5193
        %v5283 = vmul.f32 %v4683, %v5195
        %v5284 = vmul.f32 %v4685, %v5197
        %v5285 = vmul.f32 %v4687, %v5199
        %v5286 = vmul.f32 %v4689, %v5201
        %v5287 = vmul.f32 %v4691, %v5203
        %v5288 = vmul.f32 %v4693, %v5205
        %v5289 = vmul.f32 %v4695, %v5207
        %v5290 = vmul.f32 %v4697, %v5209
        %v5291 = vmul.f32 %v4699, %v5211
        %v5292 = vmul.f32 %v4701, %v5213
        %v5293 = vmul.f32 %v4703, %v5215
        %v5294 = vmul.f32 %v4705, %v5217
        %v5295 = vmul.f32 %v4707, %v5219
        %v5296 = vmul.f32 %v4709, %v5221
        %v5297 = vmul.f32 %v4711, %v5223
        %v5298 = vmul.f32 %v4713, %v5225
        %v5299 = vmul.f32 %v4715, %v5227
        %v5300 = vmul.f32 %v4717, %v5229
        %v5301 = vmul.f32 %v4719, %v5231
        %v5302 = vmul.f32 %v4721, %v5233
        %v5303 = vmul.f32 %v4723, %v5235
        %v5304 = vmul.f32 %v4725, %v5237
        %v5305 = vmul.f32 %v4727, %v5239
        %v5306 = vmul.f32 %v4729, %v5241
        %v5307 = vmul.f32 %v4731, %v5243
        %5340 = vrot.lane.b32.xlu0 %v5276, 32
        %v5341 = vpop.permute.xlu0 %5340
        %5342 = vrot.lane.b32.xlu0 %v5277, 32
        %v5343 = vpop.permute.xlu0 %5342
        %5344 = vrot.lane.b32.xlu0 %v5278, 32
        %v5345 = vpop.permute.xlu0 %5344
        %5346 = vrot.lane.b32.xlu0 %v5279, 32
        %v5347 = vpop.permute.xlu0 %5346
        %5348 = vrot.lane.b32.xlu0 %v5280, 32
        %v5349 = vpop.permute.xlu0 %5348
        %5350 = vrot.lane.b32.xlu0 %v5281, 32
        %v5351 = vpop.permute.xlu0 %5350
        %5352 = vrot.lane.b32.xlu0 %v5282, 32
        %v5353 = vpop.permute.xlu0 %5352
        %5354 = vrot.lane.b32.xlu0 %v5283, 32
        %v5355 = vpop.permute.xlu0 %5354
        %5356 = vrot.lane.b32.xlu0 %v5284, 32
        %v5357 = vpop.permute.xlu0 %5356
        %5358 = vrot.lane.b32.xlu0 %v5285, 32
        %v5359 = vpop.permute.xlu0 %5358
        %5360 = vrot.lane.b32.xlu0 %v5286, 32
        %v5361 = vpop.permute.xlu0 %5360
        %5362 = vrot.lane.b32.xlu0 %v5287, 32
        %v5363 = vpop.permute.xlu0 %5362
        %5364 = vrot.lane.b32.xlu0 %v5288, 32
        %v5365 = vpop.permute.xlu0 %5364
        %5366 = vrot.lane.b32.xlu0 %v5289, 32
        %v5367 = vpop.permute.xlu0 %5366
        %5368 = vrot.lane.b32.xlu0 %v5290, 32
        %v5369 = vpop.permute.xlu0 %5368
        %5370 = vrot.lane.b32.xlu0 %v5291, 32
        %v5371 = vpop.permute.xlu0 %5370
        %5372 = vrot.lane.b32.xlu0 %v5292, 32
        %v5373 = vpop.permute.xlu0 %5372
        %5374 = vrot.lane.b32.xlu0 %v5293, 32
        %v5375 = vpop.permute.xlu0 %5374
        %5376 = vrot.lane.b32.xlu0 %v5294, 32
        %v5377 = vpop.permute.xlu0 %5376
        %5378 = vrot.lane.b32.xlu0 %v5295, 32
        %v5379 = vpop.permute.xlu0 %5378
        %5380 = vrot.lane.b32.xlu0 %v5296, 32
        %v5381 = vpop.permute.xlu0 %5380
        %5382 = vrot.lane.b32.xlu0 %v5297, 32
        %v5383 = vpop.permute.xlu0 %5382
        %5384 = vrot.lane.b32.xlu0 %v5298, 32
        %v5385 = vpop.permute.xlu0 %5384
        %5386 = vrot.lane.b32.xlu0 %v5299, 32
        %v5387 = vpop.permute.xlu0 %5386
        %5388 = vrot.lane.b32.xlu0 %v5300, 32
        %v5389 = vpop.permute.xlu0 %5388
        %5390 = vrot.lane.b32.xlu0 %v5301, 32
        %v5391 = vpop.permute.xlu0 %5390
        %5392 = vrot.lane.b32.xlu0 %v5302, 32
        %v5393 = vpop.permute.xlu0 %5392
        %5394 = vrot.lane.b32.xlu0 %v5303, 32
        %v5395 = vpop.permute.xlu0 %5394
        %5396 = vrot.lane.b32.xlu0 %v5304, 32
        %v5397 = vpop.permute.xlu0 %5396
        %5398 = vrot.lane.b32.xlu0 %v5305, 32
        %v5399 = vpop.permute.xlu0 %5398
        %5400 = vrot.lane.b32.xlu0 %v5306, 32
        %v5401 = vpop.permute.xlu0 %5400
        %5402 = vrot.lane.b32.xlu0 %v5307, 32
        %v5403 = vpop.permute.xlu0 %5402
        %v5436 = vadd.f32 %v5116, %v5341
        %v5437 = vadd.f32 %v5117, %v5343
        %v5438 = vadd.f32 %v5118, %v5345
        %v5439 = vadd.f32 %v5119, %v5347
        %v5440 = vadd.f32 %v5120, %v5349
        %v5441 = vadd.f32 %v5121, %v5351
        %v5442 = vadd.f32 %v5122, %v5353
        %v5443 = vadd.f32 %v5123, %v5355
        %v5444 = vadd.f32 %v5124, %v5357
        %v5445 = vadd.f32 %v5125, %v5359
        %v5446 = vadd.f32 %v5126, %v5361
        %v5447 = vadd.f32 %v5127, %v5363
        %v5448 = vadd.f32 %v5128, %v5365
        %v5449 = vadd.f32 %v5129, %v5367
        %v5450 = vadd.f32 %v5130, %v5369
        %v5451 = vadd.f32 %v5131, %v5371
        %v5452 = vadd.f32 %v5132, %v5373
        %v5453 = vadd.f32 %v5133, %v5375
        %v5454 = vadd.f32 %v5134, %v5377
        %v5455 = vadd.f32 %v5135, %v5379
        %v5456 = vadd.f32 %v5136, %v5381
        %v5457 = vadd.f32 %v5137, %v5383
        %v5458 = vadd.f32 %v5138, %v5385
        %v5459 = vadd.f32 %v5139, %v5387
        %v5460 = vadd.f32 %v5140, %v5389
        %v5461 = vadd.f32 %v5141, %v5391
        %v5462 = vadd.f32 %v5142, %v5393
        %v5463 = vadd.f32 %v5143, %v5395
        %v5464 = vadd.f32 %v5144, %v5397
        %v5465 = vadd.f32 %v5145, %v5399
        %v5466 = vadd.f32 %v5146, %v5401
        %v5467 = vadd.f32 %v5147, %v5403
        %v5468 = vadd.f32 %v4413, 1.0
        %v5469 = vadd.f32 %v4415, 1.0
        %v5470 = vadd.f32 %v4417, 1.0
        %v5471 = vadd.f32 %v4419, 1.0
        %v5472 = vadd.f32 %v4421, 1.0
        %v5473 = vadd.f32 %v4423, 1.0
        %v5474 = vadd.f32 %v4425, 1.0
        %v5475 = vadd.f32 %v4427, 1.0
        %v5476 = vadd.f32 %v4429, 1.0
        %v5477 = vadd.f32 %v4431, 1.0
        %v5478 = vadd.f32 %v4433, 1.0
        %v5479 = vadd.f32 %v4435, 1.0
        %v5480 = vadd.f32 %v4437, 1.0
        %v5481 = vadd.f32 %v4439, 1.0
        %v5482 = vadd.f32 %v4441, 1.0
        %v5483 = vadd.f32 %v4443, 1.0
        %v5484 = vadd.f32 %v4445, 1.0
        %v5485 = vadd.f32 %v4447, 1.0
        %v5486 = vadd.f32 %v4449, 1.0
        %v5487 = vadd.f32 %v4451, 1.0
        %v5488 = vadd.f32 %v4453, 1.0
        %v5489 = vadd.f32 %v4455, 1.0
        %v5490 = vadd.f32 %v4457, 1.0
        %v5491 = vadd.f32 %v4459, 1.0
        %v5492 = vadd.f32 %v4461, 1.0
        %v5493 = vadd.f32 %v4463, 1.0
        %v5494 = vadd.f32 %v4465, 1.0
        %v5495 = vadd.f32 %v4467, 1.0
        %v5496 = vadd.f32 %v4469, 1.0
        %v5497 = vadd.f32 %v4471, 1.0
        %v5498 = vadd.f32 %v4473, 1.0
        %v5499 = vadd.f32 %v4475, 1.0
        %v5500 = vxor.u32 %v5468, 2147483648
        %v5501 = vxor.u32 %v5469, 2147483648
        %v5502 = vxor.u32 %v5470, 2147483648
        %v5503 = vxor.u32 %v5471, 2147483648
        %v5504 = vxor.u32 %v5472, 2147483648
        %v5505 = vxor.u32 %v5473, 2147483648
        %v5506 = vxor.u32 %v5474, 2147483648
        %v5507 = vxor.u32 %v5475, 2147483648
        %v5508 = vxor.u32 %v5476, 2147483648
        %v5509 = vxor.u32 %v5477, 2147483648
        %v5510 = vxor.u32 %v5478, 2147483648
        %v5511 = vxor.u32 %v5479, 2147483648
        %v5512 = vxor.u32 %v5480, 2147483648
        %v5513 = vxor.u32 %v5481, 2147483648
        %v5514 = vxor.u32 %v5482, 2147483648
        %v5515 = vxor.u32 %v5483, 2147483648
        %v5516 = vxor.u32 %v5484, 2147483648
        %v5517 = vxor.u32 %v5485, 2147483648
        %v5518 = vxor.u32 %v5486, 2147483648
        %v5519 = vxor.u32 %v5487, 2147483648
        %v5520 = vxor.u32 %v5488, 2147483648
        %v5521 = vxor.u32 %v5489, 2147483648
        %v5522 = vxor.u32 %v5490, 2147483648
        %v5523 = vxor.u32 %v5491, 2147483648
        %v5524 = vxor.u32 %v5492, 2147483648
        %v5525 = vxor.u32 %v5493, 2147483648
        %v5526 = vxor.u32 %v5494, 2147483648
        %v5527 = vxor.u32 %v5495, 2147483648
        %v5528 = vxor.u32 %v5496, 2147483648
        %v5529 = vxor.u32 %v5497, 2147483648
        %v5530 = vxor.u32 %v5498, 2147483648
        %v5531 = vxor.u32 %v5499, 2147483648
        %v5532 = vmul.f32 %v5500, 1.442695
        %v5533 = vpow.pop %v5532
        %v5534 = vmul.f32 %v5501, 1.442695
        %v5535 = vpow.pop %v5534
        %v5536 = vmul.f32 %v5502, 1.442695
        %v5537 = vpow.pop %v5536
        %v5538 = vmul.f32 %v5503, 1.442695
        %v5539 = vpow.pop %v5538
        %v5540 = vmul.f32 %v5504, 1.442695
        %v5541 = vpow.pop %v5540
        %v5542 = vmul.f32 %v5505, 1.442695
        %v5543 = vpow.pop %v5542
        %v5544 = vmul.f32 %v5506, 1.442695
        %v5545 = vpow.pop %v5544
        %v5546 = vmul.f32 %v5507, 1.442695
        %v5547 = vpow.pop %v5546
        %v5548 = vmul.f32 %v5508, 1.442695
        %v5549 = vpow.pop %v5548
        %v5550 = vmul.f32 %v5509, 1.442695
        %v5551 = vpow.pop %v5550
        %v5552 = vmul.f32 %v5510, 1.442695
        %v5553 = vpow.pop %v5552
        %v5554 = vmul.f32 %v5511, 1.442695
        %v5555 = vpow.pop %v5554
        %v5556 = vmul.f32 %v5512, 1.442695
        %v5557 = vpow.pop %v5556
        %v5558 = vmul.f32 %v5513, 1.442695
        %v5559 = vpow.pop %v5558
        %v5560 = vmul.f32 %v5514, 1.442695
        %v5561 = vpow.pop %v5560
        %v5562 = vmul.f32 %v5515, 1.442695
        %v5563 = vpow.pop %v5562
        %v5564 = vmul.f32 %v5516, 1.442695
        %v5565 = vpow.pop %v5564
        %v5566 = vmul.f32 %v5517, 1.442695
        %v5567 = vpow.pop %v5566
        %v5568 = vmul.f32 %v5518, 1.442695
        %v5569 = vpow.pop %v5568
        %v5570 = vmul.f32 %v5519, 1.442695
        %v5571 = vpow.pop %v5570
        %v5572 = vmul.f32 %v5520, 1.442695
        %v5573 = vpow.pop %v5572
        %v5574 = vmul.f32 %v5521, 1.442695
        %v5575 = vpow.pop %v5574
        %v5576 = vmul.f32 %v5522, 1.442695
        %v5577 = vpow.pop %v5576
        %v5578 = vmul.f32 %v5523, 1.442695
        %v5579 = vpow.pop %v5578
        %v5580 = vmul.f32 %v5524, 1.442695
        %v5581 = vpow.pop %v5580
        %v5582 = vmul.f32 %v5525, 1.442695
        %v5583 = vpow.pop %v5582
        %v5584 = vmul.f32 %v5526, 1.442695
        %v5585 = vpow.pop %v5584
        %v5586 = vmul.f32 %v5527, 1.442695
        %v5587 = vpow.pop %v5586
        %v5588 = vmul.f32 %v5528, 1.442695
        %v5589 = vpow.pop %v5588
        %v5590 = vmul.f32 %v5529, 1.442695
        %v5591 = vpow.pop %v5590
        %v5592 = vmul.f32 %v5530, 1.442695
        %v5593 = vpow.pop %v5592
        %v5594 = vmul.f32 %v5531, 1.442695
        %v5595 = vpow.pop %v5594
        %v5596 = vadd.f32 %v5533, 1.0
        %v5597 = vadd.f32 %v5535, 1.0
        %v5598 = vadd.f32 %v5537, 1.0
        %v5599 = vadd.f32 %v5539, 1.0
        %v5600 = vadd.f32 %v5541, 1.0
        %v5601 = vadd.f32 %v5543, 1.0
        %v5602 = vadd.f32 %v5545, 1.0
        %v5603 = vadd.f32 %v5547, 1.0
        %v5604 = vadd.f32 %v5549, 1.0
        %v5605 = vadd.f32 %v5551, 1.0
        %v5606 = vadd.f32 %v5553, 1.0
        %v5607 = vadd.f32 %v5555, 1.0
        %v5608 = vadd.f32 %v5557, 1.0
        %v5609 = vadd.f32 %v5559, 1.0
        %v5610 = vadd.f32 %v5561, 1.0
        %v5611 = vadd.f32 %v5563, 1.0
        %v5612 = vadd.f32 %v5565, 1.0
        %v5613 = vadd.f32 %v5567, 1.0
        %v5614 = vadd.f32 %v5569, 1.0
        %v5615 = vadd.f32 %v5571, 1.0
        %v5616 = vadd.f32 %v5573, 1.0
        %v5617 = vadd.f32 %v5575, 1.0
        %v5618 = vadd.f32 %v5577, 1.0
        %v5619 = vadd.f32 %v5579, 1.0
        %v5620 = vadd.f32 %v5581, 1.0
        %v5621 = vadd.f32 %v5583, 1.0
        %v5622 = vadd.f32 %v5585, 1.0
        %v5623 = vadd.f32 %v5587, 1.0
        %v5624 = vadd.f32 %v5589, 1.0
        %v5625 = vadd.f32 %v5591, 1.0
        %v5626 = vadd.f32 %v5593, 1.0
        %v5627 = vadd.f32 %v5595, 1.0
        %v5628 = vrcp.pop %v5596
        %v5629 = vmul.f32 1.0, %v5628
        %v5630 = vrcp.pop %v5597
        %v5631 = vmul.f32 1.0, %v5630
        %v5632 = vrcp.pop %v5598
        %v5633 = vmul.f32 1.0, %v5632
        %v5634 = vrcp.pop %v5599
        %v5635 = vmul.f32 1.0, %v5634
        %v5636 = vrcp.pop %v5600
        %v5637 = vmul.f32 1.0, %v5636
        %v5638 = vrcp.pop %v5601
        %v5639 = vmul.f32 1.0, %v5638
        %v5640 = vrcp.pop %v5602
        %v5641 = vmul.f32 1.0, %v5640
        %v5642 = vrcp.pop %v5603
        %v5643 = vmul.f32 1.0, %v5642
        %v5644 = vrcp.pop %v5604
        %v5645 = vmul.f32 1.0, %v5644
        %v5646 = vrcp.pop %v5605
        %v5647 = vmul.f32 1.0, %v5646
        %v5648 = vrcp.pop %v5606
        %v5649 = vmul.f32 1.0, %v5648
        %v5650 = vrcp.pop %v5607
        %v5651 = vmul.f32 1.0, %v5650
        %v5652 = vrcp.pop %v5608
        %v5653 = vmul.f32 1.0, %v5652
        %v5654 = vrcp.pop %v5609
        %v5655 = vmul.f32 1.0, %v5654
        %v5656 = vrcp.pop %v5610
        %v5657 = vmul.f32 1.0, %v5656
        %v5658 = vrcp.pop %v5611
        %v5659 = vmul.f32 1.0, %v5658
        %v5660 = vrcp.pop %v5612
        %v5661 = vmul.f32 1.0, %v5660
        %v5662 = vrcp.pop %v5613
        %v5663 = vmul.f32 1.0, %v5662
        %v5664 = vrcp.pop %v5614
        %v5665 = vmul.f32 1.0, %v5664
        %v5666 = vrcp.pop %v5615
        %v5667 = vmul.f32 1.0, %v5666
        %v5668 = vrcp.pop %v5616
        %v5669 = vmul.f32 1.0, %v5668
        %v5670 = vrcp.pop %v5617
        %v5671 = vmul.f32 1.0, %v5670
        %v5672 = vrcp.pop %v5618
        %v5673 = vmul.f32 1.0, %v5672
        %v5674 = vrcp.pop %v5619
        %v5675 = vmul.f32 1.0, %v5674
        %v5676 = vrcp.pop %v5620
        %v5677 = vmul.f32 1.0, %v5676
        %v5678 = vrcp.pop %v5621
        %v5679 = vmul.f32 1.0, %v5678
        %v5680 = vrcp.pop %v5622
        %v5681 = vmul.f32 1.0, %v5680
        %v5682 = vrcp.pop %v5623
        %v5683 = vmul.f32 1.0, %v5682
        %v5684 = vrcp.pop %v5624
        %v5685 = vmul.f32 1.0, %v5684
        %v5686 = vrcp.pop %v5625
        %v5687 = vmul.f32 1.0, %v5686
        %v5688 = vrcp.pop %v5626
        %v5689 = vmul.f32 1.0, %v5688
        %v5690 = vrcp.pop %v5627
        %v5691 = vmul.f32 1.0, %v5690
        %v5692 = vtanh.pop %v4413
        %v5693 = vtanh.pop %v4415
        %v5694 = vtanh.pop %v4417
        %v5695 = vtanh.pop %v4419
        %v5696 = vtanh.pop %v4421
        %v5697 = vtanh.pop %v4423
        %v5698 = vtanh.pop %v4425
        %v5699 = vtanh.pop %v4427
        %v5700 = vtanh.pop %v4429
        %v5701 = vtanh.pop %v4431
        %v5702 = vtanh.pop %v4433
        %v5703 = vtanh.pop %v4435
        %v5704 = vtanh.pop %v4437
        %v5705 = vtanh.pop %v4439
        %v5706 = vtanh.pop %v4441
        %v5707 = vtanh.pop %v4443
        %v5708 = vtanh.pop %v4445
        %v5709 = vtanh.pop %v4447
        %v5710 = vtanh.pop %v4449
        %v5711 = vtanh.pop %v4451
        %v5712 = vtanh.pop %v4453
        %v5713 = vtanh.pop %v4455
        %v5714 = vtanh.pop %v4457
        %v5715 = vtanh.pop %v4459
        %v5716 = vtanh.pop %v4461
        %v5717 = vtanh.pop %v4463
        %v5718 = vtanh.pop %v4465
        %v5719 = vtanh.pop %v4467
        %v5720 = vtanh.pop %v4469
        %v5721 = vtanh.pop %v4471
        %v5722 = vtanh.pop %v4473
        %v5723 = vtanh.pop %v4475
        %v5724 = vmul.f32 %v5629, %v4508
        %v5725 = vmul.f32 %v5631, %v4509
        %v5726 = vmul.f32 %v5633, %v4510
        %v5727 = vmul.f32 %v5635, %v4511
        %v5728 = vmul.f32 %v5637, %v4512
        %v5729 = vmul.f32 %v5639, %v4513
        %v5730 = vmul.f32 %v5641, %v4514
        %v5731 = vmul.f32 %v5643, %v4515
        %v5732 = vmul.f32 %v5645, %v4516
        %v5733 = vmul.f32 %v5647, %v4517
        %v5734 = vmul.f32 %v5649, %v4518
        %v5735 = vmul.f32 %v5651, %v4519
        %v5736 = vmul.f32 %v5653, %v4520
        %v5737 = vmul.f32 %v5655, %v4521
        %v5738 = vmul.f32 %v5657, %v4522
        %v5739 = vmul.f32 %v5659, %v4523
        %v5740 = vmul.f32 %v5661, %v4524
        %v5741 = vmul.f32 %v5663, %v4525
        %v5742 = vmul.f32 %v5665, %v4526
        %v5743 = vmul.f32 %v5667, %v4527
        %v5744 = vmul.f32 %v5669, %v4528
        %v5745 = vmul.f32 %v5671, %v4529
        %v5746 = vmul.f32 %v5673, %v4530
        %v5747 = vmul.f32 %v5675, %v4531
        %v5748 = vmul.f32 %v5677, %v4532
        %v5749 = vmul.f32 %v5679, %v4533
        %v5750 = vmul.f32 %v5681, %v4534
        %v5751 = vmul.f32 %v5683, %v4535
        %v5752 = vmul.f32 %v5685, %v4536
        %v5753 = vmul.f32 %v5687, %v4537
        %v5754 = vmul.f32 %v5689, %v4538
        %v5755 = vmul.f32 %v5691, %v4539
        %5788 = vrot.lane.b32.xlu0 %v5692, 64
        %v5789 = vpop.permute.xlu0 %5788
        %5790 = vrot.lane.b32.xlu0 %v5693, 64
        %v5791 = vpop.permute.xlu0 %5790
        %5792 = vrot.lane.b32.xlu0 %v5694, 64
        %v5793 = vpop.permute.xlu0 %5792
        %5794 = vrot.lane.b32.xlu0 %v5695, 64
        %v5795 = vpop.permute.xlu0 %5794
        %5796 = vrot.lane.b32.xlu0 %v5696, 64
        %v5797 = vpop.permute.xlu0 %5796
        %5798 = vrot.lane.b32.xlu0 %v5697, 64
        %v5799 = vpop.permute.xlu0 %5798
        %5800 = vrot.lane.b32.xlu0 %v5698, 64
        %v5801 = vpop.permute.xlu0 %5800
        %5802 = vrot.lane.b32.xlu0 %v5699, 64
        %v5803 = vpop.permute.xlu0 %5802
        %5804 = vrot.lane.b32.xlu0 %v5700, 64
        %v5805 = vpop.permute.xlu0 %5804
        %5806 = vrot.lane.b32.xlu0 %v5701, 64
        %v5807 = vpop.permute.xlu0 %5806
        %5808 = vrot.lane.b32.xlu0 %v5702, 64
        %v5809 = vpop.permute.xlu0 %5808
        %5810 = vrot.lane.b32.xlu0 %v5703, 64
        %v5811 = vpop.permute.xlu0 %5810
        %5812 = vrot.lane.b32.xlu0 %v5704, 64
        %v5813 = vpop.permute.xlu0 %5812
        %5814 = vrot.lane.b32.xlu0 %v5705, 64
        %v5815 = vpop.permute.xlu0 %5814
        %5816 = vrot.lane.b32.xlu0 %v5706, 64
        %v5817 = vpop.permute.xlu0 %5816
        %5818 = vrot.lane.b32.xlu0 %v5707, 64
        %v5819 = vpop.permute.xlu0 %5818
        %5820 = vrot.lane.b32.xlu0 %v5708, 64
        %v5821 = vpop.permute.xlu0 %5820
        %5822 = vrot.lane.b32.xlu0 %v5709, 64
        %v5823 = vpop.permute.xlu0 %5822
        %5824 = vrot.lane.b32.xlu0 %v5710, 64
        %v5825 = vpop.permute.xlu0 %5824
        %5826 = vrot.lane.b32.xlu0 %v5711, 64
        %v5827 = vpop.permute.xlu0 %5826
        %5828 = vrot.lane.b32.xlu0 %v5712, 64
        %v5829 = vpop.permute.xlu0 %5828
        %5830 = vrot.lane.b32.xlu0 %v5713, 64
        %v5831 = vpop.permute.xlu0 %5830
        %5832 = vrot.lane.b32.xlu0 %v5714, 64
        %v5833 = vpop.permute.xlu0 %5832
        %5834 = vrot.lane.b32.xlu0 %v5715, 64
        %v5835 = vpop.permute.xlu0 %5834
        %5836 = vrot.lane.b32.xlu0 %v5716, 64
        %v5837 = vpop.permute.xlu0 %5836
        %5838 = vrot.lane.b32.xlu0 %v5717, 64
        %v5839 = vpop.permute.xlu0 %5838
        %5840 = vrot.lane.b32.xlu0 %v5718, 64
        %v5841 = vpop.permute.xlu0 %5840
        %5842 = vrot.lane.b32.xlu0 %v5719, 64
        %v5843 = vpop.permute.xlu0 %5842
        %5844 = vrot.lane.b32.xlu0 %v5720, 64
        %v5845 = vpop.permute.xlu0 %5844
        %5846 = vrot.lane.b32.xlu0 %v5721, 64
        %v5847 = vpop.permute.xlu0 %5846
        %5848 = vrot.lane.b32.xlu0 %v5722, 64
        %v5849 = vpop.permute.xlu0 %5848
        %5850 = vrot.lane.b32.xlu0 %v5723, 64
        %v5851 = vpop.permute.xlu0 %5850
        %v5884 = vmul.f32 %v4669, %v5789
        %v5885 = vmul.f32 %v4671, %v5791
        %v5886 = vmul.f32 %v4673, %v5793
        %v5887 = vmul.f32 %v4675, %v5795
        %v5888 = vmul.f32 %v4677, %v5797
        %v5889 = vmul.f32 %v4679, %v5799
        %v5890 = vmul.f32 %v4681, %v5801
        %v5891 = vmul.f32 %v4683, %v5803
        %v5892 = vmul.f32 %v4685, %v5805
        %v5893 = vmul.f32 %v4687, %v5807
        %v5894 = vmul.f32 %v4689, %v5809
        %v5895 = vmul.f32 %v4691, %v5811
        %v5896 = vmul.f32 %v4693, %v5813
        %v5897 = vmul.f32 %v4695, %v5815
        %v5898 = vmul.f32 %v4697, %v5817
        %v5899 = vmul.f32 %v4699, %v5819
        %v5900 = vmul.f32 %v4701, %v5821
        %v5901 = vmul.f32 %v4703, %v5823
        %v5902 = vmul.f32 %v4705, %v5825
        %v5903 = vmul.f32 %v4707, %v5827
        %v5904 = vmul.f32 %v4709, %v5829
        %v5905 = vmul.f32 %v4711, %v5831
        %v5906 = vmul.f32 %v4713, %v5833
        %v5907 = vmul.f32 %v4715, %v5835
        %v5908 = vmul.f32 %v4717, %v5837
        %v5909 = vmul.f32 %v4719, %v5839
        %v5910 = vmul.f32 %v4721, %v5841
        %v5911 = vmul.f32 %v4723, %v5843
        %v5912 = vmul.f32 %v4725, %v5845
        %v5913 = vmul.f32 %v4727, %v5847
        %v5914 = vmul.f32 %v4729, %v5849
        %v5915 = vmul.f32 %v4731, %v5851
        %5948 = vrot.lane.b32.xlu0 %v5884, 32
        %v5949 = vpop.permute.xlu0 %5948
        %5950 = vrot.lane.b32.xlu0 %v5885, 32
        %v5951 = vpop.permute.xlu0 %5950
        %5952 = vrot.lane.b32.xlu0 %v5886, 32
        %v5953 = vpop.permute.xlu0 %5952
        %5954 = vrot.lane.b32.xlu0 %v5887, 32
        %v5955 = vpop.permute.xlu0 %5954
        %5956 = vrot.lane.b32.xlu0 %v5888, 32
        %v5957 = vpop.permute.xlu0 %5956
        %5958 = vrot.lane.b32.xlu0 %v5889, 32
        %v5959 = vpop.permute.xlu0 %5958
        %5960 = vrot.lane.b32.xlu0 %v5890, 32
        %v5961 = vpop.permute.xlu0 %5960
        %5962 = vrot.lane.b32.xlu0 %v5891, 32
        %v5963 = vpop.permute.xlu0 %5962
        %5964 = vrot.lane.b32.xlu0 %v5892, 32
        %v5965 = vpop.permute.xlu0 %5964
        %5966 = vrot.lane.b32.xlu0 %v5893, 32
        %v5967 = vpop.permute.xlu0 %5966
        %5968 = vrot.lane.b32.xlu0 %v5894, 32
        %v5969 = vpop.permute.xlu0 %5968
        %5970 = vrot.lane.b32.xlu0 %v5895, 32
        %v5971 = vpop.permute.xlu0 %5970
        %5972 = vrot.lane.b32.xlu0 %v5896, 32
        %v5973 = vpop.permute.xlu0 %5972
        %5974 = vrot.lane.b32.xlu0 %v5897, 32
        %v5975 = vpop.permute.xlu0 %5974
        %5976 = vrot.lane.b32.xlu0 %v5898, 32
        %v5977 = vpop.permute.xlu0 %5976
        %5978 = vrot.lane.b32.xlu0 %v5899, 32
        %v5979 = vpop.permute.xlu0 %5978
        %5980 = vrot.lane.b32.xlu0 %v5900, 32
        %v5981 = vpop.permute.xlu0 %5980
        %5982 = vrot.lane.b32.xlu0 %v5901, 32
        %v5983 = vpop.permute.xlu0 %5982
        %5984 = vrot.lane.b32.xlu0 %v5902, 32
        %v5985 = vpop.permute.xlu0 %5984
        %5986 = vrot.lane.b32.xlu0 %v5903, 32
        %v5987 = vpop.permute.xlu0 %5986
        %5988 = vrot.lane.b32.xlu0 %v5904, 32
        %v5989 = vpop.permute.xlu0 %5988
        %5990 = vrot.lane.b32.xlu0 %v5905, 32
        %v5991 = vpop.permute.xlu0 %5990
        %5992 = vrot.lane.b32.xlu0 %v5906, 32
        %v5993 = vpop.permute.xlu0 %5992
        %5994 = vrot.lane.b32.xlu0 %v5907, 32
        %v5995 = vpop.permute.xlu0 %5994
        %5996 = vrot.lane.b32.xlu0 %v5908, 32
        %v5997 = vpop.permute.xlu0 %5996
        %5998 = vrot.lane.b32.xlu0 %v5909, 32
        %v5999 = vpop.permute.xlu0 %5998
        %6000 = vrot.lane.b32.xlu0 %v5910, 32
        %v6001 = vpop.permute.xlu0 %6000
        %6002 = vrot.lane.b32.xlu0 %v5911, 32
        %v6003 = vpop.permute.xlu0 %6002
        %6004 = vrot.lane.b32.xlu0 %v5912, 32
        %v6005 = vpop.permute.xlu0 %6004
        %6006 = vrot.lane.b32.xlu0 %v5913, 32
        %v6007 = vpop.permute.xlu0 %6006
        %6008 = vrot.lane.b32.xlu0 %v5914, 32
        %v6009 = vpop.permute.xlu0 %6008
        %6010 = vrot.lane.b32.xlu0 %v5915, 32
        %v6011 = vpop.permute.xlu0 %6010
        %v6044 = vadd.f32 %v5724, %v5949
        %v6045 = vadd.f32 %v5725, %v5951
        %v6046 = vadd.f32 %v5726, %v5953
        %v6047 = vadd.f32 %v5727, %v5955
        %v6048 = vadd.f32 %v5728, %v5957
        %v6049 = vadd.f32 %v5729, %v5959
        %v6050 = vadd.f32 %v5730, %v5961
        %v6051 = vadd.f32 %v5731, %v5963
        %v6052 = vadd.f32 %v5732, %v5965
        %v6053 = vadd.f32 %v5733, %v5967
        %v6054 = vadd.f32 %v5734, %v5969
        %v6055 = vadd.f32 %v5735, %v5971
        %v6056 = vadd.f32 %v5736, %v5973
        %v6057 = vadd.f32 %v5737, %v5975
        %v6058 = vadd.f32 %v5738, %v5977
        %v6059 = vadd.f32 %v5739, %v5979
        %v6060 = vadd.f32 %v5740, %v5981
        %v6061 = vadd.f32 %v5741, %v5983
        %v6062 = vadd.f32 %v5742, %v5985
        %v6063 = vadd.f32 %v5743, %v5987
        %v6064 = vadd.f32 %v5744, %v5989
        %v6065 = vadd.f32 %v5745, %v5991
        %v6066 = vadd.f32 %v5746, %v5993
        %v6067 = vadd.f32 %v5747, %v5995
        %v6068 = vadd.f32 %v5748, %v5997
        %v6069 = vadd.f32 %v5749, %v5999
        %v6070 = vadd.f32 %v5750, %v6001
        %v6071 = vadd.f32 %v5751, %v6003
        %v6072 = vadd.f32 %v5752, %v6005
        %v6073 = vadd.f32 %v5753, %v6007
        %v6074 = vadd.f32 %v5754, %v6009
        %v6075 = vadd.f32 %v5755, %v6011
        %vm6076 = vcmask 523264
        %6077 = vst.msk [vmem:[#allocation2] sm:$0xff] %vm6076, 0.0
        %6078 = vst.msk [vmem:[#allocation2 + $0x8] sm:$0xff] %vm6076, 0.0
        %vm6079 = vcmask 517120
        %6080 = vst.msk [vmem:[#allocation2 + $0x10] sm:$0x3] %vm6079, 0.0
        %6081 = vst.msk [vmem:[#allocation2 + $0x18] sm:$0xff] %vm6076, 0.0
        %6082 = vst.msk [vmem:[#allocation2 + $0x20] sm:$0xff] %vm6076, 0.0
        %6083 = vst.msk [vmem:[#allocation2 + $0x28] sm:$0x3] %vm6079, 0.0
        %6084 = vst.msk [vmem:[#allocation2 + $0x30] sm:$0xff] %vm6076, 0.0
        %6085 = vst.msk [vmem:[#allocation2 + $0x38] sm:$0xff] %vm6076, 0.0
        %6086 = vst.msk [vmem:[#allocation2 + $0x40] sm:$0x3] %vm6079, 0.0
        %6087 = vst.msk [vmem:[#allocation2 + $0x48] sm:$0xff] %vm6076, 0.0
        %6088 = vst.msk [vmem:[#allocation2 + $0x50] sm:$0xff] %vm6076, 0.0
        %6089 = vst.msk [vmem:[#allocation2 + $0x58] sm:$0x3] %vm6079, 0.0
        %6090 = vst.msk [vmem:[#allocation2 + $0x60] sm:$0xff] %vm6076, 0.0
        %6091 = vst.msk [vmem:[#allocation2 + $0x68] sm:$0xff] %vm6076, 0.0
        %6092 = vst.msk [vmem:[#allocation2 + $0x70] sm:$0x3] %vm6079, 0.0
        %6093 = vst.msk [vmem:[#allocation2 + $0x78] sm:$0xff] %vm6076, 0.0
        %6094 = vst.msk [vmem:[#allocation2 + $0x80] sm:$0xff] %vm6076, 0.0
        %6095 = vst.msk [vmem:[#allocation2 + $0x88] sm:$0x3] %vm6079, 0.0
        %6096 = vst.msk [vmem:[#allocation2 + $0x90] sm:$0xff] %vm6076, 0.0
        %6097 = vst.msk [vmem:[#allocation2 + $0x98] sm:$0xff] %vm6076, 0.0
        %6098 = vst.msk [vmem:[#allocation2 + $0xa0] sm:$0x3] %vm6079, 0.0
        %6099 = vst.msk [vmem:[#allocation2 + $0xa8] sm:$0xff] %vm6076, 0.0
        %6100 = vst.msk [vmem:[#allocation2 + $0xb0] sm:$0xff] %vm6076, 0.0
        %6101 = vst.msk [vmem:[#allocation2 + $0xb8] sm:$0x3] %vm6079, 0.0
        %6102 = vst.msk [vmem:[#allocation2 + $0xc0] sm:$0xff] %vm6076, 0.0
        %6103 = vst.msk [vmem:[#allocation2 + $0xc8] sm:$0xff] %vm6076, 0.0
        %6104 = vst.msk [vmem:[#allocation2 + $0xd0] sm:$0x3] %vm6079, 0.0
        %6105 = vst.msk [vmem:[#allocation2 + $0xd8] sm:$0xff] %vm6076, 0.0
        %6106 = vst.msk [vmem:[#allocation2 + $0xe0] sm:$0xff] %vm6076, 0.0
        %6107 = vst.msk [vmem:[#allocation2 + $0xe8] sm:$0x3] %vm6079, 0.0
        %6108 = vst.msk [vmem:[#allocation2 + $0xf0] sm:$0xff] %vm6076, 0.0
        %6109 = vst.msk [vmem:[#allocation2 + $0xf8] sm:$0xff] %vm6076, 0.0
        %6110 = vst.msk [vmem:[#allocation2 + $0x100] sm:$0x3] %vm6079, 0.0
        %6111 = vst.msk [vmem:[#allocation2 + $0x108] sm:$0xff] %vm6076, 0.0
        %6112 = vst.msk [vmem:[#allocation2 + $0x110] sm:$0xff] %vm6076, 0.0
        %6113 = vst.msk [vmem:[#allocation2 + $0x118] sm:$0x3] %vm6079, 0.0
        %6114 = vst.msk [vmem:[#allocation2 + $0x120] sm:$0xff] %vm6076, 0.0
        %6115 = vst.msk [vmem:[#allocation2 + $0x128] sm:$0xff] %vm6076, 0.0
        %6116 = vst.msk [vmem:[#allocation2 + $0x130] sm:$0x3] %vm6079, 0.0
        %6117 = vst.msk [vmem:[#allocation2 + $0x138] sm:$0xff] %vm6076, 0.0
        %6118 = vst.msk [vmem:[#allocation2 + $0x140] sm:$0xff] %vm6076, 0.0
        %6119 = vst.msk [vmem:[#allocation2 + $0x148] sm:$0x3] %vm6079, 0.0
        %6120 = vst.msk [vmem:[#allocation2 + $0x150] sm:$0xff] %vm6076, 0.0
        %6121 = vst.msk [vmem:[#allocation2 + $0x158] sm:$0xff] %vm6076, 0.0
        %6122 = vst.msk [vmem:[#allocation2 + $0x160] sm:$0x3] %vm6079, 0.0
        %6123 = vst.msk [vmem:[#allocation2 + $0x168] sm:$0xff] %vm6076, 0.0
        %6124 = vst.msk [vmem:[#allocation2 + $0x170] sm:$0xff] %vm6076, 0.0
        %6125 = vst.msk [vmem:[#allocation2 + $0x178] sm:$0x3] %vm6079, 0.0
        %6126 = vst.msk [vmem:[#allocation2 + $0x180] sm:$0xff] %vm6076, 0.0
        %6127 = vst.msk [vmem:[#allocation2 + $0x188] sm:$0xff] %vm6076, 0.0
        %6128 = vst.msk [vmem:[#allocation2 + $0x190] sm:$0x3] %vm6079, 0.0
        %6129 = vst.msk [vmem:[#allocation2 + $0x198] sm:$0xff] %vm6076, 0.0
        %6130 = vst.msk [vmem:[#allocation2 + $0x1a0] sm:$0xff] %vm6076, 0.0
        %6131 = vst.msk [vmem:[#allocation2 + $0x1a8] sm:$0x3] %vm6079, 0.0
        %6164 = vrot.lane.b32.xlu0 %v5436, 96
        %v6165 = vpop.permute.xlu0 %6164
        %6166 = vrot.lane.b32.xlu0 %v5437, 96
        %v6167 = vpop.permute.xlu0 %6166
        %6168 = vrot.lane.b32.xlu0 %v5438, 96
        %v6169 = vpop.permute.xlu0 %6168
        %6170 = vrot.lane.b32.xlu0 %v5439, 96
        %v6171 = vpop.permute.xlu0 %6170
        %6172 = vrot.lane.b32.xlu0 %v5440, 96
        %v6173 = vpop.permute.xlu0 %6172
        %6174 = vrot.lane.b32.xlu0 %v5441, 96
        %v6175 = vpop.permute.xlu0 %6174
        %6176 = vrot.lane.b32.xlu0 %v5442, 96
        %v6177 = vpop.permute.xlu0 %6176
        %6178 = vrot.lane.b32.xlu0 %v5443, 96
        %v6179 = vpop.permute.xlu0 %6178
        %6180 = vrot.lane.b32.xlu0 %v5444, 96
        %v6181 = vpop.permute.xlu0 %6180
        %6182 = vrot.lane.b32.xlu0 %v5445, 96
        %v6183 = vpop.permute.xlu0 %6182
        %6184 = vrot.lane.b32.xlu0 %v5446, 96
        %v6185 = vpop.permute.xlu0 %6184
        %6186 = vrot.lane.b32.xlu0 %v5447, 96
        %v6187 = vpop.permute.xlu0 %6186
        %6188 = vrot.lane.b32.xlu0 %v5448, 96
        %v6189 = vpop.permute.xlu0 %6188
        %6190 = vrot.lane.b32.xlu0 %v5449, 96
        %v6191 = vpop.permute.xlu0 %6190
        %6192 = vrot.lane.b32.xlu0 %v5450, 96
        %v6193 = vpop.permute.xlu0 %6192
        %6194 = vrot.lane.b32.xlu0 %v5451, 96
        %v6195 = vpop.permute.xlu0 %6194
        %6196 = vrot.lane.b32.xlu0 %v5452, 96
        %v6197 = vpop.permute.xlu0 %6196
        %6198 = vrot.lane.b32.xlu0 %v5453, 96
        %v6199 = vpop.permute.xlu0 %6198
        %6200 = vrot.lane.b32.xlu0 %v5454, 96
        %v6201 = vpop.permute.xlu0 %6200
        %6202 = vrot.lane.b32.xlu0 %v5455, 96
        %v6203 = vpop.permute.xlu0 %6202
        %6204 = vrot.lane.b32.xlu0 %v5456, 96
        %v6205 = vpop.permute.xlu0 %6204
        %6206 = vrot.lane.b32.xlu0 %v5457, 96
        %v6207 = vpop.permute.xlu0 %6206
        %6208 = vrot.lane.b32.xlu0 %v5458, 96
        %v6209 = vpop.permute.xlu0 %6208
        %6210 = vrot.lane.b32.xlu0 %v5459, 96
        %v6211 = vpop.permute.xlu0 %6210
        %6212 = vrot.lane.b32.xlu0 %v5460, 96
        %v6213 = vpop.permute.xlu0 %6212
        %6214 = vrot.lane.b32.xlu0 %v5461, 96
        %v6215 = vpop.permute.xlu0 %6214
        %6216 = vrot.lane.b32.xlu0 %v5462, 96
        %v6217 = vpop.permute.xlu0 %6216
        %6218 = vrot.lane.b32.xlu0 %v5463, 96
        %v6219 = vpop.permute.xlu0 %6218
        %6220 = vrot.lane.b32.xlu0 %v5464, 96
        %v6221 = vpop.permute.xlu0 %6220
        %6222 = vrot.lane.b32.xlu0 %v5465, 96
        %v6223 = vpop.permute.xlu0 %6222
        %6224 = vrot.lane.b32.xlu0 %v5466, 96
        %v6225 = vpop.permute.xlu0 %6224
        %6226 = vrot.lane.b32.xlu0 %v5467, 96
        %v6227 = vpop.permute.xlu0 %6226
        %6292 = vrot.lane.b32.xlu0 %v6044, 32
        %v6293 = vpop.permute.xlu0 %6292
        %6294 = vrot.lane.b32.xlu0 %v6045, 32
        %v6295 = vpop.permute.xlu0 %6294
        %6296 = vrot.lane.b32.xlu0 %v6046, 32
        %v6297 = vpop.permute.xlu0 %6296
        %6298 = vrot.lane.b32.xlu0 %v6047, 32
        %v6299 = vpop.permute.xlu0 %6298
        %6300 = vrot.lane.b32.xlu0 %v6048, 32
        %v6301 = vpop.permute.xlu0 %6300
        %6302 = vrot.lane.b32.xlu0 %v6049, 32
        %v6303 = vpop.permute.xlu0 %6302
        %6304 = vrot.lane.b32.xlu0 %v6050, 32
        %v6305 = vpop.permute.xlu0 %6304
        %6306 = vrot.lane.b32.xlu0 %v6051, 32
        %v6307 = vpop.permute.xlu0 %6306
        %6308 = vrot.lane.b32.xlu0 %v6052, 32
        %v6309 = vpop.permute.xlu0 %6308
        %6310 = vrot.lane.b32.xlu0 %v6053, 32
        %v6311 = vpop.permute.xlu0 %6310
        %6312 = vrot.lane.b32.xlu0 %v6054, 32
        %v6313 = vpop.permute.xlu0 %6312
        %6314 = vrot.lane.b32.xlu0 %v6055, 32
        %v6315 = vpop.permute.xlu0 %6314
        %6316 = vrot.lane.b32.xlu0 %v6056, 32
        %v6317 = vpop.permute.xlu0 %6316
        %6318 = vrot.lane.b32.xlu0 %v6057, 32
        %v6319 = vpop.permute.xlu0 %6318
        %6320 = vrot.lane.b32.xlu0 %v6058, 32
        %v6321 = vpop.permute.xlu0 %6320
        %6322 = vrot.lane.b32.xlu0 %v6059, 32
        %v6323 = vpop.permute.xlu0 %6322
        %6324 = vrot.lane.b32.xlu0 %v6060, 32
        %v6325 = vpop.permute.xlu0 %6324
        %6326 = vrot.lane.b32.xlu0 %v6061, 32
        %v6327 = vpop.permute.xlu0 %6326
        %6328 = vrot.lane.b32.xlu0 %v6062, 32
        %v6329 = vpop.permute.xlu0 %6328
        %6330 = vrot.lane.b32.xlu0 %v6063, 32
        %v6331 = vpop.permute.xlu0 %6330
        %6332 = vrot.lane.b32.xlu0 %v6064, 32
        %v6333 = vpop.permute.xlu0 %6332
        %6334 = vrot.lane.b32.xlu0 %v6065, 32
        %v6335 = vpop.permute.xlu0 %6334
        %6336 = vrot.lane.b32.xlu0 %v6066, 32
        %v6337 = vpop.permute.xlu0 %6336
        %6338 = vrot.lane.b32.xlu0 %v6067, 32
        %v6339 = vpop.permute.xlu0 %6338
        %6340 = vrot.lane.b32.xlu0 %v6068, 32
        %v6341 = vpop.permute.xlu0 %6340
        %6342 = vrot.lane.b32.xlu0 %v6069, 32
        %v6343 = vpop.permute.xlu0 %6342
        %6344 = vrot.lane.b32.xlu0 %v6070, 32
        %v6345 = vpop.permute.xlu0 %6344
        %6346 = vrot.lane.b32.xlu0 %v6071, 32
        %v6347 = vpop.permute.xlu0 %6346
        %6348 = vrot.lane.b32.xlu0 %v6072, 32
        %v6349 = vpop.permute.xlu0 %6348
        %6350 = vrot.lane.b32.xlu0 %v6073, 32
        %v6351 = vpop.permute.xlu0 %6350
        %6352 = vrot.lane.b32.xlu0 %v6074, 32
        %v6353 = vpop.permute.xlu0 %6352
        %6354 = vrot.lane.b32.xlu0 %v6075, 32
        %v6355 = vpop.permute.xlu0 %6354
        %vm6388 = vcmask 261120
        %v6389 = vsel %vm6388, %v6165, %v6293
        %v6390 = vsel %vm6388, %v6167, %v6295
        %v6391 = vsel %vm6388, %v6169, %v6297
        %v6392 = vsel %vm6388, %v6171, %v6299
        %v6393 = vsel %vm6388, %v6173, %v6301
        %v6394 = vsel %vm6388, %v6175, %v6303
        %v6395 = vsel %vm6388, %v6177, %v6305
        %v6396 = vsel %vm6388, %v6179, %v6307
        %v6397 = vsel %vm6388, %v6181, %v6309
        %v6398 = vsel %vm6388, %v6183, %v6311
        %v6399 = vsel %vm6388, %v6185, %v6313
        %v6400 = vsel %vm6388, %v6187, %v6315
        %v6401 = vsel %vm6388, %v6189, %v6317
        %v6402 = vsel %vm6388, %v6191, %v6319
        %v6403 = vsel %vm6388, %v6193, %v6321
        %v6404 = vsel %vm6388, %v6195, %v6323
        %v6405 = vsel %vm6388, %v6197, %v6325
        %v6406 = vsel %vm6388, %v6199, %v6327
        %v6407 = vsel %vm6388, %v6201, %v6329
        %v6408 = vsel %vm6388, %v6203, %v6331
        %v6409 = vsel %vm6388, %v6205, %v6333
        %v6410 = vsel %vm6388, %v6207, %v6335
        %v6411 = vsel %vm6388, %v6209, %v6337
        %v6412 = vsel %vm6388, %v6211, %v6339
        %v6413 = vsel %vm6388, %v6213, %v6341
        %v6414 = vsel %vm6388, %v6215, %v6343
        %v6415 = vsel %vm6388, %v6217, %v6345
        %v6416 = vsel %vm6388, %v6219, %v6347
        %v6417 = vsel %vm6388, %v6221, %v6349
        %v6418 = vsel %vm6388, %v6223, %v6351
        %v6419 = vsel %vm6388, %v6225, %v6353
        %v6420 = vsel %vm6388, %v6227, %v6355
        %s6421 = scalar_lea.vmem [#allocation2], 24
        %6422 = vst.msk [vmem:[%s6421 + $0x1] sm:$0xff] %vm6076, %v6389
        %6423 = vst.msk [vmem:[%s6421 + $0x9] sm:$0xff] %vm6076, %v6390
        %6424 = vst.msk [vmem:[%s6421 + $0x19] sm:$0xff] %vm6076, %v6391
        %6425 = vst.msk [vmem:[%s6421 + $0x21] sm:$0xff] %vm6076, %v6392
        %6426 = vst.msk [vmem:[%s6421 + $0x31] sm:$0xff] %vm6076, %v6393
        %6427 = vst.msk [vmem:[%s6421 + $0x39] sm:$0xff] %vm6076, %v6394
        %6428 = vst.msk [vmem:[%s6421 + $0x49] sm:$0xff] %vm6076, %v6395
        %6429 = vst.msk [vmem:[%s6421 + $0x51] sm:$0xff] %vm6076, %v6396
        %6430 = vst.msk [vmem:[%s6421 + $0x61] sm:$0xff] %vm6076, %v6397
        %6431 = vst.msk [vmem:[%s6421 + $0x69] sm:$0xff] %vm6076, %v6398
        %6432 = vst.msk [vmem:[%s6421 + $0x79] sm:$0xff] %vm6076, %v6399
        %6433 = vst.msk [vmem:[%s6421 + $0x81] sm:$0xff] %vm6076, %v6400
        %6434 = vst.msk [vmem:[%s6421 + $0x91] sm:$0xff] %vm6076, %v6401
        %6435 = vst.msk [vmem:[%s6421 + $0x99] sm:$0xff] %vm6076, %v6402
        %6436 = vst.msk [vmem:[%s6421 + $0xa9] sm:$0xff] %vm6076, %v6403
        %6437 = vst.msk [vmem:[%s6421 + $0xb1] sm:$0xff] %vm6076, %v6404
        %6438 = vst.msk [vmem:[%s6421 + $0xc1] sm:$0xff] %vm6076, %v6405
        %6439 = vst.msk [vmem:[%s6421 + $0xc9] sm:$0xff] %vm6076, %v6406
        %6440 = vst.msk [vmem:[%s6421 + $0xd9] sm:$0xff] %vm6076, %v6407
        %6441 = vst.msk [vmem:[%s6421 + $0xe1] sm:$0xff] %vm6076, %v6408
        %6442 = vst.msk [vmem:[%s6421 + $0xf1] sm:$0xff] %vm6076, %v6409
        %6443 = vst.msk [vmem:[%s6421 + $0xf9] sm:$0xff] %vm6076, %v6410
        %6444 = vst.msk [vmem:[%s6421 + $0x109] sm:$0xff] %vm6076, %v6411
        %6445 = vst.msk [vmem:[%s6421 + $0x111] sm:$0xff] %vm6076, %v6412
        %6446 = vst.msk [vmem:[%s6421 + $0x121] sm:$0xff] %vm6076, %v6413
        %6447 = vst.msk [vmem:[%s6421 + $0x129] sm:$0xff] %vm6076, %v6414
        %6448 = vst.msk [vmem:[%s6421 + $0x139] sm:$0xff] %vm6076, %v6415
        %6449 = vst.msk [vmem:[%s6421 + $0x141] sm:$0xff] %vm6076, %v6416
        %6450 = vst.msk [vmem:[%s6421 + $0x151] sm:$0xff] %vm6076, %v6417
        %6451 = vst.msk [vmem:[%s6421 + $0x159] sm:$0xff] %vm6076, %v6418
        %6452 = vst.msk [vmem:[%s6421 + $0x169] sm:$0xff] %vm6076, %v6419
        %6453 = vst.msk [vmem:[%s6421 + $0x171] sm:$0xff] %vm6076, %v6420
        %v6454 = vld [vmem:[#allocation2] sm:$0xff]
        %v6455 = vld [vmem:[#allocation2 + $0x8] sm:$0xff]
        %v6456 = vld [vmem:[#allocation2 + $0x18] sm:$0xff]
        %v6457 = vld [vmem:[#allocation2 + $0x20] sm:$0xff]
        %v6458 = vld [vmem:[#allocation2 + $0x30] sm:$0xff]
        %v6459 = vld [vmem:[#allocation2 + $0x38] sm:$0xff]
        %v6460 = vld [vmem:[#allocation2 + $0x48] sm:$0xff]
        %v6461 = vld [vmem:[#allocation2 + $0x50] sm:$0xff]
        %v6462 = vld [vmem:[#allocation2 + $0x60] sm:$0xff]
        %v6463 = vld [vmem:[#allocation2 + $0x68] sm:$0xff]
        %v6464 = vld [vmem:[#allocation2 + $0x78] sm:$0xff]
        %v6465 = vld [vmem:[#allocation2 + $0x80] sm:$0xff]
        %v6466 = vld [vmem:[#allocation2 + $0x90] sm:$0xff]
        %v6467 = vld [vmem:[#allocation2 + $0x98] sm:$0xff]
        %v6468 = vld [vmem:[#allocation2 + $0xa8] sm:$0xff]
        %v6469 = vld [vmem:[#allocation2 + $0xb0] sm:$0xff]
        %v6470 = vld [vmem:[#allocation2 + $0xc0] sm:$0xff]
        %v6471 = vld [vmem:[#allocation2 + $0xc8] sm:$0xff]
        %v6472 = vld [vmem:[#allocation2 + $0xd8] sm:$0xff]
        %v6473 = vld [vmem:[#allocation2 + $0xe0] sm:$0xff]
        %v6474 = vld [vmem:[#allocation2 + $0xf0] sm:$0xff]
        %v6475 = vld [vmem:[#allocation2 + $0xf8] sm:$0xff]
        %v6476 = vld [vmem:[#allocation2 + $0x108] sm:$0xff]
        %v6477 = vld [vmem:[#allocation2 + $0x110] sm:$0xff]
        %v6478 = vld [vmem:[#allocation2 + $0x120] sm:$0xff]
        %v6479 = vld [vmem:[#allocation2 + $0x128] sm:$0xff]
        %v6480 = vld [vmem:[#allocation2 + $0x138] sm:$0xff]
        %v6481 = vld [vmem:[#allocation2 + $0x140] sm:$0xff]
        %v6482 = vld [vmem:[#allocation2 + $0x150] sm:$0xff]
        %v6483 = vld [vmem:[#allocation2 + $0x158] sm:$0xff]
        %v6484 = vld [vmem:[#allocation2 + $0x168] sm:$0xff]
        %v6485 = vld [vmem:[#allocation2 + $0x170] sm:$0xff]
        %v6486 = vld [vmem:[%s4] sm:$0xff]
        %v6487 = vld [vmem:[%s4 + $0x8] sm:$0xff]
        %v6488 = vld [vmem:[%s4 + $0x10] sm:$0xff]
        %v6489 = vld [vmem:[%s4 + $0x18] sm:$0xff]
        %v6490 = vld [vmem:[%s4 + $0x20] sm:$0xff]
        %v6491 = vld [vmem:[%s4 + $0x28] sm:$0xff]
        %v6492 = vld [vmem:[%s4 + $0x30] sm:$0xff]
        %v6493 = vld [vmem:[%s4 + $0x38] sm:$0xff]
        %v6494 = vld [vmem:[#allocation2 + $0x1] sm:$0xff]
        %v6495 = vld [vmem:[#allocation2 + $0x9] sm:$0xff]
        %v6496 = vld [vmem:[#allocation2 + $0x19] sm:$0xff]
        %v6497 = vld [vmem:[#allocation2 + $0x21] sm:$0xff]
        %v6498 = vld [vmem:[#allocation2 + $0x31] sm:$0xff]
        %v6499 = vld [vmem:[#allocation2 + $0x39] sm:$0xff]
        %v6500 = vld [vmem:[#allocation2 + $0x49] sm:$0xff]
        %v6501 = vld [vmem:[#allocation2 + $0x51] sm:$0xff]
        %v6502 = vld [vmem:[#allocation2 + $0x61] sm:$0xff]
        %v6503 = vld [vmem:[#allocation2 + $0x69] sm:$0xff]
        %v6504 = vld [vmem:[#allocation2 + $0x79] sm:$0xff]
        %v6505 = vld [vmem:[#allocation2 + $0x81] sm:$0xff]
        %v6506 = vld [vmem:[#allocation2 + $0x91] sm:$0xff]
        %v6507 = vld [vmem:[#allocation2 + $0x99] sm:$0xff]
        %v6508 = vld [vmem:[#allocation2 + $0xa9] sm:$0xff]
        %v6509 = vld [vmem:[#allocation2 + $0xb1] sm:$0xff]
        %v6510 = vld [vmem:[#allocation2 + $0xc1] sm:$0xff]
        %v6511 = vld [vmem:[#allocation2 + $0xc9] sm:$0xff]
        %v6512 = vld [vmem:[#allocation2 + $0xd9] sm:$0xff]
        %v6513 = vld [vmem:[#allocation2 + $0xe1] sm:$0xff]
        %v6514 = vld [vmem:[#allocation2 + $0xf1] sm:$0xff]
        %v6515 = vld [vmem:[#allocation2 + $0xf9] sm:$0xff]
        %v6516 = vld [vmem:[#allocation2 + $0x109] sm:$0xff]
        %v6517 = vld [vmem:[#allocation2 + $0x111] sm:$0xff]
        %v6518 = vld [vmem:[#allocation2 + $0x121] sm:$0xff]
        %v6519 = vld [vmem:[#allocation2 + $0x129] sm:$0xff]
        %v6520 = vld [vmem:[#allocation2 + $0x139] sm:$0xff]
        %v6521 = vld [vmem:[#allocation2 + $0x141] sm:$0xff]
        %v6522 = vld [vmem:[#allocation2 + $0x151] sm:$0xff]
        %v6523 = vld [vmem:[#allocation2 + $0x159] sm:$0xff]
        %v6524 = vld [vmem:[#allocation2 + $0x169] sm:$0xff]
        %v6525 = vld [vmem:[#allocation2 + $0x171] sm:$0xff]
        %s6526 = scalar_lea.vmem %s4, 64
        %v6527 = vld [vmem:[%s6526] sm:$0xff]
        %v6528 = vld [vmem:[%s6526 + $0x8] sm:$0xff]
        %v6529 = vld [vmem:[%s6526 + $0x10] sm:$0xff]
        %v6530 = vld [vmem:[%s6526 + $0x18] sm:$0xff]
        %v6531 = vld [vmem:[%s6526 + $0x20] sm:$0xff]
        %v6532 = vld [vmem:[%s6526 + $0x28] sm:$0xff]
        %v6533 = vld [vmem:[%s6526 + $0x30] sm:$0xff]
        %v6534 = vld [vmem:[%s6526 + $0x38] sm:$0xff]
        %v6536 = vsel %vm6076, %v6494, 0
        %v6539 = vsel %vm6076, %v6495, 0
        %v6542 = vsel %vm6076, %v6496, 0
        %v6545 = vsel %vm6076, %v6497, 0
        %v6548 = vsel %vm6076, %v6498, 0
        %v6551 = vsel %vm6076, %v6499, 0
        %v6554 = vsel %vm6076, %v6500, 0
        %v6557 = vsel %vm6076, %v6501, 0
        %v6560 = vsel %vm6076, %v6502, 0
        %v6563 = vsel %vm6076, %v6503, 0
        %v6566 = vsel %vm6076, %v6504, 0
        %v6569 = vsel %vm6076, %v6505, 0
        %v6572 = vsel %vm6076, %v6506, 0
        %v6575 = vsel %vm6076, %v6507, 0
        %v6578 = vsel %vm6076, %v6508, 0
        %v6581 = vsel %vm6076, %v6509, 0
        %v6584 = vsel %vm6076, %v6510, 0
        %v6587 = vsel %vm6076, %v6511, 0
        %v6590 = vsel %vm6076, %v6512, 0
        %v6593 = vsel %vm6076, %v6513, 0
        %v6596 = vsel %vm6076, %v6514, 0
        %v6599 = vsel %vm6076, %v6515, 0
        %v6602 = vsel %vm6076, %v6516, 0
        %v6605 = vsel %vm6076, %v6517, 0
        %v6608 = vsel %vm6076, %v6518, 0
        %v6611 = vsel %vm6076, %v6519, 0
        %v6614 = vsel %vm6076, %v6520, 0
        %v6617 = vsel %vm6076, %v6521, 0
        %v6620 = vsel %vm6076, %v6522, 0
        %v6623 = vsel %vm6076, %v6523, 0
        %v6626 = vsel %vm6076, %v6524, 0
        %v6629 = vsel %vm6076, %v6525, 0
        %6631 = vmatprep.subr.mxu0 0.0
        %6632 = vmatpush1.msra.mxu0 0.0
        %6633 = vmatprep.subr.mxu0 0.0
        %6634 = vmatpush1.msra.mxu0 0.0
        %6635 = vmatprep.subr.mxu0 0.0
        %6636 = vmatpush1.msra.mxu0 0.0
        %6637 = vmatprep.subr.mxu0 0.0
        %6638 = vmatpush1.msra.mxu0 0.0
        %6639 = vmatprep.subr.mxu0 0.0
        %6640 = vmatpush1.msra.mxu0 0.0
        %6641 = vmatprep.subr.mxu0 0.0
        %6642 = vmatpush1.msra.mxu0 0.0
        %6643 = vmatprep.subr.mxu0 0.0
        %6644 = vmatpush1.msra.mxu0 0.0
        %6645 = vmatprep.subr.mxu0 0.0
        %6646 = vmatpush1.msra.mxu0 0.0
        %6647 = vmatprep.subr.mxu0 0.0
        %6648 = vmatpush1.msra.mxu0 %v6534
        %6649 = vmatprep.subr.mxu0 0.0
        %6650 = vmatpush1.msra.mxu0 %v6533
        %6651 = vmatprep.subr.mxu0 0.0
        %6652 = vmatpush1.msra.mxu0 %v6532
        %6653 = vmatprep.subr.mxu0 0.0
        %6654 = vmatpush1.msra.mxu0 %v6531
        %6655 = vmatprep.subr.mxu0 0.0
        %6656 = vmatpush1.msra.mxu0 %v6530
        %6657 = vmatprep.subr.mxu0 0.0
        %6658 = vmatpush1.msra.mxu0 %v6529
        %6659 = vmatprep.subr.mxu0 0.0
        %6660 = vmatpush1.msra.mxu0 %v6528
        %6661 = vmatprep.subr.mxu0 0.0
        %6662 = vmatpush1.msra.mxu0 %v6527
        %6663 = vmatprep.subr.mxu0 0.0
        %6664 = vmatpush2.msra.mxu0 0.0
        %6665 = vmatprep.subr.mxu0 0.0
        %6666 = vmatpush2.msra.mxu0 0.0
        %6667 = vmatprep.subr.mxu0 0.0
        %6668 = vmatpush2.msra.mxu0 0.0
        %6669 = vmatprep.subr.mxu0 0.0
        %6670 = vmatpush2.msra.mxu0 0.0
        %6671 = vmatprep.subr.mxu0 0.0
        %6672 = vmatpush2.msra.mxu0 0.0
        %6673 = vmatprep.subr.mxu0 0.0
        %6674 = vmatpush2.msra.mxu0 0.0
        %6675 = vmatprep.subr.mxu0 0.0
        %6676 = vmatpush2.msra.mxu0 0.0
        %6677 = vmatprep.subr.mxu0 0.0
        %6678 = vmatpush2.msra.mxu0 0.0
        %6679 = vmatprep.subr.mxu0 0.0
        %6680 = vmatpush2.msra.mxu0 0.0
        %6681 = vmatprep.subr.mxu0 0.0
        %6682 = vmatpush2.msra.mxu0 0.0
        %6683 = vmatprep.subr.mxu0 0.0
        %6684 = vmatpush2.msra.mxu0 0.0
        %6685 = vmatprep.subr.mxu0 0.0
        %6686 = vmatpush2.msra.mxu0 0.0
        %6687 = vmatprep.subr.mxu0 0.0
        %6688 = vmatpush2.msra.mxu0 0.0
        %6689 = vmatprep.subr.mxu0 0.0
        %6690 = vmatpush2.msra.mxu0 0.0
        %6691 = vmatprep.subr.mxu0 0.0
        %6692 = vmatpush2.msra.mxu0 0.0
        %6693 = vmatprep.subr.mxu0 0.0
        %6694 = vmatpush2.msra.mxu0 0.0
        %6695 = vmatprep.mubr.f32.mxu0 0.0
        %6696 = vmatmul.mubr.f32.gmra.mxu0 %v6536
        %v6697 = vpop.f32.mrf.mxu0
        %v6698 = vadd.f32 0.0, %v6697
        %v6699 = vpop.f32.mrf.mxu0
        %6700 = vmatprep.mubr.f32.mxu0 0.0
        %6701 = vmatmul.mubr.f32.gmra.mxu0 %v6539
        %v6702 = vpop.f32.mrf.mxu0
        %v6703 = vadd.f32 0.0, %v6702
        %v6704 = vpop.f32.mrf.mxu0
        %6705 = vmatprep.mubr.f32.mxu0 0.0
        %6706 = vmatmul.mubr.f32.gmra.mxu0 %v6542
        %v6707 = vpop.f32.mrf.mxu0
        %v6708 = vadd.f32 0.0, %v6707
        %v6709 = vpop.f32.mrf.mxu0
        %6710 = vmatprep.mubr.f32.mxu0 0.0
        %6711 = vmatmul.mubr.f32.gmra.mxu0 %v6545
        %v6712 = vpop.f32.mrf.mxu0
        %v6713 = vadd.f32 0.0, %v6712
        %v6714 = vpop.f32.mrf.mxu0
        %6715 = vmatprep.mubr.f32.mxu0 0.0
        %6716 = vmatmul.mubr.f32.gmra.mxu0 %v6548
        %v6717 = vpop.f32.mrf.mxu0
        %v6718 = vadd.f32 0.0, %v6717
        %v6719 = vpop.f32.mrf.mxu0
        %6720 = vmatprep.mubr.f32.mxu0 0.0
        %6721 = vmatmul.mubr.f32.gmra.mxu0 %v6551
        %v6722 = vpop.f32.mrf.mxu0
        %v6723 = vadd.f32 0.0, %v6722
        %v6724 = vpop.f32.mrf.mxu0
        %6725 = vmatprep.mubr.f32.mxu0 0.0
        %6726 = vmatmul.mubr.f32.gmra.mxu0 %v6554
        %v6727 = vpop.f32.mrf.mxu0
        %v6728 = vadd.f32 0.0, %v6727
        %v6729 = vpop.f32.mrf.mxu0
        %6730 = vmatprep.mubr.f32.mxu0 0.0
        %6731 = vmatmul.mubr.f32.gmra.mxu0 %v6557
        %v6732 = vpop.f32.mrf.mxu0
        %v6733 = vadd.f32 0.0, %v6732
        %v6734 = vpop.f32.mrf.mxu0
        %6735 = vmatprep.mubr.f32.mxu0 0.0
        %6736 = vmatmul.mubr.f32.gmra.mxu0 %v6560
        %v6737 = vpop.f32.mrf.mxu0
        %v6738 = vadd.f32 0.0, %v6737
        %v6739 = vpop.f32.mrf.mxu0
        %6740 = vmatprep.mubr.f32.mxu0 0.0
        %6741 = vmatmul.mubr.f32.gmra.mxu0 %v6563
        %v6742 = vpop.f32.mrf.mxu0
        %v6743 = vadd.f32 0.0, %v6742
        %v6744 = vpop.f32.mrf.mxu0
        %6745 = vmatprep.mubr.f32.mxu0 0.0
        %6746 = vmatmul.mubr.f32.gmra.mxu0 %v6566
        %v6747 = vpop.f32.mrf.mxu0
        %v6748 = vadd.f32 0.0, %v6747
        %v6749 = vpop.f32.mrf.mxu0
        %6750 = vmatprep.mubr.f32.mxu0 0.0
        %6751 = vmatmul.mubr.f32.gmra.mxu0 %v6569
        %v6752 = vpop.f32.mrf.mxu0
        %v6753 = vadd.f32 0.0, %v6752
        %v6754 = vpop.f32.mrf.mxu0
        %6755 = vmatprep.mubr.f32.mxu0 0.0
        %6756 = vmatmul.mubr.f32.gmra.mxu0 %v6572
        %v6757 = vpop.f32.mrf.mxu0
        %v6758 = vadd.f32 0.0, %v6757
        %v6759 = vpop.f32.mrf.mxu0
        %6760 = vmatprep.mubr.f32.mxu0 0.0
        %6761 = vmatmul.mubr.f32.gmra.mxu0 %v6575
        %v6762 = vpop.f32.mrf.mxu0
        %v6763 = vadd.f32 0.0, %v6762
        %v6764 = vpop.f32.mrf.mxu0
        %6765 = vmatprep.mubr.f32.mxu0 0.0
        %6766 = vmatmul.mubr.f32.gmra.mxu0 %v6578
        %v6767 = vpop.f32.mrf.mxu0
        %v6768 = vadd.f32 0.0, %v6767
        %v6769 = vpop.f32.mrf.mxu0
        %6770 = vmatprep.mubr.f32.mxu0 0.0
        %6771 = vmatmul.mubr.f32.gmra.mxu0 %v6581
        %v6772 = vpop.f32.mrf.mxu0
        %v6773 = vadd.f32 0.0, %v6772
        %v6774 = vpop.f32.mrf.mxu0
        %6775 = vmatprep.mubr.f32.mxu0 0.0
        %6776 = vmatmul.mubr.f32.gmra.mxu0 %v6584
        %v6777 = vpop.f32.mrf.mxu0
        %v6778 = vadd.f32 0.0, %v6777
        %v6779 = vpop.f32.mrf.mxu0
        %6780 = vmatprep.mubr.f32.mxu0 0.0
        %6781 = vmatmul.mubr.f32.gmra.mxu0 %v6587
        %v6782 = vpop.f32.mrf.mxu0
        %v6783 = vadd.f32 0.0, %v6782
        %v6784 = vpop.f32.mrf.mxu0
        %6785 = vmatprep.mubr.f32.mxu0 0.0
        %6786 = vmatmul.mubr.f32.gmra.mxu0 %v6590
        %v6787 = vpop.f32.mrf.mxu0
        %v6788 = vadd.f32 0.0, %v6787
        %v6789 = vpop.f32.mrf.mxu0
        %6790 = vmatprep.mubr.f32.mxu0 0.0
        %6791 = vmatmul.mubr.f32.gmra.mxu0 %v6593
        %v6792 = vpop.f32.mrf.mxu0
        %v6793 = vadd.f32 0.0, %v6792
        %v6794 = vpop.f32.mrf.mxu0
        %6795 = vmatprep.mubr.f32.mxu0 0.0
        %6796 = vmatmul.mubr.f32.gmra.mxu0 %v6596
        %v6797 = vpop.f32.mrf.mxu0
        %v6798 = vadd.f32 0.0, %v6797
        %v6799 = vpop.f32.mrf.mxu0
        %6800 = vmatprep.mubr.f32.mxu0 0.0
        %6801 = vmatmul.mubr.f32.gmra.mxu0 %v6599
        %v6802 = vpop.f32.mrf.mxu0
        %v6803 = vadd.f32 0.0, %v6802
        %v6804 = vpop.f32.mrf.mxu0
        %6805 = vmatprep.mubr.f32.mxu0 0.0
        %6806 = vmatmul.mubr.f32.gmra.mxu0 %v6602
        %v6807 = vpop.f32.mrf.mxu0
        %v6808 = vadd.f32 0.0, %v6807
        %v6809 = vpop.f32.mrf.mxu0
        %6810 = vmatprep.mubr.f32.mxu0 0.0
        %6811 = vmatmul.mubr.f32.gmra.mxu0 %v6605
        %v6812 = vpop.f32.mrf.mxu0
        %v6813 = vadd.f32 0.0, %v6812
        %v6814 = vpop.f32.mrf.mxu0
        %6815 = vmatprep.mubr.f32.mxu0 0.0
        %6816 = vmatmul.mubr.f32.gmra.mxu0 %v6608
        %v6817 = vpop.f32.mrf.mxu0
        %v6818 = vadd.f32 0.0, %v6817
        %v6819 = vpop.f32.mrf.mxu0
        %6820 = vmatprep.mubr.f32.mxu0 0.0
        %6821 = vmatmul.mubr.f32.gmra.mxu0 %v6611
        %v6822 = vpop.f32.mrf.mxu0
        %v6823 = vadd.f32 0.0, %v6822
        %v6824 = vpop.f32.mrf.mxu0
        %6825 = vmatprep.mubr.f32.mxu0 0.0
        %6826 = vmatmul.mubr.f32.gmra.mxu0 %v6614
        %v6827 = vpop.f32.mrf.mxu0
        %v6828 = vadd.f32 0.0, %v6827
        %v6829 = vpop.f32.mrf.mxu0
        %6830 = vmatprep.mubr.f32.mxu0 0.0
        %6831 = vmatmul.mubr.f32.gmra.mxu0 %v6617
        %v6832 = vpop.f32.mrf.mxu0
        %v6833 = vadd.f32 0.0, %v6832
        %v6834 = vpop.f32.mrf.mxu0
        %6835 = vmatprep.mubr.f32.mxu0 0.0
        %6836 = vmatmul.mubr.f32.gmra.mxu0 %v6620
        %v6837 = vpop.f32.mrf.mxu0
        %v6838 = vadd.f32 0.0, %v6837
        %v6839 = vpop.f32.mrf.mxu0
        %6840 = vmatprep.mubr.f32.mxu0 0.0
        %6841 = vmatmul.mubr.f32.gmra.mxu0 %v6623
        %v6842 = vpop.f32.mrf.mxu0
        %v6843 = vadd.f32 0.0, %v6842
        %v6844 = vpop.f32.mrf.mxu0
        %6845 = vmatprep.mubr.f32.mxu0 0.0
        %6846 = vmatmul.mubr.f32.gmra.mxu0 %v6626
        %v6847 = vpop.f32.mrf.mxu0
        %v6848 = vadd.f32 0.0, %v6847
        %v6849 = vpop.f32.mrf.mxu0
        %6850 = vmatprep.mubr.f32.mxu0 0.0
        %6851 = vmatmul.mubr.f32.gmra.mxu0 %v6629
        %v6852 = vpop.f32.mrf.mxu0
        %v6853 = vadd.f32 0.0, %v6852
        %v6854 = vpop.f32.mrf.mxu0
        %6855 = vdwg.mxu0
        %v6857 = vsel %vm6076, %v6454, 0
        %v6860 = vsel %vm6076, %v6455, 0
        %v6863 = vsel %vm6076, %v6456, 0
        %v6866 = vsel %vm6076, %v6457, 0
        %v6869 = vsel %vm6076, %v6458, 0
        %v6872 = vsel %vm6076, %v6459, 0
        %v6875 = vsel %vm6076, %v6460, 0
        %v6878 = vsel %vm6076, %v6461, 0
        %v6881 = vsel %vm6076, %v6462, 0
        %v6884 = vsel %vm6076, %v6463, 0
        %v6887 = vsel %vm6076, %v6464, 0
        %v6890 = vsel %vm6076, %v6465, 0
        %v6893 = vsel %vm6076, %v6466, 0
        %v6896 = vsel %vm6076, %v6467, 0
        %v6899 = vsel %vm6076, %v6468, 0
        %v6902 = vsel %vm6076, %v6469, 0
        %v6905 = vsel %vm6076, %v6470, 0
        %v6908 = vsel %vm6076, %v6471, 0
        %v6911 = vsel %vm6076, %v6472, 0
        %v6914 = vsel %vm6076, %v6473, 0
        %v6917 = vsel %vm6076, %v6474, 0
        %v6920 = vsel %vm6076, %v6475, 0
        %v6923 = vsel %vm6076, %v6476, 0
        %v6926 = vsel %vm6076, %v6477, 0
        %v6929 = vsel %vm6076, %v6478, 0
        %v6932 = vsel %vm6076, %v6479, 0
        %v6935 = vsel %vm6076, %v6480, 0
        %v6938 = vsel %vm6076, %v6481, 0
        %v6941 = vsel %vm6076, %v6482, 0
        %v6944 = vsel %vm6076, %v6483, 0
        %v6947 = vsel %vm6076, %v6484, 0
        %v6950 = vsel %vm6076, %v6485, 0
        %6952 = vmatprep.subr.mxu0 0.0
        %6953 = vmatpush1.msra.mxu0 0.0
        %6954 = vmatprep.subr.mxu0 0.0
        %6955 = vmatpush1.msra.mxu0 0.0
        %6956 = vmatprep.subr.mxu0 0.0
        %6957 = vmatpush1.msra.mxu0 0.0
        %6958 = vmatprep.subr.mxu0 0.0
        %6959 = vmatpush1.msra.mxu0 0.0
        %6960 = vmatprep.subr.mxu0 0.0
        %6961 = vmatpush1.msra.mxu0 0.0
        %6962 = vmatprep.subr.mxu0 0.0
        %6963 = vmatpush1.msra.mxu0 0.0
        %6964 = vmatprep.subr.mxu0 0.0
        %6965 = vmatpush1.msra.mxu0 0.0
        %6966 = vmatprep.subr.mxu0 0.0
        %6967 = vmatpush1.msra.mxu0 0.0
        %6968 = vmatprep.subr.mxu0 0.0
        %6969 = vmatpush1.msra.mxu0 %v6493
        %6970 = vmatprep.subr.mxu0 0.0
        %6971 = vmatpush1.msra.mxu0 %v6492
        %6972 = vmatprep.subr.mxu0 0.0
        %6973 = vmatpush1.msra.mxu0 %v6491
        %6974 = vmatprep.subr.mxu0 0.0
        %6975 = vmatpush1.msra.mxu0 %v6490
        %6976 = vmatprep.subr.mxu0 0.0
        %6977 = vmatpush1.msra.mxu0 %v6489
        %6978 = vmatprep.subr.mxu0 0.0
        %6979 = vmatpush1.msra.mxu0 %v6488
        %6980 = vmatprep.subr.mxu0 0.0
        %6981 = vmatpush1.msra.mxu0 %v6487
        %6982 = vmatprep.subr.mxu0 0.0
        %6983 = vmatpush1.msra.mxu0 %v6486
        %6984 = vmatprep.subr.mxu0 0.0
        %6985 = vmatpush2.msra.mxu0 0.0
        %6986 = vmatprep.subr.mxu0 0.0
        %6987 = vmatpush2.msra.mxu0 0.0
        %6988 = vmatprep.subr.mxu0 0.0
        %6989 = vmatpush2.msra.mxu0 0.0
        %6990 = vmatprep.subr.mxu0 0.0
        %6991 = vmatpush2.msra.mxu0 0.0
        %6992 = vmatprep.subr.mxu0 0.0
        %6993 = vmatpush2.msra.mxu0 0.0
        %6994 = vmatprep.subr.mxu0 0.0
        %6995 = vmatpush2.msra.mxu0 0.0
        %6996 = vmatprep.subr.mxu0 0.0
        %6997 = vmatpush2.msra.mxu0 0.0
        %6998 = vmatprep.subr.mxu0 0.0
        %6999 = vmatpush2.msra.mxu0 0.0
        %7000 = vmatprep.subr.mxu0 0.0
        %7001 = vmatpush2.msra.mxu0 0.0
        %7002 = vmatprep.subr.mxu0 0.0
        %7003 = vmatpush2.msra.mxu0 0.0
        %7004 = vmatprep.subr.mxu0 0.0
        %7005 = vmatpush2.msra.mxu0 0.0
        %7006 = vmatprep.subr.mxu0 0.0
        %7007 = vmatpush2.msra.mxu0 0.0
        %7008 = vmatprep.subr.mxu0 0.0
        %7009 = vmatpush2.msra.mxu0 0.0
        %7010 = vmatprep.subr.mxu0 0.0
        %7011 = vmatpush2.msra.mxu0 0.0
        %7012 = vmatprep.subr.mxu0 0.0
        %7013 = vmatpush2.msra.mxu0 0.0
        %7014 = vmatprep.subr.mxu0 0.0
        %7015 = vmatpush2.msra.mxu0 0.0
        %7016 = vmatprep.mubr.f32.mxu0 0.0
        %7017 = vmatmul.mubr.f32.gmra.mxu0 %v6857
        %v7018 = vpop.f32.mrf.mxu0
        %v7019 = vadd.f32 %v6698, %v7018
        %v7020 = vpop.f32.mrf.mxu0
        %7021 = vmatprep.mubr.f32.mxu0 0.0
        %7022 = vmatmul.mubr.f32.gmra.mxu0 %v6860
        %v7023 = vpop.f32.mrf.mxu0
        %v7024 = vadd.f32 %v6703, %v7023
        %v7025 = vpop.f32.mrf.mxu0
        %7026 = vmatprep.mubr.f32.mxu0 0.0
        %7027 = vmatmul.mubr.f32.gmra.mxu0 %v6863
        %v7028 = vpop.f32.mrf.mxu0
        %v7029 = vadd.f32 %v6708, %v7028
        %v7030 = vpop.f32.mrf.mxu0
        %7031 = vmatprep.mubr.f32.mxu0 0.0
        %7032 = vmatmul.mubr.f32.gmra.mxu0 %v6866
        %v7033 = vpop.f32.mrf.mxu0
        %v7034 = vadd.f32 %v6713, %v7033
        %v7035 = vpop.f32.mrf.mxu0
        %7036 = vmatprep.mubr.f32.mxu0 0.0
        %7037 = vmatmul.mubr.f32.gmra.mxu0 %v6869
        %v7038 = vpop.f32.mrf.mxu0
        %v7039 = vadd.f32 %v6718, %v7038
        %v7040 = vpop.f32.mrf.mxu0
        %7041 = vmatprep.mubr.f32.mxu0 0.0
        %7042 = vmatmul.mubr.f32.gmra.mxu0 %v6872
        %v7043 = vpop.f32.mrf.mxu0
        %v7044 = vadd.f32 %v6723, %v7043
        %v7045 = vpop.f32.mrf.mxu0
        %7046 = vmatprep.mubr.f32.mxu0 0.0
        %7047 = vmatmul.mubr.f32.gmra.mxu0 %v6875
        %v7048 = vpop.f32.mrf.mxu0
        %v7049 = vadd.f32 %v6728, %v7048
        %v7050 = vpop.f32.mrf.mxu0
        %7051 = vmatprep.mubr.f32.mxu0 0.0
        %7052 = vmatmul.mubr.f32.gmra.mxu0 %v6878
        %v7053 = vpop.f32.mrf.mxu0
        %v7054 = vadd.f32 %v6733, %v7053
        %v7055 = vpop.f32.mrf.mxu0
        %7056 = vmatprep.mubr.f32.mxu0 0.0
        %7057 = vmatmul.mubr.f32.gmra.mxu0 %v6881
        %v7058 = vpop.f32.mrf.mxu0
        %v7059 = vadd.f32 %v6738, %v7058
        %v7060 = vpop.f32.mrf.mxu0
        %7061 = vmatprep.mubr.f32.mxu0 0.0
        %7062 = vmatmul.mubr.f32.gmra.mxu0 %v6884
        %v7063 = vpop.f32.mrf.mxu0
        %v7064 = vadd.f32 %v6743, %v7063
        %v7065 = vpop.f32.mrf.mxu0
        %7066 = vmatprep.mubr.f32.mxu0 0.0
        %7067 = vmatmul.mubr.f32.gmra.mxu0 %v6887
        %v7068 = vpop.f32.mrf.mxu0
        %v7069 = vadd.f32 %v6748, %v7068
        %v7070 = vpop.f32.mrf.mxu0
        %7071 = vmatprep.mubr.f32.mxu0 0.0
        %7072 = vmatmul.mubr.f32.gmra.mxu0 %v6890
        %v7073 = vpop.f32.mrf.mxu0
        %v7074 = vadd.f32 %v6753, %v7073
        %v7075 = vpop.f32.mrf.mxu0
        %7076 = vmatprep.mubr.f32.mxu0 0.0
        %7077 = vmatmul.mubr.f32.gmra.mxu0 %v6893
        %v7078 = vpop.f32.mrf.mxu0
        %v7079 = vadd.f32 %v6758, %v7078
        %v7080 = vpop.f32.mrf.mxu0
        %7081 = vmatprep.mubr.f32.mxu0 0.0
        %7082 = vmatmul.mubr.f32.gmra.mxu0 %v6896
        %v7083 = vpop.f32.mrf.mxu0
        %v7084 = vadd.f32 %v6763, %v7083
        %v7085 = vpop.f32.mrf.mxu0
        %7086 = vmatprep.mubr.f32.mxu0 0.0
        %7087 = vmatmul.mubr.f32.gmra.mxu0 %v6899
        %v7088 = vpop.f32.mrf.mxu0
        %v7089 = vadd.f32 %v6768, %v7088
        %v7090 = vpop.f32.mrf.mxu0
        %7091 = vmatprep.mubr.f32.mxu0 0.0
        %7092 = vmatmul.mubr.f32.gmra.mxu0 %v6902
        %v7093 = vpop.f32.mrf.mxu0
        %v7094 = vadd.f32 %v6773, %v7093
        %v7095 = vpop.f32.mrf.mxu0
        %7096 = vmatprep.mubr.f32.mxu0 0.0
        %7097 = vmatmul.mubr.f32.gmra.mxu0 %v6905
        %v7098 = vpop.f32.mrf.mxu0
        %v7099 = vadd.f32 %v6778, %v7098
        %v7100 = vpop.f32.mrf.mxu0
        %7101 = vmatprep.mubr.f32.mxu0 0.0
        %7102 = vmatmul.mubr.f32.gmra.mxu0 %v6908
        %v7103 = vpop.f32.mrf.mxu0
        %v7104 = vadd.f32 %v6783, %v7103
        %v7105 = vpop.f32.mrf.mxu0
        %7106 = vmatprep.mubr.f32.mxu0 0.0
        %7107 = vmatmul.mubr.f32.gmra.mxu0 %v6911
        %v7108 = vpop.f32.mrf.mxu0
        %v7109 = vadd.f32 %v6788, %v7108
        %v7110 = vpop.f32.mrf.mxu0
        %7111 = vmatprep.mubr.f32.mxu0 0.0
        %7112 = vmatmul.mubr.f32.gmra.mxu0 %v6914
        %v7113 = vpop.f32.mrf.mxu0
        %v7114 = vadd.f32 %v6793, %v7113
        %v7115 = vpop.f32.mrf.mxu0
        %7116 = vmatprep.mubr.f32.mxu0 0.0
        %7117 = vmatmul.mubr.f32.gmra.mxu0 %v6917
        %v7118 = vpop.f32.mrf.mxu0
        %v7119 = vadd.f32 %v6798, %v7118
        %v7120 = vpop.f32.mrf.mxu0
        %7121 = vmatprep.mubr.f32.mxu0 0.0
        %7122 = vmatmul.mubr.f32.gmra.mxu0 %v6920
        %v7123 = vpop.f32.mrf.mxu0
        %v7124 = vadd.f32 %v6803, %v7123
        %v7125 = vpop.f32.mrf.mxu0
        %7126 = vmatprep.mubr.f32.mxu0 0.0
        %7127 = vmatmul.mubr.f32.gmra.mxu0 %v6923
        %v7128 = vpop.f32.mrf.mxu0
        %v7129 = vadd.f32 %v6808, %v7128
        %v7130 = vpop.f32.mrf.mxu0
        %7131 = vmatprep.mubr.f32.mxu0 0.0
        %7132 = vmatmul.mubr.f32.gmra.mxu0 %v6926
        %v7133 = vpop.f32.mrf.mxu0
        %v7134 = vadd.f32 %v6813, %v7133
        %v7135 = vpop.f32.mrf.mxu0
        %7136 = vmatprep.mubr.f32.mxu0 0.0
        %7137 = vmatmul.mubr.f32.gmra.mxu0 %v6929
        %v7138 = vpop.f32.mrf.mxu0
        %v7139 = vadd.f32 %v6818, %v7138
        %v7140 = vpop.f32.mrf.mxu0
        %7141 = vmatprep.mubr.f32.mxu0 0.0
        %7142 = vmatmul.mubr.f32.gmra.mxu0 %v6932
        %v7143 = vpop.f32.mrf.mxu0
        %v7144 = vadd.f32 %v6823, %v7143
        %v7145 = vpop.f32.mrf.mxu0
        %7146 = vmatprep.mubr.f32.mxu0 0.0
        %7147 = vmatmul.mubr.f32.gmra.mxu0 %v6935
        %v7148 = vpop.f32.mrf.mxu0
        %v7149 = vadd.f32 %v6828, %v7148
        %v7150 = vpop.f32.mrf.mxu0
        %7151 = vmatprep.mubr.f32.mxu0 0.0
        %7152 = vmatmul.mubr.f32.gmra.mxu0 %v6938
        %v7153 = vpop.f32.mrf.mxu0
        %v7154 = vadd.f32 %v6833, %v7153
        %v7155 = vpop.f32.mrf.mxu0
        %7156 = vmatprep.mubr.f32.mxu0 0.0
        %7157 = vmatmul.mubr.f32.gmra.mxu0 %v6941
        %v7158 = vpop.f32.mrf.mxu0
        %v7159 = vadd.f32 %v6838, %v7158
        %v7160 = vpop.f32.mrf.mxu0
        %7161 = vmatprep.mubr.f32.mxu0 0.0
        %7162 = vmatmul.mubr.f32.gmra.mxu0 %v6944
        %v7163 = vpop.f32.mrf.mxu0
        %v7164 = vadd.f32 %v6843, %v7163
        %v7165 = vpop.f32.mrf.mxu0
        %7166 = vmatprep.mubr.f32.mxu0 0.0
        %7167 = vmatmul.mubr.f32.gmra.mxu0 %v6947
        %v7168 = vpop.f32.mrf.mxu0
        %v7169 = vadd.f32 %v6848, %v7168
        %v7170 = vpop.f32.mrf.mxu0
        %7171 = vmatprep.mubr.f32.mxu0 0.0
        %7172 = vmatmul.mubr.f32.gmra.mxu0 %v6950
        %v7173 = vpop.f32.mrf.mxu0
        %v7174 = vadd.f32 %v6853, %v7173
        %v7175 = vpop.f32.mrf.mxu0
        %7176 = vdwg.mxu0
        %v7177 = vld [vmem:[#allocation2 + $0x2] sm:$0xff]
        %v7178 = vld [vmem:[#allocation2 + $0xa] sm:$0xff]
        %v7179 = vld [vmem:[#allocation2 + $0x1a] sm:$0xff]
        %v7180 = vld [vmem:[#allocation2 + $0x22] sm:$0xff]
        %v7181 = vld [vmem:[#allocation2 + $0x32] sm:$0xff]
        %v7182 = vld [vmem:[#allocation2 + $0x3a] sm:$0xff]
        %v7183 = vld [vmem:[#allocation2 + $0x4a] sm:$0xff]
        %v7184 = vld [vmem:[#allocation2 + $0x52] sm:$0xff]
        %v7185 = vld [vmem:[#allocation2 + $0x62] sm:$0xff]
        %v7186 = vld [vmem:[#allocation2 + $0x6a] sm:$0xff]
        %v7187 = vld [vmem:[#allocation2 + $0x7a] sm:$0xff]
        %v7188 = vld [vmem:[#allocation2 + $0x82] sm:$0xff]
        %v7189 = vld [vmem:[#allocation2 + $0x92] sm:$0xff]
        %v7190 = vld [vmem:[#allocation2 + $0x9a] sm:$0xff]
        %v7191 = vld [vmem:[#allocation2 + $0xaa] sm:$0xff]
        %v7192 = vld [vmem:[#allocation2 + $0xb2] sm:$0xff]
        %v7193 = vld [vmem:[#allocation2 + $0xc2] sm:$0xff]
        %v7194 = vld [vmem:[#allocation2 + $0xca] sm:$0xff]
        %v7195 = vld [vmem:[#allocation2 + $0xda] sm:$0xff]
        %v7196 = vld [vmem:[#allocation2 + $0xe2] sm:$0xff]
        %v7197 = vld [vmem:[#allocation2 + $0xf2] sm:$0xff]
        %v7198 = vld [vmem:[#allocation2 + $0xfa] sm:$0xff]
        %v7199 = vld [vmem:[#allocation2 + $0x10a] sm:$0xff]
        %v7200 = vld [vmem:[#allocation2 + $0x112] sm:$0xff]
        %v7201 = vld [vmem:[#allocation2 + $0x122] sm:$0xff]
        %v7202 = vld [vmem:[#allocation2 + $0x12a] sm:$0xff]
        %v7203 = vld [vmem:[#allocation2 + $0x13a] sm:$0xff]
        %v7204 = vld [vmem:[#allocation2 + $0x142] sm:$0xff]
        %v7205 = vld [vmem:[#allocation2 + $0x152] sm:$0xff]
        %v7206 = vld [vmem:[#allocation2 + $0x15a] sm:$0xff]
        %v7207 = vld [vmem:[#allocation2 + $0x16a] sm:$0xff]
        %v7208 = vld [vmem:[#allocation2 + $0x172] sm:$0xff]
        %s7209 = scalar_lea.vmem %s4, 128
        %v7210 = vld [vmem:[%s7209] sm:$0xff]
        %v7211 = vld [vmem:[%s7209 + $0x8] sm:$0xff]
        %v7212 = vld [vmem:[%s7209 + $0x10] sm:$0xff]
        %v7213 = vld [vmem:[%s7209 + $0x18] sm:$0xff]
        %v7214 = vld [vmem:[%s7209 + $0x20] sm:$0xff]
        %v7215 = vld [vmem:[%s7209 + $0x28] sm:$0xff]
        %v7216 = vld [vmem:[%s7209 + $0x30] sm:$0xff]
        %v7217 = vld [vmem:[%s7209 + $0x38] sm:$0xff]
        %v7219 = vsel %vm6076, %v7177, 0
        %v7222 = vsel %vm6076, %v7178, 0
        %v7225 = vsel %vm6076, %v7179, 0
        %v7228 = vsel %vm6076, %v7180, 0
        %v7231 = vsel %vm6076, %v7181, 0
        %v7234 = vsel %vm6076, %v7182, 0
        %v7237 = vsel %vm6076, %v7183, 0
        %v7240 = vsel %vm6076, %v7184, 0
        %v7243 = vsel %vm6076, %v7185, 0
        %v7246 = vsel %vm6076, %v7186, 0
        %v7249 = vsel %vm6076, %v7187, 0
        %v7252 = vsel %vm6076, %v7188, 0
        %v7255 = vsel %vm6076, %v7189, 0
        %v7258 = vsel %vm6076, %v7190, 0
        %v7261 = vsel %vm6076, %v7191, 0
        %v7264 = vsel %vm6076, %v7192, 0
        %v7267 = vsel %vm6076, %v7193, 0
        %v7270 = vsel %vm6076, %v7194, 0
        %v7273 = vsel %vm6076, %v7195, 0
        %v7276 = vsel %vm6076, %v7196, 0
        %v7279 = vsel %vm6076, %v7197, 0
        %v7282 = vsel %vm6076, %v7198, 0
        %v7285 = vsel %vm6076, %v7199, 0
        %v7288 = vsel %vm6076, %v7200, 0
        %v7291 = vsel %vm6076, %v7201, 0
        %v7294 = vsel %vm6076, %v7202, 0
        %v7297 = vsel %vm6076, %v7203, 0
        %v7300 = vsel %vm6076, %v7204, 0
        %v7303 = vsel %vm6076, %v7205, 0
        %v7306 = vsel %vm6076, %v7206, 0
        %v7309 = vsel %vm6076, %v7207, 0
        %v7312 = vsel %vm6076, %v7208, 0
        %7314 = vmatprep.subr.mxu0 0.0
        %7315 = vmatpush1.msra.mxu0 0.0
        %7316 = vmatprep.subr.mxu0 0.0
        %7317 = vmatpush1.msra.mxu0 0.0
        %7318 = vmatprep.subr.mxu0 0.0
        %7319 = vmatpush1.msra.mxu0 0.0
        %7320 = vmatprep.subr.mxu0 0.0
        %7321 = vmatpush1.msra.mxu0 0.0
        %7322 = vmatprep.subr.mxu0 0.0
        %7323 = vmatpush1.msra.mxu0 0.0
        %7324 = vmatprep.subr.mxu0 0.0
        %7325 = vmatpush1.msra.mxu0 0.0
        %7326 = vmatprep.subr.mxu0 0.0
        %7327 = vmatpush1.msra.mxu0 0.0
        %7328 = vmatprep.subr.mxu0 0.0
        %7329 = vmatpush1.msra.mxu0 0.0
        %7330 = vmatprep.subr.mxu0 0.0
        %7331 = vmatpush1.msra.mxu0 %v7217
        %7332 = vmatprep.subr.mxu0 0.0
        %7333 = vmatpush1.msra.mxu0 %v7216
        %7334 = vmatprep.subr.mxu0 0.0
        %7335 = vmatpush1.msra.mxu0 %v7215
        %7336 = vmatprep.subr.mxu0 0.0
        %7337 = vmatpush1.msra.mxu0 %v7214
        %7338 = vmatprep.subr.mxu0 0.0
        %7339 = vmatpush1.msra.mxu0 %v7213
        %7340 = vmatprep.subr.mxu0 0.0
        %7341 = vmatpush1.msra.mxu0 %v7212
        %7342 = vmatprep.subr.mxu0 0.0
        %7343 = vmatpush1.msra.mxu0 %v7211
        %7344 = vmatprep.subr.mxu0 0.0
        %7345 = vmatpush1.msra.mxu0 %v7210
        %7346 = vmatprep.subr.mxu0 0.0
        %7347 = vmatpush2.msra.mxu0 0.0
        %7348 = vmatprep.subr.mxu0 0.0
        %7349 = vmatpush2.msra.mxu0 0.0
        %7350 = vmatprep.subr.mxu0 0.0
        %7351 = vmatpush2.msra.mxu0 0.0
        %7352 = vmatprep.subr.mxu0 0.0
        %7353 = vmatpush2.msra.mxu0 0.0
        %7354 = vmatprep.subr.mxu0 0.0
        %7355 = vmatpush2.msra.mxu0 0.0
        %7356 = vmatprep.subr.mxu0 0.0
        %7357 = vmatpush2.msra.mxu0 0.0
        %7358 = vmatprep.subr.mxu0 0.0
        %7359 = vmatpush2.msra.mxu0 0.0
        %7360 = vmatprep.subr.mxu0 0.0
        %7361 = vmatpush2.msra.mxu0 0.0
        %7362 = vmatprep.subr.mxu0 0.0
        %7363 = vmatpush2.msra.mxu0 0.0
        %7364 = vmatprep.subr.mxu0 0.0
        %7365 = vmatpush2.msra.mxu0 0.0
        %7366 = vmatprep.subr.mxu0 0.0
        %7367 = vmatpush2.msra.mxu0 0.0
        %7368 = vmatprep.subr.mxu0 0.0
        %7369 = vmatpush2.msra.mxu0 0.0
        %7370 = vmatprep.subr.mxu0 0.0
        %7371 = vmatpush2.msra.mxu0 0.0
        %7372 = vmatprep.subr.mxu0 0.0
        %7373 = vmatpush2.msra.mxu0 0.0
        %7374 = vmatprep.subr.mxu0 0.0
        %7375 = vmatpush2.msra.mxu0 0.0
        %7376 = vmatprep.subr.mxu0 0.0
        %7377 = vmatpush2.msra.mxu0 0.0
        %7378 = vmatprep.mubr.f32.mxu0 0.0
        %7379 = vmatmul.mubr.f32.gmra.mxu0 %v7219
        %v7380 = vpop.f32.mrf.mxu0
        %v7381 = vadd.f32 0.0, %v7380
        %v7382 = vpop.f32.mrf.mxu0
        %7383 = vmatprep.mubr.f32.mxu0 0.0
        %7384 = vmatmul.mubr.f32.gmra.mxu0 %v7222
        %v7385 = vpop.f32.mrf.mxu0
        %v7386 = vadd.f32 0.0, %v7385
        %v7387 = vpop.f32.mrf.mxu0
        %7388 = vmatprep.mubr.f32.mxu0 0.0
        %7389 = vmatmul.mubr.f32.gmra.mxu0 %v7225
        %v7390 = vpop.f32.mrf.mxu0
        %v7391 = vadd.f32 0.0, %v7390
        %v7392 = vpop.f32.mrf.mxu0
        %7393 = vmatprep.mubr.f32.mxu0 0.0
        %7394 = vmatmul.mubr.f32.gmra.mxu0 %v7228
        %v7395 = vpop.f32.mrf.mxu0
        %v7396 = vadd.f32 0.0, %v7395
        %v7397 = vpop.f32.mrf.mxu0
        %7398 = vmatprep.mubr.f32.mxu0 0.0
        %7399 = vmatmul.mubr.f32.gmra.mxu0 %v7231
        %v7400 = vpop.f32.mrf.mxu0
        %v7401 = vadd.f32 0.0, %v7400
        %v7402 = vpop.f32.mrf.mxu0
        %7403 = vmatprep.mubr.f32.mxu0 0.0
        %7404 = vmatmul.mubr.f32.gmra.mxu0 %v7234
        %v7405 = vpop.f32.mrf.mxu0
        %v7406 = vadd.f32 0.0, %v7405
        %v7407 = vpop.f32.mrf.mxu0
        %7408 = vmatprep.mubr.f32.mxu0 0.0
        %7409 = vmatmul.mubr.f32.gmra.mxu0 %v7237
        %v7410 = vpop.f32.mrf.mxu0
        %v7411 = vadd.f32 0.0, %v7410
        %v7412 = vpop.f32.mrf.mxu0
        %7413 = vmatprep.mubr.f32.mxu0 0.0
        %7414 = vmatmul.mubr.f32.gmra.mxu0 %v7240
        %v7415 = vpop.f32.mrf.mxu0
        %v7416 = vadd.f32 0.0, %v7415
        %v7417 = vpop.f32.mrf.mxu0
        %7418 = vmatprep.mubr.f32.mxu0 0.0
        %7419 = vmatmul.mubr.f32.gmra.mxu0 %v7243
        %v7420 = vpop.f32.mrf.mxu0
        %v7421 = vadd.f32 0.0, %v7420
        %v7422 = vpop.f32.mrf.mxu0
        %7423 = vmatprep.mubr.f32.mxu0 0.0
        %7424 = vmatmul.mubr.f32.gmra.mxu0 %v7246
        %v7425 = vpop.f32.mrf.mxu0
        %v7426 = vadd.f32 0.0, %v7425
        %v7427 = vpop.f32.mrf.mxu0
        %7428 = vmatprep.mubr.f32.mxu0 0.0
        %7429 = vmatmul.mubr.f32.gmra.mxu0 %v7249
        %v7430 = vpop.f32.mrf.mxu0
        %v7431 = vadd.f32 0.0, %v7430
        %v7432 = vpop.f32.mrf.mxu0
        %7433 = vmatprep.mubr.f32.mxu0 0.0
        %7434 = vmatmul.mubr.f32.gmra.mxu0 %v7252
        %v7435 = vpop.f32.mrf.mxu0
        %v7436 = vadd.f32 0.0, %v7435
        %v7437 = vpop.f32.mrf.mxu0
        %7438 = vmatprep.mubr.f32.mxu0 0.0
        %7439 = vmatmul.mubr.f32.gmra.mxu0 %v7255
        %v7440 = vpop.f32.mrf.mxu0
        %v7441 = vadd.f32 0.0, %v7440
        %v7442 = vpop.f32.mrf.mxu0
        %7443 = vmatprep.mubr.f32.mxu0 0.0
        %7444 = vmatmul.mubr.f32.gmra.mxu0 %v7258
        %v7445 = vpop.f32.mrf.mxu0
        %v7446 = vadd.f32 0.0, %v7445
        %v7447 = vpop.f32.mrf.mxu0
        %7448 = vmatprep.mubr.f32.mxu0 0.0
        %7449 = vmatmul.mubr.f32.gmra.mxu0 %v7261
        %v7450 = vpop.f32.mrf.mxu0
        %v7451 = vadd.f32 0.0, %v7450
        %v7452 = vpop.f32.mrf.mxu0
        %7453 = vmatprep.mubr.f32.mxu0 0.0
        %7454 = vmatmul.mubr.f32.gmra.mxu0 %v7264
        %v7455 = vpop.f32.mrf.mxu0
        %v7456 = vadd.f32 0.0, %v7455
        %v7457 = vpop.f32.mrf.mxu0
        %7458 = vmatprep.mubr.f32.mxu0 0.0
        %7459 = vmatmul.mubr.f32.gmra.mxu0 %v7267
        %v7460 = vpop.f32.mrf.mxu0
        %v7461 = vadd.f32 0.0, %v7460
        %v7462 = vpop.f32.mrf.mxu0
        %7463 = vmatprep.mubr.f32.mxu0 0.0
        %7464 = vmatmul.mubr.f32.gmra.mxu0 %v7270
        %v7465 = vpop.f32.mrf.mxu0
        %v7466 = vadd.f32 0.0, %v7465
        %v7467 = vpop.f32.mrf.mxu0
        %7468 = vmatprep.mubr.f32.mxu0 0.0
        %7469 = vmatmul.mubr.f32.gmra.mxu0 %v7273
        %v7470 = vpop.f32.mrf.mxu0
        %v7471 = vadd.f32 0.0, %v7470
        %v7472 = vpop.f32.mrf.mxu0
        %7473 = vmatprep.mubr.f32.mxu0 0.0
        %7474 = vmatmul.mubr.f32.gmra.mxu0 %v7276
        %v7475 = vpop.f32.mrf.mxu0
        %v7476 = vadd.f32 0.0, %v7475
        %v7477 = vpop.f32.mrf.mxu0
        %7478 = vmatprep.mubr.f32.mxu0 0.0
        %7479 = vmatmul.mubr.f32.gmra.mxu0 %v7279
        %v7480 = vpop.f32.mrf.mxu0
        %v7481 = vadd.f32 0.0, %v7480
        %v7482 = vpop.f32.mrf.mxu0
        %7483 = vmatprep.mubr.f32.mxu0 0.0
        %7484 = vmatmul.mubr.f32.gmra.mxu0 %v7282
        %v7485 = vpop.f32.mrf.mxu0
        %v7486 = vadd.f32 0.0, %v7485
        %v7487 = vpop.f32.mrf.mxu0
        %7488 = vmatprep.mubr.f32.mxu0 0.0
        %7489 = vmatmul.mubr.f32.gmra.mxu0 %v7285
        %v7490 = vpop.f32.mrf.mxu0
        %v7491 = vadd.f32 0.0, %v7490
        %v7492 = vpop.f32.mrf.mxu0
        %7493 = vmatprep.mubr.f32.mxu0 0.0
        %7494 = vmatmul.mubr.f32.gmra.mxu0 %v7288
        %v7495 = vpop.f32.mrf.mxu0
        %v7496 = vadd.f32 0.0, %v7495
        %v7497 = vpop.f32.mrf.mxu0
        %7498 = vmatprep.mubr.f32.mxu0 0.0
        %7499 = vmatmul.mubr.f32.gmra.mxu0 %v7291
        %v7500 = vpop.f32.mrf.mxu0
        %v7501 = vadd.f32 0.0, %v7500
        %v7502 = vpop.f32.mrf.mxu0
        %7503 = vmatprep.mubr.f32.mxu0 0.0
        %7504 = vmatmul.mubr.f32.gmra.mxu0 %v7294
        %v7505 = vpop.f32.mrf.mxu0
        %v7506 = vadd.f32 0.0, %v7505
        %v7507 = vpop.f32.mrf.mxu0
        %7508 = vmatprep.mubr.f32.mxu0 0.0
        %7509 = vmatmul.mubr.f32.gmra.mxu0 %v7297
        %v7510 = vpop.f32.mrf.mxu0
        %v7511 = vadd.f32 0.0, %v7510
        %v7512 = vpop.f32.mrf.mxu0
        %7513 = vmatprep.mubr.f32.mxu0 0.0
        %7514 = vmatmul.mubr.f32.gmra.mxu0 %v7300
        %v7515 = vpop.f32.mrf.mxu0
        %v7516 = vadd.f32 0.0, %v7515
        %v7517 = vpop.f32.mrf.mxu0
        %7518 = vmatprep.mubr.f32.mxu0 0.0
        %7519 = vmatmul.mubr.f32.gmra.mxu0 %v7303
        %v7520 = vpop.f32.mrf.mxu0
        %v7521 = vadd.f32 0.0, %v7520
        %v7522 = vpop.f32.mrf.mxu0
        %7523 = vmatprep.mubr.f32.mxu0 0.0
        %7524 = vmatmul.mubr.f32.gmra.mxu0 %v7306
        %v7525 = vpop.f32.mrf.mxu0
        %v7526 = vadd.f32 0.0, %v7525
        %v7527 = vpop.f32.mrf.mxu0
        %7528 = vmatprep.mubr.f32.mxu0 0.0
        %7529 = vmatmul.mubr.f32.gmra.mxu0 %v7309
        %v7530 = vpop.f32.mrf.mxu0
        %v7531 = vadd.f32 0.0, %v7530
        %v7532 = vpop.f32.mrf.mxu0
        %7533 = vmatprep.mubr.f32.mxu0 0.0
        %7534 = vmatmul.mubr.f32.gmra.mxu0 %v7312
        %v7535 = vpop.f32.mrf.mxu0
        %v7536 = vadd.f32 0.0, %v7535
        %v7537 = vpop.f32.mrf.mxu0
        %7538 = vdwg.mxu0
        %v7539 = vadd.f32 %v7019, %v7381
        %v7540 = vadd.f32 %v7024, %v7386
        %v7541 = vadd.f32 %v7029, %v7391
        %v7542 = vadd.f32 %v7034, %v7396
        %v7543 = vadd.f32 %v7039, %v7401
        %v7544 = vadd.f32 %v7044, %v7406
        %v7545 = vadd.f32 %v7049, %v7411
        %v7546 = vadd.f32 %v7054, %v7416
        %v7547 = vadd.f32 %v7059, %v7421
        %v7548 = vadd.f32 %v7064, %v7426
        %v7549 = vadd.f32 %v7069, %v7431
        %v7550 = vadd.f32 %v7074, %v7436
        %v7551 = vadd.f32 %v7079, %v7441
        %v7552 = vadd.f32 %v7084, %v7446
        %v7553 = vadd.f32 %v7089, %v7451
        %v7554 = vadd.f32 %v7094, %v7456
        %v7555 = vadd.f32 %v7099, %v7461
        %v7556 = vadd.f32 %v7104, %v7466
        %v7557 = vadd.f32 %v7109, %v7471
        %v7558 = vadd.f32 %v7114, %v7476
        %v7559 = vadd.f32 %v7119, %v7481
        %v7560 = vadd.f32 %v7124, %v7486
        %v7561 = vadd.f32 %v7129, %v7491
        %v7562 = vadd.f32 %v7134, %v7496
        %v7563 = vadd.f32 %v7139, %v7501
        %v7564 = vadd.f32 %v7144, %v7506
        %v7565 = vadd.f32 %v7149, %v7511
        %v7566 = vadd.f32 %v7154, %v7516
        %v7567 = vadd.f32 %v7159, %v7521
        %v7568 = vadd.f32 %v7164, %v7526
        %v7569 = vadd.f32 %v7169, %v7531
        %v7570 = vadd.f32 %v7174, %v7536
        %v7571 = vld [vmem:[%s6421] sm:$0xff]
        %v7572 = vld [vmem:[%s6421 + $0x8] sm:$0xff]
        %v7573 = vld [vmem:[%s6421 + $0x18] sm:$0xff]
        %v7574 = vld [vmem:[%s6421 + $0x20] sm:$0xff]
        %v7575 = vld [vmem:[%s6421 + $0x30] sm:$0xff]
        %v7576 = vld [vmem:[%s6421 + $0x38] sm:$0xff]
        %v7577 = vld [vmem:[%s6421 + $0x48] sm:$0xff]
        %v7578 = vld [vmem:[%s6421 + $0x50] sm:$0xff]
        %v7579 = vld [vmem:[%s6421 + $0x60] sm:$0xff]
        %v7580 = vld [vmem:[%s6421 + $0x68] sm:$0xff]
        %v7581 = vld [vmem:[%s6421 + $0x78] sm:$0xff]
        %v7582 = vld [vmem:[%s6421 + $0x80] sm:$0xff]
        %v7583 = vld [vmem:[%s6421 + $0x90] sm:$0xff]
        %v7584 = vld [vmem:[%s6421 + $0x98] sm:$0xff]
        %v7585 = vld [vmem:[%s6421 + $0xa8] sm:$0xff]
        %v7586 = vld [vmem:[%s6421 + $0xb0] sm:$0xff]
        %v7587 = vld [vmem:[%s6421 + $0xc0] sm:$0xff]
        %v7588 = vld [vmem:[%s6421 + $0xc8] sm:$0xff]
        %v7589 = vld [vmem:[%s6421 + $0xd8] sm:$0xff]
        %v7590 = vld [vmem:[%s6421 + $0xe0] sm:$0xff]
        %v7591 = vld [vmem:[%s6421 + $0xf0] sm:$0xff]
        %v7592 = vld [vmem:[%s6421 + $0xf8] sm:$0xff]
        %v7593 = vld [vmem:[%s6421 + $0x108] sm:$0xff]
        %v7594 = vld [vmem:[%s6421 + $0x110] sm:$0xff]
        %v7595 = vld [vmem:[%s6421 + $0x120] sm:$0xff]
        %v7596 = vld [vmem:[%s6421 + $0x128] sm:$0xff]
        %v7597 = vld [vmem:[%s6421 + $0x138] sm:$0xff]
        %v7598 = vld [vmem:[%s6421 + $0x140] sm:$0xff]
        %v7599 = vld [vmem:[%s6421 + $0x150] sm:$0xff]
        %v7600 = vld [vmem:[%s6421 + $0x158] sm:$0xff]
        %v7601 = vld [vmem:[%s6421 + $0x168] sm:$0xff]
        %v7602 = vld [vmem:[%s6421 + $0x170] sm:$0xff]
        %s7603 = scalar_lea.vmem %s4, 192
        %v7604 = vld [vmem:[%s7603] sm:$0xff]
        %v7605 = vld [vmem:[%s7603 + $0x8] sm:$0xff]
        %v7606 = vld [vmem:[%s7603 + $0x10] sm:$0xff]
        %v7607 = vld [vmem:[%s7603 + $0x18] sm:$0xff]
        %v7608 = vld [vmem:[%s7603 + $0x20] sm:$0xff]
        %v7609 = vld [vmem:[%s7603 + $0x28] sm:$0xff]
        %v7610 = vld [vmem:[%s7603 + $0x30] sm:$0xff]
        %v7611 = vld [vmem:[%s7603 + $0x38] sm:$0xff]
        %v7613 = vsel %vm6076, %v7571, 0
        %v7616 = vsel %vm6076, %v7572, 0
        %v7619 = vsel %vm6076, %v7573, 0
        %v7622 = vsel %vm6076, %v7574, 0
        %v7625 = vsel %vm6076, %v7575, 0
        %v7628 = vsel %vm6076, %v7576, 0
        %v7631 = vsel %vm6076, %v7577, 0
        %v7634 = vsel %vm6076, %v7578, 0
        %v7637 = vsel %vm6076, %v7579, 0
        %v7640 = vsel %vm6076, %v7580, 0
        %v7643 = vsel %vm6076, %v7581, 0
        %v7646 = vsel %vm6076, %v7582, 0
        %v7649 = vsel %vm6076, %v7583, 0
        %v7652 = vsel %vm6076, %v7584, 0
        %v7655 = vsel %vm6076, %v7585, 0
        %v7658 = vsel %vm6076, %v7586, 0
        %v7661 = vsel %vm6076, %v7587, 0
        %v7664 = vsel %vm6076, %v7588, 0
        %v7667 = vsel %vm6076, %v7589, 0
        %v7670 = vsel %vm6076, %v7590, 0
        %v7673 = vsel %vm6076, %v7591, 0
        %v7676 = vsel %vm6076, %v7592, 0
        %v7679 = vsel %vm6076, %v7593, 0
        %v7682 = vsel %vm6076, %v7594, 0
        %v7685 = vsel %vm6076, %v7595, 0
        %v7688 = vsel %vm6076, %v7596, 0
        %v7691 = vsel %vm6076, %v7597, 0
        %v7694 = vsel %vm6076, %v7598, 0
        %v7697 = vsel %vm6076, %v7599, 0
        %v7700 = vsel %vm6076, %v7600, 0
        %v7703 = vsel %vm6076, %v7601, 0
        %v7706 = vsel %vm6076, %v7602, 0
        %7708 = vmatprep.subr.mxu0 0.0
        %7709 = vmatpush1.msra.mxu0 0.0
        %7710 = vmatprep.subr.mxu0 0.0
        %7711 = vmatpush1.msra.mxu0 0.0
        %7712 = vmatprep.subr.mxu0 0.0
        %7713 = vmatpush1.msra.mxu0 0.0
        %7714 = vmatprep.subr.mxu0 0.0
        %7715 = vmatpush1.msra.mxu0 0.0
        %7716 = vmatprep.subr.mxu0 0.0
        %7717 = vmatpush1.msra.mxu0 0.0
        %7718 = vmatprep.subr.mxu0 0.0
        %7719 = vmatpush1.msra.mxu0 0.0
        %7720 = vmatprep.subr.mxu0 0.0
        %7721 = vmatpush1.msra.mxu0 0.0
        %7722 = vmatprep.subr.mxu0 0.0
        %7723 = vmatpush1.msra.mxu0 0.0
        %7724 = vmatprep.subr.mxu0 0.0
        %7725 = vmatpush1.msra.mxu0 %v7611
        %7726 = vmatprep.subr.mxu0 0.0
        %7727 = vmatpush1.msra.mxu0 %v7610
        %7728 = vmatprep.subr.mxu0 0.0
        %7729 = vmatpush1.msra.mxu0 %v7609
        %7730 = vmatprep.subr.mxu0 0.0
        %7731 = vmatpush1.msra.mxu0 %v7608
        %7732 = vmatprep.subr.mxu0 0.0
        %7733 = vmatpush1.msra.mxu0 %v7607
        %7734 = vmatprep.subr.mxu0 0.0
        %7735 = vmatpush1.msra.mxu0 %v7606
        %7736 = vmatprep.subr.mxu0 0.0
        %7737 = vmatpush1.msra.mxu0 %v7605
        %7738 = vmatprep.subr.mxu0 0.0
        %7739 = vmatpush1.msra.mxu0 %v7604
        %7740 = vmatprep.subr.mxu0 0.0
        %7741 = vmatpush2.msra.mxu0 0.0
        %7742 = vmatprep.subr.mxu0 0.0
        %7743 = vmatpush2.msra.mxu0 0.0
        %7744 = vmatprep.subr.mxu0 0.0
        %7745 = vmatpush2.msra.mxu0 0.0
        %7746 = vmatprep.subr.mxu0 0.0
        %7747 = vmatpush2.msra.mxu0 0.0
        %7748 = vmatprep.subr.mxu0 0.0
        %7749 = vmatpush2.msra.mxu0 0.0
        %7750 = vmatprep.subr.mxu0 0.0
        %7751 = vmatpush2.msra.mxu0 0.0
        %7752 = vmatprep.subr.mxu0 0.0
        %7753 = vmatpush2.msra.mxu0 0.0
        %7754 = vmatprep.subr.mxu0 0.0
        %7755 = vmatpush2.msra.mxu0 0.0
        %7756 = vmatprep.subr.mxu0 0.0
        %7757 = vmatpush2.msra.mxu0 0.0
        %7758 = vmatprep.subr.mxu0 0.0
        %7759 = vmatpush2.msra.mxu0 0.0
        %7760 = vmatprep.subr.mxu0 0.0
        %7761 = vmatpush2.msra.mxu0 0.0
        %7762 = vmatprep.subr.mxu0 0.0
        %7763 = vmatpush2.msra.mxu0 0.0
        %7764 = vmatprep.subr.mxu0 0.0
        %7765 = vmatpush2.msra.mxu0 0.0
        %7766 = vmatprep.subr.mxu0 0.0
        %7767 = vmatpush2.msra.mxu0 0.0
        %7768 = vmatprep.subr.mxu0 0.0
        %7769 = vmatpush2.msra.mxu0 0.0
        %7770 = vmatprep.subr.mxu0 0.0
        %7771 = vmatpush2.msra.mxu0 0.0
        %7772 = vmatprep.mubr.f32.mxu0 0.0
        %7773 = vmatmul.mubr.f32.gmra.mxu0 %v7613
        %v7774 = vpop.f32.mrf.mxu0
        %v7775 = vadd.f32 0.0, %v7774
        %v7776 = vpop.f32.mrf.mxu0
        %7777 = vmatprep.mubr.f32.mxu0 0.0
        %7778 = vmatmul.mubr.f32.gmra.mxu0 %v7616
        %v7779 = vpop.f32.mrf.mxu0
        %v7780 = vadd.f32 0.0, %v7779
        %v7781 = vpop.f32.mrf.mxu0
        %7782 = vmatprep.mubr.f32.mxu0 0.0
        %7783 = vmatmul.mubr.f32.gmra.mxu0 %v7619
        %v7784 = vpop.f32.mrf.mxu0
        %v7785 = vadd.f32 0.0, %v7784
        %v7786 = vpop.f32.mrf.mxu0
        %7787 = vmatprep.mubr.f32.mxu0 0.0
        %7788 = vmatmul.mubr.f32.gmra.mxu0 %v7622
        %v7789 = vpop.f32.mrf.mxu0
        %v7790 = vadd.f32 0.0, %v7789
        %v7791 = vpop.f32.mrf.mxu0
        %7792 = vmatprep.mubr.f32.mxu0 0.0
        %7793 = vmatmul.mubr.f32.gmra.mxu0 %v7625
        %v7794 = vpop.f32.mrf.mxu0
        %v7795 = vadd.f32 0.0, %v7794
        %v7796 = vpop.f32.mrf.mxu0
        %7797 = vmatprep.mubr.f32.mxu0 0.0
        %7798 = vmatmul.mubr.f32.gmra.mxu0 %v7628
        %v7799 = vpop.f32.mrf.mxu0
        %v7800 = vadd.f32 0.0, %v7799
        %v7801 = vpop.f32.mrf.mxu0
        %7802 = vmatprep.mubr.f32.mxu0 0.0
        %7803 = vmatmul.mubr.f32.gmra.mxu0 %v7631
        %v7804 = vpop.f32.mrf.mxu0
        %v7805 = vadd.f32 0.0, %v7804
        %v7806 = vpop.f32.mrf.mxu0
        %7807 = vmatprep.mubr.f32.mxu0 0.0
        %7808 = vmatmul.mubr.f32.gmra.mxu0 %v7634
        %v7809 = vpop.f32.mrf.mxu0
        %v7810 = vadd.f32 0.0, %v7809
        %v7811 = vpop.f32.mrf.mxu0
        %7812 = vmatprep.mubr.f32.mxu0 0.0
        %7813 = vmatmul.mubr.f32.gmra.mxu0 %v7637
        %v7814 = vpop.f32.mrf.mxu0
        %v7815 = vadd.f32 0.0, %v7814
        %v7816 = vpop.f32.mrf.mxu0
        %7817 = vmatprep.mubr.f32.mxu0 0.0
        %7818 = vmatmul.mubr.f32.gmra.mxu0 %v7640
        %v7819 = vpop.f32.mrf.mxu0
        %v7820 = vadd.f32 0.0, %v7819
        %v7821 = vpop.f32.mrf.mxu0
        %7822 = vmatprep.mubr.f32.mxu0 0.0
        %7823 = vmatmul.mubr.f32.gmra.mxu0 %v7643
        %v7824 = vpop.f32.mrf.mxu0
        %v7825 = vadd.f32 0.0, %v7824
        %v7826 = vpop.f32.mrf.mxu0
        %7827 = vmatprep.mubr.f32.mxu0 0.0
        %7828 = vmatmul.mubr.f32.gmra.mxu0 %v7646
        %v7829 = vpop.f32.mrf.mxu0
        %v7830 = vadd.f32 0.0, %v7829
        %v7831 = vpop.f32.mrf.mxu0
        %7832 = vmatprep.mubr.f32.mxu0 0.0
        %7833 = vmatmul.mubr.f32.gmra.mxu0 %v7649
        %v7834 = vpop.f32.mrf.mxu0
        %v7835 = vadd.f32 0.0, %v7834
        %v7836 = vpop.f32.mrf.mxu0
        %7837 = vmatprep.mubr.f32.mxu0 0.0
        %7838 = vmatmul.mubr.f32.gmra.mxu0 %v7652
        %v7839 = vpop.f32.mrf.mxu0
        %v7840 = vadd.f32 0.0, %v7839
        %v7841 = vpop.f32.mrf.mxu0
        %7842 = vmatprep.mubr.f32.mxu0 0.0
        %7843 = vmatmul.mubr.f32.gmra.mxu0 %v7655
        %v7844 = vpop.f32.mrf.mxu0
        %v7845 = vadd.f32 0.0, %v7844
        %v7846 = vpop.f32.mrf.mxu0
        %7847 = vmatprep.mubr.f32.mxu0 0.0
        %7848 = vmatmul.mubr.f32.gmra.mxu0 %v7658
        %v7849 = vpop.f32.mrf.mxu0
        %v7850 = vadd.f32 0.0, %v7849
        %v7851 = vpop.f32.mrf.mxu0
        %7852 = vmatprep.mubr.f32.mxu0 0.0
        %7853 = vmatmul.mubr.f32.gmra.mxu0 %v7661
        %v7854 = vpop.f32.mrf.mxu0
        %v7855 = vadd.f32 0.0, %v7854
        %v7856 = vpop.f32.mrf.mxu0
        %7857 = vmatprep.mubr.f32.mxu0 0.0
        %7858 = vmatmul.mubr.f32.gmra.mxu0 %v7664
        %v7859 = vpop.f32.mrf.mxu0
        %v7860 = vadd.f32 0.0, %v7859
        %v7861 = vpop.f32.mrf.mxu0
        %7862 = vmatprep.mubr.f32.mxu0 0.0
        %7863 = vmatmul.mubr.f32.gmra.mxu0 %v7667
        %v7864 = vpop.f32.mrf.mxu0
        %v7865 = vadd.f32 0.0, %v7864
        %v7866 = vpop.f32.mrf.mxu0
        %7867 = vmatprep.mubr.f32.mxu0 0.0
        %7868 = vmatmul.mubr.f32.gmra.mxu0 %v7670
        %v7869 = vpop.f32.mrf.mxu0
        %v7870 = vadd.f32 0.0, %v7869
        %v7871 = vpop.f32.mrf.mxu0
        %7872 = vmatprep.mubr.f32.mxu0 0.0
        %7873 = vmatmul.mubr.f32.gmra.mxu0 %v7673
        %v7874 = vpop.f32.mrf.mxu0
        %v7875 = vadd.f32 0.0, %v7874
        %v7876 = vpop.f32.mrf.mxu0
        %7877 = vmatprep.mubr.f32.mxu0 0.0
        %7878 = vmatmul.mubr.f32.gmra.mxu0 %v7676
        %v7879 = vpop.f32.mrf.mxu0
        %v7880 = vadd.f32 0.0, %v7879
        %v7881 = vpop.f32.mrf.mxu0
        %7882 = vmatprep.mubr.f32.mxu0 0.0
        %7883 = vmatmul.mubr.f32.gmra.mxu0 %v7679
        %v7884 = vpop.f32.mrf.mxu0
        %v7885 = vadd.f32 0.0, %v7884
        %v7886 = vpop.f32.mrf.mxu0
        %7887 = vmatprep.mubr.f32.mxu0 0.0
        %7888 = vmatmul.mubr.f32.gmra.mxu0 %v7682
        %v7889 = vpop.f32.mrf.mxu0
        %v7890 = vadd.f32 0.0, %v7889
        %v7891 = vpop.f32.mrf.mxu0
        %7892 = vmatprep.mubr.f32.mxu0 0.0
        %7893 = vmatmul.mubr.f32.gmra.mxu0 %v7685
        %v7894 = vpop.f32.mrf.mxu0
        %v7895 = vadd.f32 0.0, %v7894
        %v7896 = vpop.f32.mrf.mxu0
        %7897 = vmatprep.mubr.f32.mxu0 0.0
        %7898 = vmatmul.mubr.f32.gmra.mxu0 %v7688
        %v7899 = vpop.f32.mrf.mxu0
        %v7900 = vadd.f32 0.0, %v7899
        %v7901 = vpop.f32.mrf.mxu0
        %7902 = vmatprep.mubr.f32.mxu0 0.0
        %7903 = vmatmul.mubr.f32.gmra.mxu0 %v7691
        %v7904 = vpop.f32.mrf.mxu0
        %v7905 = vadd.f32 0.0, %v7904
        %v7906 = vpop.f32.mrf.mxu0
        %7907 = vmatprep.mubr.f32.mxu0 0.0
        %7908 = vmatmul.mubr.f32.gmra.mxu0 %v7694
        %v7909 = vpop.f32.mrf.mxu0
        %v7910 = vadd.f32 0.0, %v7909
        %v7911 = vpop.f32.mrf.mxu0
        %7912 = vmatprep.mubr.f32.mxu0 0.0
        %7913 = vmatmul.mubr.f32.gmra.mxu0 %v7697
        %v7914 = vpop.f32.mrf.mxu0
        %v7915 = vadd.f32 0.0, %v7914
        %v7916 = vpop.f32.mrf.mxu0
        %7917 = vmatprep.mubr.f32.mxu0 0.0
        %7918 = vmatmul.mubr.f32.gmra.mxu0 %v7700
        %v7919 = vpop.f32.mrf.mxu0
        %v7920 = vadd.f32 0.0, %v7919
        %v7921 = vpop.f32.mrf.mxu0
        %7922 = vmatprep.mubr.f32.mxu0 0.0
        %7923 = vmatmul.mubr.f32.gmra.mxu0 %v7703
        %v7924 = vpop.f32.mrf.mxu0
        %v7925 = vadd.f32 0.0, %v7924
        %v7926 = vpop.f32.mrf.mxu0
        %7927 = vmatprep.mubr.f32.mxu0 0.0
        %7928 = vmatmul.mubr.f32.gmra.mxu0 %v7706
        %v7929 = vpop.f32.mrf.mxu0
        %v7930 = vadd.f32 0.0, %v7929
        %v7931 = vpop.f32.mrf.mxu0
        %7932 = vdwg.mxu0
        %v7933 = vadd.f32 %v7539, %v7775
        %v7934 = vadd.f32 %v7540, %v7780
        %v7935 = vadd.f32 %v7541, %v7785
        %v7936 = vadd.f32 %v7542, %v7790
        %v7937 = vadd.f32 %v7543, %v7795
        %v7938 = vadd.f32 %v7544, %v7800
        %v7939 = vadd.f32 %v7545, %v7805
        %v7940 = vadd.f32 %v7546, %v7810
        %v7941 = vadd.f32 %v7547, %v7815
        %v7942 = vadd.f32 %v7548, %v7820
        %v7943 = vadd.f32 %v7549, %v7825
        %v7944 = vadd.f32 %v7550, %v7830
        %v7945 = vadd.f32 %v7551, %v7835
        %v7946 = vadd.f32 %v7552, %v7840
        %v7947 = vadd.f32 %v7553, %v7845
        %v7948 = vadd.f32 %v7554, %v7850
        %v7949 = vadd.f32 %v7555, %v7855
        %v7950 = vadd.f32 %v7556, %v7860
        %v7951 = vadd.f32 %v7557, %v7865
        %v7952 = vadd.f32 %v7558, %v7870
        %v7953 = vadd.f32 %v7559, %v7875
        %v7954 = vadd.f32 %v7560, %v7880
        %v7955 = vadd.f32 %v7561, %v7885
        %v7956 = vadd.f32 %v7562, %v7890
        %v7957 = vadd.f32 %v7563, %v7895
        %v7958 = vadd.f32 %v7564, %v7900
        %v7959 = vadd.f32 %v7565, %v7905
        %v7960 = vadd.f32 %v7566, %v7910
        %v7961 = vadd.f32 %v7567, %v7915
        %v7962 = vadd.f32 %v7568, %v7920
        %v7963 = vadd.f32 %v7569, %v7925
        %v7964 = vadd.f32 %v7570, %v7930
        %v7965 = vld [vmem:[%s6421 + $0x1] sm:$0xff]
        %v7966 = vld [vmem:[%s6421 + $0x9] sm:$0xff]
        %v7967 = vld [vmem:[%s6421 + $0x19] sm:$0xff]
        %v7968 = vld [vmem:[%s6421 + $0x21] sm:$0xff]
        %v7969 = vld [vmem:[%s6421 + $0x31] sm:$0xff]
        %v7970 = vld [vmem:[%s6421 + $0x39] sm:$0xff]
        %v7971 = vld [vmem:[%s6421 + $0x49] sm:$0xff]
        %v7972 = vld [vmem:[%s6421 + $0x51] sm:$0xff]
        %v7973 = vld [vmem:[%s6421 + $0x61] sm:$0xff]
        %v7974 = vld [vmem:[%s6421 + $0x69] sm:$0xff]
        %v7975 = vld [vmem:[%s6421 + $0x79] sm:$0xff]
        %v7976 = vld [vmem:[%s6421 + $0x81] sm:$0xff]
        %v7977 = vld [vmem:[%s6421 + $0x91] sm:$0xff]
        %v7978 = vld [vmem:[%s6421 + $0x99] sm:$0xff]
        %v7979 = vld [vmem:[%s6421 + $0xa9] sm:$0xff]
        %v7980 = vld [vmem:[%s6421 + $0xb1] sm:$0xff]
        %v7981 = vld [vmem:[%s6421 + $0xc1] sm:$0xff]
        %v7982 = vld [vmem:[%s6421 + $0xc9] sm:$0xff]
        %v7983 = vld [vmem:[%s6421 + $0xd9] sm:$0xff]
        %v7984 = vld [vmem:[%s6421 + $0xe1] sm:$0xff]
        %v7985 = vld [vmem:[%s6421 + $0xf1] sm:$0xff]
        %v7986 = vld [vmem:[%s6421 + $0xf9] sm:$0xff]
        %v7987 = vld [vmem:[%s6421 + $0x109] sm:$0xff]
        %v7988 = vld [vmem:[%s6421 + $0x111] sm:$0xff]
        %v7989 = vld [vmem:[%s6421 + $0x121] sm:$0xff]
        %v7990 = vld [vmem:[%s6421 + $0x129] sm:$0xff]
        %v7991 = vld [vmem:[%s6421 + $0x139] sm:$0xff]
        %v7992 = vld [vmem:[%s6421 + $0x141] sm:$0xff]
        %v7993 = vld [vmem:[%s6421 + $0x151] sm:$0xff]
        %v7994 = vld [vmem:[%s6421 + $0x159] sm:$0xff]
        %v7995 = vld [vmem:[%s6421 + $0x169] sm:$0xff]
        %v7996 = vld [vmem:[%s6421 + $0x171] sm:$0xff]
        %s7997 = scalar_lea.vmem %s4, 256
        %v7998 = vld [vmem:[%s7997] sm:$0xff]
        %v7999 = vld [vmem:[%s7997 + $0x8] sm:$0xff]
        %v8000 = vld [vmem:[%s7997 + $0x10] sm:$0xff]
        %v8001 = vld [vmem:[%s7997 + $0x18] sm:$0xff]
        %v8002 = vld [vmem:[%s7997 + $0x20] sm:$0xff]
        %v8003 = vld [vmem:[%s7997 + $0x28] sm:$0xff]
        %v8004 = vld [vmem:[%s7997 + $0x30] sm:$0xff]
        %v8005 = vld [vmem:[%s7997 + $0x38] sm:$0xff]
        %v8007 = vsel %vm6076, %v7965, 0
        %v8010 = vsel %vm6076, %v7966, 0
        %v8013 = vsel %vm6076, %v7967, 0
        %v8016 = vsel %vm6076, %v7968, 0
        %v8019 = vsel %vm6076, %v7969, 0
        %v8022 = vsel %vm6076, %v7970, 0
        %v8025 = vsel %vm6076, %v7971, 0
        %v8028 = vsel %vm6076, %v7972, 0
        %v8031 = vsel %vm6076, %v7973, 0
        %v8034 = vsel %vm6076, %v7974, 0
        %v8037 = vsel %vm6076, %v7975, 0
        %v8040 = vsel %vm6076, %v7976, 0
        %v8043 = vsel %vm6076, %v7977, 0
        %v8046 = vsel %vm6076, %v7978, 0
        %v8049 = vsel %vm6076, %v7979, 0
        %v8052 = vsel %vm6076, %v7980, 0
        %v8055 = vsel %vm6076, %v7981, 0
        %v8058 = vsel %vm6076, %v7982, 0
        %v8061 = vsel %vm6076, %v7983, 0
        %v8064 = vsel %vm6076, %v7984, 0
        %v8067 = vsel %vm6076, %v7985, 0
        %v8070 = vsel %vm6076, %v7986, 0
        %v8073 = vsel %vm6076, %v7987, 0
        %v8076 = vsel %vm6076, %v7988, 0
        %v8079 = vsel %vm6076, %v7989, 0
        %v8082 = vsel %vm6076, %v7990, 0
        %v8085 = vsel %vm6076, %v7991, 0
        %v8088 = vsel %vm6076, %v7992, 0
        %v8091 = vsel %vm6076, %v7993, 0
        %v8094 = vsel %vm6076, %v7994, 0
        %v8097 = vsel %vm6076, %v7995, 0
        %v8100 = vsel %vm6076, %v7996, 0
        %8102 = vmatprep.subr.mxu0 0.0
        %8103 = vmatpush1.msra.mxu0 0.0
        %8104 = vmatprep.subr.mxu0 0.0
        %8105 = vmatpush1.msra.mxu0 0.0
        %8106 = vmatprep.subr.mxu0 0.0
        %8107 = vmatpush1.msra.mxu0 0.0
        %8108 = vmatprep.subr.mxu0 0.0
        %8109 = vmatpush1.msra.mxu0 0.0
        %8110 = vmatprep.subr.mxu0 0.0
        %8111 = vmatpush1.msra.mxu0 0.0
        %8112 = vmatprep.subr.mxu0 0.0
        %8113 = vmatpush1.msra.mxu0 0.0
        %8114 = vmatprep.subr.mxu0 0.0
        %8115 = vmatpush1.msra.mxu0 0.0
        %8116 = vmatprep.subr.mxu0 0.0
        %8117 = vmatpush1.msra.mxu0 0.0
        %8118 = vmatprep.subr.mxu0 0.0
        %8119 = vmatpush1.msra.mxu0 %v8005
        %8120 = vmatprep.subr.mxu0 0.0
        %8121 = vmatpush1.msra.mxu0 %v8004
        %8122 = vmatprep.subr.mxu0 0.0
        %8123 = vmatpush1.msra.mxu0 %v8003
        %8124 = vmatprep.subr.mxu0 0.0
        %8125 = vmatpush1.msra.mxu0 %v8002
        %8126 = vmatprep.subr.mxu0 0.0
        %8127 = vmatpush1.msra.mxu0 %v8001
        %8128 = vmatprep.subr.mxu0 0.0
        %8129 = vmatpush1.msra.mxu0 %v8000
        %8130 = vmatprep.subr.mxu0 0.0
        %8131 = vmatpush1.msra.mxu0 %v7999
        %8132 = vmatprep.subr.mxu0 0.0
        %8133 = vmatpush1.msra.mxu0 %v7998
        %8134 = vmatprep.subr.mxu0 0.0
        %8135 = vmatpush2.msra.mxu0 0.0
        %8136 = vmatprep.subr.mxu0 0.0
        %8137 = vmatpush2.msra.mxu0 0.0
        %8138 = vmatprep.subr.mxu0 0.0
        %8139 = vmatpush2.msra.mxu0 0.0
        %8140 = vmatprep.subr.mxu0 0.0
        %8141 = vmatpush2.msra.mxu0 0.0
        %8142 = vmatprep.subr.mxu0 0.0
        %8143 = vmatpush2.msra.mxu0 0.0
        %8144 = vmatprep.subr.mxu0 0.0
        %8145 = vmatpush2.msra.mxu0 0.0
        %8146 = vmatprep.subr.mxu0 0.0
        %8147 = vmatpush2.msra.mxu0 0.0
        %8148 = vmatprep.subr.mxu0 0.0
        %8149 = vmatpush2.msra.mxu0 0.0
        %8150 = vmatprep.subr.mxu0 0.0
        %8151 = vmatpush2.msra.mxu0 0.0
        %8152 = vmatprep.subr.mxu0 0.0
        %8153 = vmatpush2.msra.mxu0 0.0
        %8154 = vmatprep.subr.mxu0 0.0
        %8155 = vmatpush2.msra.mxu0 0.0
        %8156 = vmatprep.subr.mxu0 0.0
        %8157 = vmatpush2.msra.mxu0 0.0
        %8158 = vmatprep.subr.mxu0 0.0
        %8159 = vmatpush2.msra.mxu0 0.0
        %8160 = vmatprep.subr.mxu0 0.0
        %8161 = vmatpush2.msra.mxu0 0.0
        %8162 = vmatprep.subr.mxu0 0.0
        %8163 = vmatpush2.msra.mxu0 0.0
        %8164 = vmatprep.subr.mxu0 0.0
        %8165 = vmatpush2.msra.mxu0 0.0
        %8166 = vmatprep.mubr.f32.mxu0 0.0
        %8167 = vmatmul.mubr.f32.gmra.mxu0 %v8007
        %v8168 = vpop.f32.mrf.mxu0
        %v8169 = vadd.f32 0.0, %v8168
        %v8170 = vpop.f32.mrf.mxu0
        %8171 = vmatprep.mubr.f32.mxu0 0.0
        %8172 = vmatmul.mubr.f32.gmra.mxu0 %v8010
        %v8173 = vpop.f32.mrf.mxu0
        %v8174 = vadd.f32 0.0, %v8173
        %v8175 = vpop.f32.mrf.mxu0
        %8176 = vmatprep.mubr.f32.mxu0 0.0
        %8177 = vmatmul.mubr.f32.gmra.mxu0 %v8013
        %v8178 = vpop.f32.mrf.mxu0
        %v8179 = vadd.f32 0.0, %v8178
        %v8180 = vpop.f32.mrf.mxu0
        %8181 = vmatprep.mubr.f32.mxu0 0.0
        %8182 = vmatmul.mubr.f32.gmra.mxu0 %v8016
        %v8183 = vpop.f32.mrf.mxu0
        %v8184 = vadd.f32 0.0, %v8183
        %v8185 = vpop.f32.mrf.mxu0
        %8186 = vmatprep.mubr.f32.mxu0 0.0
        %8187 = vmatmul.mubr.f32.gmra.mxu0 %v8019
        %v8188 = vpop.f32.mrf.mxu0
        %v8189 = vadd.f32 0.0, %v8188
        %v8190 = vpop.f32.mrf.mxu0
        %8191 = vmatprep.mubr.f32.mxu0 0.0
        %8192 = vmatmul.mubr.f32.gmra.mxu0 %v8022
        %v8193 = vpop.f32.mrf.mxu0
        %v8194 = vadd.f32 0.0, %v8193
        %v8195 = vpop.f32.mrf.mxu0
        %8196 = vmatprep.mubr.f32.mxu0 0.0
        %8197 = vmatmul.mubr.f32.gmra.mxu0 %v8025
        %v8198 = vpop.f32.mrf.mxu0
        %v8199 = vadd.f32 0.0, %v8198
        %v8200 = vpop.f32.mrf.mxu0
        %8201 = vmatprep.mubr.f32.mxu0 0.0
        %8202 = vmatmul.mubr.f32.gmra.mxu0 %v8028
        %v8203 = vpop.f32.mrf.mxu0
        %v8204 = vadd.f32 0.0, %v8203
        %v8205 = vpop.f32.mrf.mxu0
        %8206 = vmatprep.mubr.f32.mxu0 0.0
        %8207 = vmatmul.mubr.f32.gmra.mxu0 %v8031
        %v8208 = vpop.f32.mrf.mxu0
        %v8209 = vadd.f32 0.0, %v8208
        %v8210 = vpop.f32.mrf.mxu0
        %8211 = vmatprep.mubr.f32.mxu0 0.0
        %8212 = vmatmul.mubr.f32.gmra.mxu0 %v8034
        %v8213 = vpop.f32.mrf.mxu0
        %v8214 = vadd.f32 0.0, %v8213
        %v8215 = vpop.f32.mrf.mxu0
        %8216 = vmatprep.mubr.f32.mxu0 0.0
        %8217 = vmatmul.mubr.f32.gmra.mxu0 %v8037
        %v8218 = vpop.f32.mrf.mxu0
        %v8219 = vadd.f32 0.0, %v8218
        %v8220 = vpop.f32.mrf.mxu0
        %8221 = vmatprep.mubr.f32.mxu0 0.0
        %8222 = vmatmul.mubr.f32.gmra.mxu0 %v8040
        %v8223 = vpop.f32.mrf.mxu0
        %v8224 = vadd.f32 0.0, %v8223
        %v8225 = vpop.f32.mrf.mxu0
        %8226 = vmatprep.mubr.f32.mxu0 0.0
        %8227 = vmatmul.mubr.f32.gmra.mxu0 %v8043
        %v8228 = vpop.f32.mrf.mxu0
        %v8229 = vadd.f32 0.0, %v8228
        %v8230 = vpop.f32.mrf.mxu0
        %8231 = vmatprep.mubr.f32.mxu0 0.0
        %8232 = vmatmul.mubr.f32.gmra.mxu0 %v8046
        %v8233 = vpop.f32.mrf.mxu0
        %v8234 = vadd.f32 0.0, %v8233
        %v8235 = vpop.f32.mrf.mxu0
        %8236 = vmatprep.mubr.f32.mxu0 0.0
        %8237 = vmatmul.mubr.f32.gmra.mxu0 %v8049
        %v8238 = vpop.f32.mrf.mxu0
        %v8239 = vadd.f32 0.0, %v8238
        %v8240 = vpop.f32.mrf.mxu0
        %8241 = vmatprep.mubr.f32.mxu0 0.0
        %8242 = vmatmul.mubr.f32.gmra.mxu0 %v8052
        %v8243 = vpop.f32.mrf.mxu0
        %v8244 = vadd.f32 0.0, %v8243
        %v8245 = vpop.f32.mrf.mxu0
        %8246 = vmatprep.mubr.f32.mxu0 0.0
        %8247 = vmatmul.mubr.f32.gmra.mxu0 %v8055
        %v8248 = vpop.f32.mrf.mxu0
        %v8249 = vadd.f32 0.0, %v8248
        %v8250 = vpop.f32.mrf.mxu0
        %8251 = vmatprep.mubr.f32.mxu0 0.0
        %8252 = vmatmul.mubr.f32.gmra.mxu0 %v8058
        %v8253 = vpop.f32.mrf.mxu0
        %v8254 = vadd.f32 0.0, %v8253
        %v8255 = vpop.f32.mrf.mxu0
        %8256 = vmatprep.mubr.f32.mxu0 0.0
        %8257 = vmatmul.mubr.f32.gmra.mxu0 %v8061
        %v8258 = vpop.f32.mrf.mxu0
        %v8259 = vadd.f32 0.0, %v8258
        %v8260 = vpop.f32.mrf.mxu0
        %8261 = vmatprep.mubr.f32.mxu0 0.0
        %8262 = vmatmul.mubr.f32.gmra.mxu0 %v8064
        %v8263 = vpop.f32.mrf.mxu0
        %v8264 = vadd.f32 0.0, %v8263
        %v8265 = vpop.f32.mrf.mxu0
        %8266 = vmatprep.mubr.f32.mxu0 0.0
        %8267 = vmatmul.mubr.f32.gmra.mxu0 %v8067
        %v8268 = vpop.f32.mrf.mxu0
        %v8269 = vadd.f32 0.0, %v8268
        %v8270 = vpop.f32.mrf.mxu0
        %8271 = vmatprep.mubr.f32.mxu0 0.0
        %8272 = vmatmul.mubr.f32.gmra.mxu0 %v8070
        %v8273 = vpop.f32.mrf.mxu0
        %v8274 = vadd.f32 0.0, %v8273
        %v8275 = vpop.f32.mrf.mxu0
        %8276 = vmatprep.mubr.f32.mxu0 0.0
        %8277 = vmatmul.mubr.f32.gmra.mxu0 %v8073
        %v8278 = vpop.f32.mrf.mxu0
        %v8279 = vadd.f32 0.0, %v8278
        %v8280 = vpop.f32.mrf.mxu0
        %8281 = vmatprep.mubr.f32.mxu0 0.0
        %8282 = vmatmul.mubr.f32.gmra.mxu0 %v8076
        %v8283 = vpop.f32.mrf.mxu0
        %v8284 = vadd.f32 0.0, %v8283
        %v8285 = vpop.f32.mrf.mxu0
        %8286 = vmatprep.mubr.f32.mxu0 0.0
        %8287 = vmatmul.mubr.f32.gmra.mxu0 %v8079
        %v8288 = vpop.f32.mrf.mxu0
        %v8289 = vadd.f32 0.0, %v8288
        %v8290 = vpop.f32.mrf.mxu0
        %8291 = vmatprep.mubr.f32.mxu0 0.0
        %8292 = vmatmul.mubr.f32.gmra.mxu0 %v8082
        %v8293 = vpop.f32.mrf.mxu0
        %v8294 = vadd.f32 0.0, %v8293
        %v8295 = vpop.f32.mrf.mxu0
        %8296 = vmatprep.mubr.f32.mxu0 0.0
        %8297 = vmatmul.mubr.f32.gmra.mxu0 %v8085
        %v8298 = vpop.f32.mrf.mxu0
        %v8299 = vadd.f32 0.0, %v8298
        %v8300 = vpop.f32.mrf.mxu0
        %8301 = vmatprep.mubr.f32.mxu0 0.0
        %8302 = vmatmul.mubr.f32.gmra.mxu0 %v8088
        %v8303 = vpop.f32.mrf.mxu0
        %v8304 = vadd.f32 0.0, %v8303
        %v8305 = vpop.f32.mrf.mxu0
        %8306 = vmatprep.mubr.f32.mxu0 0.0
        %8307 = vmatmul.mubr.f32.gmra.mxu0 %v8091
        %v8308 = vpop.f32.mrf.mxu0
        %v8309 = vadd.f32 0.0, %v8308
        %v8310 = vpop.f32.mrf.mxu0
        %8311 = vmatprep.mubr.f32.mxu0 0.0
        %8312 = vmatmul.mubr.f32.gmra.mxu0 %v8094
        %v8313 = vpop.f32.mrf.mxu0
        %v8314 = vadd.f32 0.0, %v8313
        %v8315 = vpop.f32.mrf.mxu0
        %8316 = vmatprep.mubr.f32.mxu0 0.0
        %8317 = vmatmul.mubr.f32.gmra.mxu0 %v8097
        %v8318 = vpop.f32.mrf.mxu0
        %v8319 = vadd.f32 0.0, %v8318
        %v8320 = vpop.f32.mrf.mxu0
        %8321 = vmatprep.mubr.f32.mxu0 0.0
        %8322 = vmatmul.mubr.f32.gmra.mxu0 %v8100
        %v8323 = vpop.f32.mrf.mxu0
        %v8324 = vadd.f32 0.0, %v8323
        %v8325 = vpop.f32.mrf.mxu0
        %8326 = vdwg.mxu0
        %v8327 = vadd.f32 %v7933, %v8169
        %v8328 = vadd.f32 %v7934, %v8174
        %v8329 = vadd.f32 %v7935, %v8179
        %v8330 = vadd.f32 %v7936, %v8184
        %v8331 = vadd.f32 %v7937, %v8189
        %v8332 = vadd.f32 %v7938, %v8194
        %v8333 = vadd.f32 %v7939, %v8199
        %v8334 = vadd.f32 %v7940, %v8204
        %v8335 = vadd.f32 %v7941, %v8209
        %v8336 = vadd.f32 %v7942, %v8214
        %v8337 = vadd.f32 %v7943, %v8219
        %v8338 = vadd.f32 %v7944, %v8224
        %v8339 = vadd.f32 %v7945, %v8229
        %v8340 = vadd.f32 %v7946, %v8234
        %v8341 = vadd.f32 %v7947, %v8239
        %v8342 = vadd.f32 %v7948, %v8244
        %v8343 = vadd.f32 %v7949, %v8249
        %v8344 = vadd.f32 %v7950, %v8254
        %v8345 = vadd.f32 %v7951, %v8259
        %v8346 = vadd.f32 %v7952, %v8264
        %v8347 = vadd.f32 %v7953, %v8269
        %v8348 = vadd.f32 %v7954, %v8274
        %v8349 = vadd.f32 %v7955, %v8279
        %v8350 = vadd.f32 %v7956, %v8284
        %v8351 = vadd.f32 %v7957, %v8289
        %v8352 = vadd.f32 %v7958, %v8294
        %v8353 = vadd.f32 %v7959, %v8299
        %v8354 = vadd.f32 %v7960, %v8304
        %v8355 = vadd.f32 %v7961, %v8309
        %v8356 = vadd.f32 %v7962, %v8314
        %v8357 = vadd.f32 %v7963, %v8319
        %v8358 = vadd.f32 %v7964, %v8324
        %v8359 = vld [vmem:[%s6421 + $0x2] sm:$0xff]
        %v8360 = vld [vmem:[%s6421 + $0xa] sm:$0xff]
        %v8361 = vld [vmem:[%s6421 + $0x1a] sm:$0xff]
        %v8362 = vld [vmem:[%s6421 + $0x22] sm:$0xff]
        %v8363 = vld [vmem:[%s6421 + $0x32] sm:$0xff]
        %v8364 = vld [vmem:[%s6421 + $0x3a] sm:$0xff]
        %v8365 = vld [vmem:[%s6421 + $0x4a] sm:$0xff]
        %v8366 = vld [vmem:[%s6421 + $0x52] sm:$0xff]
        %v8367 = vld [vmem:[%s6421 + $0x62] sm:$0xff]
        %v8368 = vld [vmem:[%s6421 + $0x6a] sm:$0xff]
        %v8369 = vld [vmem:[%s6421 + $0x7a] sm:$0xff]
        %v8370 = vld [vmem:[%s6421 + $0x82] sm:$0xff]
        %v8371 = vld [vmem:[%s6421 + $0x92] sm:$0xff]
        %v8372 = vld [vmem:[%s6421 + $0x9a] sm:$0xff]
        %v8373 = vld [vmem:[%s6421 + $0xaa] sm:$0xff]
        %v8374 = vld [vmem:[%s6421 + $0xb2] sm:$0xff]
        %v8375 = vld [vmem:[%s6421 + $0xc2] sm:$0xff]
        %v8376 = vld [vmem:[%s6421 + $0xca] sm:$0xff]
        %v8377 = vld [vmem:[%s6421 + $0xda] sm:$0xff]
        %v8378 = vld [vmem:[%s6421 + $0xe2] sm:$0xff]
        %v8379 = vld [vmem:[%s6421 + $0xf2] sm:$0xff]
        %v8380 = vld [vmem:[%s6421 + $0xfa] sm:$0xff]
        %v8381 = vld [vmem:[%s6421 + $0x10a] sm:$0xff]
        %v8382 = vld [vmem:[%s6421 + $0x112] sm:$0xff]
        %v8383 = vld [vmem:[%s6421 + $0x122] sm:$0xff]
        %v8384 = vld [vmem:[%s6421 + $0x12a] sm:$0xff]
        %v8385 = vld [vmem:[%s6421 + $0x13a] sm:$0xff]
        %v8386 = vld [vmem:[%s6421 + $0x142] sm:$0xff]
        %v8387 = vld [vmem:[%s6421 + $0x152] sm:$0xff]
        %v8388 = vld [vmem:[%s6421 + $0x15a] sm:$0xff]
        %v8389 = vld [vmem:[%s6421 + $0x16a] sm:$0xff]
        %v8390 = vld [vmem:[%s6421 + $0x172] sm:$0xff]
        %s8391 = scalar_lea.vmem %s4, 320
        %v8392 = vld [vmem:[%s8391] sm:$0xff]
        %v8393 = vld [vmem:[%s8391 + $0x8] sm:$0xff]
        %v8394 = vld [vmem:[%s8391 + $0x10] sm:$0xff]
        %v8395 = vld [vmem:[%s8391 + $0x18] sm:$0xff]
        %v8396 = vld [vmem:[%s8391 + $0x20] sm:$0xff]
        %v8397 = vld [vmem:[%s8391 + $0x28] sm:$0xff]
        %v8398 = vld [vmem:[%s8391 + $0x30] sm:$0xff]
        %v8399 = vld [vmem:[%s8391 + $0x38] sm:$0xff]
        %v8401 = vsel %vm6076, %v8359, 0
        %v8404 = vsel %vm6076, %v8360, 0
        %v8407 = vsel %vm6076, %v8361, 0
        %v8410 = vsel %vm6076, %v8362, 0
        %v8413 = vsel %vm6076, %v8363, 0
        %v8416 = vsel %vm6076, %v8364, 0
        %v8419 = vsel %vm6076, %v8365, 0
        %v8422 = vsel %vm6076, %v8366, 0
        %v8425 = vsel %vm6076, %v8367, 0
        %v8428 = vsel %vm6076, %v8368, 0
        %v8431 = vsel %vm6076, %v8369, 0
        %v8434 = vsel %vm6076, %v8370, 0
        %v8437 = vsel %vm6076, %v8371, 0
        %v8440 = vsel %vm6076, %v8372, 0
        %v8443 = vsel %vm6076, %v8373, 0
        %v8446 = vsel %vm6076, %v8374, 0
        %v8449 = vsel %vm6076, %v8375, 0
        %v8452 = vsel %vm6076, %v8376, 0
        %v8455 = vsel %vm6076, %v8377, 0
        %v8458 = vsel %vm6076, %v8378, 0
        %v8461 = vsel %vm6076, %v8379, 0
        %v8464 = vsel %vm6076, %v8380, 0
        %v8467 = vsel %vm6076, %v8381, 0
        %v8470 = vsel %vm6076, %v8382, 0
        %v8473 = vsel %vm6076, %v8383, 0
        %v8476 = vsel %vm6076, %v8384, 0
        %v8479 = vsel %vm6076, %v8385, 0
        %v8482 = vsel %vm6076, %v8386, 0
        %v8485 = vsel %vm6076, %v8387, 0
        %v8488 = vsel %vm6076, %v8388, 0
        %v8491 = vsel %vm6076, %v8389, 0
        %v8494 = vsel %vm6076, %v8390, 0
        %8496 = vmatprep.subr.mxu0 0.0
        %8497 = vmatpush1.msra.mxu0 0.0
        %8498 = vmatprep.subr.mxu0 0.0
        %8499 = vmatpush1.msra.mxu0 0.0
        %8500 = vmatprep.subr.mxu0 0.0
        %8501 = vmatpush1.msra.mxu0 0.0
        %8502 = vmatprep.subr.mxu0 0.0
        %8503 = vmatpush1.msra.mxu0 0.0
        %8504 = vmatprep.subr.mxu0 0.0
        %8505 = vmatpush1.msra.mxu0 0.0
        %8506 = vmatprep.subr.mxu0 0.0
        %8507 = vmatpush1.msra.mxu0 0.0
        %8508 = vmatprep.subr.mxu0 0.0
        %8509 = vmatpush1.msra.mxu0 0.0
        %8510 = vmatprep.subr.mxu0 0.0
        %8511 = vmatpush1.msra.mxu0 0.0
        %8512 = vmatprep.subr.mxu0 0.0
        %8513 = vmatpush1.msra.mxu0 %v8399
        %8514 = vmatprep.subr.mxu0 0.0
        %8515 = vmatpush1.msra.mxu0 %v8398
        %8516 = vmatprep.subr.mxu0 0.0
        %8517 = vmatpush1.msra.mxu0 %v8397
        %8518 = vmatprep.subr.mxu0 0.0
        %8519 = vmatpush1.msra.mxu0 %v8396
        %8520 = vmatprep.subr.mxu0 0.0
        %8521 = vmatpush1.msra.mxu0 %v8395
        %8522 = vmatprep.subr.mxu0 0.0
        %8523 = vmatpush1.msra.mxu0 %v8394
        %8524 = vmatprep.subr.mxu0 0.0
        %8525 = vmatpush1.msra.mxu0 %v8393
        %8526 = vmatprep.subr.mxu0 0.0
        %8527 = vmatpush1.msra.mxu0 %v8392
        %8528 = vmatprep.subr.mxu0 0.0
        %8529 = vmatpush2.msra.mxu0 0.0
        %8530 = vmatprep.subr.mxu0 0.0
        %8531 = vmatpush2.msra.mxu0 0.0
        %8532 = vmatprep.subr.mxu0 0.0
        %8533 = vmatpush2.msra.mxu0 0.0
        %8534 = vmatprep.subr.mxu0 0.0
        %8535 = vmatpush2.msra.mxu0 0.0
        %8536 = vmatprep.subr.mxu0 0.0
        %8537 = vmatpush2.msra.mxu0 0.0
        %8538 = vmatprep.subr.mxu0 0.0
        %8539 = vmatpush2.msra.mxu0 0.0
        %8540 = vmatprep.subr.mxu0 0.0
        %8541 = vmatpush2.msra.mxu0 0.0
        %8542 = vmatprep.subr.mxu0 0.0
        %8543 = vmatpush2.msra.mxu0 0.0
        %8544 = vmatprep.subr.mxu0 0.0
        %8545 = vmatpush2.msra.mxu0 0.0
        %8546 = vmatprep.subr.mxu0 0.0
        %8547 = vmatpush2.msra.mxu0 0.0
        %8548 = vmatprep.subr.mxu0 0.0
        %8549 = vmatpush2.msra.mxu0 0.0
        %8550 = vmatprep.subr.mxu0 0.0
        %8551 = vmatpush2.msra.mxu0 0.0
        %8552 = vmatprep.subr.mxu0 0.0
        %8553 = vmatpush2.msra.mxu0 0.0
        %8554 = vmatprep.subr.mxu0 0.0
        %8555 = vmatpush2.msra.mxu0 0.0
        %8556 = vmatprep.subr.mxu0 0.0
        %8557 = vmatpush2.msra.mxu0 0.0
        %8558 = vmatprep.subr.mxu0 0.0
        %8559 = vmatpush2.msra.mxu0 0.0
        %8560 = vmatprep.mubr.f32.mxu0 0.0
        %8561 = vmatmul.mubr.f32.gmra.mxu0 %v8401
        %v8562 = vpop.f32.mrf.mxu0
        %v8563 = vadd.f32 0.0, %v8562
        %v8564 = vpop.f32.mrf.mxu0
        %8565 = vmatprep.mubr.f32.mxu0 0.0
        %8566 = vmatmul.mubr.f32.gmra.mxu0 %v8404
        %v8567 = vpop.f32.mrf.mxu0
        %v8568 = vadd.f32 0.0, %v8567
        %v8569 = vpop.f32.mrf.mxu0
        %8570 = vmatprep.mubr.f32.mxu0 0.0
        %8571 = vmatmul.mubr.f32.gmra.mxu0 %v8407
        %v8572 = vpop.f32.mrf.mxu0
        %v8573 = vadd.f32 0.0, %v8572
        %v8574 = vpop.f32.mrf.mxu0
        %8575 = vmatprep.mubr.f32.mxu0 0.0
        %8576 = vmatmul.mubr.f32.gmra.mxu0 %v8410
        %v8577 = vpop.f32.mrf.mxu0
        %v8578 = vadd.f32 0.0, %v8577
        %v8579 = vpop.f32.mrf.mxu0
        %8580 = vmatprep.mubr.f32.mxu0 0.0
        %8581 = vmatmul.mubr.f32.gmra.mxu0 %v8413
        %v8582 = vpop.f32.mrf.mxu0
        %v8583 = vadd.f32 0.0, %v8582
        %v8584 = vpop.f32.mrf.mxu0
        %8585 = vmatprep.mubr.f32.mxu0 0.0
        %8586 = vmatmul.mubr.f32.gmra.mxu0 %v8416
        %v8587 = vpop.f32.mrf.mxu0
        %v8588 = vadd.f32 0.0, %v8587
        %v8589 = vpop.f32.mrf.mxu0
        %8590 = vmatprep.mubr.f32.mxu0 0.0
        %8591 = vmatmul.mubr.f32.gmra.mxu0 %v8419
        %v8592 = vpop.f32.mrf.mxu0
        %v8593 = vadd.f32 0.0, %v8592
        %v8594 = vpop.f32.mrf.mxu0
        %8595 = vmatprep.mubr.f32.mxu0 0.0
        %8596 = vmatmul.mubr.f32.gmra.mxu0 %v8422
        %v8597 = vpop.f32.mrf.mxu0
        %v8598 = vadd.f32 0.0, %v8597
        %v8599 = vpop.f32.mrf.mxu0
        %8600 = vmatprep.mubr.f32.mxu0 0.0
        %8601 = vmatmul.mubr.f32.gmra.mxu0 %v8425
        %v8602 = vpop.f32.mrf.mxu0
        %v8603 = vadd.f32 0.0, %v8602
        %v8604 = vpop.f32.mrf.mxu0
        %8605 = vmatprep.mubr.f32.mxu0 0.0
        %8606 = vmatmul.mubr.f32.gmra.mxu0 %v8428
        %v8607 = vpop.f32.mrf.mxu0
        %v8608 = vadd.f32 0.0, %v8607
        %v8609 = vpop.f32.mrf.mxu0
        %8610 = vmatprep.mubr.f32.mxu0 0.0
        %8611 = vmatmul.mubr.f32.gmra.mxu0 %v8431
        %v8612 = vpop.f32.mrf.mxu0
        %v8613 = vadd.f32 0.0, %v8612
        %v8614 = vpop.f32.mrf.mxu0
        %8615 = vmatprep.mubr.f32.mxu0 0.0
        %8616 = vmatmul.mubr.f32.gmra.mxu0 %v8434
        %v8617 = vpop.f32.mrf.mxu0
        %v8618 = vadd.f32 0.0, %v8617
        %v8619 = vpop.f32.mrf.mxu0
        %8620 = vmatprep.mubr.f32.mxu0 0.0
        %8621 = vmatmul.mubr.f32.gmra.mxu0 %v8437
        %v8622 = vpop.f32.mrf.mxu0
        %v8623 = vadd.f32 0.0, %v8622
        %v8624 = vpop.f32.mrf.mxu0
        %8625 = vmatprep.mubr.f32.mxu0 0.0
        %8626 = vmatmul.mubr.f32.gmra.mxu0 %v8440
        %v8627 = vpop.f32.mrf.mxu0
        %v8628 = vadd.f32 0.0, %v8627
        %v8629 = vpop.f32.mrf.mxu0
        %8630 = vmatprep.mubr.f32.mxu0 0.0
        %8631 = vmatmul.mubr.f32.gmra.mxu0 %v8443
        %v8632 = vpop.f32.mrf.mxu0
        %v8633 = vadd.f32 0.0, %v8632
        %v8634 = vpop.f32.mrf.mxu0
        %8635 = vmatprep.mubr.f32.mxu0 0.0
        %8636 = vmatmul.mubr.f32.gmra.mxu0 %v8446
        %v8637 = vpop.f32.mrf.mxu0
        %v8638 = vadd.f32 0.0, %v8637
        %v8639 = vpop.f32.mrf.mxu0
        %8640 = vmatprep.mubr.f32.mxu0 0.0
        %8641 = vmatmul.mubr.f32.gmra.mxu0 %v8449
        %v8642 = vpop.f32.mrf.mxu0
        %v8643 = vadd.f32 0.0, %v8642
        %v8644 = vpop.f32.mrf.mxu0
        %8645 = vmatprep.mubr.f32.mxu0 0.0
        %8646 = vmatmul.mubr.f32.gmra.mxu0 %v8452
        %v8647 = vpop.f32.mrf.mxu0
        %v8648 = vadd.f32 0.0, %v8647
        %v8649 = vpop.f32.mrf.mxu0
        %8650 = vmatprep.mubr.f32.mxu0 0.0
        %8651 = vmatmul.mubr.f32.gmra.mxu0 %v8455
        %v8652 = vpop.f32.mrf.mxu0
        %v8653 = vadd.f32 0.0, %v8652
        %v8654 = vpop.f32.mrf.mxu0
        %8655 = vmatprep.mubr.f32.mxu0 0.0
        %8656 = vmatmul.mubr.f32.gmra.mxu0 %v8458
        %v8657 = vpop.f32.mrf.mxu0
        %v8658 = vadd.f32 0.0, %v8657
        %v8659 = vpop.f32.mrf.mxu0
        %8660 = vmatprep.mubr.f32.mxu0 0.0
        %8661 = vmatmul.mubr.f32.gmra.mxu0 %v8461
        %v8662 = vpop.f32.mrf.mxu0
        %v8663 = vadd.f32 0.0, %v8662
        %v8664 = vpop.f32.mrf.mxu0
        %8665 = vmatprep.mubr.f32.mxu0 0.0
        %8666 = vmatmul.mubr.f32.gmra.mxu0 %v8464
        %v8667 = vpop.f32.mrf.mxu0
        %v8668 = vadd.f32 0.0, %v8667
        %v8669 = vpop.f32.mrf.mxu0
        %8670 = vmatprep.mubr.f32.mxu0 0.0
        %8671 = vmatmul.mubr.f32.gmra.mxu0 %v8467
        %v8672 = vpop.f32.mrf.mxu0
        %v8673 = vadd.f32 0.0, %v8672
        %v8674 = vpop.f32.mrf.mxu0
        %8675 = vmatprep.mubr.f32.mxu0 0.0
        %8676 = vmatmul.mubr.f32.gmra.mxu0 %v8470
        %v8677 = vpop.f32.mrf.mxu0
        %v8678 = vadd.f32 0.0, %v8677
        %v8679 = vpop.f32.mrf.mxu0
        %8680 = vmatprep.mubr.f32.mxu0 0.0
        %8681 = vmatmul.mubr.f32.gmra.mxu0 %v8473
        %v8682 = vpop.f32.mrf.mxu0
        %v8683 = vadd.f32 0.0, %v8682
        %v8684 = vpop.f32.mrf.mxu0
        %8685 = vmatprep.mubr.f32.mxu0 0.0
        %8686 = vmatmul.mubr.f32.gmra.mxu0 %v8476
        %v8687 = vpop.f32.mrf.mxu0
        %v8688 = vadd.f32 0.0, %v8687
        %v8689 = vpop.f32.mrf.mxu0
        %8690 = vmatprep.mubr.f32.mxu0 0.0
        %8691 = vmatmul.mubr.f32.gmra.mxu0 %v8479
        %v8692 = vpop.f32.mrf.mxu0
        %v8693 = vadd.f32 0.0, %v8692
        %v8694 = vpop.f32.mrf.mxu0
        %8695 = vmatprep.mubr.f32.mxu0 0.0
        %8696 = vmatmul.mubr.f32.gmra.mxu0 %v8482
        %v8697 = vpop.f32.mrf.mxu0
        %v8698 = vadd.f32 0.0, %v8697
        %v8699 = vpop.f32.mrf.mxu0
        %8700 = vmatprep.mubr.f32.mxu0 0.0
        %8701 = vmatmul.mubr.f32.gmra.mxu0 %v8485
        %v8702 = vpop.f32.mrf.mxu0
        %v8703 = vadd.f32 0.0, %v8702
        %v8704 = vpop.f32.mrf.mxu0
        %8705 = vmatprep.mubr.f32.mxu0 0.0
        %8706 = vmatmul.mubr.f32.gmra.mxu0 %v8488
        %v8707 = vpop.f32.mrf.mxu0
        %v8708 = vadd.f32 0.0, %v8707
        %v8709 = vpop.f32.mrf.mxu0
        %8710 = vmatprep.mubr.f32.mxu0 0.0
        %8711 = vmatmul.mubr.f32.gmra.mxu0 %v8491
        %v8712 = vpop.f32.mrf.mxu0
        %v8713 = vadd.f32 0.0, %v8712
        %v8714 = vpop.f32.mrf.mxu0
        %8715 = vmatprep.mubr.f32.mxu0 0.0
        %8716 = vmatmul.mubr.f32.gmra.mxu0 %v8494
        %v8717 = vpop.f32.mrf.mxu0
        %v8718 = vadd.f32 0.0, %v8717
        %v8719 = vpop.f32.mrf.mxu0
        %8720 = vdwg.mxu0
        %v8721 = vadd.f32 %v8327, %v8563
        %v8722 = vadd.f32 %v8328, %v8568
        %v8723 = vadd.f32 %v8329, %v8573
        %v8724 = vadd.f32 %v8330, %v8578
        %v8725 = vadd.f32 %v8331, %v8583
        %v8726 = vadd.f32 %v8332, %v8588
        %v8727 = vadd.f32 %v8333, %v8593
        %v8728 = vadd.f32 %v8334, %v8598
        %v8729 = vadd.f32 %v8335, %v8603
        %v8730 = vadd.f32 %v8336, %v8608
        %v8731 = vadd.f32 %v8337, %v8613
        %v8732 = vadd.f32 %v8338, %v8618
        %v8733 = vadd.f32 %v8339, %v8623
        %v8734 = vadd.f32 %v8340, %v8628
        %v8735 = vadd.f32 %v8341, %v8633
        %v8736 = vadd.f32 %v8342, %v8638
        %v8737 = vadd.f32 %v8343, %v8643
        %v8738 = vadd.f32 %v8344, %v8648
        %v8739 = vadd.f32 %v8345, %v8653
        %v8740 = vadd.f32 %v8346, %v8658
        %v8741 = vadd.f32 %v8347, %v8663
        %v8742 = vadd.f32 %v8348, %v8668
        %v8743 = vadd.f32 %v8349, %v8673
        %v8744 = vadd.f32 %v8350, %v8678
        %v8745 = vadd.f32 %v8351, %v8683
        %v8746 = vadd.f32 %v8352, %v8688
        %v8747 = vadd.f32 %v8353, %v8693
        %v8748 = vadd.f32 %v8354, %v8698
        %v8749 = vadd.f32 %v8355, %v8703
        %v8750 = vadd.f32 %v8356, %v8708
        %v8751 = vadd.f32 %v8357, %v8713
        %v8752 = vadd.f32 %v8358, %v8718
        %s8753 = scalar_lea.vmem [#allocation2], 48
        %v8754 = vld [vmem:[%s8753] sm:$0xff]
        %v8755 = vld [vmem:[%s8753 + $0x8] sm:$0xff]
        %v8756 = vld [vmem:[%s8753 + $0x18] sm:$0xff]
        %v8757 = vld [vmem:[%s8753 + $0x20] sm:$0xff]
        %v8758 = vld [vmem:[%s8753 + $0x30] sm:$0xff]
        %v8759 = vld [vmem:[%s8753 + $0x38] sm:$0xff]
        %v8760 = vld [vmem:[%s8753 + $0x48] sm:$0xff]
        %v8761 = vld [vmem:[%s8753 + $0x50] sm:$0xff]
        %v8762 = vld [vmem:[%s8753 + $0x60] sm:$0xff]
        %v8763 = vld [vmem:[%s8753 + $0x68] sm:$0xff]
        %v8764 = vld [vmem:[%s8753 + $0x78] sm:$0xff]
        %v8765 = vld [vmem:[%s8753 + $0x80] sm:$0xff]
        %v8766 = vld [vmem:[%s8753 + $0x90] sm:$0xff]
        %v8767 = vld [vmem:[%s8753 + $0x98] sm:$0xff]
        %v8768 = vld [vmem:[%s8753 + $0xa8] sm:$0xff]
        %v8769 = vld [vmem:[%s8753 + $0xb0] sm:$0xff]
        %v8770 = vld [vmem:[%s8753 + $0xc0] sm:$0xff]
        %v8771 = vld [vmem:[%s8753 + $0xc8] sm:$0xff]
        %v8772 = vld [vmem:[%s8753 + $0xd8] sm:$0xff]
        %v8773 = vld [vmem:[%s8753 + $0xe0] sm:$0xff]
        %v8774 = vld [vmem:[%s8753 + $0xf0] sm:$0xff]
        %v8775 = vld [vmem:[%s8753 + $0xf8] sm:$0xff]
        %v8776 = vld [vmem:[%s8753 + $0x108] sm:$0xff]
        %v8777 = vld [vmem:[%s8753 + $0x110] sm:$0xff]
        %v8778 = vld [vmem:[%s8753 + $0x120] sm:$0xff]
        %v8779 = vld [vmem:[%s8753 + $0x128] sm:$0xff]
        %v8780 = vld [vmem:[%s8753 + $0x138] sm:$0xff]
        %v8781 = vld [vmem:[%s8753 + $0x140] sm:$0xff]
        %v8782 = vld [vmem:[%s8753 + $0x150] sm:$0xff]
        %v8783 = vld [vmem:[%s8753 + $0x158] sm:$0xff]
        %v8784 = vld [vmem:[%s8753 + $0x168] sm:$0xff]
        %v8785 = vld [vmem:[%s8753 + $0x170] sm:$0xff]
        %s8786 = scalar_lea.vmem %s4, 384
        %v8787 = vld [vmem:[%s8786] sm:$0xff]
        %v8788 = vld [vmem:[%s8786 + $0x8] sm:$0xff]
        %v8789 = vld [vmem:[%s8786 + $0x10] sm:$0xff]
        %v8790 = vld [vmem:[%s8786 + $0x18] sm:$0xff]
        %v8791 = vld [vmem:[%s8786 + $0x20] sm:$0xff]
        %v8792 = vld [vmem:[%s8786 + $0x28] sm:$0xff]
        %v8793 = vld [vmem:[%s8786 + $0x30] sm:$0xff]
        %v8794 = vld [vmem:[%s8786 + $0x38] sm:$0xff]
        %v8796 = vsel %vm6076, %v8754, 0
        %v8799 = vsel %vm6076, %v8755, 0
        %v8802 = vsel %vm6076, %v8756, 0
        %v8805 = vsel %vm6076, %v8757, 0
        %v8808 = vsel %vm6076, %v8758, 0
        %v8811 = vsel %vm6076, %v8759, 0
        %v8814 = vsel %vm6076, %v8760, 0
        %v8817 = vsel %vm6076, %v8761, 0
        %v8820 = vsel %vm6076, %v8762, 0
        %v8823 = vsel %vm6076, %v8763, 0
        %v8826 = vsel %vm6076, %v8764, 0
        %v8829 = vsel %vm6076, %v8765, 0
        %v8832 = vsel %vm6076, %v8766, 0
        %v8835 = vsel %vm6076, %v8767, 0
        %v8838 = vsel %vm6076, %v8768, 0
        %v8841 = vsel %vm6076, %v8769, 0
        %v8844 = vsel %vm6076, %v8770, 0
        %v8847 = vsel %vm6076, %v8771, 0
        %v8850 = vsel %vm6076, %v8772, 0
        %v8853 = vsel %vm6076, %v8773, 0
        %v8856 = vsel %vm6076, %v8774, 0
        %v8859 = vsel %vm6076, %v8775, 0
        %v8862 = vsel %vm6076, %v8776, 0
        %v8865 = vsel %vm6076, %v8777, 0
        %v8868 = vsel %vm6076, %v8778, 0
        %v8871 = vsel %vm6076, %v8779, 0
        %v8874 = vsel %vm6076, %v8780, 0
        %v8877 = vsel %vm6076, %v8781, 0
        %v8880 = vsel %vm6076, %v8782, 0
        %v8883 = vsel %vm6076, %v8783, 0
        %v8886 = vsel %vm6076, %v8784, 0
        %v8889 = vsel %vm6076, %v8785, 0
        %8891 = vmatprep.subr.mxu0 0.0
        %8892 = vmatpush1.msra.mxu0 0.0
        %8893 = vmatprep.subr.mxu0 0.0
        %8894 = vmatpush1.msra.mxu0 0.0
        %8895 = vmatprep.subr.mxu0 0.0
        %8896 = vmatpush1.msra.mxu0 0.0
        %8897 = vmatprep.subr.mxu0 0.0
        %8898 = vmatpush1.msra.mxu0 0.0
        %8899 = vmatprep.subr.mxu0 0.0
        %8900 = vmatpush1.msra.mxu0 0.0
        %8901 = vmatprep.subr.mxu0 0.0
        %8902 = vmatpush1.msra.mxu0 0.0
        %8903 = vmatprep.subr.mxu0 0.0
        %8904 = vmatpush1.msra.mxu0 0.0
        %8905 = vmatprep.subr.mxu0 0.0
        %8906 = vmatpush1.msra.mxu0 0.0
        %8907 = vmatprep.subr.mxu0 0.0
        %8908 = vmatpush1.msra.mxu0 %v8794
        %8909 = vmatprep.subr.mxu0 0.0
        %8910 = vmatpush1.msra.mxu0 %v8793
        %8911 = vmatprep.subr.mxu0 0.0
        %8912 = vmatpush1.msra.mxu0 %v8792
        %8913 = vmatprep.subr.mxu0 0.0
        %8914 = vmatpush1.msra.mxu0 %v8791
        %8915 = vmatprep.subr.mxu0 0.0
        %8916 = vmatpush1.msra.mxu0 %v8790
        %8917 = vmatprep.subr.mxu0 0.0
        %8918 = vmatpush1.msra.mxu0 %v8789
        %8919 = vmatprep.subr.mxu0 0.0
        %8920 = vmatpush1.msra.mxu0 %v8788
        %8921 = vmatprep.subr.mxu0 0.0
        %8922 = vmatpush1.msra.mxu0 %v8787
        %8923 = vmatprep.subr.mxu0 0.0
        %8924 = vmatpush2.msra.mxu0 0.0
        %8925 = vmatprep.subr.mxu0 0.0
        %8926 = vmatpush2.msra.mxu0 0.0
        %8927 = vmatprep.subr.mxu0 0.0
        %8928 = vmatpush2.msra.mxu0 0.0
        %8929 = vmatprep.subr.mxu0 0.0
        %8930 = vmatpush2.msra.mxu0 0.0
        %8931 = vmatprep.subr.mxu0 0.0
        %8932 = vmatpush2.msra.mxu0 0.0
        %8933 = vmatprep.subr.mxu0 0.0
        %8934 = vmatpush2.msra.mxu0 0.0
        %8935 = vmatprep.subr.mxu0 0.0
        %8936 = vmatpush2.msra.mxu0 0.0
        %8937 = vmatprep.subr.mxu0 0.0
        %8938 = vmatpush2.msra.mxu0 0.0
        %8939 = vmatprep.subr.mxu0 0.0
        %8940 = vmatpush2.msra.mxu0 0.0
        %8941 = vmatprep.subr.mxu0 0.0
        %8942 = vmatpush2.msra.mxu0 0.0
        %8943 = vmatprep.subr.mxu0 0.0
        %8944 = vmatpush2.msra.mxu0 0.0
        %8945 = vmatprep.subr.mxu0 0.0
        %8946 = vmatpush2.msra.mxu0 0.0
        %8947 = vmatprep.subr.mxu0 0.0
        %8948 = vmatpush2.msra.mxu0 0.0
        %8949 = vmatprep.subr.mxu0 0.0
        %8950 = vmatpush2.msra.mxu0 0.0
        %8951 = vmatprep.subr.mxu0 0.0
        %8952 = vmatpush2.msra.mxu0 0.0
        %8953 = vmatprep.subr.mxu0 0.0
        %8954 = vmatpush2.msra.mxu0 0.0
        %8955 = vmatprep.mubr.f32.mxu0 0.0
        %8956 = vmatmul.mubr.f32.gmra.mxu0 %v8796
        %v8957 = vpop.f32.mrf.mxu0
        %v8958 = vadd.f32 0.0, %v8957
        %v8959 = vpop.f32.mrf.mxu0
        %8960 = vmatprep.mubr.f32.mxu0 0.0
        %8961 = vmatmul.mubr.f32.gmra.mxu0 %v8799
        %v8962 = vpop.f32.mrf.mxu0
        %v8963 = vadd.f32 0.0, %v8962
        %v8964 = vpop.f32.mrf.mxu0
        %8965 = vmatprep.mubr.f32.mxu0 0.0
        %8966 = vmatmul.mubr.f32.gmra.mxu0 %v8802
        %v8967 = vpop.f32.mrf.mxu0
        %v8968 = vadd.f32 0.0, %v8967
        %v8969 = vpop.f32.mrf.mxu0
        %8970 = vmatprep.mubr.f32.mxu0 0.0
        %8971 = vmatmul.mubr.f32.gmra.mxu0 %v8805
        %v8972 = vpop.f32.mrf.mxu0
        %v8973 = vadd.f32 0.0, %v8972
        %v8974 = vpop.f32.mrf.mxu0
        %8975 = vmatprep.mubr.f32.mxu0 0.0
        %8976 = vmatmul.mubr.f32.gmra.mxu0 %v8808
        %v8977 = vpop.f32.mrf.mxu0
        %v8978 = vadd.f32 0.0, %v8977
        %v8979 = vpop.f32.mrf.mxu0
        %8980 = vmatprep.mubr.f32.mxu0 0.0
        %8981 = vmatmul.mubr.f32.gmra.mxu0 %v8811
        %v8982 = vpop.f32.mrf.mxu0
        %v8983 = vadd.f32 0.0, %v8982
        %v8984 = vpop.f32.mrf.mxu0
        %8985 = vmatprep.mubr.f32.mxu0 0.0
        %8986 = vmatmul.mubr.f32.gmra.mxu0 %v8814
        %v8987 = vpop.f32.mrf.mxu0
        %v8988 = vadd.f32 0.0, %v8987
        %v8989 = vpop.f32.mrf.mxu0
        %8990 = vmatprep.mubr.f32.mxu0 0.0
        %8991 = vmatmul.mubr.f32.gmra.mxu0 %v8817
        %v8992 = vpop.f32.mrf.mxu0
        %v8993 = vadd.f32 0.0, %v8992
        %v8994 = vpop.f32.mrf.mxu0
        %8995 = vmatprep.mubr.f32.mxu0 0.0
        %8996 = vmatmul.mubr.f32.gmra.mxu0 %v8820
        %v8997 = vpop.f32.mrf.mxu0
        %v8998 = vadd.f32 0.0, %v8997
        %v8999 = vpop.f32.mrf.mxu0
        %9000 = vmatprep.mubr.f32.mxu0 0.0
        %9001 = vmatmul.mubr.f32.gmra.mxu0 %v8823
        %v9002 = vpop.f32.mrf.mxu0
        %v9003 = vadd.f32 0.0, %v9002
        %v9004 = vpop.f32.mrf.mxu0
        %9005 = vmatprep.mubr.f32.mxu0 0.0
        %9006 = vmatmul.mubr.f32.gmra.mxu0 %v8826
        %v9007 = vpop.f32.mrf.mxu0
        %v9008 = vadd.f32 0.0, %v9007
        %v9009 = vpop.f32.mrf.mxu0
        %9010 = vmatprep.mubr.f32.mxu0 0.0
        %9011 = vmatmul.mubr.f32.gmra.mxu0 %v8829
        %v9012 = vpop.f32.mrf.mxu0
        %v9013 = vadd.f32 0.0, %v9012
        %v9014 = vpop.f32.mrf.mxu0
        %9015 = vmatprep.mubr.f32.mxu0 0.0
        %9016 = vmatmul.mubr.f32.gmra.mxu0 %v8832
        %v9017 = vpop.f32.mrf.mxu0
        %v9018 = vadd.f32 0.0, %v9017
        %v9019 = vpop.f32.mrf.mxu0
        %9020 = vmatprep.mubr.f32.mxu0 0.0
        %9021 = vmatmul.mubr.f32.gmra.mxu0 %v8835
        %v9022 = vpop.f32.mrf.mxu0
        %v9023 = vadd.f32 0.0, %v9022
        %v9024 = vpop.f32.mrf.mxu0
        %9025 = vmatprep.mubr.f32.mxu0 0.0
        %9026 = vmatmul.mubr.f32.gmra.mxu0 %v8838
        %v9027 = vpop.f32.mrf.mxu0
        %v9028 = vadd.f32 0.0, %v9027
        %v9029 = vpop.f32.mrf.mxu0
        %9030 = vmatprep.mubr.f32.mxu0 0.0
        %9031 = vmatmul.mubr.f32.gmra.mxu0 %v8841
        %v9032 = vpop.f32.mrf.mxu0
        %v9033 = vadd.f32 0.0, %v9032
        %v9034 = vpop.f32.mrf.mxu0
        %9035 = vmatprep.mubr.f32.mxu0 0.0
        %9036 = vmatmul.mubr.f32.gmra.mxu0 %v8844
        %v9037 = vpop.f32.mrf.mxu0
        %v9038 = vadd.f32 0.0, %v9037
        %v9039 = vpop.f32.mrf.mxu0
        %9040 = vmatprep.mubr.f32.mxu0 0.0
        %9041 = vmatmul.mubr.f32.gmra.mxu0 %v8847
        %v9042 = vpop.f32.mrf.mxu0
        %v9043 = vadd.f32 0.0, %v9042
        %v9044 = vpop.f32.mrf.mxu0
        %9045 = vmatprep.mubr.f32.mxu0 0.0
        %9046 = vmatmul.mubr.f32.gmra.mxu0 %v8850
        %v9047 = vpop.f32.mrf.mxu0
        %v9048 = vadd.f32 0.0, %v9047
        %v9049 = vpop.f32.mrf.mxu0
        %9050 = vmatprep.mubr.f32.mxu0 0.0
        %9051 = vmatmul.mubr.f32.gmra.mxu0 %v8853
        %v9052 = vpop.f32.mrf.mxu0
        %v9053 = vadd.f32 0.0, %v9052
        %v9054 = vpop.f32.mrf.mxu0
        %9055 = vmatprep.mubr.f32.mxu0 0.0
        %9056 = vmatmul.mubr.f32.gmra.mxu0 %v8856
        %v9057 = vpop.f32.mrf.mxu0
        %v9058 = vadd.f32 0.0, %v9057
        %v9059 = vpop.f32.mrf.mxu0
        %9060 = vmatprep.mubr.f32.mxu0 0.0
        %9061 = vmatmul.mubr.f32.gmra.mxu0 %v8859
        %v9062 = vpop.f32.mrf.mxu0
        %v9063 = vadd.f32 0.0, %v9062
        %v9064 = vpop.f32.mrf.mxu0
        %9065 = vmatprep.mubr.f32.mxu0 0.0
        %9066 = vmatmul.mubr.f32.gmra.mxu0 %v8862
        %v9067 = vpop.f32.mrf.mxu0
        %v9068 = vadd.f32 0.0, %v9067
        %v9069 = vpop.f32.mrf.mxu0
        %9070 = vmatprep.mubr.f32.mxu0 0.0
        %9071 = vmatmul.mubr.f32.gmra.mxu0 %v8865
        %v9072 = vpop.f32.mrf.mxu0
        %v9073 = vadd.f32 0.0, %v9072
        %v9074 = vpop.f32.mrf.mxu0
        %9075 = vmatprep.mubr.f32.mxu0 0.0
        %9076 = vmatmul.mubr.f32.gmra.mxu0 %v8868
        %v9077 = vpop.f32.mrf.mxu0
        %v9078 = vadd.f32 0.0, %v9077
        %v9079 = vpop.f32.mrf.mxu0
        %9080 = vmatprep.mubr.f32.mxu0 0.0
        %9081 = vmatmul.mubr.f32.gmra.mxu0 %v8871
        %v9082 = vpop.f32.mrf.mxu0
        %v9083 = vadd.f32 0.0, %v9082
        %v9084 = vpop.f32.mrf.mxu0
        %9085 = vmatprep.mubr.f32.mxu0 0.0
        %9086 = vmatmul.mubr.f32.gmra.mxu0 %v8874
        %v9087 = vpop.f32.mrf.mxu0
        %v9088 = vadd.f32 0.0, %v9087
        %v9089 = vpop.f32.mrf.mxu0
        %9090 = vmatprep.mubr.f32.mxu0 0.0
        %9091 = vmatmul.mubr.f32.gmra.mxu0 %v8877
        %v9092 = vpop.f32.mrf.mxu0
        %v9093 = vadd.f32 0.0, %v9092
        %v9094 = vpop.f32.mrf.mxu0
        %9095 = vmatprep.mubr.f32.mxu0 0.0
        %9096 = vmatmul.mubr.f32.gmra.mxu0 %v8880
        %v9097 = vpop.f32.mrf.mxu0
        %v9098 = vadd.f32 0.0, %v9097
        %v9099 = vpop.f32.mrf.mxu0
        %9100 = vmatprep.mubr.f32.mxu0 0.0
        %9101 = vmatmul.mubr.f32.gmra.mxu0 %v8883
        %v9102 = vpop.f32.mrf.mxu0
        %v9103 = vadd.f32 0.0, %v9102
        %v9104 = vpop.f32.mrf.mxu0
        %9105 = vmatprep.mubr.f32.mxu0 0.0
        %9106 = vmatmul.mubr.f32.gmra.mxu0 %v8886
        %v9107 = vpop.f32.mrf.mxu0
        %v9108 = vadd.f32 0.0, %v9107
        %v9109 = vpop.f32.mrf.mxu0
        %9110 = vmatprep.mubr.f32.mxu0 0.0
        %9111 = vmatmul.mubr.f32.gmra.mxu0 %v8889
        %v9112 = vpop.f32.mrf.mxu0
        %v9113 = vadd.f32 0.0, %v9112
        %v9114 = vpop.f32.mrf.mxu0
        %9115 = vdwg.mxu0
        %v9116 = vadd.f32 %v8721, %v8958
        %v9117 = vadd.f32 %v8722, %v8963
        %v9118 = vadd.f32 %v8723, %v8968
        %v9119 = vadd.f32 %v8724, %v8973
        %v9120 = vadd.f32 %v8725, %v8978
        %v9121 = vadd.f32 %v8726, %v8983
        %v9122 = vadd.f32 %v8727, %v8988
        %v9123 = vadd.f32 %v8728, %v8993
        %v9124 = vadd.f32 %v8729, %v8998
        %v9125 = vadd.f32 %v8730, %v9003
        %v9126 = vadd.f32 %v8731, %v9008
        %v9127 = vadd.f32 %v8732, %v9013
        %v9128 = vadd.f32 %v8733, %v9018
        %v9129 = vadd.f32 %v8734, %v9023
        %v9130 = vadd.f32 %v8735, %v9028
        %v9131 = vadd.f32 %v8736, %v9033
        %v9132 = vadd.f32 %v8737, %v9038
        %v9133 = vadd.f32 %v8738, %v9043
        %v9134 = vadd.f32 %v8739, %v9048
        %v9135 = vadd.f32 %v8740, %v9053
        %v9136 = vadd.f32 %v8741, %v9058
        %v9137 = vadd.f32 %v8742, %v9063
        %v9138 = vadd.f32 %v8743, %v9068
        %v9139 = vadd.f32 %v8744, %v9073
        %v9140 = vadd.f32 %v8745, %v9078
        %v9141 = vadd.f32 %v8746, %v9083
        %v9142 = vadd.f32 %v8747, %v9088
        %v9143 = vadd.f32 %v8748, %v9093
        %v9144 = vadd.f32 %v8749, %v9098
        %v9145 = vadd.f32 %v8750, %v9103
        %v9146 = vadd.f32 %v8751, %v9108
        %v9147 = vadd.f32 %v8752, %v9113
        %v9148 = vld [vmem:[%s8753 + $0x1] sm:$0xff]
        %v9149 = vld [vmem:[%s8753 + $0x9] sm:$0xff]
        %v9150 = vld [vmem:[%s8753 + $0x19] sm:$0xff]
        %v9151 = vld [vmem:[%s8753 + $0x21] sm:$0xff]
        %v9152 = vld [vmem:[%s8753 + $0x31] sm:$0xff]
        %v9153 = vld [vmem:[%s8753 + $0x39] sm:$0xff]
        %v9154 = vld [vmem:[%s8753 + $0x49] sm:$0xff]
        %v9155 = vld [vmem:[%s8753 + $0x51] sm:$0xff]
        %v9156 = vld [vmem:[%s8753 + $0x61] sm:$0xff]
        %v9157 = vld [vmem:[%s8753 + $0x69] sm:$0xff]
        %v9158 = vld [vmem:[%s8753 + $0x79] sm:$0xff]
        %v9159 = vld [vmem:[%s8753 + $0x81] sm:$0xff]
        %v9160 = vld [vmem:[%s8753 + $0x91] sm:$0xff]
        %v9161 = vld [vmem:[%s8753 + $0x99] sm:$0xff]
        %v9162 = vld [vmem:[%s8753 + $0xa9] sm:$0xff]
        %v9163 = vld [vmem:[%s8753 + $0xb1] sm:$0xff]
        %v9164 = vld [vmem:[%s8753 + $0xc1] sm:$0xff]
        %v9165 = vld [vmem:[%s8753 + $0xc9] sm:$0xff]
        %v9166 = vld [vmem:[%s8753 + $0xd9] sm:$0xff]
        %v9167 = vld [vmem:[%s8753 + $0xe1] sm:$0xff]
        %v9168 = vld [vmem:[%s8753 + $0xf1] sm:$0xff]
        %v9169 = vld [vmem:[%s8753 + $0xf9] sm:$0xff]
        %v9170 = vld [vmem:[%s8753 + $0x109] sm:$0xff]
        %v9171 = vld [vmem:[%s8753 + $0x111] sm:$0xff]
        %v9172 = vld [vmem:[%s8753 + $0x121] sm:$0xff]
        %v9173 = vld [vmem:[%s8753 + $0x129] sm:$0xff]
        %v9174 = vld [vmem:[%s8753 + $0x139] sm:$0xff]
        %v9175 = vld [vmem:[%s8753 + $0x141] sm:$0xff]
        %v9176 = vld [vmem:[%s8753 + $0x151] sm:$0xff]
        %v9177 = vld [vmem:[%s8753 + $0x159] sm:$0xff]
        %v9178 = vld [vmem:[%s8753 + $0x169] sm:$0xff]
        %v9179 = vld [vmem:[%s8753 + $0x171] sm:$0xff]
        %s9180 = scalar_lea.vmem %s4, 448
        %v9181 = vld [vmem:[%s9180] sm:$0xff]
        %v9182 = vld [vmem:[%s9180 + $0x8] sm:$0xff]
        %v9183 = vld [vmem:[%s9180 + $0x10] sm:$0xff]
        %v9184 = vld [vmem:[%s9180 + $0x18] sm:$0xff]
        %v9185 = vld [vmem:[%s9180 + $0x20] sm:$0xff]
        %v9186 = vld [vmem:[%s9180 + $0x28] sm:$0xff]
        %v9187 = vld [vmem:[%s9180 + $0x30] sm:$0xff]
        %v9188 = vld [vmem:[%s9180 + $0x38] sm:$0xff]
        %v9190 = vsel %vm6076, %v9148, 0
        %v9193 = vsel %vm6076, %v9149, 0
        %v9196 = vsel %vm6076, %v9150, 0
        %v9199 = vsel %vm6076, %v9151, 0
        %v9202 = vsel %vm6076, %v9152, 0
        %v9205 = vsel %vm6076, %v9153, 0
        %v9208 = vsel %vm6076, %v9154, 0
        %v9211 = vsel %vm6076, %v9155, 0
        %v9214 = vsel %vm6076, %v9156, 0
        %v9217 = vsel %vm6076, %v9157, 0
        %v9220 = vsel %vm6076, %v9158, 0
        %v9223 = vsel %vm6076, %v9159, 0
        %v9226 = vsel %vm6076, %v9160, 0
        %v9229 = vsel %vm6076, %v9161, 0
        %v9232 = vsel %vm6076, %v9162, 0
        %v9235 = vsel %vm6076, %v9163, 0
        %v9238 = vsel %vm6076, %v9164, 0
        %v9241 = vsel %vm6076, %v9165, 0
        %v9244 = vsel %vm6076, %v9166, 0
        %v9247 = vsel %vm6076, %v9167, 0
        %v9250 = vsel %vm6076, %v9168, 0
        %v9253 = vsel %vm6076, %v9169, 0
        %v9256 = vsel %vm6076, %v9170, 0
        %v9259 = vsel %vm6076, %v9171, 0
        %v9262 = vsel %vm6076, %v9172, 0
        %v9265 = vsel %vm6076, %v9173, 0
        %v9268 = vsel %vm6076, %v9174, 0
        %v9271 = vsel %vm6076, %v9175, 0
        %v9274 = vsel %vm6076, %v9176, 0
        %v9277 = vsel %vm6076, %v9177, 0
        %v9280 = vsel %vm6076, %v9178, 0
        %v9283 = vsel %vm6076, %v9179, 0
        %9285 = vmatprep.subr.mxu0 0.0
        %9286 = vmatpush1.msra.mxu0 0.0
        %9287 = vmatprep.subr.mxu0 0.0
        %9288 = vmatpush1.msra.mxu0 0.0
        %9289 = vmatprep.subr.mxu0 0.0
        %9290 = vmatpush1.msra.mxu0 0.0
        %9291 = vmatprep.subr.mxu0 0.0
        %9292 = vmatpush1.msra.mxu0 0.0
        %9293 = vmatprep.subr.mxu0 0.0
        %9294 = vmatpush1.msra.mxu0 0.0
        %9295 = vmatprep.subr.mxu0 0.0
        %9296 = vmatpush1.msra.mxu0 0.0
        %9297 = vmatprep.subr.mxu0 0.0
        %9298 = vmatpush1.msra.mxu0 0.0
        %9299 = vmatprep.subr.mxu0 0.0
        %9300 = vmatpush1.msra.mxu0 0.0
        %9301 = vmatprep.subr.mxu0 0.0
        %9302 = vmatpush1.msra.mxu0 %v9188
        %9303 = vmatprep.subr.mxu0 0.0
        %9304 = vmatpush1.msra.mxu0 %v9187
        %9305 = vmatprep.subr.mxu0 0.0
        %9306 = vmatpush1.msra.mxu0 %v9186
        %9307 = vmatprep.subr.mxu0 0.0
        %9308 = vmatpush1.msra.mxu0 %v9185
        %9309 = vmatprep.subr.mxu0 0.0
        %9310 = vmatpush1.msra.mxu0 %v9184
        %9311 = vmatprep.subr.mxu0 0.0
        %9312 = vmatpush1.msra.mxu0 %v9183
        %9313 = vmatprep.subr.mxu0 0.0
        %9314 = vmatpush1.msra.mxu0 %v9182
        %9315 = vmatprep.subr.mxu0 0.0
        %9316 = vmatpush1.msra.mxu0 %v9181
        %9317 = vmatprep.subr.mxu0 0.0
        %9318 = vmatpush2.msra.mxu0 0.0
        %9319 = vmatprep.subr.mxu0 0.0
        %9320 = vmatpush2.msra.mxu0 0.0
        %9321 = vmatprep.subr.mxu0 0.0
        %9322 = vmatpush2.msra.mxu0 0.0
        %9323 = vmatprep.subr.mxu0 0.0
        %9324 = vmatpush2.msra.mxu0 0.0
        %9325 = vmatprep.subr.mxu0 0.0
        %9326 = vmatpush2.msra.mxu0 0.0
        %9327 = vmatprep.subr.mxu0 0.0
        %9328 = vmatpush2.msra.mxu0 0.0
        %9329 = vmatprep.subr.mxu0 0.0
        %9330 = vmatpush2.msra.mxu0 0.0
        %9331 = vmatprep.subr.mxu0 0.0
        %9332 = vmatpush2.msra.mxu0 0.0
        %9333 = vmatprep.subr.mxu0 0.0
        %9334 = vmatpush2.msra.mxu0 0.0
        %9335 = vmatprep.subr.mxu0 0.0
        %9336 = vmatpush2.msra.mxu0 0.0
        %9337 = vmatprep.subr.mxu0 0.0
        %9338 = vmatpush2.msra.mxu0 0.0
        %9339 = vmatprep.subr.mxu0 0.0
        %9340 = vmatpush2.msra.mxu0 0.0
        %9341 = vmatprep.subr.mxu0 0.0
        %9342 = vmatpush2.msra.mxu0 0.0
        %9343 = vmatprep.subr.mxu0 0.0
        %9344 = vmatpush2.msra.mxu0 0.0
        %9345 = vmatprep.subr.mxu0 0.0
        %9346 = vmatpush2.msra.mxu0 0.0
        %9347 = vmatprep.subr.mxu0 0.0
        %9348 = vmatpush2.msra.mxu0 0.0
        %9349 = vmatprep.mubr.f32.mxu0 0.0
        %9350 = vmatmul.mubr.f32.gmra.mxu0 %v9190
        %v9351 = vpop.f32.mrf.mxu0
        %v9352 = vadd.f32 0.0, %v9351
        %v9353 = vpop.f32.mrf.mxu0
        %9354 = vmatprep.mubr.f32.mxu0 0.0
        %9355 = vmatmul.mubr.f32.gmra.mxu0 %v9193
        %v9356 = vpop.f32.mrf.mxu0
        %v9357 = vadd.f32 0.0, %v9356
        %v9358 = vpop.f32.mrf.mxu0
        %9359 = vmatprep.mubr.f32.mxu0 0.0
        %9360 = vmatmul.mubr.f32.gmra.mxu0 %v9196
        %v9361 = vpop.f32.mrf.mxu0
        %v9362 = vadd.f32 0.0, %v9361
        %v9363 = vpop.f32.mrf.mxu0
        %9364 = vmatprep.mubr.f32.mxu0 0.0
        %9365 = vmatmul.mubr.f32.gmra.mxu0 %v9199
        %v9366 = vpop.f32.mrf.mxu0
        %v9367 = vadd.f32 0.0, %v9366
        %v9368 = vpop.f32.mrf.mxu0
        %9369 = vmatprep.mubr.f32.mxu0 0.0
        %9370 = vmatmul.mubr.f32.gmra.mxu0 %v9202
        %v9371 = vpop.f32.mrf.mxu0
        %v9372 = vadd.f32 0.0, %v9371
        %v9373 = vpop.f32.mrf.mxu0
        %9374 = vmatprep.mubr.f32.mxu0 0.0
        %9375 = vmatmul.mubr.f32.gmra.mxu0 %v9205
        %v9376 = vpop.f32.mrf.mxu0
        %v9377 = vadd.f32 0.0, %v9376
        %v9378 = vpop.f32.mrf.mxu0
        %9379 = vmatprep.mubr.f32.mxu0 0.0
        %9380 = vmatmul.mubr.f32.gmra.mxu0 %v9208
        %v9381 = vpop.f32.mrf.mxu0
        %v9382 = vadd.f32 0.0, %v9381
        %v9383 = vpop.f32.mrf.mxu0
        %9384 = vmatprep.mubr.f32.mxu0 0.0
        %9385 = vmatmul.mubr.f32.gmra.mxu0 %v9211
        %v9386 = vpop.f32.mrf.mxu0
        %v9387 = vadd.f32 0.0, %v9386
        %v9388 = vpop.f32.mrf.mxu0
        %9389 = vmatprep.mubr.f32.mxu0 0.0
        %9390 = vmatmul.mubr.f32.gmra.mxu0 %v9214
        %v9391 = vpop.f32.mrf.mxu0
        %v9392 = vadd.f32 0.0, %v9391
        %v9393 = vpop.f32.mrf.mxu0
        %9394 = vmatprep.mubr.f32.mxu0 0.0
        %9395 = vmatmul.mubr.f32.gmra.mxu0 %v9217
        %v9396 = vpop.f32.mrf.mxu0
        %v9397 = vadd.f32 0.0, %v9396
        %v9398 = vpop.f32.mrf.mxu0
        %9399 = vmatprep.mubr.f32.mxu0 0.0
        %9400 = vmatmul.mubr.f32.gmra.mxu0 %v9220
        %v9401 = vpop.f32.mrf.mxu0
        %v9402 = vadd.f32 0.0, %v9401
        %v9403 = vpop.f32.mrf.mxu0
        %9404 = vmatprep.mubr.f32.mxu0 0.0
        %9405 = vmatmul.mubr.f32.gmra.mxu0 %v9223
        %v9406 = vpop.f32.mrf.mxu0
        %v9407 = vadd.f32 0.0, %v9406
        %v9408 = vpop.f32.mrf.mxu0
        %9409 = vmatprep.mubr.f32.mxu0 0.0
        %9410 = vmatmul.mubr.f32.gmra.mxu0 %v9226
        %v9411 = vpop.f32.mrf.mxu0
        %v9412 = vadd.f32 0.0, %v9411
        %v9413 = vpop.f32.mrf.mxu0
        %9414 = vmatprep.mubr.f32.mxu0 0.0
        %9415 = vmatmul.mubr.f32.gmra.mxu0 %v9229
        %v9416 = vpop.f32.mrf.mxu0
        %v9417 = vadd.f32 0.0, %v9416
        %v9418 = vpop.f32.mrf.mxu0
        %9419 = vmatprep.mubr.f32.mxu0 0.0
        %9420 = vmatmul.mubr.f32.gmra.mxu0 %v9232
        %v9421 = vpop.f32.mrf.mxu0
        %v9422 = vadd.f32 0.0, %v9421
        %v9423 = vpop.f32.mrf.mxu0
        %9424 = vmatprep.mubr.f32.mxu0 0.0
        %9425 = vmatmul.mubr.f32.gmra.mxu0 %v9235
        %v9426 = vpop.f32.mrf.mxu0
        %v9427 = vadd.f32 0.0, %v9426
        %v9428 = vpop.f32.mrf.mxu0
        %9429 = vmatprep.mubr.f32.mxu0 0.0
        %9430 = vmatmul.mubr.f32.gmra.mxu0 %v9238
        %v9431 = vpop.f32.mrf.mxu0
        %v9432 = vadd.f32 0.0, %v9431
        %v9433 = vpop.f32.mrf.mxu0
        %9434 = vmatprep.mubr.f32.mxu0 0.0
        %9435 = vmatmul.mubr.f32.gmra.mxu0 %v9241
        %v9436 = vpop.f32.mrf.mxu0
        %v9437 = vadd.f32 0.0, %v9436
        %v9438 = vpop.f32.mrf.mxu0
        %9439 = vmatprep.mubr.f32.mxu0 0.0
        %9440 = vmatmul.mubr.f32.gmra.mxu0 %v9244
        %v9441 = vpop.f32.mrf.mxu0
        %v9442 = vadd.f32 0.0, %v9441
        %v9443 = vpop.f32.mrf.mxu0
        %9444 = vmatprep.mubr.f32.mxu0 0.0
        %9445 = vmatmul.mubr.f32.gmra.mxu0 %v9247
        %v9446 = vpop.f32.mrf.mxu0
        %v9447 = vadd.f32 0.0, %v9446
        %v9448 = vpop.f32.mrf.mxu0
        %9449 = vmatprep.mubr.f32.mxu0 0.0
        %9450 = vmatmul.mubr.f32.gmra.mxu0 %v9250
        %v9451 = vpop.f32.mrf.mxu0
        %v9452 = vadd.f32 0.0, %v9451
        %v9453 = vpop.f32.mrf.mxu0
        %9454 = vmatprep.mubr.f32.mxu0 0.0
        %9455 = vmatmul.mubr.f32.gmra.mxu0 %v9253
        %v9456 = vpop.f32.mrf.mxu0
        %v9457 = vadd.f32 0.0, %v9456
        %v9458 = vpop.f32.mrf.mxu0
        %9459 = vmatprep.mubr.f32.mxu0 0.0
        %9460 = vmatmul.mubr.f32.gmra.mxu0 %v9256
        %v9461 = vpop.f32.mrf.mxu0
        %v9462 = vadd.f32 0.0, %v9461
        %v9463 = vpop.f32.mrf.mxu0
        %9464 = vmatprep.mubr.f32.mxu0 0.0
        %9465 = vmatmul.mubr.f32.gmra.mxu0 %v9259
        %v9466 = vpop.f32.mrf.mxu0
        %v9467 = vadd.f32 0.0, %v9466
        %v9468 = vpop.f32.mrf.mxu0
        %9469 = vmatprep.mubr.f32.mxu0 0.0
        %9470 = vmatmul.mubr.f32.gmra.mxu0 %v9262
        %v9471 = vpop.f32.mrf.mxu0
        %v9472 = vadd.f32 0.0, %v9471
        %v9473 = vpop.f32.mrf.mxu0
        %9474 = vmatprep.mubr.f32.mxu0 0.0
        %9475 = vmatmul.mubr.f32.gmra.mxu0 %v9265
        %v9476 = vpop.f32.mrf.mxu0
        %v9477 = vadd.f32 0.0, %v9476
        %v9478 = vpop.f32.mrf.mxu0
        %9479 = vmatprep.mubr.f32.mxu0 0.0
        %9480 = vmatmul.mubr.f32.gmra.mxu0 %v9268
        %v9481 = vpop.f32.mrf.mxu0
        %v9482 = vadd.f32 0.0, %v9481
        %v9483 = vpop.f32.mrf.mxu0
        %9484 = vmatprep.mubr.f32.mxu0 0.0
        %9485 = vmatmul.mubr.f32.gmra.mxu0 %v9271
        %v9486 = vpop.f32.mrf.mxu0
        %v9487 = vadd.f32 0.0, %v9486
        %v9488 = vpop.f32.mrf.mxu0
        %9489 = vmatprep.mubr.f32.mxu0 0.0
        %9490 = vmatmul.mubr.f32.gmra.mxu0 %v9274
        %v9491 = vpop.f32.mrf.mxu0
        %v9492 = vadd.f32 0.0, %v9491
        %v9493 = vpop.f32.mrf.mxu0
        %9494 = vmatprep.mubr.f32.mxu0 0.0
        %9495 = vmatmul.mubr.f32.gmra.mxu0 %v9277
        %v9496 = vpop.f32.mrf.mxu0
        %v9497 = vadd.f32 0.0, %v9496
        %v9498 = vpop.f32.mrf.mxu0
        %9499 = vmatprep.mubr.f32.mxu0 0.0
        %9500 = vmatmul.mubr.f32.gmra.mxu0 %v9280
        %v9501 = vpop.f32.mrf.mxu0
        %v9502 = vadd.f32 0.0, %v9501
        %v9503 = vpop.f32.mrf.mxu0
        %9504 = vmatprep.mubr.f32.mxu0 0.0
        %9505 = vmatmul.mubr.f32.gmra.mxu0 %v9283
        %v9506 = vpop.f32.mrf.mxu0
        %v9507 = vadd.f32 0.0, %v9506
        %v9508 = vpop.f32.mrf.mxu0
        %9509 = vdwg.mxu0
        %v9510 = vadd.f32 %v9116, %v9352
        %v9511 = vadd.f32 %v9117, %v9357
        %v9512 = vadd.f32 %v9118, %v9362
        %v9513 = vadd.f32 %v9119, %v9367
        %v9514 = vadd.f32 %v9120, %v9372
        %v9515 = vadd.f32 %v9121, %v9377
        %v9516 = vadd.f32 %v9122, %v9382
        %v9517 = vadd.f32 %v9123, %v9387
        %v9518 = vadd.f32 %v9124, %v9392
        %v9519 = vadd.f32 %v9125, %v9397
        %v9520 = vadd.f32 %v9126, %v9402
        %v9521 = vadd.f32 %v9127, %v9407
        %v9522 = vadd.f32 %v9128, %v9412
        %v9523 = vadd.f32 %v9129, %v9417
        %v9524 = vadd.f32 %v9130, %v9422
        %v9525 = vadd.f32 %v9131, %v9427
        %v9526 = vadd.f32 %v9132, %v9432
        %v9527 = vadd.f32 %v9133, %v9437
        %v9528 = vadd.f32 %v9134, %v9442
        %v9529 = vadd.f32 %v9135, %v9447
        %v9530 = vadd.f32 %v9136, %v9452
        %v9531 = vadd.f32 %v9137, %v9457
        %v9532 = vadd.f32 %v9138, %v9462
        %v9533 = vadd.f32 %v9139, %v9467
        %v9534 = vadd.f32 %v9140, %v9472
        %v9535 = vadd.f32 %v9141, %v9477
        %v9536 = vadd.f32 %v9142, %v9482
        %v9537 = vadd.f32 %v9143, %v9487
        %v9538 = vadd.f32 %v9144, %v9492
        %v9539 = vadd.f32 %v9145, %v9497
        %v9540 = vadd.f32 %v9146, %v9502
        %v9541 = vadd.f32 %v9147, %v9507
        %v9542 = vld [vmem:[%s8753 + $0x2] sm:$0xff]
        %v9543 = vld [vmem:[%s8753 + $0xa] sm:$0xff]
        %v9544 = vld [vmem:[%s8753 + $0x1a] sm:$0xff]
        %v9545 = vld [vmem:[%s8753 + $0x22] sm:$0xff]
        %v9546 = vld [vmem:[%s8753 + $0x32] sm:$0xff]
        %v9547 = vld [vmem:[%s8753 + $0x3a] sm:$0xff]
        %v9548 = vld [vmem:[%s8753 + $0x4a] sm:$0xff]
        %v9549 = vld [vmem:[%s8753 + $0x52] sm:$0xff]
        %v9550 = vld [vmem:[%s8753 + $0x62] sm:$0xff]
        %v9551 = vld [vmem:[%s8753 + $0x6a] sm:$0xff]
        %v9552 = vld [vmem:[%s8753 + $0x7a] sm:$0xff]
        %v9553 = vld [vmem:[%s8753 + $0x82] sm:$0xff]
        %v9554 = vld [vmem:[%s8753 + $0x92] sm:$0xff]
        %v9555 = vld [vmem:[%s8753 + $0x9a] sm:$0xff]
        %v9556 = vld [vmem:[%s8753 + $0xaa] sm:$0xff]
        %v9557 = vld [vmem:[%s8753 + $0xb2] sm:$0xff]
        %v9558 = vld [vmem:[%s8753 + $0xc2] sm:$0xff]
        %v9559 = vld [vmem:[%s8753 + $0xca] sm:$0xff]
        %v9560 = vld [vmem:[%s8753 + $0xda] sm:$0xff]
        %v9561 = vld [vmem:[%s8753 + $0xe2] sm:$0xff]
        %v9562 = vld [vmem:[%s8753 + $0xf2] sm:$0xff]
        %v9563 = vld [vmem:[%s8753 + $0xfa] sm:$0xff]
        %v9564 = vld [vmem:[%s8753 + $0x10a] sm:$0xff]
        %v9565 = vld [vmem:[%s8753 + $0x112] sm:$0xff]
        %v9566 = vld [vmem:[%s8753 + $0x122] sm:$0xff]
        %v9567 = vld [vmem:[%s8753 + $0x12a] sm:$0xff]
        %v9568 = vld [vmem:[%s8753 + $0x13a] sm:$0xff]
        %v9569 = vld [vmem:[%s8753 + $0x142] sm:$0xff]
        %v9570 = vld [vmem:[%s8753 + $0x152] sm:$0xff]
        %v9571 = vld [vmem:[%s8753 + $0x15a] sm:$0xff]
        %v9572 = vld [vmem:[%s8753 + $0x16a] sm:$0xff]
        %v9573 = vld [vmem:[%s8753 + $0x172] sm:$0xff]
        %s9574 = scalar_lea.vmem %s4, 512
        %v9575 = vld [vmem:[%s9574] sm:$0xff]
        %v9576 = vld [vmem:[%s9574 + $0x8] sm:$0xff]
        %v9577 = vld [vmem:[%s9574 + $0x10] sm:$0xff]
        %v9578 = vld [vmem:[%s9574 + $0x18] sm:$0xff]
        %v9579 = vld [vmem:[%s9574 + $0x20] sm:$0xff]
        %v9580 = vld [vmem:[%s9574 + $0x28] sm:$0xff]
        %v9581 = vld [vmem:[%s9574 + $0x30] sm:$0xff]
        %v9582 = vld [vmem:[%s9574 + $0x38] sm:$0xff]
        %v9584 = vsel %vm6076, %v9542, 0
        %v9587 = vsel %vm6076, %v9543, 0
        %v9590 = vsel %vm6076, %v9544, 0
        %v9593 = vsel %vm6076, %v9545, 0
        %v9596 = vsel %vm6076, %v9546, 0
        %v9599 = vsel %vm6076, %v9547, 0
        %v9602 = vsel %vm6076, %v9548, 0
        %v9605 = vsel %vm6076, %v9549, 0
        %v9608 = vsel %vm6076, %v9550, 0
        %v9611 = vsel %vm6076, %v9551, 0
        %v9614 = vsel %vm6076, %v9552, 0
        %v9617 = vsel %vm6076, %v9553, 0
        %v9620 = vsel %vm6076, %v9554, 0
        %v9623 = vsel %vm6076, %v9555, 0
        %v9626 = vsel %vm6076, %v9556, 0
        %v9629 = vsel %vm6076, %v9557, 0
        %v9632 = vsel %vm6076, %v9558, 0
        %v9635 = vsel %vm6076, %v9559, 0
        %v9638 = vsel %vm6076, %v9560, 0
        %v9641 = vsel %vm6076, %v9561, 0
        %v9644 = vsel %vm6076, %v9562, 0
        %v9647 = vsel %vm6076, %v9563, 0
        %v9650 = vsel %vm6076, %v9564, 0
        %v9653 = vsel %vm6076, %v9565, 0
        %v9656 = vsel %vm6076, %v9566, 0
        %v9659 = vsel %vm6076, %v9567, 0
        %v9662 = vsel %vm6076, %v9568, 0
        %v9665 = vsel %vm6076, %v9569, 0
        %v9668 = vsel %vm6076, %v9570, 0
        %v9671 = vsel %vm6076, %v9571, 0
        %v9674 = vsel %vm6076, %v9572, 0
        %v9677 = vsel %vm6076, %v9573, 0
        %9679 = vmatprep.subr.mxu0 0.0
        %9680 = vmatpush1.msra.mxu0 0.0
        %9681 = vmatprep.subr.mxu0 0.0
        %9682 = vmatpush1.msra.mxu0 0.0
        %9683 = vmatprep.subr.mxu0 0.0
        %9684 = vmatpush1.msra.mxu0 0.0
        %9685 = vmatprep.subr.mxu0 0.0
        %9686 = vmatpush1.msra.mxu0 0.0
        %9687 = vmatprep.subr.mxu0 0.0
        %9688 = vmatpush1.msra.mxu0 0.0
        %9689 = vmatprep.subr.mxu0 0.0
        %9690 = vmatpush1.msra.mxu0 0.0
        %9691 = vmatprep.subr.mxu0 0.0
        %9692 = vmatpush1.msra.mxu0 0.0
        %9693 = vmatprep.subr.mxu0 0.0
        %9694 = vmatpush1.msra.mxu0 0.0
        %9695 = vmatprep.subr.mxu0 0.0
        %9696 = vmatpush1.msra.mxu0 %v9582
        %9697 = vmatprep.subr.mxu0 0.0
        %9698 = vmatpush1.msra.mxu0 %v9581
        %9699 = vmatprep.subr.mxu0 0.0
        %9700 = vmatpush1.msra.mxu0 %v9580
        %9701 = vmatprep.subr.mxu0 0.0
        %9702 = vmatpush1.msra.mxu0 %v9579
        %9703 = vmatprep.subr.mxu0 0.0
        %9704 = vmatpush1.msra.mxu0 %v9578
        %9705 = vmatprep.subr.mxu0 0.0
        %9706 = vmatpush1.msra.mxu0 %v9577
        %9707 = vmatprep.subr.mxu0 0.0
        %9708 = vmatpush1.msra.mxu0 %v9576
        %9709 = vmatprep.subr.mxu0 0.0
        %9710 = vmatpush1.msra.mxu0 %v9575
        %9711 = vmatprep.subr.mxu0 0.0
        %9712 = vmatpush2.msra.mxu0 0.0
        %9713 = vmatprep.subr.mxu0 0.0
        %9714 = vmatpush2.msra.mxu0 0.0
        %9715 = vmatprep.subr.mxu0 0.0
        %9716 = vmatpush2.msra.mxu0 0.0
        %9717 = vmatprep.subr.mxu0 0.0
        %9718 = vmatpush2.msra.mxu0 0.0
        %9719 = vmatprep.subr.mxu0 0.0
        %9720 = vmatpush2.msra.mxu0 0.0
        %9721 = vmatprep.subr.mxu0 0.0
        %9722 = vmatpush2.msra.mxu0 0.0
        %9723 = vmatprep.subr.mxu0 0.0
        %9724 = vmatpush2.msra.mxu0 0.0
        %9725 = vmatprep.subr.mxu0 0.0
        %9726 = vmatpush2.msra.mxu0 0.0
        %9727 = vmatprep.subr.mxu0 0.0
        %9728 = vmatpush2.msra.mxu0 0.0
        %9729 = vmatprep.subr.mxu0 0.0
        %9730 = vmatpush2.msra.mxu0 0.0
        %9731 = vmatprep.subr.mxu0 0.0
        %9732 = vmatpush2.msra.mxu0 0.0
        %9733 = vmatprep.subr.mxu0 0.0
        %9734 = vmatpush2.msra.mxu0 0.0
        %9735 = vmatprep.subr.mxu0 0.0
        %9736 = vmatpush2.msra.mxu0 0.0
        %9737 = vmatprep.subr.mxu0 0.0
        %9738 = vmatpush2.msra.mxu0 0.0
        %9739 = vmatprep.subr.mxu0 0.0
        %9740 = vmatpush2.msra.mxu0 0.0
        %9741 = vmatprep.subr.mxu0 0.0
        %9742 = vmatpush2.msra.mxu0 0.0
        %9743 = vmatprep.mubr.f32.mxu0 0.0
        %9744 = vmatmul.mubr.f32.gmra.mxu0 %v9584
        %v9745 = vpop.f32.mrf.mxu0
        %v9746 = vadd.f32 0.0, %v9745
        %v9747 = vpop.f32.mrf.mxu0
        %9748 = vmatprep.mubr.f32.mxu0 0.0
        %9749 = vmatmul.mubr.f32.gmra.mxu0 %v9587
        %v9750 = vpop.f32.mrf.mxu0
        %v9751 = vadd.f32 0.0, %v9750
        %v9752 = vpop.f32.mrf.mxu0
        %9753 = vmatprep.mubr.f32.mxu0 0.0
        %9754 = vmatmul.mubr.f32.gmra.mxu0 %v9590
        %v9755 = vpop.f32.mrf.mxu0
        %v9756 = vadd.f32 0.0, %v9755
        %v9757 = vpop.f32.mrf.mxu0
        %9758 = vmatprep.mubr.f32.mxu0 0.0
        %9759 = vmatmul.mubr.f32.gmra.mxu0 %v9593
        %v9760 = vpop.f32.mrf.mxu0
        %v9761 = vadd.f32 0.0, %v9760
        %v9762 = vpop.f32.mrf.mxu0
        %9763 = vmatprep.mubr.f32.mxu0 0.0
        %9764 = vmatmul.mubr.f32.gmra.mxu0 %v9596
        %v9765 = vpop.f32.mrf.mxu0
        %v9766 = vadd.f32 0.0, %v9765
        %v9767 = vpop.f32.mrf.mxu0
        %9768 = vmatprep.mubr.f32.mxu0 0.0
        %9769 = vmatmul.mubr.f32.gmra.mxu0 %v9599
        %v9770 = vpop.f32.mrf.mxu0
        %v9771 = vadd.f32 0.0, %v9770
        %v9772 = vpop.f32.mrf.mxu0
        %9773 = vmatprep.mubr.f32.mxu0 0.0
        %9774 = vmatmul.mubr.f32.gmra.mxu0 %v9602
        %v9775 = vpop.f32.mrf.mxu0
        %v9776 = vadd.f32 0.0, %v9775
        %v9777 = vpop.f32.mrf.mxu0
        %9778 = vmatprep.mubr.f32.mxu0 0.0
        %9779 = vmatmul.mubr.f32.gmra.mxu0 %v9605
        %v9780 = vpop.f32.mrf.mxu0
        %v9781 = vadd.f32 0.0, %v9780
        %v9782 = vpop.f32.mrf.mxu0
        %9783 = vmatprep.mubr.f32.mxu0 0.0
        %9784 = vmatmul.mubr.f32.gmra.mxu0 %v9608
        %v9785 = vpop.f32.mrf.mxu0
        %v9786 = vadd.f32 0.0, %v9785
        %v9787 = vpop.f32.mrf.mxu0
        %9788 = vmatprep.mubr.f32.mxu0 0.0
        %9789 = vmatmul.mubr.f32.gmra.mxu0 %v9611
        %v9790 = vpop.f32.mrf.mxu0
        %v9791 = vadd.f32 0.0, %v9790
        %v9792 = vpop.f32.mrf.mxu0
        %9793 = vmatprep.mubr.f32.mxu0 0.0
        %9794 = vmatmul.mubr.f32.gmra.mxu0 %v9614
        %v9795 = vpop.f32.mrf.mxu0
        %v9796 = vadd.f32 0.0, %v9795
        %v9797 = vpop.f32.mrf.mxu0
        %9798 = vmatprep.mubr.f32.mxu0 0.0
        %9799 = vmatmul.mubr.f32.gmra.mxu0 %v9617
        %v9800 = vpop.f32.mrf.mxu0
        %v9801 = vadd.f32 0.0, %v9800
        %v9802 = vpop.f32.mrf.mxu0
        %9803 = vmatprep.mubr.f32.mxu0 0.0
        %9804 = vmatmul.mubr.f32.gmra.mxu0 %v9620
        %v9805 = vpop.f32.mrf.mxu0
        %v9806 = vadd.f32 0.0, %v9805
        %v9807 = vpop.f32.mrf.mxu0
        %9808 = vmatprep.mubr.f32.mxu0 0.0
        %9809 = vmatmul.mubr.f32.gmra.mxu0 %v9623
        %v9810 = vpop.f32.mrf.mxu0
        %v9811 = vadd.f32 0.0, %v9810
        %v9812 = vpop.f32.mrf.mxu0
        %9813 = vmatprep.mubr.f32.mxu0 0.0
        %9814 = vmatmul.mubr.f32.gmra.mxu0 %v9626
        %v9815 = vpop.f32.mrf.mxu0
        %v9816 = vadd.f32 0.0, %v9815
        %v9817 = vpop.f32.mrf.mxu0
        %9818 = vmatprep.mubr.f32.mxu0 0.0
        %9819 = vmatmul.mubr.f32.gmra.mxu0 %v9629
        %v9820 = vpop.f32.mrf.mxu0
        %v9821 = vadd.f32 0.0, %v9820
        %v9822 = vpop.f32.mrf.mxu0
        %9823 = vmatprep.mubr.f32.mxu0 0.0
        %9824 = vmatmul.mubr.f32.gmra.mxu0 %v9632
        %v9825 = vpop.f32.mrf.mxu0
        %v9826 = vadd.f32 0.0, %v9825
        %v9827 = vpop.f32.mrf.mxu0
        %9828 = vmatprep.mubr.f32.mxu0 0.0
        %9829 = vmatmul.mubr.f32.gmra.mxu0 %v9635
        %v9830 = vpop.f32.mrf.mxu0
        %v9831 = vadd.f32 0.0, %v9830
        %v9832 = vpop.f32.mrf.mxu0
        %9833 = vmatprep.mubr.f32.mxu0 0.0
        %9834 = vmatmul.mubr.f32.gmra.mxu0 %v9638
        %v9835 = vpop.f32.mrf.mxu0
        %v9836 = vadd.f32 0.0, %v9835
        %v9837 = vpop.f32.mrf.mxu0
        %9838 = vmatprep.mubr.f32.mxu0 0.0
        %9839 = vmatmul.mubr.f32.gmra.mxu0 %v9641
        %v9840 = vpop.f32.mrf.mxu0
        %v9841 = vadd.f32 0.0, %v9840
        %v9842 = vpop.f32.mrf.mxu0
        %9843 = vmatprep.mubr.f32.mxu0 0.0
        %9844 = vmatmul.mubr.f32.gmra.mxu0 %v9644
        %v9845 = vpop.f32.mrf.mxu0
        %v9846 = vadd.f32 0.0, %v9845
        %v9847 = vpop.f32.mrf.mxu0
        %9848 = vmatprep.mubr.f32.mxu0 0.0
        %9849 = vmatmul.mubr.f32.gmra.mxu0 %v9647
        %v9850 = vpop.f32.mrf.mxu0
        %v9851 = vadd.f32 0.0, %v9850
        %v9852 = vpop.f32.mrf.mxu0
        %9853 = vmatprep.mubr.f32.mxu0 0.0
        %9854 = vmatmul.mubr.f32.gmra.mxu0 %v9650
        %v9855 = vpop.f32.mrf.mxu0
        %v9856 = vadd.f32 0.0, %v9855
        %v9857 = vpop.f32.mrf.mxu0
        %9858 = vmatprep.mubr.f32.mxu0 0.0
        %9859 = vmatmul.mubr.f32.gmra.mxu0 %v9653
        %v9860 = vpop.f32.mrf.mxu0
        %v9861 = vadd.f32 0.0, %v9860
        %v9862 = vpop.f32.mrf.mxu0
        %9863 = vmatprep.mubr.f32.mxu0 0.0
        %9864 = vmatmul.mubr.f32.gmra.mxu0 %v9656
        %v9865 = vpop.f32.mrf.mxu0
        %v9866 = vadd.f32 0.0, %v9865
        %v9867 = vpop.f32.mrf.mxu0
        %9868 = vmatprep.mubr.f32.mxu0 0.0
        %9869 = vmatmul.mubr.f32.gmra.mxu0 %v9659
        %v9870 = vpop.f32.mrf.mxu0
        %v9871 = vadd.f32 0.0, %v9870
        %v9872 = vpop.f32.mrf.mxu0
        %9873 = vmatprep.mubr.f32.mxu0 0.0
        %9874 = vmatmul.mubr.f32.gmra.mxu0 %v9662
        %v9875 = vpop.f32.mrf.mxu0
        %v9876 = vadd.f32 0.0, %v9875
        %v9877 = vpop.f32.mrf.mxu0
        %9878 = vmatprep.mubr.f32.mxu0 0.0
        %9879 = vmatmul.mubr.f32.gmra.mxu0 %v9665
        %v9880 = vpop.f32.mrf.mxu0
        %v9881 = vadd.f32 0.0, %v9880
        %v9882 = vpop.f32.mrf.mxu0
        %9883 = vmatprep.mubr.f32.mxu0 0.0
        %9884 = vmatmul.mubr.f32.gmra.mxu0 %v9668
        %v9885 = vpop.f32.mrf.mxu0
        %v9886 = vadd.f32 0.0, %v9885
        %v9887 = vpop.f32.mrf.mxu0
        %9888 = vmatprep.mubr.f32.mxu0 0.0
        %9889 = vmatmul.mubr.f32.gmra.mxu0 %v9671
        %v9890 = vpop.f32.mrf.mxu0
        %v9891 = vadd.f32 0.0, %v9890
        %v9892 = vpop.f32.mrf.mxu0
        %9893 = vmatprep.mubr.f32.mxu0 0.0
        %9894 = vmatmul.mubr.f32.gmra.mxu0 %v9674
        %v9895 = vpop.f32.mrf.mxu0
        %v9896 = vadd.f32 0.0, %v9895
        %v9897 = vpop.f32.mrf.mxu0
        %9898 = vmatprep.mubr.f32.mxu0 0.0
        %9899 = vmatmul.mubr.f32.gmra.mxu0 %v9677
        %v9900 = vpop.f32.mrf.mxu0
        %v9901 = vadd.f32 0.0, %v9900
        %v9902 = vpop.f32.mrf.mxu0
        %9903 = vdwg.mxu0
        %v9904 = vadd.f32 %v9510, %v9746
        %v9905 = vadd.f32 %v9511, %v9751
        %v9906 = vadd.f32 %v9512, %v9756
        %v9907 = vadd.f32 %v9513, %v9761
        %v9908 = vadd.f32 %v9514, %v9766
        %v9909 = vadd.f32 %v9515, %v9771
        %v9910 = vadd.f32 %v9516, %v9776
        %v9911 = vadd.f32 %v9517, %v9781
        %v9912 = vadd.f32 %v9518, %v9786
        %v9913 = vadd.f32 %v9519, %v9791
        %v9914 = vadd.f32 %v9520, %v9796
        %v9915 = vadd.f32 %v9521, %v9801
        %v9916 = vadd.f32 %v9522, %v9806
        %v9917 = vadd.f32 %v9523, %v9811
        %v9918 = vadd.f32 %v9524, %v9816
        %v9919 = vadd.f32 %v9525, %v9821
        %v9920 = vadd.f32 %v9526, %v9826
        %v9921 = vadd.f32 %v9527, %v9831
        %v9922 = vadd.f32 %v9528, %v9836
        %v9923 = vadd.f32 %v9529, %v9841
        %v9924 = vadd.f32 %v9530, %v9846
        %v9925 = vadd.f32 %v9531, %v9851
        %v9926 = vadd.f32 %v9532, %v9856
        %v9927 = vadd.f32 %v9533, %v9861
        %v9928 = vadd.f32 %v9534, %v9866
        %v9929 = vadd.f32 %v9535, %v9871
        %v9930 = vadd.f32 %v9536, %v9876
        %v9931 = vadd.f32 %v9537, %v9881
        %v9932 = vadd.f32 %v9538, %v9886
        %v9933 = vadd.f32 %v9539, %v9891
        %v9934 = vadd.f32 %v9540, %v9896
        %v9935 = vadd.f32 %v9541, %v9901
        %9968 = vrot.lane.b32.xlu0 %v9904, 64
        %v9969 = vpop.permute.xlu0 %9968
        %9970 = vrot.lane.b32.xlu0 %v9905, 64
        %v9971 = vpop.permute.xlu0 %9970
        %9972 = vrot.lane.b32.xlu0 %v9906, 64
        %v9973 = vpop.permute.xlu0 %9972
        %9974 = vrot.lane.b32.xlu0 %v9907, 64
        %v9975 = vpop.permute.xlu0 %9974
        %9976 = vrot.lane.b32.xlu0 %v9908, 64
        %v9977 = vpop.permute.xlu0 %9976
        %9978 = vrot.lane.b32.xlu0 %v9909, 64
        %v9979 = vpop.permute.xlu0 %9978
        %9980 = vrot.lane.b32.xlu0 %v9910, 64
        %v9981 = vpop.permute.xlu0 %9980
        %9982 = vrot.lane.b32.xlu0 %v9911, 64
        %v9983 = vpop.permute.xlu0 %9982
        %9984 = vrot.lane.b32.xlu0 %v9912, 64
        %v9985 = vpop.permute.xlu0 %9984
        %9986 = vrot.lane.b32.xlu0 %v9913, 64
        %v9987 = vpop.permute.xlu0 %9986
        %9988 = vrot.lane.b32.xlu0 %v9914, 64
        %v9989 = vpop.permute.xlu0 %9988
        %9990 = vrot.lane.b32.xlu0 %v9915, 64
        %v9991 = vpop.permute.xlu0 %9990
        %9992 = vrot.lane.b32.xlu0 %v9916, 64
        %v9993 = vpop.permute.xlu0 %9992
        %9994 = vrot.lane.b32.xlu0 %v9917, 64
        %v9995 = vpop.permute.xlu0 %9994
        %9996 = vrot.lane.b32.xlu0 %v9918, 64
        %v9997 = vpop.permute.xlu0 %9996
        %9998 = vrot.lane.b32.xlu0 %v9919, 64
        %v9999 = vpop.permute.xlu0 %9998
        %10000 = vrot.lane.b32.xlu0 %v9920, 64
        %v10001 = vpop.permute.xlu0 %10000
        %10002 = vrot.lane.b32.xlu0 %v9921, 64
        %v10003 = vpop.permute.xlu0 %10002
        %10004 = vrot.lane.b32.xlu0 %v9922, 64
        %v10005 = vpop.permute.xlu0 %10004
        %10006 = vrot.lane.b32.xlu0 %v9923, 64
        %v10007 = vpop.permute.xlu0 %10006
        %10008 = vrot.lane.b32.xlu0 %v9924, 64
        %v10009 = vpop.permute.xlu0 %10008
        %10010 = vrot.lane.b32.xlu0 %v9925, 64
        %v10011 = vpop.permute.xlu0 %10010
        %10012 = vrot.lane.b32.xlu0 %v9926, 64
        %v10013 = vpop.permute.xlu0 %10012
        %10014 = vrot.lane.b32.xlu0 %v9927, 64
        %v10015 = vpop.permute.xlu0 %10014
        %10016 = vrot.lane.b32.xlu0 %v9928, 64
        %v10017 = vpop.permute.xlu0 %10016
        %10018 = vrot.lane.b32.xlu0 %v9929, 64
        %v10019 = vpop.permute.xlu0 %10018
        %10020 = vrot.lane.b32.xlu0 %v9930, 64
        %v10021 = vpop.permute.xlu0 %10020
        %10022 = vrot.lane.b32.xlu0 %v9931, 64
        %v10023 = vpop.permute.xlu0 %10022
        %10024 = vrot.lane.b32.xlu0 %v9932, 64
        %v10025 = vpop.permute.xlu0 %10024
        %10026 = vrot.lane.b32.xlu0 %v9933, 64
        %v10027 = vpop.permute.xlu0 %10026
        %10028 = vrot.lane.b32.xlu0 %v9934, 64
        %v10029 = vpop.permute.xlu0 %10028
        %10030 = vrot.lane.b32.xlu0 %v9935, 64
        %v10031 = vpop.permute.xlu0 %10030
        %v10064 = vadd.f32 %v4413, %v9969
        %v10065 = vadd.f32 %v4415, %v9971
        %v10066 = vadd.f32 %v4417, %v9973
        %v10067 = vadd.f32 %v4419, %v9975
        %v10068 = vadd.f32 %v4421, %v9977
        %v10069 = vadd.f32 %v4423, %v9979
        %v10070 = vadd.f32 %v4425, %v9981
        %v10071 = vadd.f32 %v4427, %v9983
        %v10072 = vadd.f32 %v4429, %v9985
        %v10073 = vadd.f32 %v4431, %v9987
        %v10074 = vadd.f32 %v4433, %v9989
        %v10075 = vadd.f32 %v4435, %v9991
        %v10076 = vadd.f32 %v4437, %v9993
        %v10077 = vadd.f32 %v4439, %v9995
        %v10078 = vadd.f32 %v4441, %v9997
        %v10079 = vadd.f32 %v4443, %v9999
        %v10080 = vadd.f32 %v4445, %v10001
        %v10081 = vadd.f32 %v4447, %v10003
        %v10082 = vadd.f32 %v4449, %v10005
        %v10083 = vadd.f32 %v4451, %v10007
        %v10084 = vadd.f32 %v4453, %v10009
        %v10085 = vadd.f32 %v4455, %v10011
        %v10086 = vadd.f32 %v4457, %v10013
        %v10087 = vadd.f32 %v4459, %v10015
        %v10088 = vadd.f32 %v4461, %v10017
        %v10089 = vadd.f32 %v4463, %v10019
        %v10090 = vadd.f32 %v4465, %v10021
        %v10091 = vadd.f32 %v4467, %v10023
        %v10092 = vadd.f32 %v4469, %v10025
        %v10093 = vadd.f32 %v4471, %v10027
        %v10094 = vadd.f32 %v4473, %v10029
        %v10095 = vadd.f32 %v4475, %v10031
        %v10096 = vxor.u32 %v10064, 2147483648
        %v10097 = vxor.u32 %v10065, 2147483648
        %v10098 = vxor.u32 %v10066, 2147483648
        %v10099 = vxor.u32 %v10067, 2147483648
        %v10100 = vxor.u32 %v10068, 2147483648
        %v10101 = vxor.u32 %v10069, 2147483648
        %v10102 = vxor.u32 %v10070, 2147483648
        %v10103 = vxor.u32 %v10071, 2147483648
        %v10104 = vxor.u32 %v10072, 2147483648
        %v10105 = vxor.u32 %v10073, 2147483648
        %v10106 = vxor.u32 %v10074, 2147483648
        %v10107 = vxor.u32 %v10075, 2147483648
        %v10108 = vxor.u32 %v10076, 2147483648
        %v10109 = vxor.u32 %v10077, 2147483648
        %v10110 = vxor.u32 %v10078, 2147483648
        %v10111 = vxor.u32 %v10079, 2147483648
        %v10112 = vxor.u32 %v10080, 2147483648
        %v10113 = vxor.u32 %v10081, 2147483648
        %v10114 = vxor.u32 %v10082, 2147483648
        %v10115 = vxor.u32 %v10083, 2147483648
        %v10116 = vxor.u32 %v10084, 2147483648
        %v10117 = vxor.u32 %v10085, 2147483648
        %v10118 = vxor.u32 %v10086, 2147483648
        %v10119 = vxor.u32 %v10087, 2147483648
        %v10120 = vxor.u32 %v10088, 2147483648
        %v10121 = vxor.u32 %v10089, 2147483648
        %v10122 = vxor.u32 %v10090, 2147483648
        %v10123 = vxor.u32 %v10091, 2147483648
        %v10124 = vxor.u32 %v10092, 2147483648
        %v10125 = vxor.u32 %v10093, 2147483648
        %v10126 = vxor.u32 %v10094, 2147483648
        %v10127 = vxor.u32 %v10095, 2147483648
        %v10128 = vmul.f32 %v10096, 1.442695
        %v10129 = vpow.pop %v10128
        %v10130 = vmul.f32 %v10097, 1.442695
        %v10131 = vpow.pop %v10130
        %v10132 = vmul.f32 %v10098, 1.442695
        %v10133 = vpow.pop %v10132
        %v10134 = vmul.f32 %v10099, 1.442695
        %v10135 = vpow.pop %v10134
        %v10136 = vmul.f32 %v10100, 1.442695
        %v10137 = vpow.pop %v10136
        %v10138 = vmul.f32 %v10101, 1.442695
        %v10139 = vpow.pop %v10138
        %v10140 = vmul.f32 %v10102, 1.442695
        %v10141 = vpow.pop %v10140
        %v10142 = vmul.f32 %v10103, 1.442695
        %v10143 = vpow.pop %v10142
        %v10144 = vmul.f32 %v10104, 1.442695
        %v10145 = vpow.pop %v10144
        %v10146 = vmul.f32 %v10105, 1.442695
        %v10147 = vpow.pop %v10146
        %v10148 = vmul.f32 %v10106, 1.442695
        %v10149 = vpow.pop %v10148
        %v10150 = vmul.f32 %v10107, 1.442695
        %v10151 = vpow.pop %v10150
        %v10152 = vmul.f32 %v10108, 1.442695
        %v10153 = vpow.pop %v10152
        %v10154 = vmul.f32 %v10109, 1.442695
        %v10155 = vpow.pop %v10154
        %v10156 = vmul.f32 %v10110, 1.442695
        %v10157 = vpow.pop %v10156
        %v10158 = vmul.f32 %v10111, 1.442695
        %v10159 = vpow.pop %v10158
        %v10160 = vmul.f32 %v10112, 1.442695
        %v10161 = vpow.pop %v10160
        %v10162 = vmul.f32 %v10113, 1.442695
        %v10163 = vpow.pop %v10162
        %v10164 = vmul.f32 %v10114, 1.442695
        %v10165 = vpow.pop %v10164
        %v10166 = vmul.f32 %v10115, 1.442695
        %v10167 = vpow.pop %v10166
        %v10168 = vmul.f32 %v10116, 1.442695
        %v10169 = vpow.pop %v10168
        %v10170 = vmul.f32 %v10117, 1.442695
        %v10171 = vpow.pop %v10170
        %v10172 = vmul.f32 %v10118, 1.442695
        %v10173 = vpow.pop %v10172
        %v10174 = vmul.f32 %v10119, 1.442695
        %v10175 = vpow.pop %v10174
        %v10176 = vmul.f32 %v10120, 1.442695
        %v10177 = vpow.pop %v10176
        %v10178 = vmul.f32 %v10121, 1.442695
        %v10179 = vpow.pop %v10178
        %v10180 = vmul.f32 %v10122, 1.442695
        %v10181 = vpow.pop %v10180
        %v10182 = vmul.f32 %v10123, 1.442695
        %v10183 = vpow.pop %v10182
        %v10184 = vmul.f32 %v10124, 1.442695
        %v10185 = vpow.pop %v10184
        %v10186 = vmul.f32 %v10125, 1.442695
        %v10187 = vpow.pop %v10186
        %v10188 = vmul.f32 %v10126, 1.442695
        %v10189 = vpow.pop %v10188
        %v10190 = vmul.f32 %v10127, 1.442695
        %v10191 = vpow.pop %v10190
        %v10192 = vadd.f32 %v10129, 1.0
        %v10193 = vadd.f32 %v10131, 1.0
        %v10194 = vadd.f32 %v10133, 1.0
        %v10195 = vadd.f32 %v10135, 1.0
        %v10196 = vadd.f32 %v10137, 1.0
        %v10197 = vadd.f32 %v10139, 1.0
        %v10198 = vadd.f32 %v10141, 1.0
        %v10199 = vadd.f32 %v10143, 1.0
        %v10200 = vadd.f32 %v10145, 1.0
        %v10201 = vadd.f32 %v10147, 1.0
        %v10202 = vadd.f32 %v10149, 1.0
        %v10203 = vadd.f32 %v10151, 1.0
        %v10204 = vadd.f32 %v10153, 1.0
        %v10205 = vadd.f32 %v10155, 1.0
        %v10206 = vadd.f32 %v10157, 1.0
        %v10207 = vadd.f32 %v10159, 1.0
        %v10208 = vadd.f32 %v10161, 1.0
        %v10209 = vadd.f32 %v10163, 1.0
        %v10210 = vadd.f32 %v10165, 1.0
        %v10211 = vadd.f32 %v10167, 1.0
        %v10212 = vadd.f32 %v10169, 1.0
        %v10213 = vadd.f32 %v10171, 1.0
        %v10214 = vadd.f32 %v10173, 1.0
        %v10215 = vadd.f32 %v10175, 1.0
        %v10216 = vadd.f32 %v10177, 1.0
        %v10217 = vadd.f32 %v10179, 1.0
        %v10218 = vadd.f32 %v10181, 1.0
        %v10219 = vadd.f32 %v10183, 1.0
        %v10220 = vadd.f32 %v10185, 1.0
        %v10221 = vadd.f32 %v10187, 1.0
        %v10222 = vadd.f32 %v10189, 1.0
        %v10223 = vadd.f32 %v10191, 1.0
        %v10224 = vrcp.pop %v10192
        %v10225 = vmul.f32 1.0, %v10224
        %v10226 = vrcp.pop %v10193
        %v10227 = vmul.f32 1.0, %v10226
        %v10228 = vrcp.pop %v10194
        %v10229 = vmul.f32 1.0, %v10228
        %v10230 = vrcp.pop %v10195
        %v10231 = vmul.f32 1.0, %v10230
        %v10232 = vrcp.pop %v10196
        %v10233 = vmul.f32 1.0, %v10232
        %v10234 = vrcp.pop %v10197
        %v10235 = vmul.f32 1.0, %v10234
        %v10236 = vrcp.pop %v10198
        %v10237 = vmul.f32 1.0, %v10236
        %v10238 = vrcp.pop %v10199
        %v10239 = vmul.f32 1.0, %v10238
        %v10240 = vrcp.pop %v10200
        %v10241 = vmul.f32 1.0, %v10240
        %v10242 = vrcp.pop %v10201
        %v10243 = vmul.f32 1.0, %v10242
        %v10244 = vrcp.pop %v10202
        %v10245 = vmul.f32 1.0, %v10244
        %v10246 = vrcp.pop %v10203
        %v10247 = vmul.f32 1.0, %v10246
        %v10248 = vrcp.pop %v10204
        %v10249 = vmul.f32 1.0, %v10248
        %v10250 = vrcp.pop %v10205
        %v10251 = vmul.f32 1.0, %v10250
        %v10252 = vrcp.pop %v10206
        %v10253 = vmul.f32 1.0, %v10252
        %v10254 = vrcp.pop %v10207
        %v10255 = vmul.f32 1.0, %v10254
        %v10256 = vrcp.pop %v10208
        %v10257 = vmul.f32 1.0, %v10256
        %v10258 = vrcp.pop %v10209
        %v10259 = vmul.f32 1.0, %v10258
        %v10260 = vrcp.pop %v10210
        %v10261 = vmul.f32 1.0, %v10260
        %v10262 = vrcp.pop %v10211
        %v10263 = vmul.f32 1.0, %v10262
        %v10264 = vrcp.pop %v10212
        %v10265 = vmul.f32 1.0, %v10264
        %v10266 = vrcp.pop %v10213
        %v10267 = vmul.f32 1.0, %v10266
        %v10268 = vrcp.pop %v10214
        %v10269 = vmul.f32 1.0, %v10268
        %v10270 = vrcp.pop %v10215
        %v10271 = vmul.f32 1.0, %v10270
        %v10272 = vrcp.pop %v10216
        %v10273 = vmul.f32 1.0, %v10272
        %v10274 = vrcp.pop %v10217
        %v10275 = vmul.f32 1.0, %v10274
        %v10276 = vrcp.pop %v10218
        %v10277 = vmul.f32 1.0, %v10276
        %v10278 = vrcp.pop %v10219
        %v10279 = vmul.f32 1.0, %v10278
        %v10280 = vrcp.pop %v10220
        %v10281 = vmul.f32 1.0, %v10280
        %v10282 = vrcp.pop %v10221
        %v10283 = vmul.f32 1.0, %v10282
        %v10284 = vrcp.pop %v10222
        %v10285 = vmul.f32 1.0, %v10284
        %v10286 = vrcp.pop %v10223
        %v10287 = vmul.f32 1.0, %v10286
        %v10288 = vtanh.pop %v9904
        %v10289 = vtanh.pop %v9905
        %v10290 = vtanh.pop %v9906
        %v10291 = vtanh.pop %v9907
        %v10292 = vtanh.pop %v9908
        %v10293 = vtanh.pop %v9909
        %v10294 = vtanh.pop %v9910
        %v10295 = vtanh.pop %v9911
        %v10296 = vtanh.pop %v9912
        %v10297 = vtanh.pop %v9913
        %v10298 = vtanh.pop %v9914
        %v10299 = vtanh.pop %v9915
        %v10300 = vtanh.pop %v9916
        %v10301 = vtanh.pop %v9917
        %v10302 = vtanh.pop %v9918
        %v10303 = vtanh.pop %v9919
        %v10304 = vtanh.pop %v9920
        %v10305 = vtanh.pop %v9921
        %v10306 = vtanh.pop %v9922
        %v10307 = vtanh.pop %v9923
        %v10308 = vtanh.pop %v9924
        %v10309 = vtanh.pop %v9925
        %v10310 = vtanh.pop %v9926
        %v10311 = vtanh.pop %v9927
        %v10312 = vtanh.pop %v9928
        %v10313 = vtanh.pop %v9929
        %v10314 = vtanh.pop %v9930
        %v10315 = vtanh.pop %v9931
        %v10316 = vtanh.pop %v9932
        %v10317 = vtanh.pop %v9933
        %v10318 = vtanh.pop %v9934
        %v10319 = vtanh.pop %v9935
        %10352 = vrot.lane.b32.xlu0 %v10288, 32
        %v10353 = vpop.permute.xlu0 %10352
        %10354 = vrot.lane.b32.xlu0 %v10289, 32
        %v10355 = vpop.permute.xlu0 %10354
        %10356 = vrot.lane.b32.xlu0 %v10290, 32
        %v10357 = vpop.permute.xlu0 %10356
        %10358 = vrot.lane.b32.xlu0 %v10291, 32
        %v10359 = vpop.permute.xlu0 %10358
        %10360 = vrot.lane.b32.xlu0 %v10292, 32
        %v10361 = vpop.permute.xlu0 %10360
        %10362 = vrot.lane.b32.xlu0 %v10293, 32
        %v10363 = vpop.permute.xlu0 %10362
        %10364 = vrot.lane.b32.xlu0 %v10294, 32
        %v10365 = vpop.permute.xlu0 %10364
        %10366 = vrot.lane.b32.xlu0 %v10295, 32
        %v10367 = vpop.permute.xlu0 %10366
        %10368 = vrot.lane.b32.xlu0 %v10296, 32
        %v10369 = vpop.permute.xlu0 %10368
        %10370 = vrot.lane.b32.xlu0 %v10297, 32
        %v10371 = vpop.permute.xlu0 %10370
        %10372 = vrot.lane.b32.xlu0 %v10298, 32
        %v10373 = vpop.permute.xlu0 %10372
        %10374 = vrot.lane.b32.xlu0 %v10299, 32
        %v10375 = vpop.permute.xlu0 %10374
        %10376 = vrot.lane.b32.xlu0 %v10300, 32
        %v10377 = vpop.permute.xlu0 %10376
        %10378 = vrot.lane.b32.xlu0 %v10301, 32
        %v10379 = vpop.permute.xlu0 %10378
        %10380 = vrot.lane.b32.xlu0 %v10302, 32
        %v10381 = vpop.permute.xlu0 %10380
        %10382 = vrot.lane.b32.xlu0 %v10303, 32
        %v10383 = vpop.permute.xlu0 %10382
        %10384 = vrot.lane.b32.xlu0 %v10304, 32
        %v10385 = vpop.permute.xlu0 %10384
        %10386 = vrot.lane.b32.xlu0 %v10305, 32
        %v10387 = vpop.permute.xlu0 %10386
        %10388 = vrot.lane.b32.xlu0 %v10306, 32
        %v10389 = vpop.permute.xlu0 %10388
        %10390 = vrot.lane.b32.xlu0 %v10307, 32
        %v10391 = vpop.permute.xlu0 %10390
        %10392 = vrot.lane.b32.xlu0 %v10308, 32
        %v10393 = vpop.permute.xlu0 %10392
        %10394 = vrot.lane.b32.xlu0 %v10309, 32
        %v10395 = vpop.permute.xlu0 %10394
        %10396 = vrot.lane.b32.xlu0 %v10310, 32
        %v10397 = vpop.permute.xlu0 %10396
        %10398 = vrot.lane.b32.xlu0 %v10311, 32
        %v10399 = vpop.permute.xlu0 %10398
        %10400 = vrot.lane.b32.xlu0 %v10312, 32
        %v10401 = vpop.permute.xlu0 %10400
        %10402 = vrot.lane.b32.xlu0 %v10313, 32
        %v10403 = vpop.permute.xlu0 %10402
        %10404 = vrot.lane.b32.xlu0 %v10314, 32
        %v10405 = vpop.permute.xlu0 %10404
        %10406 = vrot.lane.b32.xlu0 %v10315, 32
        %v10407 = vpop.permute.xlu0 %10406
        %10408 = vrot.lane.b32.xlu0 %v10316, 32
        %v10409 = vpop.permute.xlu0 %10408
        %10410 = vrot.lane.b32.xlu0 %v10317, 32
        %v10411 = vpop.permute.xlu0 %10410
        %10412 = vrot.lane.b32.xlu0 %v10318, 32
        %v10413 = vpop.permute.xlu0 %10412
        %10414 = vrot.lane.b32.xlu0 %v10319, 32
        %v10415 = vpop.permute.xlu0 %10414
        %v10448 = vmul.f32 %v10225, %v10353
        %v10449 = vmul.f32 %v10227, %v10355
        %v10450 = vmul.f32 %v10229, %v10357
        %v10451 = vmul.f32 %v10231, %v10359
        %v10452 = vmul.f32 %v10233, %v10361
        %v10453 = vmul.f32 %v10235, %v10363
        %v10454 = vmul.f32 %v10237, %v10365
        %v10455 = vmul.f32 %v10239, %v10367
        %v10456 = vmul.f32 %v10241, %v10369
        %v10457 = vmul.f32 %v10243, %v10371
        %v10458 = vmul.f32 %v10245, %v10373
        %v10459 = vmul.f32 %v10247, %v10375
        %v10460 = vmul.f32 %v10249, %v10377
        %v10461 = vmul.f32 %v10251, %v10379
        %v10462 = vmul.f32 %v10253, %v10381
        %v10463 = vmul.f32 %v10255, %v10383
        %v10464 = vmul.f32 %v10257, %v10385
        %v10465 = vmul.f32 %v10259, %v10387
        %v10466 = vmul.f32 %v10261, %v10389
        %v10467 = vmul.f32 %v10263, %v10391
        %v10468 = vmul.f32 %v10265, %v10393
        %v10469 = vmul.f32 %v10267, %v10395
        %v10470 = vmul.f32 %v10269, %v10397
        %v10471 = vmul.f32 %v10271, %v10399
        %v10472 = vmul.f32 %v10273, %v10401
        %v10473 = vmul.f32 %v10275, %v10403
        %v10474 = vmul.f32 %v10277, %v10405
        %v10475 = vmul.f32 %v10279, %v10407
        %v10476 = vmul.f32 %v10281, %v10409
        %v10477 = vmul.f32 %v10283, %v10411
        %v10478 = vmul.f32 %v10285, %v10413
        %v10479 = vmul.f32 %v10287, %v10415
        %10512 = vrot.lane.b32.xlu0 %v10448, 64
        %v10513 = vpop.permute.xlu0 %10512
        %10514 = vrot.lane.b32.xlu0 %v10449, 64
        %v10515 = vpop.permute.xlu0 %10514
        %10516 = vrot.lane.b32.xlu0 %v10450, 64
        %v10517 = vpop.permute.xlu0 %10516
        %10518 = vrot.lane.b32.xlu0 %v10451, 64
        %v10519 = vpop.permute.xlu0 %10518
        %10520 = vrot.lane.b32.xlu0 %v10452, 64
        %v10521 = vpop.permute.xlu0 %10520
        %10522 = vrot.lane.b32.xlu0 %v10453, 64
        %v10523 = vpop.permute.xlu0 %10522
        %10524 = vrot.lane.b32.xlu0 %v10454, 64
        %v10525 = vpop.permute.xlu0 %10524
        %10526 = vrot.lane.b32.xlu0 %v10455, 64
        %v10527 = vpop.permute.xlu0 %10526
        %10528 = vrot.lane.b32.xlu0 %v10456, 64
        %v10529 = vpop.permute.xlu0 %10528
        %10530 = vrot.lane.b32.xlu0 %v10457, 64
        %v10531 = vpop.permute.xlu0 %10530
        %10532 = vrot.lane.b32.xlu0 %v10458, 64
        %v10533 = vpop.permute.xlu0 %10532
        %10534 = vrot.lane.b32.xlu0 %v10459, 64
        %v10535 = vpop.permute.xlu0 %10534
        %10536 = vrot.lane.b32.xlu0 %v10460, 64
        %v10537 = vpop.permute.xlu0 %10536
        %10538 = vrot.lane.b32.xlu0 %v10461, 64
        %v10539 = vpop.permute.xlu0 %10538
        %10540 = vrot.lane.b32.xlu0 %v10462, 64
        %v10541 = vpop.permute.xlu0 %10540
        %10542 = vrot.lane.b32.xlu0 %v10463, 64
        %v10543 = vpop.permute.xlu0 %10542
        %10544 = vrot.lane.b32.xlu0 %v10464, 64
        %v10545 = vpop.permute.xlu0 %10544
        %10546 = vrot.lane.b32.xlu0 %v10465, 64
        %v10547 = vpop.permute.xlu0 %10546
        %10548 = vrot.lane.b32.xlu0 %v10466, 64
        %v10549 = vpop.permute.xlu0 %10548
        %10550 = vrot.lane.b32.xlu0 %v10467, 64
        %v10551 = vpop.permute.xlu0 %10550
        %10552 = vrot.lane.b32.xlu0 %v10468, 64
        %v10553 = vpop.permute.xlu0 %10552
        %10554 = vrot.lane.b32.xlu0 %v10469, 64
        %v10555 = vpop.permute.xlu0 %10554
        %10556 = vrot.lane.b32.xlu0 %v10470, 64
        %v10557 = vpop.permute.xlu0 %10556
        %10558 = vrot.lane.b32.xlu0 %v10471, 64
        %v10559 = vpop.permute.xlu0 %10558
        %10560 = vrot.lane.b32.xlu0 %v10472, 64
        %v10561 = vpop.permute.xlu0 %10560
        %10562 = vrot.lane.b32.xlu0 %v10473, 64
        %v10563 = vpop.permute.xlu0 %10562
        %10564 = vrot.lane.b32.xlu0 %v10474, 64
        %v10565 = vpop.permute.xlu0 %10564
        %10566 = vrot.lane.b32.xlu0 %v10475, 64
        %v10567 = vpop.permute.xlu0 %10566
        %10568 = vrot.lane.b32.xlu0 %v10476, 64
        %v10569 = vpop.permute.xlu0 %10568
        %10570 = vrot.lane.b32.xlu0 %v10477, 64
        %v10571 = vpop.permute.xlu0 %10570
        %10572 = vrot.lane.b32.xlu0 %v10478, 64
        %v10573 = vpop.permute.xlu0 %10572
        %10574 = vrot.lane.b32.xlu0 %v10479, 64
        %v10575 = vpop.permute.xlu0 %10574
        %10608 = vst.msk [vmem:[%s305] sm:$0xff] %vm6388, %v10513
        %10609 = vst.msk [vmem:[%s305 + $0x8] sm:$0xff] %vm6388, %v10515
        %10610 = vst.msk [vmem:[%s305 + $0x10] sm:$0xff] %vm6388, %v10517
        %10611 = vst.msk [vmem:[%s305 + $0x18] sm:$0xff] %vm6388, %v10519
        %10612 = vst.msk [vmem:[%s305 + $0x20] sm:$0xff] %vm6388, %v10521
        %10613 = vst.msk [vmem:[%s305 + $0x28] sm:$0xff] %vm6388, %v10523
        %10614 = vst.msk [vmem:[%s305 + $0x30] sm:$0xff] %vm6388, %v10525
        %10615 = vst.msk [vmem:[%s305 + $0x38] sm:$0xff] %vm6388, %v10527
        %10616 = vst.msk [vmem:[%s305 + $0x40] sm:$0xff] %vm6388, %v10529
        %10617 = vst.msk [vmem:[%s305 + $0x48] sm:$0xff] %vm6388, %v10531
        %10618 = vst.msk [vmem:[%s305 + $0x50] sm:$0xff] %vm6388, %v10533
        %10619 = vst.msk [vmem:[%s305 + $0x58] sm:$0xff] %vm6388, %v10535
        %10620 = vst.msk [vmem:[%s305 + $0x60] sm:$0xff] %vm6388, %v10537
        %10621 = vst.msk [vmem:[%s305 + $0x68] sm:$0xff] %vm6388, %v10539
        %10622 = vst.msk [vmem:[%s305 + $0x70] sm:$0xff] %vm6388, %v10541
        %10623 = vst.msk [vmem:[%s305 + $0x78] sm:$0xff] %vm6388, %v10543
        %10624 = vst.msk [vmem:[%s305 + $0x80] sm:$0xff] %vm6388, %v10545
        %10625 = vst.msk [vmem:[%s305 + $0x88] sm:$0xff] %vm6388, %v10547
        %10626 = vst.msk [vmem:[%s305 + $0x90] sm:$0xff] %vm6388, %v10549
        %10627 = vst.msk [vmem:[%s305 + $0x98] sm:$0xff] %vm6388, %v10551
        %10628 = vst.msk [vmem:[%s305 + $0xa0] sm:$0xff] %vm6388, %v10553
        %10629 = vst.msk [vmem:[%s305 + $0xa8] sm:$0xff] %vm6388, %v10555
        %10630 = vst.msk [vmem:[%s305 + $0xb0] sm:$0xff] %vm6388, %v10557
        %10631 = vst.msk [vmem:[%s305 + $0xb8] sm:$0xff] %vm6388, %v10559
        %10632 = vst.msk [vmem:[%s305 + $0xc0] sm:$0xff] %vm6388, %v10561
        %10633 = vst.msk [vmem:[%s305 + $0xc8] sm:$0xff] %vm6388, %v10563
        %10634 = vst.msk [vmem:[%s305 + $0xd0] sm:$0xff] %vm6388, %v10565
        %10635 = vst.msk [vmem:[%s305 + $0xd8] sm:$0xff] %vm6388, %v10567
        %10636 = vst.msk [vmem:[%s305 + $0xe0] sm:$0xff] %vm6388, %v10569
        %10637 = vst.msk [vmem:[%s305 + $0xe8] sm:$0xff] %vm6388, %v10571
        %10638 = vst.msk [vmem:[%s305 + $0xf0] sm:$0xff] %vm6388, %v10573
        %10639 = vst.msk [vmem:[%s305 + $0xf8] sm:$0xff] %vm6388, %v10575
        %10640 = vst.msk [vmem:[%s312] sm:$0xff] %vm6388, %v6165
        %10641 = vst.msk [vmem:[%s312 + $0x8] sm:$0xff] %vm6388, %v6167
        %10642 = vst.msk [vmem:[%s312 + $0x10] sm:$0xff] %vm6388, %v6169
        %10643 = vst.msk [vmem:[%s312 + $0x18] sm:$0xff] %vm6388, %v6171
        %10644 = vst.msk [vmem:[%s312 + $0x20] sm:$0xff] %vm6388, %v6173
        %10645 = vst.msk [vmem:[%s312 + $0x28] sm:$0xff] %vm6388, %v6175
        %10646 = vst.msk [vmem:[%s312 + $0x30] sm:$0xff] %vm6388, %v6177
        %10647 = vst.msk [vmem:[%s312 + $0x38] sm:$0xff] %vm6388, %v6179
        %10648 = vst.msk [vmem:[%s312 + $0x40] sm:$0xff] %vm6388, %v6181
        %10649 = vst.msk [vmem:[%s312 + $0x48] sm:$0xff] %vm6388, %v6183
        %10650 = vst.msk [vmem:[%s312 + $0x50] sm:$0xff] %vm6388, %v6185
        %10651 = vst.msk [vmem:[%s312 + $0x58] sm:$0xff] %vm6388, %v6187
        %10652 = vst.msk [vmem:[%s312 + $0x60] sm:$0xff] %vm6388, %v6189
        %10653 = vst.msk [vmem:[%s312 + $0x68] sm:$0xff] %vm6388, %v6191
        %10654 = vst.msk [vmem:[%s312 + $0x70] sm:$0xff] %vm6388, %v6193
        %10655 = vst.msk [vmem:[%s312 + $0x78] sm:$0xff] %vm6388, %v6195
        %10656 = vst.msk [vmem:[%s312 + $0x80] sm:$0xff] %vm6388, %v6197
        %10657 = vst.msk [vmem:[%s312 + $0x88] sm:$0xff] %vm6388, %v6199
        %10658 = vst.msk [vmem:[%s312 + $0x90] sm:$0xff] %vm6388, %v6201
        %10659 = vst.msk [vmem:[%s312 + $0x98] sm:$0xff] %vm6388, %v6203
        %10660 = vst.msk [vmem:[%s312 + $0xa0] sm:$0xff] %vm6388, %v6205
        %10661 = vst.msk [vmem:[%s312 + $0xa8] sm:$0xff] %vm6388, %v6207
        %10662 = vst.msk [vmem:[%s312 + $0xb0] sm:$0xff] %vm6388, %v6209
        %10663 = vst.msk [vmem:[%s312 + $0xb8] sm:$0xff] %vm6388, %v6211
        %10664 = vst.msk [vmem:[%s312 + $0xc0] sm:$0xff] %vm6388, %v6213
        %10665 = vst.msk [vmem:[%s312 + $0xc8] sm:$0xff] %vm6388, %v6215
        %10666 = vst.msk [vmem:[%s312 + $0xd0] sm:$0xff] %vm6388, %v6217
        %10667 = vst.msk [vmem:[%s312 + $0xd8] sm:$0xff] %vm6388, %v6219
        %10668 = vst.msk [vmem:[%s312 + $0xe0] sm:$0xff] %vm6388, %v6221
        %10669 = vst.msk [vmem:[%s312 + $0xe8] sm:$0xff] %vm6388, %v6223
        %10670 = vst.msk [vmem:[%s312 + $0xf0] sm:$0xff] %vm6388, %v6225
        %10671 = vst.msk [vmem:[%s312 + $0xf8] sm:$0xff] %vm6388, %v6227
        %10672 = vst.msk [vmem:[%s319] sm:$0xff] %vm6388, %v6044
        %10673 = vst.msk [vmem:[%s319 + $0x8] sm:$0xff] %vm6388, %v6045
        %10674 = vst.msk [vmem:[%s319 + $0x10] sm:$0xff] %vm6388, %v6046
        %10675 = vst.msk [vmem:[%s319 + $0x18] sm:$0xff] %vm6388, %v6047
        %10676 = vst.msk [vmem:[%s319 + $0x20] sm:$0xff] %vm6388, %v6048
        %10677 = vst.msk [vmem:[%s319 + $0x28] sm:$0xff] %vm6388, %v6049
        %10678 = vst.msk [vmem:[%s319 + $0x30] sm:$0xff] %vm6388, %v6050
        %10679 = vst.msk [vmem:[%s319 + $0x38] sm:$0xff] %vm6388, %v6051
        %10680 = vst.msk [vmem:[%s319 + $0x40] sm:$0xff] %vm6388, %v6052
        %10681 = vst.msk [vmem:[%s319 + $0x48] sm:$0xff] %vm6388, %v6053
        %10682 = vst.msk [vmem:[%s319 + $0x50] sm:$0xff] %vm6388, %v6054
        %10683 = vst.msk [vmem:[%s319 + $0x58] sm:$0xff] %vm6388, %v6055
        %10684 = vst.msk [vmem:[%s319 + $0x60] sm:$0xff] %vm6388, %v6056
        %10685 = vst.msk [vmem:[%s319 + $0x68] sm:$0xff] %vm6388, %v6057
        %10686 = vst.msk [vmem:[%s319 + $0x70] sm:$0xff] %vm6388, %v6058
        %10687 = vst.msk [vmem:[%s319 + $0x78] sm:$0xff] %vm6388, %v6059
        %10688 = vst.msk [vmem:[%s319 + $0x80] sm:$0xff] %vm6388, %v6060
        %10689 = vst.msk [vmem:[%s319 + $0x88] sm:$0xff] %vm6388, %v6061
        %10690 = vst.msk [vmem:[%s319 + $0x90] sm:$0xff] %vm6388, %v6062
        %10691 = vst.msk [vmem:[%s319 + $0x98] sm:$0xff] %vm6388, %v6063
        %10692 = vst.msk [vmem:[%s319 + $0xa0] sm:$0xff] %vm6388, %v6064
        %10693 = vst.msk [vmem:[%s319 + $0xa8] sm:$0xff] %vm6388, %v6065
        %10694 = vst.msk [vmem:[%s319 + $0xb0] sm:$0xff] %vm6388, %v6066
        %10695 = vst.msk [vmem:[%s319 + $0xb8] sm:$0xff] %vm6388, %v6067
        %10696 = vst.msk [vmem:[%s319 + $0xc0] sm:$0xff] %vm6388, %v6068
        %10697 = vst.msk [vmem:[%s319 + $0xc8] sm:$0xff] %vm6388, %v6069
        %10698 = vst.msk [vmem:[%s319 + $0xd0] sm:$0xff] %vm6388, %v6070
        %10699 = vst.msk [vmem:[%s319 + $0xd8] sm:$0xff] %vm6388, %v6071
        %10700 = vst.msk [vmem:[%s319 + $0xe0] sm:$0xff] %vm6388, %v6072
        %10701 = vst.msk [vmem:[%s319 + $0xe8] sm:$0xff] %vm6388, %v6073
        %10702 = vst.msk [vmem:[%s319 + $0xf0] sm:$0xff] %vm6388, %v6074
        %10703 = vst.msk [vmem:[%s319 + $0xf8] sm:$0xff] %vm6388, %v6075
        %s10704 = sand.u32 %s153, 1
        %s10705 = scalar_lea.sflag [#allocation4], %s10704
        %s10706 = sand.u32 %s153, 1
        %s10707 = smul.addr %s10706, 256
        %s10708 = scalar_lea.vmem [#allocation3], %s10707
        %s10709 = sand.u32 %s25, 1
        %s10710 = scalar_lea.sflag [#allocation6], %s10709
        %s10711 = sand.u32 %s179, 1
        %s10712 = smul.addr %s10711, 256
        %s10713 = scalar_lea.vmem [#allocation5], %s10712
        %s10714 = sand.u32 %s25, 1
        %s10715 = scalar_lea.sflag [#allocation6], %s10714
        %s10716 = sand.u32 %s205, 1
        %s10717 = smul.addr %s10716, 256
        %s10718 = scalar_lea.vmem [#allocation7], %s10717
        // Predicated region
        $region41: #{st_lstm_cell.1} parent=39 // pred_check
          %p10719 = pneg %p163
        $region42: #{st_lstm_cell.1} parent=39 // pred_check_branch
          %10721 = sbr.rel (%p10719) target = $region44
        $region43: #{st_lstm_cell.1} parent=39 // pred_region
          %s10723 = ssub.s32 4096, 4096
          %10724 = vsyncadd %s10705, %s10723
          %s10725 = smul.addr %s25, 32
          %s10726 = smul.addr %s10725, 128
          %s10727 = scalar_lea.hbm %s5, %s10726
          %s10728 = sshll.u32 %s10708, 4
          %s10729 = int_to_ptr.vmem [resolvable:$true] %s10728
          %10734 = dma.vmem_to_hbm [thread:$0]  %s10729, 4096, %s10727, %s10705, 128, 128, 8
        $region44: #{st_lstm_cell.1} parent=39 // pred_fallthru
          _
        // Predicated region
        $region45: #{st_lstm_cell.1} parent=39 // pred_check
          %p10735 = pneg %p189
        $region46: #{st_lstm_cell.1} parent=39 // pred_check_branch
          %10737 = sbr.rel (%p10735) target = $region48
        $region47: #{st_lstm_cell.1} parent=39 // pred_region
          %s10739 = ssub.s32 4096, 4096
          %10740 = vsyncadd %s10710, %s10739
          %s10741 = smul.addr %s25, 32
          %s10742 = smul.addr %s10741, 128
          %s10743 = scalar_lea.hbm %s6, %s10742
          %s10744 = sshll.u32 %s10713, 4
          %s10745 = int_to_ptr.vmem [resolvable:$true] %s10744
          %10750 = dma.vmem_to_hbm [thread:$0]  %s10745, 4096, %s10743, %s10710, 128, 128, 8
        $region48: #{st_lstm_cell.1} parent=39 // pred_fallthru
          _
        // Predicated region
        $region49: #{st_lstm_cell.1} parent=39 // pred_check
          %p10751 = pneg %p215
        $region50: #{st_lstm_cell.1} parent=39 // pred_check_branch
          %10753 = sbr.rel (%p10751) target = $region52
        $region51: #{st_lstm_cell.1} parent=39 // pred_region
          %s10755 = ssub.s32 4096, 4096
          %10756 = vsyncadd %s10715, %s10755
          %s10757 = smul.addr %s25, 32
          %s10758 = smul.addr %s10757, 128
          %s10759 = scalar_lea.hbm %s7, %s10758
          %s10760 = sshll.u32 %s10718, 4
          %s10761 = int_to_ptr.vmem [resolvable:$true] %s10760
          %10766 = dma.vmem_to_hbm [thread:$0]  %s10761, 4096, %s10759, %s10715, 128, 128, 8
        $region52: #{st_lstm_cell.1} parent=39 // pred_fallthru
          _
      $region40: #{st_lstm_cell.1} parent=5 // pred_fallthru
        _
      %p10767 = scmp.le.s32.totalorder 2, %s20
      // Predicated region
      $region53: #{st_lstm_cell.1} parent=5 // pred_check
        %p10768 = pneg %p10767
      $region54: #{st_lstm_cell.1} parent=5 // pred_check_branch
        %10770 = sbr.rel (%p10768) target = $region56
      $region55: #{st_lstm_cell.1} parent=5 // pred_region
        %s10771 = ssub.s32 %s20, 2
        // Predicated region
        $region57: #{st_lstm_cell.1} parent=55 // pred_check
          %p10772 = pneg %p169
        $region58: #{st_lstm_cell.1} parent=55 // pred_check_branch
          %10774 = sbr.rel (%p10772) target = $region60
        $region59: #{st_lstm_cell.1} parent=55 // pred_region
          %s10775 = sand.u32 %s154, 1
          %s10776 = scalar_lea.sflag [#allocation4], %s10775
          %s10777 = sand.u32 %s154, 1
          %s10778 = smul.addr %s10777, 256
          %s10779 = scalar_lea.vmem [#allocation3], %s10778
          %10780 = dma.done %s10776, 4096
        $region60: #{st_lstm_cell.1} parent=55 // pred_fallthru
          _
        // Predicated region
        $region61: #{st_lstm_cell.1} parent=55 // pred_check
          %p10781 = pneg %p195
        $region62: #{st_lstm_cell.1} parent=55 // pred_check_branch
          %10783 = sbr.rel (%p10781) target = $region64
        $region63: #{st_lstm_cell.1} parent=55 // pred_region
          %s10784 = sand.u32 %s26, 1
          %s10785 = scalar_lea.sflag [#allocation6], %s10784
          %s10786 = sand.u32 %s180, 1
          %s10787 = smul.addr %s10786, 256
          %s10788 = scalar_lea.vmem [#allocation5], %s10787
          %10789 = dma.done %s10785, 4096
        $region64: #{st_lstm_cell.1} parent=55 // pred_fallthru
          _
        // Predicated region
        $region65: #{st_lstm_cell.1} parent=55 // pred_check
          %p10790 = pneg %p221
        $region66: #{st_lstm_cell.1} parent=55 // pred_check_branch
          %10792 = sbr.rel (%p10790) target = $region68
        $region67: #{st_lstm_cell.1} parent=55 // pred_region
          %s10793 = sand.u32 %s26, 1
          %s10794 = scalar_lea.sflag [#allocation6], %s10793
          %s10795 = sand.u32 %s206, 1
          %s10796 = smul.addr %s10795, 256
          %s10797 = scalar_lea.vmem [#allocation7], %s10796
          %10798 = dma.done %s10794, 4096
        $region68: #{st_lstm_cell.1} parent=55 // pred_fallthru
          _
      $region56: #{st_lstm_cell.1} parent=5 // pred_fallthru
        _
    $region6: #{st_lstm_cell.1} parent=1 // loop_footer
      %s24 = sadd.s32 1, %s20
    $region7: #{st_lstm_cell.1} parent=1 // loop_footer_branch
      %19 = sbr.rel target = $region3
    $region8: #{st_lstm_cell.1} parent=1 // loop_exit
      _
    %10799 = vsyncpa [#allocation4], 1
    %s10800 = scalar_lea.sflag [#allocation4], 1
    %10801 = vsyncpa %s10800, 1
    %10802 = vsyncpa [#allocation6], 1
    %s10803 = scalar_lea.sflag [#allocation6], 1
    %10804 = vsyncpa %s10803, 1

</llo_original>
